<compile_context>
chip_gen: v7x
topology: tpu7x:2x2x1
jax: 0.10.0
libtpu: 0.0.40
codegen_flags: <defaults>
</compile_context>

<pallas_src>
import jax
import jax.numpy as jnp
from jax.experimental import pallas as pl
from jax.experimental.pallas import tpu as pltpu

# ----------------------------- configuration --------------------------------
B = 2                   # batch
T = 8                   # sequence length
BT = B * T              # flattened rows; all activations are (BT, feature) 2-D
WORD_VOCAB = 50         # len(default_itos)
WORD_VOCAB_PAD = 64     # padded one-hot contraction width
WORD_EMB = 32           # default_embedding_size
PAD_IDX = 0             # DependencyDataset.PAD_IDX (padding_idx of nn.Embedding)
BERT_VOCAB = 64         # synthetic BERT vocab
BERT_H = 64             # self.BERT_SIZE
FFN = 128               # feed-forward width
N_LAYERS = 8            # -> 9 hidden states, so hidden_states[4:8] is valid
N_HEADS = 2
HEAD_DIM = BERT_H // N_HEADS     # 32
HEAD_BLOCK = 128                 # per-head padded QKV block: [Q|K|V|pad32]
QKV_W = N_HEADS * HEAD_BLOCK     # 256
OUT_DIM = WORD_EMB + BERT_H      # 96 (real output width)
OUT_PAD = 128                    # lane-dense padded output width

VMEM_SPEC = pl.BlockSpec(memory_space=pltpu.MemorySpace.VMEM)


# ------------------------------ fused kernel ---------------------------------
def fused_lexer_kernel(word_ids_ref, bert_ids_ref, mask_ref,
                       word_tbl_ref, bert_tbl_ref, pos_tbl_ref,
                       wqkv_ref, bqkv_ref, wo_ref, bo_ref,
                       ln1_g_ref, ln1_b_ref, w1_ref, b1_ref, w2_ref, b2_ref,
                       ln2_g_ref, ln2_b_ref, out_ref):
    """Embeddings + 8 encoder layers + mean(hidden[4:8]) + lane-placed concat."""
    scale = 1.0 / (HEAD_DIM ** 0.5)
    mask = mask_ref[...]          # (BT, BT) block-diagonal 0 / -1e30 (f32)

    def layer_norm(y, g, b):
        mu = jnp.mean(y, axis=-1, keepdims=True)
        var = jnp.mean((y - mu) ** 2, axis=-1, keepdims=True)
        return (y - mu) * jax.lax.rsqrt(var + 1e-12) * g + b

    def encoder_layer(x2d, layer):
        """One post-LN transformer layer on (BT, H) f32 activations."""
        xb = x2d.astype(jnp.bfloat16)
        # Fused, head-major, per-head-128-lane-padded QKV projection: 1 push.
        qkv = jnp.dot(xb, wqkv_ref[layer],
                      preferred_element_type=jnp.float32) + bqkv_ref[layer]

        head_outs = []
        for h in range(N_HEADS):                      # static unroll
            base = h * HEAD_BLOCK                     # vreg-aligned head block
            qh = qkv[:, base:base + HEAD_DIM].astype(jnp.bfloat16)
            kh = qkv[:, base + HEAD_DIM:base + 2 * HEAD_DIM].astype(jnp.bfloat16)
            vh = qkv[:, base + 2 * HEAD_DIM:base + 3 * HEAD_DIM].astype(jnp.bfloat16)

            # Both batch rows in one MXU push; cross-batch terms masked out.
            s = jnp.einsum('qd,kd->qk', qh, kh,
                           preferred_element_type=jnp.float32) * scale + mask
            s = s - jnp.max(s, axis=-1, keepdims=True)        # f32 stats (VPU)
            p = jnp.exp(s)
            p = p * pl.reciprocal(jnp.sum(p, axis=-1, keepdims=True),
                                  approx=True)                # EUP slot
            head_outs.append(jnp.dot(p.astype(jnp.bfloat16), vh,
                                     preferred_element_type=jnp.float32))

        # Recombine heads once; single (BT,64)x(64,64) output projection.
        o = jnp.concatenate(head_outs, axis=-1).astype(jnp.bfloat16)
        attn = jnp.dot(o, wo_ref[layer],
                       preferred_element_type=jnp.float32) + bo_ref[layer]

        h1 = layer_norm(x2d + attn, ln1_g_ref[layer], ln1_b_ref[layer])

        ff = jnp.dot(h1.astype(jnp.bfloat16), w1_ref[layer],
                     preferred_element_type=jnp.float32) + b1_ref[layer]
        ff = jax.nn.gelu(ff, approximate=True)
        ff = jnp.dot(ff.astype(jnp.bfloat16), w2_ref[layer],
                     preferred_element_type=jnp.float32) + b2_ref[layer]

        return layer_norm(h1 + ff, ln2_g_ref[layer], ln2_b_ref[layer])

    # ---- embedding lookups as one-hot matmuls on the MXU ----
    word_oh = jax.nn.one_hot(word_ids_ref[...], WORD_VOCAB_PAD, dtype=jnp.float32)
    bert_oh = jax.nn.one_hot(bert_ids_ref[...], BERT_VOCAB, dtype=jnp.bfloat16)

    # word_tbl is (VOCAB_PAD, 128) f32 with values pre-placed at lanes 0..31,
    # so wordE emerges already in its final output-lane positions.
    wordE_slab = jnp.dot(word_oh.reshape(BT, WORD_VOCAB_PAD), word_tbl_ref[...],
                         preferred_element_type=jnp.float32)          # (BT,128)
    tok = jnp.dot(bert_oh.reshape(BT, BERT_VOCAB), bert_tbl_ref[...],
                  preferred_element_type=jnp.float32)                 # (BT, 64)
    hid = tok + pos_tbl_ref[...]          # positional table pre-broadcast

    # ---- encoder stack + running mean of hidden_states[4:8] ----
    acc = jnp.zeros((BT, BERT_H), jnp.float32)
    for layer in range(N_LAYERS):                     # static unroll
        hid = encoder_layer(hid, layer)
        if 3 <= layer < 7:    # outputs of layers 3..6 == hidden_states[4:8]
            acc = acc + hid
    bertE = acc * 0.25

    # ---- lane placement: bertE -> lanes 32..95 via one XLU roll, then add ----
    bert_slab = jnp.concatenate(
        [bertE, jnp.zeros((BT, OUT_PAD - BERT_H), jnp.float32)], axis=-1)
    out = wordE_slab + pltpu.roll(bert_slab, shift=WORD_EMB, axis=1)
    out_ref[...] = out.reshape(B, T, OUT_PAD)


# ------------------------------ wrapper --------------------------------------
@jax.jit
def bert_base_lexer_forward(word_idxes, bert_idxes, params):
    """Pallas equivalent of BertBaseLexer.forward((word_idxes, bert_idxes))."""
    out_pad = pl.pallas_call(
        fused_lexer_kernel,
        out_shape=jax.ShapeDtypeStruct((B, T, OUT_PAD), jnp.float32),
        in_specs=[VMEM_SPEC] * 18,
        out_specs=VMEM_SPEC,
    )(word_idxes, bert_idxes, params['attn_mask'],
      params['word_tbl'], params['bert_tbl'], params['pos_tbl'],
      params['wqkv'], params['bqkv'], params['wo'], params['bo'],
      params['ln1_g'], params['ln1_b'],
      params['w1'], params['b1'], params['w2'], params['b2'],
      params['ln2_g'], params['ln2_b'])
    # Spec fidelity: torch.cat((wordE, bertE), dim=2) is 96-wide.  A consumer
    # that can index the padded slab directly should take out_pad instead.
    return out_pad[:, :, :OUT_DIM]


# --------------------------- parameter init ----------------------------------
def init_params(key):
    std = 0.02
    k_word, k_bert, k_pos, k_layers = jax.random.split(key, 4)

    word_core = std * jax.random.normal(k_word, (WORD_VOCAB_PAD, WORD_EMB),
                                        jnp.float32)
    word_core = word_core.at[PAD_IDX].set(0.0)       # nn.Embedding padding_idx
    word_core = word_core.at[WORD_VOCAB:].set(0.0)   # padded, never-indexed rows
    # Pre-placed output lanes: wordE occupies lanes [0, 32) of the 128-lane slab.
    word_tbl = jnp.zeros((WORD_VOCAB_PAD, OUT_PAD), jnp.float32)
    word_tbl = word_tbl.at[:, :WORD_EMB].set(word_core)

    bert_tbl = std * jax.random.normal(k_bert, (BERT_VOCAB, BERT_H), jnp.float32)
    pos = std * jax.random.normal(k_pos, (T, BERT_H), jnp.float32)
    pos_tbl = jnp.tile(pos, (B, 1))                   # pre-broadcast to (BT, H)

    ks = jax.random.split(k_layers, 6)
    wq = std * jax.random.normal(ks[0], (N_LAYERS, BERT_H, BERT_H), jnp.float32)
    wk = std * jax.random.normal(ks[1], (N_LAYERS, BERT_H, BERT_H), jnp.float32)
    wv = std * jax.random.normal(ks[2], (N_LAYERS, BERT_H, BERT_H), jnp.float32)
    # Head-major, per-head 128-lane padded fused QKV: [Q_h|K_h|V_h|pad32] x heads.
    pad = jnp.zeros((N_LAYERS, BERT_H, HEAD_BLOCK - 3 * HEAD_DIM), jnp.float32)
    blocks = []
    for h in range(N_HEADS):
        lo, hi = h * HEAD_DIM, (h + 1) * HEAD_DIM
        blocks += [wq[..., lo:hi], wk[..., lo:hi], wv[..., lo:hi], pad]
    wqkv = jnp.concatenate(blocks, axis=-1)           # (N_LAYERS, 64, 256)

    wo = std * jax.random.normal(ks[3], (N_LAYERS, BERT_H, BERT_H), jnp.float32)
    w1 = std * jax.random.normal(ks[4], (N_LAYERS, BERT_H, FFN), jnp.float32)
    w2 = std * jax.random.normal(ks[5], (N_LAYERS, FFN, BERT_H), jnp.float32)

    # Block-diagonal additive mask: rows only attend within their own batch row.
    seg = jnp.arange(BT, dtype=jnp.int32) // T
    attn_mask = jnp.where(seg[:, None] == seg[None, :], 0.0, -1e30)
    attn_mask = attn_mask.astype(jnp.float32)

    return dict(
        attn_mask=attn_mask,
        # word_tbl stays f32: wordE is copied into the f32 output verbatim.
        word_tbl=word_tbl,
        bert_tbl=bert_tbl.astype(jnp.bfloat16),
        pos_tbl=pos_tbl,
        wqkv=wqkv.astype(jnp.bfloat16),
        bqkv=jnp.zeros((N_LAYERS, 1, QKV_W), jnp.float32),
        wo=wo.astype(jnp.bfloat16),
        bo=jnp.zeros((N_LAYERS, 1, BERT_H), jnp.float32),
        ln1_g=jnp.ones((N_LAYERS, 1, BERT_H), jnp.float32),
        ln1_b=jnp.zeros((N_LAYERS, 1, BERT_H), jnp.float32),
        w1=w1.astype(jnp.bfloat16),
        b1=jnp.zeros((N_LAYERS, 1, FFN), jnp.float32),
        w2=w2.astype(jnp.bfloat16),
        b2=jnp.zeros((N_LAYERS, 1, BERT_H), jnp.float32),
        ln2_g=jnp.ones((N_LAYERS, 1, BERT_H), jnp.float32),
        ln2_b=jnp.zeros((N_LAYERS, 1, BERT_H), jnp.float32),
    )


# --------------------- pure-JAX reference (correctness) ----------------------
@jax.jit
def reference_forward(word_idxes, bert_idxes, params):
    """Standard (per-batch, per-head) formulation, no Pallas, for validation."""
    wf = word_idxes.reshape(BT)
    bf = bert_idxes.reshape(BT)
    wordE = params['word_tbl'][wf, :WORD_EMB]                        # exact gather
    bert_oh = jax.nn.one_hot(bf, BERT_VOCAB, dtype=jnp.bfloat16)
    tok = jnp.dot(bert_oh, params['bert_tbl'],
                  preferred_element_type=jnp.float32)
    hid = tok + params['pos_tbl']

    def layer_norm(y, g, b):
        mu = jnp.mean(y, axis=-1, keepdims=True)
        var = jnp.mean((y - mu) ** 2, axis=-1, keepdims=True)
        return (y - mu) * jax.lax.rsqrt(var + 1e-12) * g + b

    acc = jnp.zeros((BT, BERT_H), jnp.float32)
    for layer in range(N_LAYERS):
        xb = hid.astype(jnp.bfloat16)
        qkv = jnp.dot(xb, params['wqkv'][layer],
                      preferred_element_type=jnp.float32) + params['bqkv'][layer]
        heads = []
        for h in range(N_HEADS):
            base = h * HEAD_BLOCK
            qh = qkv[:, base:base + HEAD_DIM].reshape(B, T, HEAD_DIM)
            kh = qkv[:, base + HEAD_DIM:base + 2 * HEAD_DIM].reshape(B, T, HEAD_DIM)
            vh = qkv[:, base + 2 * HEAD_DIM:base + 3 * HEAD_DIM].reshape(B, T, HEAD_DIM)
            s = jnp.einsum('bqd,bkd->bqk', qh.astype(jnp.bfloat16),
                           kh.astype(jnp.bfloat16),
                           preferred_element_type=jnp.float32) / (HEAD_DIM ** 0.5)
            p = jax.nn.softmax(s, axis=-1)
            oh = jnp.einsum('bqk,bkd->bqd', p.astype(jnp.bfloat16),
                            vh.astype(jnp.bfloat16),
                            preferred_element_type=jnp.float32)
            heads.append(oh.reshape(BT, HEAD_DIM))
        attn = jnp.dot(jnp.concatenate(heads, axis=-1).astype(jnp.bfloat16),
                       params['wo'][layer],
                       preferred_element_type=jnp.float32) + params['bo'][layer]
        h1 = layer_norm(hid + attn, params['ln1_g'][layer], params['ln1_b'][layer])
        ff = jnp.dot(h1.astype(jnp.bfloat16), params['w1'][layer],
                     preferred_element_type=jnp.float32) + params['b1'][layer]
        ff = jax.nn.gelu(ff, approximate=True)
        ff = jnp.dot(ff.astype(jnp.bfloat16), params['w2'][layer],
                     preferred_element_type=jnp.float32) + params['b2'][layer]
        hid = layer_norm(h1 + ff, params['ln2_g'][layer], params['ln2_b'][layer])
        if 3 <= layer < 7:
            acc = acc + hid
    bertE = acc * 0.25
    return jnp.concatenate([wordE, bertE], axis=-1).reshape(B, T, OUT_DIM)


# --------------------------------- main ---------------------------------------
if __name__ == "__main__":
    key = jax.random.PRNGKey(0)
    k_params, k_w, k_b = jax.random.split(key, 3)
    params = init_params(k_params)

    # coupled_sequences = (word_idxes, bert_idxes), both (B, T) int32
    word_idxes = jax.random.randint(k_w, (B, T), 0, WORD_VOCAB, dtype=jnp.int32)
    bert_idxes = jax.random.randint(k_b, (B, T), 0, BERT_VOCAB, dtype=jnp.int32)

    out = bert_base_lexer_forward(word_idxes, bert_idxes, params)
    out = jax.block_until_ready(out)

    ref = jax.block_until_ready(reference_forward(word_idxes, bert_idxes, params))

    assert out.shape == (B, T, OUT_DIM), out.shape
    assert out.dtype == jnp.float32
    assert bool(jnp.all(jnp.isfinite(out)))
    max_err = float(jnp.max(jnp.abs(out - ref)))
    assert max_err < 2e-2, f"kernel vs pure-JAX reference max abs err {max_err}"
    print("KERNEL_OK")
</pallas_src>

<mosaic_0001>
module attributes {stable_mosaic.version = 11 : i64} {
  func.func @fused_lexer_kernel(%arg0: memref<2x8xi32, #tpu.memory_space<vmem>>, %arg1: memref<2x8xi32, #tpu.memory_space<vmem>>, %arg2: memref<16x16xf32, #tpu.memory_space<vmem>>, %arg3: memref<64x128xf32, #tpu.memory_space<vmem>>, %arg4: memref<64x64xbf16, #tpu.memory_space<vmem>>, %arg5: memref<16x64xf32, #tpu.memory_space<vmem>>, %arg6: memref<8x64x256xbf16, #tpu.memory_space<vmem>>, %arg7: memref<8x1x256xf32, #tpu.memory_space<vmem>>, %arg8: memref<8x64x64xbf16, #tpu.memory_space<vmem>>, %arg9: memref<8x1x64xf32, #tpu.memory_space<vmem>>, %arg10: memref<8x1x64xf32, #tpu.memory_space<vmem>>, %arg11: memref<8x1x64xf32, #tpu.memory_space<vmem>>, %arg12: memref<8x64x128xbf16, #tpu.memory_space<vmem>>, %arg13: memref<8x1x128xf32, #tpu.memory_space<vmem>>, %arg14: memref<8x128x64xbf16, #tpu.memory_space<vmem>>, %arg15: memref<8x1x64xf32, #tpu.memory_space<vmem>>, %arg16: memref<8x1x64xf32, #tpu.memory_space<vmem>>, %arg17: memref<8x1x64xf32, #tpu.memory_space<vmem>>, %arg18: memref<2x8x128xf32, #tpu.memory_space<vmem>>) attributes {dimension_semantics = [], scalar_prefetch = 0 : i64, scratch_operands = 0 : i64, tpu.core_type = #tpu.core_type<tc>} {
    %c0 = arith.constant 0 : index
    %c0_0 = arith.constant 0 : index
    %0 = vector.load %arg2[%c0, %c0_0] : memref<16x16xf32, #tpu.memory_space<vmem>>, vector<16x16xf32>
    %c0_1 = arith.constant 0 : index
    %c0_2 = arith.constant 0 : index
    %1 = vector.load %arg0[%c0_1, %c0_2] : memref<2x8xi32, #tpu.memory_space<vmem>>, vector<2x8xi32>
    %2 = vector.shape_cast %1 : vector<2x8xi32> to vector<2x8x1xi32>
    %3 = tpu.iota {dimensions = array<i32: 2>} : vector<1x1x64xi32>
    %4 = vector.broadcast %2 : vector<2x8x1xi32> to vector<2x8x64xi32>
    %5 = vector.broadcast %3 : vector<1x1x64xi32> to vector<2x8x64xi32>
    %6 = arith.cmpi eq, %4, %5 : vector<2x8x64xi32>
    %7 = arith.extui %6 : vector<2x8x64xi1> to vector<2x8x64xi32>
    %8 = arith.sitofp %7 : vector<2x8x64xi32> to vector<2x8x64xf32>
    %c0_3 = arith.constant 0 : index
    %c0_4 = arith.constant 0 : index
    %9 = vector.load %arg1[%c0_3, %c0_4] : memref<2x8xi32, #tpu.memory_space<vmem>>, vector<2x8xi32>
    %10 = vector.shape_cast %9 : vector<2x8xi32> to vector<2x8x1xi32>
    %11 = tpu.iota {dimensions = array<i32: 2>} : vector<1x1x64xi32>
    %12 = vector.broadcast %10 : vector<2x8x1xi32> to vector<2x8x64xi32>
    %13 = vector.broadcast %11 : vector<1x1x64xi32> to vector<2x8x64xi32>
    %14 = arith.cmpi eq, %12, %13 : vector<2x8x64xi32>
    %15 = arith.extui %14 : vector<2x8x64xi1> to vector<2x8x64xi32>
    %16 = arith.sitofp %15 : vector<2x8x64xi32> to vector<2x8x64xf32>
    %17 = arith.truncf %16 : vector<2x8x64xf32> to vector<2x8x64xbf16>
    %18 = vector.shape_cast %8 : vector<2x8x64xf32> to vector<16x64xf32>
    %c0_5 = arith.constant 0 : index
    %c0_6 = arith.constant 0 : index
    %19 = vector.load %arg3[%c0_5, %c0_6] : memref<64x128xf32, #tpu.memory_space<vmem>>, vector<64x128xf32>
    %cst = arith.constant dense<0.000000e+00> : vector<16x128xf32>
    %20 = tpu.matmul %18, %19, %cst {dimension_numbers = #tpu.dot_dimension_numbers<[1], [0], [0], [1], [0, 0, 1, 1], [], []>} : vector<16x64xf32>, vector<64x128xf32>, vector<16x128xf32> -> vector<16x128xf32>
    %21 = vector.shape_cast %17 : vector<2x8x64xbf16> to vector<16x64xbf16>
    %c0_7 = arith.constant 0 : index
    %c0_8 = arith.constant 0 : index
    %22 = vector.load %arg4[%c0_7, %c0_8] : memref<64x64xbf16, #tpu.memory_space<vmem>>, vector<64x64xbf16>
    %cst_9 = arith.constant dense<0.000000e+00> : vector<16x64xf32>
    %23 = tpu.matmul %21, %22, %cst_9 {dimension_numbers = #tpu.dot_dimension_numbers<[1], [0], [0], [1], [0, 0, 1, 1], [], []>} : vector<16x64xbf16>, vector<64x64xbf16>, vector<16x64xf32> -> vector<16x64xf32>
    %c0_10 = arith.constant 0 : index
    %c0_11 = arith.constant 0 : index
    %24 = vector.load %arg5[%c0_10, %c0_11] : memref<16x64xf32, #tpu.memory_space<vmem>>, vector<16x64xf32>
    %25 = arith.addf %23, %24 : vector<16x64xf32>
    %cst_12 = arith.constant 0.000000e+00 : f32
    %26 = vector.broadcast %cst_12 : f32 to vector<16x64xf32>
    %27 = arith.truncf %25 : vector<16x64xf32> to vector<16x64xbf16>
    %c0_13 = arith.constant 0 : index
    %c0_14 = arith.constant 0 : index
    %c0_15 = arith.constant 0 : index
    %28 = vector.load %arg6[%c0_13, %c0_14, %c0_15] : memref<8x64x256xbf16, #tpu.memory_space<vmem>>, vector<1x64x256xbf16>
    %29 = vector.shape_cast %28 : vector<1x64x256xbf16> to vector<64x256xbf16>
    %cst_16 = arith.constant dense<0.000000e+00> : vector<16x256xf32>
    %30 = tpu.matmul %27, %29, %cst_16 {dimension_numbers = #tpu.dot_dimension_numbers<[1], [0], [0], [1], [0, 0, 1, 1], [], []>} : vector<16x64xbf16>, vector<64x256xbf16>, vector<16x256xf32> -> vector<16x256xf32>
    %c0_17 = arith.constant 0 : index
    %c0_18 = arith.constant 0 : index
    %c0_19 = arith.constant 0 : index
    %31 = vector.load %arg7[%c0_17, %c0_18, %c0_19] : memref<8x1x256xf32, #tpu.memory_space<vmem>>, vector<1x1x256xf32>
    %32 = vector.shape_cast %31 : vector<1x1x256xf32> to vector<1x256xf32>
    %33 = vector.broadcast %32 : vector<1x256xf32> to vector<16x256xf32>
    %34 = arith.addf %30, %33 : vector<16x256xf32>
    %35 = vector.extract_strided_slice %34 {offsets = [0, 0], sizes = [16, 32], strides = [1, 1]} : vector<16x256xf32> to vector<16x32xf32>
    %36 = arith.truncf %35 : vector<16x32xf32> to vector<16x32xbf16>
    %37 = vector.extract_strided_slice %34 {offsets = [0, 32], sizes = [16, 32], strides = [1, 1]} : vector<16x256xf32> to vector<16x32xf32>
    %38 = arith.truncf %37 : vector<16x32xf32> to vector<16x32xbf16>
    %39 = vector.extract_strided_slice %34 {offsets = [0, 64], sizes = [16, 32], strides = [1, 1]} : vector<16x256xf32> to vector<16x32xf32>
    %40 = arith.truncf %39 : vector<16x32xf32> to vector<16x32xbf16>
    "tpu.trace_start"() <{level = 10 : i32, message = "qd,kd->qk"}> : () -> ()
    %cst_20 = arith.constant dense<0.000000e+00> : vector<16x16xf32>
    %41 = tpu.matmul %36, %38, %cst_20 {dimension_numbers = #tpu.dot_dimension_numbers<[1], [1], [0], [0], [0, 0, 1, 0], [], []>} : vector<16x32xbf16>, vector<16x32xbf16>, vector<16x16xf32> -> vector<16x16xf32>
    "tpu.trace_stop"() : () -> ()
    %cst_21 = arith.constant 0.176776692 : f32
    %42 = vector.broadcast %cst_21 : f32 to vector<16x16xf32>
    %43 = arith.mulf %41, %42 : vector<16x16xf32>
    %44 = arith.addf %43, %0 : vector<16x16xf32>
    %cst_22 = arith.constant dense<0xFF800000> : vector<16xf32>
    %45 = vector.multi_reduction <maximumf>, %44, %cst_22 [1] : vector<16x16xf32> to vector<16xf32>
    %46 = vector.shape_cast %45 : vector<16xf32> to vector<16x1xf32>
    %47 = vector.broadcast %46 : vector<16x1xf32> to vector<16x16xf32>
    %48 = arith.subf %44, %47 : vector<16x16xf32>
    %49 = math.exp %48 : vector<16x16xf32>
    %cst_23 = arith.constant dense<0.000000e+00> : vector<16xf32>
    %50 = vector.multi_reduction <add>, %49, %cst_23 [1] : vector<16x16xf32> to vector<16xf32>
    %51 = vector.shape_cast %50 : vector<16xf32> to vector<16x1xf32>
    %52 = tpu.reciprocal %51 {approx = true} : vector<16x1xf32> -> vector<16x1xf32>
    %53 = vector.broadcast %52 : vector<16x1xf32> to vector<16x16xf32>
    %54 = arith.mulf %49, %53 : vector<16x16xf32>
    %55 = arith.truncf %54 : vector<16x16xf32> to vector<16x16xbf16>
    %cst_24 = arith.constant dense<0.000000e+00> : vector<16x32xf32>
    %56 = tpu.matmul %55, %40, %cst_24 {dimension_numbers = #tpu.dot_dimension_numbers<[1], [0], [0], [1], [0, 0, 1, 1], [], []>} : vector<16x16xbf16>, vector<16x32xbf16>, vector<16x32xf32> -> vector<16x32xf32>
    %57 = vector.extract_strided_slice %34 {offsets = [0, 128], sizes = [16, 32], strides = [1, 1]} : vector<16x256xf32> to vector<16x32xf32>
    %58 = arith.truncf %57 : vector<16x32xf32> to vector<16x32xbf16>
    %59 = vector.extract_strided_slice %34 {offsets = [0, 160], sizes = [16, 32], strides = [1, 1]} : vector<16x256xf32> to vector<16x32xf32>
    %60 = arith.truncf %59 : vector<16x32xf32> to vector<16x32xbf16>
    %61 = vector.extract_strided_slice %34 {offsets = [0, 192], sizes = [16, 32], strides = [1, 1]} : vector<16x256xf32> to vector<16x32xf32>
    %62 = arith.truncf %61 : vector<16x32xf32> to vector<16x32xbf16>
    "tpu.trace_start"() <{level = 10 : i32, message = "qd,kd->qk"}> : () -> ()
    %cst_25 = arith.constant dense<0.000000e+00> : vector<16x16xf32>
    %63 = tpu.matmul %58, %60, %cst_25 {dimension_numbers = #tpu.dot_dimension_numbers<[1], [1], [0], [0], [0, 0, 1, 0], [], []>} : vector<16x32xbf16>, vector<16x32xbf16>, vector<16x16xf32> -> vector<16x16xf32>
    "tpu.trace_stop"() : () -> ()
    %cst_26 = arith.constant 0.176776692 : f32
    %64 = vector.broadcast %cst_26 : f32 to vector<16x16xf32>
    %65 = arith.mulf %63, %64 : vector<16x16xf32>
    %66 = arith.addf %65, %0 : vector<16x16xf32>
    %cst_27 = arith.constant dense<0xFF800000> : vector<16xf32>
    %67 = vector.multi_reduction <maximumf>, %66, %cst_27 [1] : vector<16x16xf32> to vector<16xf32>
    %68 = vector.shape_cast %67 : vector<16xf32> to vector<16x1xf32>
    %69 = vector.broadcast %68 : vector<16x1xf32> to vector<16x16xf32>
    %70 = arith.subf %66, %69 : vector<16x16xf32>
    %71 = math.exp %70 : vector<16x16xf32>
    %cst_28 = arith.constant dense<0.000000e+00> : vector<16xf32>
    %72 = vector.multi_reduction <add>, %71, %cst_28 [1] : vector<16x16xf32> to vector<16xf32>
    %73 = vector.shape_cast %72 : vector<16xf32> to vector<16x1xf32>
    %74 = tpu.reciprocal %73 {approx = true} : vector<16x1xf32> -> vector<16x1xf32>
    %75 = vector.broadcast %74 : vector<16x1xf32> to vector<16x16xf32>
    %76 = arith.mulf %71, %75 : vector<16x16xf32>
    %77 = arith.truncf %76 : vector<16x16xf32> to vector<16x16xbf16>
    %cst_29 = arith.constant dense<0.000000e+00> : vector<16x32xf32>
    %78 = tpu.matmul %77, %62, %cst_29 {dimension_numbers = #tpu.dot_dimension_numbers<[1], [0], [0], [1], [0, 0, 1, 1], [], []>} : vector<16x16xbf16>, vector<16x32xbf16>, vector<16x32xf32> -> vector<16x32xf32>
    %79 = tpu.concatenate %56, %78 in 1 : vector<16x32xf32>, vector<16x32xf32> -> vector<16x64xf32>
    %80 = arith.truncf %79 : vector<16x64xf32> to vector<16x64xbf16>
    %c0_30 = arith.constant 0 : index
    %c0_31 = arith.constant 0 : index
    %c0_32 = arith.constant 0 : index
    %81 = vector.load %arg8[%c0_30, %c0_31, %c0_32] : memref<8x64x64xbf16, #tpu.memory_space<vmem>>, vector<1x64x64xbf16>
    %82 = vector.shape_cast %81 : vector<1x64x64xbf16> to vector<64x64xbf16>
    %cst_33 = arith.constant dense<0.000000e+00> : vector<16x64xf32>
    %83 = tpu.matmul %80, %82, %cst_33 {dimension_numbers = #tpu.dot_dimension_numbers<[1], [0], [0], [1], [0, 0, 1, 1], [], []>} : vector<16x64xbf16>, vector<64x64xbf16>, vector<16x64xf32> -> vector<16x64xf32>
    %c0_34 = arith.constant 0 : index
    %c0_35 = arith.constant 0 : index
    %c0_36 = arith.constant 0 : index
    %84 = vector.load %arg9[%c0_34, %c0_35, %c0_36] : memref<8x1x64xf32, #tpu.memory_space<vmem>>, vector<1x1x64xf32>
    %85 = vector.shape_cast %84 : vector<1x1x64xf32> to vector<1x64xf32>
    %86 = vector.broadcast %85 : vector<1x64xf32> to vector<16x64xf32>
    %87 = arith.addf %83, %86 : vector<16x64xf32>
    %88 = arith.addf %25, %87 : vector<16x64xf32>
    %c0_37 = arith.constant 0 : index
    %c0_38 = arith.constant 0 : index
    %c0_39 = arith.constant 0 : index
    %89 = vector.load %arg10[%c0_37, %c0_38, %c0_39] : memref<8x1x64xf32, #tpu.memory_space<vmem>>, vector<1x1x64xf32>
    %90 = vector.shape_cast %89 : vector<1x1x64xf32> to vector<1x64xf32>
    %c0_40 = arith.constant 0 : index
    %c0_41 = arith.constant 0 : index
    %c0_42 = arith.constant 0 : index
    %91 = vector.load %arg11[%c0_40, %c0_41, %c0_42] : memref<8x1x64xf32, #tpu.memory_space<vmem>>, vector<1x1x64xf32>
    %92 = vector.shape_cast %91 : vector<1x1x64xf32> to vector<1x64xf32>
    %cst_43 = arith.constant dense<0.000000e+00> : vector<16xf32>
    %93 = vector.multi_reduction <add>, %88, %cst_43 [1] : vector<16x64xf32> to vector<16xf32>
    %94 = vector.shape_cast %93 : vector<16xf32> to vector<16x1xf32>
    %cst_44 = arith.constant 6.400000e+01 : f32
    %95 = vector.broadcast %cst_44 : f32 to vector<16x1xf32>
    %96 = arith.divf %94, %95 : vector<16x1xf32>
    %97 = vector.broadcast %96 : vector<16x1xf32> to vector<16x64xf32>
    %98 = arith.subf %88, %97 : vector<16x64xf32>
    %99 = arith.mulf %98, %98 : vector<16x64xf32>
    %cst_45 = arith.constant dense<0.000000e+00> : vector<16xf32>
    %100 = vector.multi_reduction <add>, %99, %cst_45 [1] : vector<16x64xf32> to vector<16xf32>
    %101 = vector.shape_cast %100 : vector<16xf32> to vector<16x1xf32>
    %cst_46 = arith.constant 6.400000e+01 : f32
    %102 = vector.broadcast %cst_46 : f32 to vector<16x1xf32>
    %103 = arith.divf %101, %102 : vector<16x1xf32>
    %104 = vector.broadcast %96 : vector<16x1xf32> to vector<16x64xf32>
    %105 = arith.subf %88, %104 : vector<16x64xf32>
    %cst_47 = arith.constant 9.99999996E-13 : f32
    %106 = vector.broadcast %cst_47 : f32 to vector<16x1xf32>
    %107 = arith.addf %103, %106 : vector<16x1xf32>
    %108 = math.rsqrt %107 : vector<16x1xf32>
    %109 = vector.broadcast %108 : vector<16x1xf32> to vector<16x64xf32>
    %110 = arith.mulf %105, %109 : vector<16x64xf32>
    %111 = vector.broadcast %90 : vector<1x64xf32> to vector<16x64xf32>
    %112 = arith.mulf %110, %111 : vector<16x64xf32>
    %113 = vector.broadcast %92 : vector<1x64xf32> to vector<16x64xf32>
    %114 = arith.addf %112, %113 : vector<16x64xf32>
    %115 = arith.truncf %114 : vector<16x64xf32> to vector<16x64xbf16>
    %c0_48 = arith.constant 0 : index
    %c0_49 = arith.constant 0 : index
    %c0_50 = arith.constant 0 : index
    %116 = vector.load %arg12[%c0_48, %c0_49, %c0_50] : memref<8x64x128xbf16, #tpu.memory_space<vmem>>, vector<1x64x128xbf16>
    %117 = vector.shape_cast %116 : vector<1x64x128xbf16> to vector<64x128xbf16>
    %cst_51 = arith.constant dense<0.000000e+00> : vector<16x128xf32>
    %118 = tpu.matmul %115, %117, %cst_51 {dimension_numbers = #tpu.dot_dimension_numbers<[1], [0], [0], [1], [0, 0, 1, 1], [], []>} : vector<16x64xbf16>, vector<64x128xbf16>, vector<16x128xf32> -> vector<16x128xf32>
    %c0_52 = arith.constant 0 : index
    %c0_53 = arith.constant 0 : index
    %c0_54 = arith.constant 0 : index
    %119 = vector.load %arg13[%c0_52, %c0_53, %c0_54] : memref<8x1x128xf32, #tpu.memory_space<vmem>>, vector<1x1x128xf32>
    %120 = vector.shape_cast %119 : vector<1x1x128xf32> to vector<1x128xf32>
    %121 = vector.broadcast %120 : vector<1x128xf32> to vector<16x128xf32>
    %122 = arith.addf %118, %121 : vector<16x128xf32>
    %123 = arith.mulf %122, %122 : vector<16x128xf32>
    %124 = arith.mulf %122, %123 : vector<16x128xf32>
    %cst_55 = arith.constant 4.471500e-02 : f32
    %125 = vector.broadcast %cst_55 : f32 to vector<16x128xf32>
    %126 = arith.mulf %125, %124 : vector<16x128xf32>
    %127 = arith.addf %122, %126 : vector<16x128xf32>
    %cst_56 = arith.constant 0.797884583 : f32
    %128 = vector.broadcast %cst_56 : f32 to vector<16x128xf32>
    %129 = arith.mulf %128, %127 : vector<16x128xf32>
    %130 = math.tanh %129 : vector<16x128xf32>
    %cst_57 = arith.constant 1.000000e+00 : f32
    %131 = vector.broadcast %cst_57 : f32 to vector<16x128xf32>
    %132 = arith.addf %131, %130 : vector<16x128xf32>
    %cst_58 = arith.constant 5.000000e-01 : f32
    %133 = vector.broadcast %cst_58 : f32 to vector<16x128xf32>
    %134 = arith.mulf %133, %132 : vector<16x128xf32>
    %135 = arith.mulf %122, %134 : vector<16x128xf32>
    %136 = arith.truncf %135 : vector<16x128xf32> to vector<16x128xbf16>
    %c0_59 = arith.constant 0 : index
    %c0_60 = arith.constant 0 : index
    %c0_61 = arith.constant 0 : index
    %137 = vector.load %arg14[%c0_59, %c0_60, %c0_61] : memref<8x128x64xbf16, #tpu.memory_space<vmem>>, vector<1x128x64xbf16>
    %138 = vector.shape_cast %137 : vector<1x128x64xbf16> to vector<128x64xbf16>
    %cst_62 = arith.constant dense<0.000000e+00> : vector<16x64xf32>
    %139 = tpu.matmul %136, %138, %cst_62 {dimension_numbers = #tpu.dot_dimension_numbers<[1], [0], [0], [1], [0, 0, 1, 1], [], []>} : vector<16x128xbf16>, vector<128x64xbf16>, vector<16x64xf32> -> vector<16x64xf32>
    %c0_63 = arith.constant 0 : index
    %c0_64 = arith.constant 0 : index
    %c0_65 = arith.constant 0 : index
    %140 = vector.load %arg15[%c0_63, %c0_64, %c0_65] : memref<8x1x64xf32, #tpu.memory_space<vmem>>, vector<1x1x64xf32>
    %141 = vector.shape_cast %140 : vector<1x1x64xf32> to vector<1x64xf32>
    %142 = vector.broadcast %141 : vector<1x64xf32> to vector<16x64xf32>
    %143 = arith.addf %139, %142 : vector<16x64xf32>
    %144 = arith.addf %114, %143 : vector<16x64xf32>
    %c0_66 = arith.constant 0 : index
    %c0_67 = arith.constant 0 : index
    %c0_68 = arith.constant 0 : index
    %145 = vector.load %arg16[%c0_66, %c0_67, %c0_68] : memref<8x1x64xf32, #tpu.memory_space<vmem>>, vector<1x1x64xf32>
    %146 = vector.shape_cast %145 : vector<1x1x64xf32> to vector<1x64xf32>
    %c0_69 = arith.constant 0 : index
    %c0_70 = arith.constant 0 : index
    %c0_71 = arith.constant 0 : index
    %147 = vector.load %arg17[%c0_69, %c0_70, %c0_71] : memref<8x1x64xf32, #tpu.memory_space<vmem>>, vector<1x1x64xf32>
    %148 = vector.shape_cast %147 : vector<1x1x64xf32> to vector<1x64xf32>
    %cst_72 = arith.constant dense<0.000000e+00> : vector<16xf32>
    %149 = vector.multi_reduction <add>, %144, %cst_72 [1] : vector<16x64xf32> to vector<16xf32>
    %150 = vector.shape_cast %149 : vector<16xf32> to vector<16x1xf32>
    %cst_73 = arith.constant 6.400000e+01 : f32
    %151 = vector.broadcast %cst_73 : f32 to vector<16x1xf32>
    %152 = arith.divf %150, %151 : vector<16x1xf32>
    %153 = vector.broadcast %152 : vector<16x1xf32> to vector<16x64xf32>
    %154 = arith.subf %144, %153 : vector<16x64xf32>
    %155 = arith.mulf %154, %154 : vector<16x64xf32>
    %cst_74 = arith.constant dense<0.000000e+00> : vector<16xf32>
    %156 = vector.multi_reduction <add>, %155, %cst_74 [1] : vector<16x64xf32> to vector<16xf32>
    %157 = vector.shape_cast %156 : vector<16xf32> to vector<16x1xf32>
    %cst_75 = arith.constant 6.400000e+01 : f32
    %158 = vector.broadcast %cst_75 : f32 to vector<16x1xf32>
    %159 = arith.divf %157, %158 : vector<16x1xf32>
    %160 = vector.broadcast %152 : vector<16x1xf32> to vector<16x64xf32>
    %161 = arith.subf %144, %160 : vector<16x64xf32>
    %cst_76 = arith.constant 9.99999996E-13 : f32
    %162 = vector.broadcast %cst_76 : f32 to vector<16x1xf32>
    %163 = arith.addf %159, %162 : vector<16x1xf32>
    %164 = math.rsqrt %163 : vector<16x1xf32>
    %165 = vector.broadcast %164 : vector<16x1xf32> to vector<16x64xf32>
    %166 = arith.mulf %161, %165 : vector<16x64xf32>
    %167 = vector.broadcast %146 : vector<1x64xf32> to vector<16x64xf32>
    %168 = arith.mulf %166, %167 : vector<16x64xf32>
    %169 = vector.broadcast %148 : vector<1x64xf32> to vector<16x64xf32>
    %170 = arith.addf %168, %169 : vector<16x64xf32>
    %171 = arith.truncf %170 : vector<16x64xf32> to vector<16x64xbf16>
    %c1 = arith.constant 1 : index
    %c0_77 = arith.constant 0 : index
    %c0_78 = arith.constant 0 : index
    %172 = vector.load %arg6[%c1, %c0_77, %c0_78] : memref<8x64x256xbf16, #tpu.memory_space<vmem>>, vector<1x64x256xbf16>
    %173 = vector.shape_cast %172 : vector<1x64x256xbf16> to vector<64x256xbf16>
    %cst_79 = arith.constant dense<0.000000e+00> : vector<16x256xf32>
    %174 = tpu.matmul %171, %173, %cst_79 {dimension_numbers = #tpu.dot_dimension_numbers<[1], [0], [0], [1], [0, 0, 1, 1], [], []>} : vector<16x64xbf16>, vector<64x256xbf16>, vector<16x256xf32> -> vector<16x256xf32>
    %c1_80 = arith.constant 1 : index
    %c0_81 = arith.constant 0 : index
    %c0_82 = arith.constant 0 : index
    %175 = vector.load %arg7[%c1_80, %c0_81, %c0_82] : memref<8x1x256xf32, #tpu.memory_space<vmem>>, vector<1x1x256xf32>
    %176 = vector.shape_cast %175 : vector<1x1x256xf32> to vector<1x256xf32>
    %177 = vector.broadcast %176 : vector<1x256xf32> to vector<16x256xf32>
    %178 = arith.addf %174, %177 : vector<16x256xf32>
    %179 = vector.extract_strided_slice %178 {offsets = [0, 0], sizes = [16, 32], strides = [1, 1]} : vector<16x256xf32> to vector<16x32xf32>
    %180 = arith.truncf %179 : vector<16x32xf32> to vector<16x32xbf16>
    %181 = vector.extract_strided_slice %178 {offsets = [0, 32], sizes = [16, 32], strides = [1, 1]} : vector<16x256xf32> to vector<16x32xf32>
    %182 = arith.truncf %181 : vector<16x32xf32> to vector<16x32xbf16>
    %183 = vector.extract_strided_slice %178 {offsets = [0, 64], sizes = [16, 32], strides = [1, 1]} : vector<16x256xf32> to vector<16x32xf32>
    %184 = arith.truncf %183 : vector<16x32xf32> to vector<16x32xbf16>
    "tpu.trace_start"() <{level = 10 : i32, message = "qd,kd->qk"}> : () -> ()
    %cst_83 = arith.constant dense<0.000000e+00> : vector<16x16xf32>
    %185 = tpu.matmul %180, %182, %cst_83 {dimension_numbers = #tpu.dot_dimension_numbers<[1], [1], [0], [0], [0, 0, 1, 0], [], []>} : vector<16x32xbf16>, vector<16x32xbf16>, vector<16x16xf32> -> vector<16x16xf32>
    "tpu.trace_stop"() : () -> ()
    %cst_84 = arith.constant 0.176776692 : f32
    %186 = vector.broadcast %cst_84 : f32 to vector<16x16xf32>
    %187 = arith.mulf %185, %186 : vector<16x16xf32>
    %188 = arith.addf %187, %0 : vector<16x16xf32>
    %cst_85 = arith.constant dense<0xFF800000> : vector<16xf32>
    %189 = vector.multi_reduction <maximumf>, %188, %cst_85 [1] : vector<16x16xf32> to vector<16xf32>
    %190 = vector.shape_cast %189 : vector<16xf32> to vector<16x1xf32>
    %191 = vector.broadcast %190 : vector<16x1xf32> to vector<16x16xf32>
    %192 = arith.subf %188, %191 : vector<16x16xf32>
    %193 = math.exp %192 : vector<16x16xf32>
    %cst_86 = arith.constant dense<0.000000e+00> : vector<16xf32>
    %194 = vector.multi_reduction <add>, %193, %cst_86 [1] : vector<16x16xf32> to vector<16xf32>
    %195 = vector.shape_cast %194 : vector<16xf32> to vector<16x1xf32>
    %196 = tpu.reciprocal %195 {approx = true} : vector<16x1xf32> -> vector<16x1xf32>
    %197 = vector.broadcast %196 : vector<16x1xf32> to vector<16x16xf32>
    %198 = arith.mulf %193, %197 : vector<16x16xf32>
    %199 = arith.truncf %198 : vector<16x16xf32> to vector<16x16xbf16>
    %cst_87 = arith.constant dense<0.000000e+00> : vector<16x32xf32>
    %200 = tpu.matmul %199, %184, %cst_87 {dimension_numbers = #tpu.dot_dimension_numbers<[1], [0], [0], [1], [0, 0, 1, 1], [], []>} : vector<16x16xbf16>, vector<16x32xbf16>, vector<16x32xf32> -> vector<16x32xf32>
    %201 = vector.extract_strided_slice %178 {offsets = [0, 128], sizes = [16, 32], strides = [1, 1]} : vector<16x256xf32> to vector<16x32xf32>
    %202 = arith.truncf %201 : vector<16x32xf32> to vector<16x32xbf16>
    %203 = vector.extract_strided_slice %178 {offsets = [0, 160], sizes = [16, 32], strides = [1, 1]} : vector<16x256xf32> to vector<16x32xf32>
    %204 = arith.truncf %203 : vector<16x32xf32> to vector<16x32xbf16>
    %205 = vector.extract_strided_slice %178 {offsets = [0, 192], sizes = [16, 32], strides = [1, 1]} : vector<16x256xf32> to vector<16x32xf32>
    %206 = arith.truncf %205 : vector<16x32xf32> to vector<16x32xbf16>
    "tpu.trace_start"() <{level = 10 : i32, message = "qd,kd->qk"}> : () -> ()
    %cst_88 = arith.constant dense<0.000000e+00> : vector<16x16xf32>
    %207 = tpu.matmul %202, %204, %cst_88 {dimension_numbers = #tpu.dot_dimension_numbers<[1], [1], [0], [0], [0, 0, 1, 0], [], []>} : vector<16x32xbf16>, vector<16x32xbf16>, vector<16x16xf32> -> vector<16x16xf32>
    "tpu.trace_stop"() : () -> ()
    %cst_89 = arith.constant 0.176776692 : f32
    %208 = vector.broadcast %cst_89 : f32 to vector<16x16xf32>
    %209 = arith.mulf %207, %208 : vector<16x16xf32>
    %210 = arith.addf %209, %0 : vector<16x16xf32>
    %cst_90 = arith.constant dense<0xFF800000> : vector<16xf32>
    %211 = vector.multi_reduction <maximumf>, %210, %cst_90 [1] : vector<16x16xf32> to vector<16xf32>
    %212 = vector.shape_cast %211 : vector<16xf32> to vector<16x1xf32>
    %213 = vector.broadcast %212 : vector<16x1xf32> to vector<16x16xf32>
    %214 = arith.subf %210, %213 : vector<16x16xf32>
    %215 = math.exp %214 : vector<16x16xf32>
    %cst_91 = arith.constant dense<0.000000e+00> : vector<16xf32>
    %216 = vector.multi_reduction <add>, %215, %cst_91 [1] : vector<16x16xf32> to vector<16xf32>
    %217 = vector.shape_cast %216 : vector<16xf32> to vector<16x1xf32>
    %218 = tpu.reciprocal %217 {approx = true} : vector<16x1xf32> -> vector<16x1xf32>
    %219 = vector.broadcast %218 : vector<16x1xf32> to vector<16x16xf32>
    %220 = arith.mulf %215, %219 : vector<16x16xf32>
    %221 = arith.truncf %220 : vector<16x16xf32> to vector<16x16xbf16>
    %cst_92 = arith.constant dense<0.000000e+00> : vector<16x32xf32>
    %222 = tpu.matmul %221, %206, %cst_92 {dimension_numbers = #tpu.dot_dimension_numbers<[1], [0], [0], [1], [0, 0, 1, 1], [], []>} : vector<16x16xbf16>, vector<16x32xbf16>, vector<16x32xf32> -> vector<16x32xf32>
    %223 = tpu.concatenate %200, %222 in 1 : vector<16x32xf32>, vector<16x32xf32> -> vector<16x64xf32>
    %224 = arith.truncf %223 : vector<16x64xf32> to vector<16x64xbf16>
    %c1_93 = arith.constant 1 : index
    %c0_94 = arith.constant 0 : index
    %c0_95 = arith.constant 0 : index
    %225 = vector.load %arg8[%c1_93, %c0_94, %c0_95] : memref<8x64x64xbf16, #tpu.memory_space<vmem>>, vector<1x64x64xbf16>
    %226 = vector.shape_cast %225 : vector<1x64x64xbf16> to vector<64x64xbf16>
    %cst_96 = arith.constant dense<0.000000e+00> : vector<16x64xf32>
    %227 = tpu.matmul %224, %226, %cst_96 {dimension_numbers = #tpu.dot_dimension_numbers<[1], [0], [0], [1], [0, 0, 1, 1], [], []>} : vector<16x64xbf16>, vector<64x64xbf16>, vector<16x64xf32> -> vector<16x64xf32>
    %c1_97 = arith.constant 1 : index
    %c0_98 = arith.constant 0 : index
    %c0_99 = arith.constant 0 : index
    %228 = vector.load %arg9[%c1_97, %c0_98, %c0_99] : memref<8x1x64xf32, #tpu.memory_space<vmem>>, vector<1x1x64xf32>
    %229 = vector.shape_cast %228 : vector<1x1x64xf32> to vector<1x64xf32>
    %230 = vector.broadcast %229 : vector<1x64xf32> to vector<16x64xf32>
    %231 = arith.addf %227, %230 : vector<16x64xf32>
    %232 = arith.addf %170, %231 : vector<16x64xf32>
    %c1_100 = arith.constant 1 : index
    %c0_101 = arith.constant 0 : index
    %c0_102 = arith.constant 0 : index
    %233 = vector.load %arg10[%c1_100, %c0_101, %c0_102] : memref<8x1x64xf32, #tpu.memory_space<vmem>>, vector<1x1x64xf32>
    %234 = vector.shape_cast %233 : vector<1x1x64xf32> to vector<1x64xf32>
    %c1_103 = arith.constant 1 : index
    %c0_104 = arith.constant 0 : index
    %c0_105 = arith.constant 0 : index
    %235 = vector.load %arg11[%c1_103, %c0_104, %c0_105] : memref<8x1x64xf32, #tpu.memory_space<vmem>>, vector<1x1x64xf32>
    %236 = vector.shape_cast %235 : vector<1x1x64xf32> to vector<1x64xf32>
    %cst_106 = arith.constant dense<0.000000e+00> : vector<16xf32>
    %237 = vector.multi_reduction <add>, %232, %cst_106 [1] : vector<16x64xf32> to vector<16xf32>
    %238 = vector.shape_cast %237 : vector<16xf32> to vector<16x1xf32>
    %cst_107 = arith.constant 6.400000e+01 : f32
    %239 = vector.broadcast %cst_107 : f32 to vector<16x1xf32>
    %240 = arith.divf %238, %239 : vector<16x1xf32>
    %241 = vector.broadcast %240 : vector<16x1xf32> to vector<16x64xf32>
    %242 = arith.subf %232, %241 : vector<16x64xf32>
    %243 = arith.mulf %242, %242 : vector<16x64xf32>
    %cst_108 = arith.constant dense<0.000000e+00> : vector<16xf32>
    %244 = vector.multi_reduction <add>, %243, %cst_108 [1] : vector<16x64xf32> to vector<16xf32>
    %245 = vector.shape_cast %244 : vector<16xf32> to vector<16x1xf32>
    %cst_109 = arith.constant 6.400000e+01 : f32
    %246 = vector.broadcast %cst_109 : f32 to vector<16x1xf32>
    %247 = arith.divf %245, %246 : vector<16x1xf32>
    %248 = vector.broadcast %240 : vector<16x1xf32> to vector<16x64xf32>
    %249 = arith.subf %232, %248 : vector<16x64xf32>
    %cst_110 = arith.constant 9.99999996E-13 : f32
    %250 = vector.broadcast %cst_110 : f32 to vector<16x1xf32>
    %251 = arith.addf %247, %250 : vector<16x1xf32>
    %252 = math.rsqrt %251 : vector<16x1xf32>
    %253 = vector.broadcast %252 : vector<16x1xf32> to vector<16x64xf32>
    %254 = arith.mulf %249, %253 : vector<16x64xf32>
    %255 = vector.broadcast %234 : vector<1x64xf32> to vector<16x64xf32>
    %256 = arith.mulf %254, %255 : vector<16x64xf32>
    %257 = vector.broadcast %236 : vector<1x64xf32> to vector<16x64xf32>
    %258 = arith.addf %256, %257 : vector<16x64xf32>
    %259 = arith.truncf %258 : vector<16x64xf32> to vector<16x64xbf16>
    %c1_111 = arith.constant 1 : index
    %c0_112 = arith.constant 0 : index
    %c0_113 = arith.constant 0 : index
    %260 = vector.load %arg12[%c1_111, %c0_112, %c0_113] : memref<8x64x128xbf16, #tpu.memory_space<vmem>>, vector<1x64x128xbf16>
    %261 = vector.shape_cast %260 : vector<1x64x128xbf16> to vector<64x128xbf16>
    %cst_114 = arith.constant dense<0.000000e+00> : vector<16x128xf32>
    %262 = tpu.matmul %259, %261, %cst_114 {dimension_numbers = #tpu.dot_dimension_numbers<[1], [0], [0], [1], [0, 0, 1, 1], [], []>} : vector<16x64xbf16>, vector<64x128xbf16>, vector<16x128xf32> -> vector<16x128xf32>
    %c1_115 = arith.constant 1 : index
    %c0_116 = arith.constant 0 : index
    %c0_117 = arith.constant 0 : index
    %263 = vector.load %arg13[%c1_115, %c0_116, %c0_117] : memref<8x1x128xf32, #tpu.memory_space<vmem>>, vector<1x1x128xf32>
    %264 = vector.shape_cast %263 : vector<1x1x128xf32> to vector<1x128xf32>
    %265 = vector.broadcast %264 : vector<1x128xf32> to vector<16x128xf32>
    %266 = arith.addf %262, %265 : vector<16x128xf32>
    %267 = arith.mulf %266, %266 : vector<16x128xf32>
    %268 = arith.mulf %266, %267 : vector<16x128xf32>
    %cst_118 = arith.constant 4.471500e-02 : f32
    %269 = vector.broadcast %cst_118 : f32 to vector<16x128xf32>
    %270 = arith.mulf %269, %268 : vector<16x128xf32>
    %271 = arith.addf %266, %270 : vector<16x128xf32>
    %cst_119 = arith.constant 0.797884583 : f32
    %272 = vector.broadcast %cst_119 : f32 to vector<16x128xf32>
    %273 = arith.mulf %272, %271 : vector<16x128xf32>
    %274 = math.tanh %273 : vector<16x128xf32>
    %cst_120 = arith.constant 1.000000e+00 : f32
    %275 = vector.broadcast %cst_120 : f32 to vector<16x128xf32>
    %276 = arith.addf %275, %274 : vector<16x128xf32>
    %cst_121 = arith.constant 5.000000e-01 : f32
    %277 = vector.broadcast %cst_121 : f32 to vector<16x128xf32>
    %278 = arith.mulf %277, %276 : vector<16x128xf32>
    %279 = arith.mulf %266, %278 : vector<16x128xf32>
    %280 = arith.truncf %279 : vector<16x128xf32> to vector<16x128xbf16>
    %c1_122 = arith.constant 1 : index
    %c0_123 = arith.constant 0 : index
    %c0_124 = arith.constant 0 : index
    %281 = vector.load %arg14[%c1_122, %c0_123, %c0_124] : memref<8x128x64xbf16, #tpu.memory_space<vmem>>, vector<1x128x64xbf16>
    %282 = vector.shape_cast %281 : vector<1x128x64xbf16> to vector<128x64xbf16>
    %cst_125 = arith.constant dense<0.000000e+00> : vector<16x64xf32>
    %283 = tpu.matmul %280, %282, %cst_125 {dimension_numbers = #tpu.dot_dimension_numbers<[1], [0], [0], [1], [0, 0, 1, 1], [], []>} : vector<16x128xbf16>, vector<128x64xbf16>, vector<16x64xf32> -> vector<16x64xf32>
    %c1_126 = arith.constant 1 : index
    %c0_127 = arith.constant 0 : index
    %c0_128 = arith.constant 0 : index
    %284 = vector.load %arg15[%c1_126, %c0_127, %c0_128] : memref<8x1x64xf32, #tpu.memory_space<vmem>>, vector<1x1x64xf32>
    %285 = vector.shape_cast %284 : vector<1x1x64xf32> to vector<1x64xf32>
    %286 = vector.broadcast %285 : vector<1x64xf32> to vector<16x64xf32>
    %287 = arith.addf %283, %286 : vector<16x64xf32>
    %288 = arith.addf %258, %287 : vector<16x64xf32>
    %c1_129 = arith.constant 1 : index
    %c0_130 = arith.constant 0 : index
    %c0_131 = arith.constant 0 : index
    %289 = vector.load %arg16[%c1_129, %c0_130, %c0_131] : memref<8x1x64xf32, #tpu.memory_space<vmem>>, vector<1x1x64xf32>
    %290 = vector.shape_cast %289 : vector<1x1x64xf32> to vector<1x64xf32>
    %c1_132 = arith.constant 1 : index
    %c0_133 = arith.constant 0 : index
    %c0_134 = arith.constant 0 : index
    %291 = vector.load %arg17[%c1_132, %c0_133, %c0_134] : memref<8x1x64xf32, #tpu.memory_space<vmem>>, vector<1x1x64xf32>
    %292 = vector.shape_cast %291 : vector<1x1x64xf32> to vector<1x64xf32>
    %cst_135 = arith.constant dense<0.000000e+00> : vector<16xf32>
    %293 = vector.multi_reduction <add>, %288, %cst_135 [1] : vector<16x64xf32> to vector<16xf32>
    %294 = vector.shape_cast %293 : vector<16xf32> to vector<16x1xf32>
    %cst_136 = arith.constant 6.400000e+01 : f32
    %295 = vector.broadcast %cst_136 : f32 to vector<16x1xf32>
    %296 = arith.divf %294, %295 : vector<16x1xf32>
    %297 = vector.broadcast %296 : vector<16x1xf32> to vector<16x64xf32>
    %298 = arith.subf %288, %297 : vector<16x64xf32>
    %299 = arith.mulf %298, %298 : vector<16x64xf32>
    %cst_137 = arith.constant dense<0.000000e+00> : vector<16xf32>
    %300 = vector.multi_reduction <add>, %299, %cst_137 [1] : vector<16x64xf32> to vector<16xf32>
    %301 = vector.shape_cast %300 : vector<16xf32> to vector<16x1xf32>
    %cst_138 = arith.constant 6.400000e+01 : f32
    %302 = vector.broadcast %cst_138 : f32 to vector<16x1xf32>
    %303 = arith.divf %301, %302 : vector<16x1xf32>
    %304 = vector.broadcast %296 : vector<16x1xf32> to vector<16x64xf32>
    %305 = arith.subf %288, %304 : vector<16x64xf32>
    %cst_139 = arith.constant 9.99999996E-13 : f32
    %306 = vector.broadcast %cst_139 : f32 to vector<16x1xf32>
    %307 = arith.addf %303, %306 : vector<16x1xf32>
    %308 = math.rsqrt %307 : vector<16x1xf32>
    %309 = vector.broadcast %308 : vector<16x1xf32> to vector<16x64xf32>
    %310 = arith.mulf %305, %309 : vector<16x64xf32>
    %311 = vector.broadcast %290 : vector<1x64xf32> to vector<16x64xf32>
    %312 = arith.mulf %310, %311 : vector<16x64xf32>
    %313 = vector.broadcast %292 : vector<1x64xf32> to vector<16x64xf32>
    %314 = arith.addf %312, %313 : vector<16x64xf32>
    %315 = arith.truncf %314 : vector<16x64xf32> to vector<16x64xbf16>
    %c2 = arith.constant 2 : index
    %c0_140 = arith.constant 0 : index
    %c0_141 = arith.constant 0 : index
    %316 = vector.load %arg6[%c2, %c0_140, %c0_141] : memref<8x64x256xbf16, #tpu.memory_space<vmem>>, vector<1x64x256xbf16>
    %317 = vector.shape_cast %316 : vector<1x64x256xbf16> to vector<64x256xbf16>
    %cst_142 = arith.constant dense<0.000000e+00> : vector<16x256xf32>
    %318 = tpu.matmul %315, %317, %cst_142 {dimension_numbers = #tpu.dot_dimension_numbers<[1], [0], [0], [1], [0, 0, 1, 1], [], []>} : vector<16x64xbf16>, vector<64x256xbf16>, vector<16x256xf32> -> vector<16x256xf32>
    %c2_143 = arith.constant 2 : index
    %c0_144 = arith.constant 0 : index
    %c0_145 = arith.constant 0 : index
    %319 = vector.load %arg7[%c2_143, %c0_144, %c0_145] : memref<8x1x256xf32, #tpu.memory_space<vmem>>, vector<1x1x256xf32>
    %320 = vector.shape_cast %319 : vector<1x1x256xf32> to vector<1x256xf32>
    %321 = vector.broadcast %320 : vector<1x256xf32> to vector<16x256xf32>
    %322 = arith.addf %318, %321 : vector<16x256xf32>
    %323 = vector.extract_strided_slice %322 {offsets = [0, 0], sizes = [16, 32], strides = [1, 1]} : vector<16x256xf32> to vector<16x32xf32>
    %324 = arith.truncf %323 : vector<16x32xf32> to vector<16x32xbf16>
    %325 = vector.extract_strided_slice %322 {offsets = [0, 32], sizes = [16, 32], strides = [1, 1]} : vector<16x256xf32> to vector<16x32xf32>
    %326 = arith.truncf %325 : vector<16x32xf32> to vector<16x32xbf16>
    %327 = vector.extract_strided_slice %322 {offsets = [0, 64], sizes = [16, 32], strides = [1, 1]} : vector<16x256xf32> to vector<16x32xf32>
    %328 = arith.truncf %327 : vector<16x32xf32> to vector<16x32xbf16>
    "tpu.trace_start"() <{level = 10 : i32, message = "qd,kd->qk"}> : () -> ()
    %cst_146 = arith.constant dense<0.000000e+00> : vector<16x16xf32>
    %329 = tpu.matmul %324, %326, %cst_146 {dimension_numbers = #tpu.dot_dimension_numbers<[1], [1], [0], [0], [0, 0, 1, 0], [], []>} : vector<16x32xbf16>, vector<16x32xbf16>, vector<16x16xf32> -> vector<16x16xf32>
    "tpu.trace_stop"() : () -> ()
    %cst_147 = arith.constant 0.176776692 : f32
    %330 = vector.broadcast %cst_147 : f32 to vector<16x16xf32>
    %331 = arith.mulf %329, %330 : vector<16x16xf32>
    %332 = arith.addf %331, %0 : vector<16x16xf32>
    %cst_148 = arith.constant dense<0xFF800000> : vector<16xf32>
    %333 = vector.multi_reduction <maximumf>, %332, %cst_148 [1] : vector<16x16xf32> to vector<16xf32>
    %334 = vector.shape_cast %333 : vector<16xf32> to vector<16x1xf32>
    %335 = vector.broadcast %334 : vector<16x1xf32> to vector<16x16xf32>
    %336 = arith.subf %332, %335 : vector<16x16xf32>
    %337 = math.exp %336 : vector<16x16xf32>
    %cst_149 = arith.constant dense<0.000000e+00> : vector<16xf32>
    %338 = vector.multi_reduction <add>, %337, %cst_149 [1] : vector<16x16xf32> to vector<16xf32>
    %339 = vector.shape_cast %338 : vector<16xf32> to vector<16x1xf32>
    %340 = tpu.reciprocal %339 {approx = true} : vector<16x1xf32> -> vector<16x1xf32>
    %341 = vector.broadcast %340 : vector<16x1xf32> to vector<16x16xf32>
    %342 = arith.mulf %337, %341 : vector<16x16xf32>
    %343 = arith.truncf %342 : vector<16x16xf32> to vector<16x16xbf16>
    %cst_150 = arith.constant dense<0.000000e+00> : vector<16x32xf32>
    %344 = tpu.matmul %343, %328, %cst_150 {dimension_numbers = #tpu.dot_dimension_numbers<[1], [0], [0], [1], [0, 0, 1, 1], [], []>} : vector<16x16xbf16>, vector<16x32xbf16>, vector<16x32xf32> -> vector<16x32xf32>
    %345 = vector.extract_strided_slice %322 {offsets = [0, 128], sizes = [16, 32], strides = [1, 1]} : vector<16x256xf32> to vector<16x32xf32>
    %346 = arith.truncf %345 : vector<16x32xf32> to vector<16x32xbf16>
    %347 = vector.extract_strided_slice %322 {offsets = [0, 160], sizes = [16, 32], strides = [1, 1]} : vector<16x256xf32> to vector<16x32xf32>
    %348 = arith.truncf %347 : vector<16x32xf32> to vector<16x32xbf16>
    %349 = vector.extract_strided_slice %322 {offsets = [0, 192], sizes = [16, 32], strides = [1, 1]} : vector<16x256xf32> to vector<16x32xf32>
    %350 = arith.truncf %349 : vector<16x32xf32> to vector<16x32xbf16>
    "tpu.trace_start"() <{level = 10 : i32, message = "qd,kd->qk"}> : () -> ()
    %cst_151 = arith.constant dense<0.000000e+00> : vector<16x16xf32>
    %351 = tpu.matmul %346, %348, %cst_151 {dimension_numbers = #tpu.dot_dimension_numbers<[1], [1], [0], [0], [0, 0, 1, 0], [], []>} : vector<16x32xbf16>, vector<16x32xbf16>, vector<16x16xf32> -> vector<16x16xf32>
    "tpu.trace_stop"() : () -> ()
    %cst_152 = arith.constant 0.176776692 : f32
    %352 = vector.broadcast %cst_152 : f32 to vector<16x16xf32>
    %353 = arith.mulf %351, %352 : vector<16x16xf32>
    %354 = arith.addf %353, %0 : vector<16x16xf32>
    %cst_153 = arith.constant dense<0xFF800000> : vector<16xf32>
    %355 = vector.multi_reduction <maximumf>, %354, %cst_153 [1] : vector<16x16xf32> to vector<16xf32>
    %356 = vector.shape_cast %355 : vector<16xf32> to vector<16x1xf32>
    %357 = vector.broadcast %356 : vector<16x1xf32> to vector<16x16xf32>
    %358 = arith.subf %354, %357 : vector<16x16xf32>
    %359 = math.exp %358 : vector<16x16xf32>
    %cst_154 = arith.constant dense<0.000000e+00> : vector<16xf32>
    %360 = vector.multi_reduction <add>, %359, %cst_154 [1] : vector<16x16xf32> to vector<16xf32>
    %361 = vector.shape_cast %360 : vector<16xf32> to vector<16x1xf32>
    %362 = tpu.reciprocal %361 {approx = true} : vector<16x1xf32> -> vector<16x1xf32>
    %363 = vector.broadcast %362 : vector<16x1xf32> to vector<16x16xf32>
    %364 = arith.mulf %359, %363 : vector<16x16xf32>
    %365 = arith.truncf %364 : vector<16x16xf32> to vector<16x16xbf16>
    %cst_155 = arith.constant dense<0.000000e+00> : vector<16x32xf32>
    %366 = tpu.matmul %365, %350, %cst_155 {dimension_numbers = #tpu.dot_dimension_numbers<[1], [0], [0], [1], [0, 0, 1, 1], [], []>} : vector<16x16xbf16>, vector<16x32xbf16>, vector<16x32xf32> -> vector<16x32xf32>
    %367 = tpu.concatenate %344, %366 in 1 : vector<16x32xf32>, vector<16x32xf32> -> vector<16x64xf32>
    %368 = arith.truncf %367 : vector<16x64xf32> to vector<16x64xbf16>
    %c2_156 = arith.constant 2 : index
    %c0_157 = arith.constant 0 : index
    %c0_158 = arith.constant 0 : index
    %369 = vector.load %arg8[%c2_156, %c0_157, %c0_158] : memref<8x64x64xbf16, #tpu.memory_space<vmem>>, vector<1x64x64xbf16>
    %370 = vector.shape_cast %369 : vector<1x64x64xbf16> to vector<64x64xbf16>
    %cst_159 = arith.constant dense<0.000000e+00> : vector<16x64xf32>
    %371 = tpu.matmul %368, %370, %cst_159 {dimension_numbers = #tpu.dot_dimension_numbers<[1], [0], [0], [1], [0, 0, 1, 1], [], []>} : vector<16x64xbf16>, vector<64x64xbf16>, vector<16x64xf32> -> vector<16x64xf32>
    %c2_160 = arith.constant 2 : index
    %c0_161 = arith.constant 0 : index
    %c0_162 = arith.constant 0 : index
    %372 = vector.load %arg9[%c2_160, %c0_161, %c0_162] : memref<8x1x64xf32, #tpu.memory_space<vmem>>, vector<1x1x64xf32>
    %373 = vector.shape_cast %372 : vector<1x1x64xf32> to vector<1x64xf32>
    %374 = vector.broadcast %373 : vector<1x64xf32> to vector<16x64xf32>
    %375 = arith.addf %371, %374 : vector<16x64xf32>
    %376 = arith.addf %314, %375 : vector<16x64xf32>
    %c2_163 = arith.constant 2 : index
    %c0_164 = arith.constant 0 : index
    %c0_165 = arith.constant 0 : index
    %377 = vector.load %arg10[%c2_163, %c0_164, %c0_165] : memref<8x1x64xf32, #tpu.memory_space<vmem>>, vector<1x1x64xf32>
    %378 = vector.shape_cast %377 : vector<1x1x64xf32> to vector<1x64xf32>
    %c2_166 = arith.constant 2 : index
    %c0_167 = arith.constant 0 : index
    %c0_168 = arith.constant 0 : index
    %379 = vector.load %arg11[%c2_166, %c0_167, %c0_168] : memref<8x1x64xf32, #tpu.memory_space<vmem>>, vector<1x1x64xf32>
    %380 = vector.shape_cast %379 : vector<1x1x64xf32> to vector<1x64xf32>
    %cst_169 = arith.constant dense<0.000000e+00> : vector<16xf32>
    %381 = vector.multi_reduction <add>, %376, %cst_169 [1] : vector<16x64xf32> to vector<16xf32>
    %382 = vector.shape_cast %381 : vector<16xf32> to vector<16x1xf32>
    %cst_170 = arith.constant 6.400000e+01 : f32
    %383 = vector.broadcast %cst_170 : f32 to vector<16x1xf32>
    %384 = arith.divf %382, %383 : vector<16x1xf32>
    %385 = vector.broadcast %384 : vector<16x1xf32> to vector<16x64xf32>
    %386 = arith.subf %376, %385 : vector<16x64xf32>
    %387 = arith.mulf %386, %386 : vector<16x64xf32>
    %cst_171 = arith.constant dense<0.000000e+00> : vector<16xf32>
    %388 = vector.multi_reduction <add>, %387, %cst_171 [1] : vector<16x64xf32> to vector<16xf32>
    %389 = vector.shape_cast %388 : vector<16xf32> to vector<16x1xf32>
    %cst_172 = arith.constant 6.400000e+01 : f32
    %390 = vector.broadcast %cst_172 : f32 to vector<16x1xf32>
    %391 = arith.divf %389, %390 : vector<16x1xf32>
    %392 = vector.broadcast %384 : vector<16x1xf32> to vector<16x64xf32>
    %393 = arith.subf %376, %392 : vector<16x64xf32>
    %cst_173 = arith.constant 9.99999996E-13 : f32
    %394 = vector.broadcast %cst_173 : f32 to vector<16x1xf32>
    %395 = arith.addf %391, %394 : vector<16x1xf32>
    %396 = math.rsqrt %395 : vector<16x1xf32>
    %397 = vector.broadcast %396 : vector<16x1xf32> to vector<16x64xf32>
    %398 = arith.mulf %393, %397 : vector<16x64xf32>
    %399 = vector.broadcast %378 : vector<1x64xf32> to vector<16x64xf32>
    %400 = arith.mulf %398, %399 : vector<16x64xf32>
    %401 = vector.broadcast %380 : vector<1x64xf32> to vector<16x64xf32>
    %402 = arith.addf %400, %401 : vector<16x64xf32>
    %403 = arith.truncf %402 : vector<16x64xf32> to vector<16x64xbf16>
    %c2_174 = arith.constant 2 : index
    %c0_175 = arith.constant 0 : index
    %c0_176 = arith.constant 0 : index
    %404 = vector.load %arg12[%c2_174, %c0_175, %c0_176] : memref<8x64x128xbf16, #tpu.memory_space<vmem>>, vector<1x64x128xbf16>
    %405 = vector.shape_cast %404 : vector<1x64x128xbf16> to vector<64x128xbf16>
    %cst_177 = arith.constant dense<0.000000e+00> : vector<16x128xf32>
    %406 = tpu.matmul %403, %405, %cst_177 {dimension_numbers = #tpu.dot_dimension_numbers<[1], [0], [0], [1], [0, 0, 1, 1], [], []>} : vector<16x64xbf16>, vector<64x128xbf16>, vector<16x128xf32> -> vector<16x128xf32>
    %c2_178 = arith.constant 2 : index
    %c0_179 = arith.constant 0 : index
    %c0_180 = arith.constant 0 : index
    %407 = vector.load %arg13[%c2_178, %c0_179, %c0_180] : memref<8x1x128xf32, #tpu.memory_space<vmem>>, vector<1x1x128xf32>
    %408 = vector.shape_cast %407 : vector<1x1x128xf32> to vector<1x128xf32>
    %409 = vector.broadcast %408 : vector<1x128xf32> to vector<16x128xf32>
    %410 = arith.addf %406, %409 : vector<16x128xf32>
    %411 = arith.mulf %410, %410 : vector<16x128xf32>
    %412 = arith.mulf %410, %411 : vector<16x128xf32>
    %cst_181 = arith.constant 4.471500e-02 : f32
    %413 = vector.broadcast %cst_181 : f32 to vector<16x128xf32>
    %414 = arith.mulf %413, %412 : vector<16x128xf32>
    %415 = arith.addf %410, %414 : vector<16x128xf32>
    %cst_182 = arith.constant 0.797884583 : f32
    %416 = vector.broadcast %cst_182 : f32 to vector<16x128xf32>
    %417 = arith.mulf %416, %415 : vector<16x128xf32>
    %418 = math.tanh %417 : vector<16x128xf32>
    %cst_183 = arith.constant 1.000000e+00 : f32
    %419 = vector.broadcast %cst_183 : f32 to vector<16x128xf32>
    %420 = arith.addf %419, %418 : vector<16x128xf32>
    %cst_184 = arith.constant 5.000000e-01 : f32
    %421 = vector.broadcast %cst_184 : f32 to vector<16x128xf32>
    %422 = arith.mulf %421, %420 : vector<16x128xf32>
    %423 = arith.mulf %410, %422 : vector<16x128xf32>
    %424 = arith.truncf %423 : vector<16x128xf32> to vector<16x128xbf16>
    %c2_185 = arith.constant 2 : index
    %c0_186 = arith.constant 0 : index
    %c0_187 = arith.constant 0 : index
    %425 = vector.load %arg14[%c2_185, %c0_186, %c0_187] : memref<8x128x64xbf16, #tpu.memory_space<vmem>>, vector<1x128x64xbf16>
    %426 = vector.shape_cast %425 : vector<1x128x64xbf16> to vector<128x64xbf16>
    %cst_188 = arith.constant dense<0.000000e+00> : vector<16x64xf32>
    %427 = tpu.matmul %424, %426, %cst_188 {dimension_numbers = #tpu.dot_dimension_numbers<[1], [0], [0], [1], [0, 0, 1, 1], [], []>} : vector<16x128xbf16>, vector<128x64xbf16>, vector<16x64xf32> -> vector<16x64xf32>
    %c2_189 = arith.constant 2 : index
    %c0_190 = arith.constant 0 : index
    %c0_191 = arith.constant 0 : index
    %428 = vector.load %arg15[%c2_189, %c0_190, %c0_191] : memref<8x1x64xf32, #tpu.memory_space<vmem>>, vector<1x1x64xf32>
    %429 = vector.shape_cast %428 : vector<1x1x64xf32> to vector<1x64xf32>
    %430 = vector.broadcast %429 : vector<1x64xf32> to vector<16x64xf32>
    %431 = arith.addf %427, %430 : vector<16x64xf32>
    %432 = arith.addf %402, %431 : vector<16x64xf32>
    %c2_192 = arith.constant 2 : index
    %c0_193 = arith.constant 0 : index
    %c0_194 = arith.constant 0 : index
    %433 = vector.load %arg16[%c2_192, %c0_193, %c0_194] : memref<8x1x64xf32, #tpu.memory_space<vmem>>, vector<1x1x64xf32>
    %434 = vector.shape_cast %433 : vector<1x1x64xf32> to vector<1x64xf32>
    %c2_195 = arith.constant 2 : index
    %c0_196 = arith.constant 0 : index
    %c0_197 = arith.constant 0 : index
    %435 = vector.load %arg17[%c2_195, %c0_196, %c0_197] : memref<8x1x64xf32, #tpu.memory_space<vmem>>, vector<1x1x64xf32>
    %436 = vector.shape_cast %435 : vector<1x1x64xf32> to vector<1x64xf32>
    %cst_198 = arith.constant dense<0.000000e+00> : vector<16xf32>
    %437 = vector.multi_reduction <add>, %432, %cst_198 [1] : vector<16x64xf32> to vector<16xf32>
    %438 = vector.shape_cast %437 : vector<16xf32> to vector<16x1xf32>
    %cst_199 = arith.constant 6.400000e+01 : f32
    %439 = vector.broadcast %cst_199 : f32 to vector<16x1xf32>
    %440 = arith.divf %438, %439 : vector<16x1xf32>
    %441 = vector.broadcast %440 : vector<16x1xf32> to vector<16x64xf32>
    %442 = arith.subf %432, %441 : vector<16x64xf32>
    %443 = arith.mulf %442, %442 : vector<16x64xf32>
    %cst_200 = arith.constant dense<0.000000e+00> : vector<16xf32>
    %444 = vector.multi_reduction <add>, %443, %cst_200 [1] : vector<16x64xf32> to vector<16xf32>
    %445 = vector.shape_cast %444 : vector<16xf32> to vector<16x1xf32>
    %cst_201 = arith.constant 6.400000e+01 : f32
    %446 = vector.broadcast %cst_201 : f32 to vector<16x1xf32>
    %447 = arith.divf %445, %446 : vector<16x1xf32>
    %448 = vector.broadcast %440 : vector<16x1xf32> to vector<16x64xf32>
    %449 = arith.subf %432, %448 : vector<16x64xf32>
    %cst_202 = arith.constant 9.99999996E-13 : f32
    %450 = vector.broadcast %cst_202 : f32 to vector<16x1xf32>
    %451 = arith.addf %447, %450 : vector<16x1xf32>
    %452 = math.rsqrt %451 : vector<16x1xf32>
    %453 = vector.broadcast %452 : vector<16x1xf32> to vector<16x64xf32>
    %454 = arith.mulf %449, %453 : vector<16x64xf32>
    %455 = vector.broadcast %434 : vector<1x64xf32> to vector<16x64xf32>
    %456 = arith.mulf %454, %455 : vector<16x64xf32>
    %457 = vector.broadcast %436 : vector<1x64xf32> to vector<16x64xf32>
    %458 = arith.addf %456, %457 : vector<16x64xf32>
    %459 = arith.truncf %458 : vector<16x64xf32> to vector<16x64xbf16>
    %c3 = arith.constant 3 : index
    %c0_203 = arith.constant 0 : index
    %c0_204 = arith.constant 0 : index
    %460 = vector.load %arg6[%c3, %c0_203, %c0_204] : memref<8x64x256xbf16, #tpu.memory_space<vmem>>, vector<1x64x256xbf16>
    %461 = vector.shape_cast %460 : vector<1x64x256xbf16> to vector<64x256xbf16>
    %cst_205 = arith.constant dense<0.000000e+00> : vector<16x256xf32>
    %462 = tpu.matmul %459, %461, %cst_205 {dimension_numbers = #tpu.dot_dimension_numbers<[1], [0], [0], [1], [0, 0, 1, 1], [], []>} : vector<16x64xbf16>, vector<64x256xbf16>, vector<16x256xf32> -> vector<16x256xf32>
    %c3_206 = arith.constant 3 : index
    %c0_207 = arith.constant 0 : index
    %c0_208 = arith.constant 0 : index
    %463 = vector.load %arg7[%c3_206, %c0_207, %c0_208] : memref<8x1x256xf32, #tpu.memory_space<vmem>>, vector<1x1x256xf32>
    %464 = vector.shape_cast %463 : vector<1x1x256xf32> to vector<1x256xf32>
    %465 = vector.broadcast %464 : vector<1x256xf32> to vector<16x256xf32>
    %466 = arith.addf %462, %465 : vector<16x256xf32>
    %467 = vector.extract_strided_slice %466 {offsets = [0, 0], sizes = [16, 32], strides = [1, 1]} : vector<16x256xf32> to vector<16x32xf32>
    %468 = arith.truncf %467 : vector<16x32xf32> to vector<16x32xbf16>
    %469 = vector.extract_strided_slice %466 {offsets = [0, 32], sizes = [16, 32], strides = [1, 1]} : vector<16x256xf32> to vector<16x32xf32>
    %470 = arith.truncf %469 : vector<16x32xf32> to vector<16x32xbf16>
    %471 = vector.extract_strided_slice %466 {offsets = [0, 64], sizes = [16, 32], strides = [1, 1]} : vector<16x256xf32> to vector<16x32xf32>
    %472 = arith.truncf %471 : vector<16x32xf32> to vector<16x32xbf16>
    "tpu.trace_start"() <{level = 10 : i32, message = "qd,kd->qk"}> : () -> ()
    %cst_209 = arith.constant dense<0.000000e+00> : vector<16x16xf32>
    %473 = tpu.matmul %468, %470, %cst_209 {dimension_numbers = #tpu.dot_dimension_numbers<[1], [1], [0], [0], [0, 0, 1, 0], [], []>} : vector<16x32xbf16>, vector<16x32xbf16>, vector<16x16xf32> -> vector<16x16xf32>
    "tpu.trace_stop"() : () -> ()
    %cst_210 = arith.constant 0.176776692 : f32
    %474 = vector.broadcast %cst_210 : f32 to vector<16x16xf32>
    %475 = arith.mulf %473, %474 : vector<16x16xf32>
    %476 = arith.addf %475, %0 : vector<16x16xf32>
    %cst_211 = arith.constant dense<0xFF800000> : vector<16xf32>
    %477 = vector.multi_reduction <maximumf>, %476, %cst_211 [1] : vector<16x16xf32> to vector<16xf32>
    %478 = vector.shape_cast %477 : vector<16xf32> to vector<16x1xf32>
    %479 = vector.broadcast %478 : vector<16x1xf32> to vector<16x16xf32>
    %480 = arith.subf %476, %479 : vector<16x16xf32>
    %481 = math.exp %480 : vector<16x16xf32>
    %cst_212 = arith.constant dense<0.000000e+00> : vector<16xf32>
    %482 = vector.multi_reduction <add>, %481, %cst_212 [1] : vector<16x16xf32> to vector<16xf32>
    %483 = vector.shape_cast %482 : vector<16xf32> to vector<16x1xf32>
    %484 = tpu.reciprocal %483 {approx = true} : vector<16x1xf32> -> vector<16x1xf32>
    %485 = vector.broadcast %484 : vector<16x1xf32> to vector<16x16xf32>
    %486 = arith.mulf %481, %485 : vector<16x16xf32>
    %487 = arith.truncf %486 : vector<16x16xf32> to vector<16x16xbf16>
    %cst_213 = arith.constant dense<0.000000e+00> : vector<16x32xf32>
    %488 = tpu.matmul %487, %472, %cst_213 {dimension_numbers = #tpu.dot_dimension_numbers<[1], [0], [0], [1], [0, 0, 1, 1], [], []>} : vector<16x16xbf16>, vector<16x32xbf16>, vector<16x32xf32> -> vector<16x32xf32>
    %489 = vector.extract_strided_slice %466 {offsets = [0, 128], sizes = [16, 32], strides = [1, 1]} : vector<16x256xf32> to vector<16x32xf32>
    %490 = arith.truncf %489 : vector<16x32xf32> to vector<16x32xbf16>
    %491 = vector.extract_strided_slice %466 {offsets = [0, 160], sizes = [16, 32], strides = [1, 1]} : vector<16x256xf32> to vector<16x32xf32>
    %492 = arith.truncf %491 : vector<16x32xf32> to vector<16x32xbf16>
    %493 = vector.extract_strided_slice %466 {offsets = [0, 192], sizes = [16, 32], strides = [1, 1]} : vector<16x256xf32> to vector<16x32xf32>
    %494 = arith.truncf %493 : vector<16x32xf32> to vector<16x32xbf16>
    "tpu.trace_start"() <{level = 10 : i32, message = "qd,kd->qk"}> : () -> ()
    %cst_214 = arith.constant dense<0.000000e+00> : vector<16x16xf32>
    %495 = tpu.matmul %490, %492, %cst_214 {dimension_numbers = #tpu.dot_dimension_numbers<[1], [1], [0], [0], [0, 0, 1, 0], [], []>} : vector<16x32xbf16>, vector<16x32xbf16>, vector<16x16xf32> -> vector<16x16xf32>
    "tpu.trace_stop"() : () -> ()
    %cst_215 = arith.constant 0.176776692 : f32
    %496 = vector.broadcast %cst_215 : f32 to vector<16x16xf32>
    %497 = arith.mulf %495, %496 : vector<16x16xf32>
    %498 = arith.addf %497, %0 : vector<16x16xf32>
    %cst_216 = arith.constant dense<0xFF800000> : vector<16xf32>
    %499 = vector.multi_reduction <maximumf>, %498, %cst_216 [1] : vector<16x16xf32> to vector<16xf32>
    %500 = vector.shape_cast %499 : vector<16xf32> to vector<16x1xf32>
    %501 = vector.broadcast %500 : vector<16x1xf32> to vector<16x16xf32>
    %502 = arith.subf %498, %501 : vector<16x16xf32>
    %503 = math.exp %502 : vector<16x16xf32>
    %cst_217 = arith.constant dense<0.000000e+00> : vector<16xf32>
    %504 = vector.multi_reduction <add>, %503, %cst_217 [1] : vector<16x16xf32> to vector<16xf32>
    %505 = vector.shape_cast %504 : vector<16xf32> to vector<16x1xf32>
    %506 = tpu.reciprocal %505 {approx = true} : vector<16x1xf32> -> vector<16x1xf32>
    %507 = vector.broadcast %506 : vector<16x1xf32> to vector<16x16xf32>
    %508 = arith.mulf %503, %507 : vector<16x16xf32>
    %509 = arith.truncf %508 : vector<16x16xf32> to vector<16x16xbf16>
    %cst_218 = arith.constant dense<0.000000e+00> : vector<16x32xf32>
    %510 = tpu.matmul %509, %494, %cst_218 {dimension_numbers = #tpu.dot_dimension_numbers<[1], [0], [0], [1], [0, 0, 1, 1], [], []>} : vector<16x16xbf16>, vector<16x32xbf16>, vector<16x32xf32> -> vector<16x32xf32>
    %511 = tpu.concatenate %488, %510 in 1 : vector<16x32xf32>, vector<16x32xf32> -> vector<16x64xf32>
    %512 = arith.truncf %511 : vector<16x64xf32> to vector<16x64xbf16>
    %c3_219 = arith.constant 3 : index
    %c0_220 = arith.constant 0 : index
    %c0_221 = arith.constant 0 : index
    %513 = vector.load %arg8[%c3_219, %c0_220, %c0_221] : memref<8x64x64xbf16, #tpu.memory_space<vmem>>, vector<1x64x64xbf16>
    %514 = vector.shape_cast %513 : vector<1x64x64xbf16> to vector<64x64xbf16>
    %cst_222 = arith.constant dense<0.000000e+00> : vector<16x64xf32>
    %515 = tpu.matmul %512, %514, %cst_222 {dimension_numbers = #tpu.dot_dimension_numbers<[1], [0], [0], [1], [0, 0, 1, 1], [], []>} : vector<16x64xbf16>, vector<64x64xbf16>, vector<16x64xf32> -> vector<16x64xf32>
    %c3_223 = arith.constant 3 : index
    %c0_224 = arith.constant 0 : index
    %c0_225 = arith.constant 0 : index
    %516 = vector.load %arg9[%c3_223, %c0_224, %c0_225] : memref<8x1x64xf32, #tpu.memory_space<vmem>>, vector<1x1x64xf32>
    %517 = vector.shape_cast %516 : vector<1x1x64xf32> to vector<1x64xf32>
    %518 = vector.broadcast %517 : vector<1x64xf32> to vector<16x64xf32>
    %519 = arith.addf %515, %518 : vector<16x64xf32>
    %520 = arith.addf %458, %519 : vector<16x64xf32>
    %c3_226 = arith.constant 3 : index
    %c0_227 = arith.constant 0 : index
    %c0_228 = arith.constant 0 : index
    %521 = vector.load %arg10[%c3_226, %c0_227, %c0_228] : memref<8x1x64xf32, #tpu.memory_space<vmem>>, vector<1x1x64xf32>
    %522 = vector.shape_cast %521 : vector<1x1x64xf32> to vector<1x64xf32>
    %c3_229 = arith.constant 3 : index
    %c0_230 = arith.constant 0 : index
    %c0_231 = arith.constant 0 : index
    %523 = vector.load %arg11[%c3_229, %c0_230, %c0_231] : memref<8x1x64xf32, #tpu.memory_space<vmem>>, vector<1x1x64xf32>
    %524 = vector.shape_cast %523 : vector<1x1x64xf32> to vector<1x64xf32>
    %cst_232 = arith.constant dense<0.000000e+00> : vector<16xf32>
    %525 = vector.multi_reduction <add>, %520, %cst_232 [1] : vector<16x64xf32> to vector<16xf32>
    %526 = vector.shape_cast %525 : vector<16xf32> to vector<16x1xf32>
    %cst_233 = arith.constant 6.400000e+01 : f32
    %527 = vector.broadcast %cst_233 : f32 to vector<16x1xf32>
    %528 = arith.divf %526, %527 : vector<16x1xf32>
    %529 = vector.broadcast %528 : vector<16x1xf32> to vector<16x64xf32>
    %530 = arith.subf %520, %529 : vector<16x64xf32>
    %531 = arith.mulf %530, %530 : vector<16x64xf32>
    %cst_234 = arith.constant dense<0.000000e+00> : vector<16xf32>
    %532 = vector.multi_reduction <add>, %531, %cst_234 [1] : vector<16x64xf32> to vector<16xf32>
    %533 = vector.shape_cast %532 : vector<16xf32> to vector<16x1xf32>
    %cst_235 = arith.constant 6.400000e+01 : f32
    %534 = vector.broadcast %cst_235 : f32 to vector<16x1xf32>
    %535 = arith.divf %533, %534 : vector<16x1xf32>
    %536 = vector.broadcast %528 : vector<16x1xf32> to vector<16x64xf32>
    %537 = arith.subf %520, %536 : vector<16x64xf32>
    %cst_236 = arith.constant 9.99999996E-13 : f32
    %538 = vector.broadcast %cst_236 : f32 to vector<16x1xf32>
    %539 = arith.addf %535, %538 : vector<16x1xf32>
    %540 = math.rsqrt %539 : vector<16x1xf32>
    %541 = vector.broadcast %540 : vector<16x1xf32> to vector<16x64xf32>
    %542 = arith.mulf %537, %541 : vector<16x64xf32>
    %543 = vector.broadcast %522 : vector<1x64xf32> to vector<16x64xf32>
    %544 = arith.mulf %542, %543 : vector<16x64xf32>
    %545 = vector.broadcast %524 : vector<1x64xf32> to vector<16x64xf32>
    %546 = arith.addf %544, %545 : vector<16x64xf32>
    %547 = arith.truncf %546 : vector<16x64xf32> to vector<16x64xbf16>
    %c3_237 = arith.constant 3 : index
    %c0_238 = arith.constant 0 : index
    %c0_239 = arith.constant 0 : index
    %548 = vector.load %arg12[%c3_237, %c0_238, %c0_239] : memref<8x64x128xbf16, #tpu.memory_space<vmem>>, vector<1x64x128xbf16>
    %549 = vector.shape_cast %548 : vector<1x64x128xbf16> to vector<64x128xbf16>
    %cst_240 = arith.constant dense<0.000000e+00> : vector<16x128xf32>
    %550 = tpu.matmul %547, %549, %cst_240 {dimension_numbers = #tpu.dot_dimension_numbers<[1], [0], [0], [1], [0, 0, 1, 1], [], []>} : vector<16x64xbf16>, vector<64x128xbf16>, vector<16x128xf32> -> vector<16x128xf32>
    %c3_241 = arith.constant 3 : index
    %c0_242 = arith.constant 0 : index
    %c0_243 = arith.constant 0 : index
    %551 = vector.load %arg13[%c3_241, %c0_242, %c0_243] : memref<8x1x128xf32, #tpu.memory_space<vmem>>, vector<1x1x128xf32>
    %552 = vector.shape_cast %551 : vector<1x1x128xf32> to vector<1x128xf32>
    %553 = vector.broadcast %552 : vector<1x128xf32> to vector<16x128xf32>
    %554 = arith.addf %550, %553 : vector<16x128xf32>
    %555 = arith.mulf %554, %554 : vector<16x128xf32>
    %556 = arith.mulf %554, %555 : vector<16x128xf32>
    %cst_244 = arith.constant 4.471500e-02 : f32
    %557 = vector.broadcast %cst_244 : f32 to vector<16x128xf32>
    %558 = arith.mulf %557, %556 : vector<16x128xf32>
    %559 = arith.addf %554, %558 : vector<16x128xf32>
    %cst_245 = arith.constant 0.797884583 : f32
    %560 = vector.broadcast %cst_245 : f32 to vector<16x128xf32>
    %561 = arith.mulf %560, %559 : vector<16x128xf32>
    %562 = math.tanh %561 : vector<16x128xf32>
    %cst_246 = arith.constant 1.000000e+00 : f32
    %563 = vector.broadcast %cst_246 : f32 to vector<16x128xf32>
    %564 = arith.addf %563, %562 : vector<16x128xf32>
    %cst_247 = arith.constant 5.000000e-01 : f32
    %565 = vector.broadcast %cst_247 : f32 to vector<16x128xf32>
    %566 = arith.mulf %565, %564 : vector<16x128xf32>
    %567 = arith.mulf %554, %566 : vector<16x128xf32>
    %568 = arith.truncf %567 : vector<16x128xf32> to vector<16x128xbf16>
    %c3_248 = arith.constant 3 : index
    %c0_249 = arith.constant 0 : index
    %c0_250 = arith.constant 0 : index
    %569 = vector.load %arg14[%c3_248, %c0_249, %c0_250] : memref<8x128x64xbf16, #tpu.memory_space<vmem>>, vector<1x128x64xbf16>
    %570 = vector.shape_cast %569 : vector<1x128x64xbf16> to vector<128x64xbf16>
    %cst_251 = arith.constant dense<0.000000e+00> : vector<16x64xf32>
    %571 = tpu.matmul %568, %570, %cst_251 {dimension_numbers = #tpu.dot_dimension_numbers<[1], [0], [0], [1], [0, 0, 1, 1], [], []>} : vector<16x128xbf16>, vector<128x64xbf16>, vector<16x64xf32> -> vector<16x64xf32>
    %c3_252 = arith.constant 3 : index
    %c0_253 = arith.constant 0 : index
    %c0_254 = arith.constant 0 : index
    %572 = vector.load %arg15[%c3_252, %c0_253, %c0_254] : memref<8x1x64xf32, #tpu.memory_space<vmem>>, vector<1x1x64xf32>
    %573 = vector.shape_cast %572 : vector<1x1x64xf32> to vector<1x64xf32>
    %574 = vector.broadcast %573 : vector<1x64xf32> to vector<16x64xf32>
    %575 = arith.addf %571, %574 : vector<16x64xf32>
    %576 = arith.addf %546, %575 : vector<16x64xf32>
    %c3_255 = arith.constant 3 : index
    %c0_256 = arith.constant 0 : index
    %c0_257 = arith.constant 0 : index
    %577 = vector.load %arg16[%c3_255, %c0_256, %c0_257] : memref<8x1x64xf32, #tpu.memory_space<vmem>>, vector<1x1x64xf32>
    %578 = vector.shape_cast %577 : vector<1x1x64xf32> to vector<1x64xf32>
    %c3_258 = arith.constant 3 : index
    %c0_259 = arith.constant 0 : index
    %c0_260 = arith.constant 0 : index
    %579 = vector.load %arg17[%c3_258, %c0_259, %c0_260] : memref<8x1x64xf32, #tpu.memory_space<vmem>>, vector<1x1x64xf32>
    %580 = vector.shape_cast %579 : vector<1x1x64xf32> to vector<1x64xf32>
    %cst_261 = arith.constant dense<0.000000e+00> : vector<16xf32>
    %581 = vector.multi_reduction <add>, %576, %cst_261 [1] : vector<16x64xf32> to vector<16xf32>
    %582 = vector.shape_cast %581 : vector<16xf32> to vector<16x1xf32>
    %cst_262 = arith.constant 6.400000e+01 : f32
    %583 = vector.broadcast %cst_262 : f32 to vector<16x1xf32>
    %584 = arith.divf %582, %583 : vector<16x1xf32>
    %585 = vector.broadcast %584 : vector<16x1xf32> to vector<16x64xf32>
    %586 = arith.subf %576, %585 : vector<16x64xf32>
    %587 = arith.mulf %586, %586 : vector<16x64xf32>
    %cst_263 = arith.constant dense<0.000000e+00> : vector<16xf32>
    %588 = vector.multi_reduction <add>, %587, %cst_263 [1] : vector<16x64xf32> to vector<16xf32>
    %589 = vector.shape_cast %588 : vector<16xf32> to vector<16x1xf32>
    %cst_264 = arith.constant 6.400000e+01 : f32
    %590 = vector.broadcast %cst_264 : f32 to vector<16x1xf32>
    %591 = arith.divf %589, %590 : vector<16x1xf32>
    %592 = vector.broadcast %584 : vector<16x1xf32> to vector<16x64xf32>
    %593 = arith.subf %576, %592 : vector<16x64xf32>
    %cst_265 = arith.constant 9.99999996E-13 : f32
    %594 = vector.broadcast %cst_265 : f32 to vector<16x1xf32>
    %595 = arith.addf %591, %594 : vector<16x1xf32>
    %596 = math.rsqrt %595 : vector<16x1xf32>
    %597 = vector.broadcast %596 : vector<16x1xf32> to vector<16x64xf32>
    %598 = arith.mulf %593, %597 : vector<16x64xf32>
    %599 = vector.broadcast %578 : vector<1x64xf32> to vector<16x64xf32>
    %600 = arith.mulf %598, %599 : vector<16x64xf32>
    %601 = vector.broadcast %580 : vector<1x64xf32> to vector<16x64xf32>
    %602 = arith.addf %600, %601 : vector<16x64xf32>
    %603 = arith.addf %26, %602 : vector<16x64xf32>
    %604 = arith.truncf %602 : vector<16x64xf32> to vector<16x64xbf16>
    %c4 = arith.constant 4 : index
    %c0_266 = arith.constant 0 : index
    %c0_267 = arith.constant 0 : index
    %605 = vector.load %arg6[%c4, %c0_266, %c0_267] : memref<8x64x256xbf16, #tpu.memory_space<vmem>>, vector<1x64x256xbf16>
    %606 = vector.shape_cast %605 : vector<1x64x256xbf16> to vector<64x256xbf16>
    %cst_268 = arith.constant dense<0.000000e+00> : vector<16x256xf32>
    %607 = tpu.matmul %604, %606, %cst_268 {dimension_numbers = #tpu.dot_dimension_numbers<[1], [0], [0], [1], [0, 0, 1, 1], [], []>} : vector<16x64xbf16>, vector<64x256xbf16>, vector<16x256xf32> -> vector<16x256xf32>
    %c4_269 = arith.constant 4 : index
    %c0_270 = arith.constant 0 : index
    %c0_271 = arith.constant 0 : index
    %608 = vector.load %arg7[%c4_269, %c0_270, %c0_271] : memref<8x1x256xf32, #tpu.memory_space<vmem>>, vector<1x1x256xf32>
    %609 = vector.shape_cast %608 : vector<1x1x256xf32> to vector<1x256xf32>
    %610 = vector.broadcast %609 : vector<1x256xf32> to vector<16x256xf32>
    %611 = arith.addf %607, %610 : vector<16x256xf32>
    %612 = vector.extract_strided_slice %611 {offsets = [0, 0], sizes = [16, 32], strides = [1, 1]} : vector<16x256xf32> to vector<16x32xf32>
    %613 = arith.truncf %612 : vector<16x32xf32> to vector<16x32xbf16>
    %614 = vector.extract_strided_slice %611 {offsets = [0, 32], sizes = [16, 32], strides = [1, 1]} : vector<16x256xf32> to vector<16x32xf32>
    %615 = arith.truncf %614 : vector<16x32xf32> to vector<16x32xbf16>
    %616 = vector.extract_strided_slice %611 {offsets = [0, 64], sizes = [16, 32], strides = [1, 1]} : vector<16x256xf32> to vector<16x32xf32>
    %617 = arith.truncf %616 : vector<16x32xf32> to vector<16x32xbf16>
    "tpu.trace_start"() <{level = 10 : i32, message = "qd,kd->qk"}> : () -> ()
    %cst_272 = arith.constant dense<0.000000e+00> : vector<16x16xf32>
    %618 = tpu.matmul %613, %615, %cst_272 {dimension_numbers = #tpu.dot_dimension_numbers<[1], [1], [0], [0], [0, 0, 1, 0], [], []>} : vector<16x32xbf16>, vector<16x32xbf16>, vector<16x16xf32> -> vector<16x16xf32>
    "tpu.trace_stop"() : () -> ()
    %cst_273 = arith.constant 0.176776692 : f32
    %619 = vector.broadcast %cst_273 : f32 to vector<16x16xf32>
    %620 = arith.mulf %618, %619 : vector<16x16xf32>
    %621 = arith.addf %620, %0 : vector<16x16xf32>
    %cst_274 = arith.constant dense<0xFF800000> : vector<16xf32>
    %622 = vector.multi_reduction <maximumf>, %621, %cst_274 [1] : vector<16x16xf32> to vector<16xf32>
    %623 = vector.shape_cast %622 : vector<16xf32> to vector<16x1xf32>
    %624 = vector.broadcast %623 : vector<16x1xf32> to vector<16x16xf32>
    %625 = arith.subf %621, %624 : vector<16x16xf32>
    %626 = math.exp %625 : vector<16x16xf32>
    %cst_275 = arith.constant dense<0.000000e+00> : vector<16xf32>
    %627 = vector.multi_reduction <add>, %626, %cst_275 [1] : vector<16x16xf32> to vector<16xf32>
    %628 = vector.shape_cast %627 : vector<16xf32> to vector<16x1xf32>
    %629 = tpu.reciprocal %628 {approx = true} : vector<16x1xf32> -> vector<16x1xf32>
    %630 = vector.broadcast %629 : vector<16x1xf32> to vector<16x16xf32>
    %631 = arith.mulf %626, %630 : vector<16x16xf32>
    %632 = arith.truncf %631 : vector<16x16xf32> to vector<16x16xbf16>
    %cst_276 = arith.constant dense<0.000000e+00> : vector<16x32xf32>
    %633 = tpu.matmul %632, %617, %cst_276 {dimension_numbers = #tpu.dot_dimension_numbers<[1], [0], [0], [1], [0, 0, 1, 1], [], []>} : vector<16x16xbf16>, vector<16x32xbf16>, vector<16x32xf32> -> vector<16x32xf32>
    %634 = vector.extract_strided_slice %611 {offsets = [0, 128], sizes = [16, 32], strides = [1, 1]} : vector<16x256xf32> to vector<16x32xf32>
    %635 = arith.truncf %634 : vector<16x32xf32> to vector<16x32xbf16>
    %636 = vector.extract_strided_slice %611 {offsets = [0, 160], sizes = [16, 32], strides = [1, 1]} : vector<16x256xf32> to vector<16x32xf32>
    %637 = arith.truncf %636 : vector<16x32xf32> to vector<16x32xbf16>
    %638 = vector.extract_strided_slice %611 {offsets = [0, 192], sizes = [16, 32], strides = [1, 1]} : vector<16x256xf32> to vector<16x32xf32>
    %639 = arith.truncf %638 : vector<16x32xf32> to vector<16x32xbf16>
    "tpu.trace_start"() <{level = 10 : i32, message = "qd,kd->qk"}> : () -> ()
    %cst_277 = arith.constant dense<0.000000e+00> : vector<16x16xf32>
    %640 = tpu.matmul %635, %637, %cst_277 {dimension_numbers = #tpu.dot_dimension_numbers<[1], [1], [0], [0], [0, 0, 1, 0], [], []>} : vector<16x32xbf16>, vector<16x32xbf16>, vector<16x16xf32> -> vector<16x16xf32>
    "tpu.trace_stop"() : () -> ()
    %cst_278 = arith.constant 0.176776692 : f32
    %641 = vector.broadcast %cst_278 : f32 to vector<16x16xf32>
    %642 = arith.mulf %640, %641 : vector<16x16xf32>
    %643 = arith.addf %642, %0 : vector<16x16xf32>
    %cst_279 = arith.constant dense<0xFF800000> : vector<16xf32>
    %644 = vector.multi_reduction <maximumf>, %643, %cst_279 [1] : vector<16x16xf32> to vector<16xf32>
    %645 = vector.shape_cast %644 : vector<16xf32> to vector<16x1xf32>
    %646 = vector.broadcast %645 : vector<16x1xf32> to vector<16x16xf32>
    %647 = arith.subf %643, %646 : vector<16x16xf32>
    %648 = math.exp %647 : vector<16x16xf32>
    %cst_280 = arith.constant dense<0.000000e+00> : vector<16xf32>
    %649 = vector.multi_reduction <add>, %648, %cst_280 [1] : vector<16x16xf32> to vector<16xf32>
    %650 = vector.shape_cast %649 : vector<16xf32> to vector<16x1xf32>
    %651 = tpu.reciprocal %650 {approx = true} : vector<16x1xf32> -> vector<16x1xf32>
    %652 = vector.broadcast %651 : vector<16x1xf32> to vector<16x16xf32>
    %653 = arith.mulf %648, %652 : vector<16x16xf32>
    %654 = arith.truncf %653 : vector<16x16xf32> to vector<16x16xbf16>
    %cst_281 = arith.constant dense<0.000000e+00> : vector<16x32xf32>
    %655 = tpu.matmul %654, %639, %cst_281 {dimension_numbers = #tpu.dot_dimension_numbers<[1], [0], [0], [1], [0, 0, 1, 1], [], []>} : vector<16x16xbf16>, vector<16x32xbf16>, vector<16x32xf32> -> vector<16x32xf32>
    %656 = tpu.concatenate %633, %655 in 1 : vector<16x32xf32>, vector<16x32xf32> -> vector<16x64xf32>
    %657 = arith.truncf %656 : vector<16x64xf32> to vector<16x64xbf16>
    %c4_282 = arith.constant 4 : index
    %c0_283 = arith.constant 0 : index
    %c0_284 = arith.constant 0 : index
    %658 = vector.load %arg8[%c4_282, %c0_283, %c0_284] : memref<8x64x64xbf16, #tpu.memory_space<vmem>>, vector<1x64x64xbf16>
    %659 = vector.shape_cast %658 : vector<1x64x64xbf16> to vector<64x64xbf16>
    %cst_285 = arith.constant dense<0.000000e+00> : vector<16x64xf32>
    %660 = tpu.matmul %657, %659, %cst_285 {dimension_numbers = #tpu.dot_dimension_numbers<[1], [0], [0], [1], [0, 0, 1, 1], [], []>} : vector<16x64xbf16>, vector<64x64xbf16>, vector<16x64xf32> -> vector<16x64xf32>
    %c4_286 = arith.constant 4 : index
    %c0_287 = arith.constant 0 : index
    %c0_288 = arith.constant 0 : index
    %661 = vector.load %arg9[%c4_286, %c0_287, %c0_288] : memref<8x1x64xf32, #tpu.memory_space<vmem>>, vector<1x1x64xf32>
    %662 = vector.shape_cast %661 : vector<1x1x64xf32> to vector<1x64xf32>
    %663 = vector.broadcast %662 : vector<1x64xf32> to vector<16x64xf32>
    %664 = arith.addf %660, %663 : vector<16x64xf32>
    %665 = arith.addf %602, %664 : vector<16x64xf32>
    %c4_289 = arith.constant 4 : index
    %c0_290 = arith.constant 0 : index
    %c0_291 = arith.constant 0 : index
    %666 = vector.load %arg10[%c4_289, %c0_290, %c0_291] : memref<8x1x64xf32, #tpu.memory_space<vmem>>, vector<1x1x64xf32>
    %667 = vector.shape_cast %666 : vector<1x1x64xf32> to vector<1x64xf32>
    %c4_292 = arith.constant 4 : index
    %c0_293 = arith.constant 0 : index
    %c0_294 = arith.constant 0 : index
    %668 = vector.load %arg11[%c4_292, %c0_293, %c0_294] : memref<8x1x64xf32, #tpu.memory_space<vmem>>, vector<1x1x64xf32>
    %669 = vector.shape_cast %668 : vector<1x1x64xf32> to vector<1x64xf32>
    %cst_295 = arith.constant dense<0.000000e+00> : vector<16xf32>
    %670 = vector.multi_reduction <add>, %665, %cst_295 [1] : vector<16x64xf32> to vector<16xf32>
    %671 = vector.shape_cast %670 : vector<16xf32> to vector<16x1xf32>
    %cst_296 = arith.constant 6.400000e+01 : f32
    %672 = vector.broadcast %cst_296 : f32 to vector<16x1xf32>
    %673 = arith.divf %671, %672 : vector<16x1xf32>
    %674 = vector.broadcast %673 : vector<16x1xf32> to vector<16x64xf32>
    %675 = arith.subf %665, %674 : vector<16x64xf32>
    %676 = arith.mulf %675, %675 : vector<16x64xf32>
    %cst_297 = arith.constant dense<0.000000e+00> : vector<16xf32>
    %677 = vector.multi_reduction <add>, %676, %cst_297 [1] : vector<16x64xf32> to vector<16xf32>
    %678 = vector.shape_cast %677 : vector<16xf32> to vector<16x1xf32>
    %cst_298 = arith.constant 6.400000e+01 : f32
    %679 = vector.broadcast %cst_298 : f32 to vector<16x1xf32>
    %680 = arith.divf %678, %679 : vector<16x1xf32>
    %681 = vector.broadcast %673 : vector<16x1xf32> to vector<16x64xf32>
    %682 = arith.subf %665, %681 : vector<16x64xf32>
    %cst_299 = arith.constant 9.99999996E-13 : f32
    %683 = vector.broadcast %cst_299 : f32 to vector<16x1xf32>
    %684 = arith.addf %680, %683 : vector<16x1xf32>
    %685 = math.rsqrt %684 : vector<16x1xf32>
    %686 = vector.broadcast %685 : vector<16x1xf32> to vector<16x64xf32>
    %687 = arith.mulf %682, %686 : vector<16x64xf32>
    %688 = vector.broadcast %667 : vector<1x64xf32> to vector<16x64xf32>
    %689 = arith.mulf %687, %688 : vector<16x64xf32>
    %690 = vector.broadcast %669 : vector<1x64xf32> to vector<16x64xf32>
    %691 = arith.addf %689, %690 : vector<16x64xf32>
    %692 = arith.truncf %691 : vector<16x64xf32> to vector<16x64xbf16>
    %c4_300 = arith.constant 4 : index
    %c0_301 = arith.constant 0 : index
    %c0_302 = arith.constant 0 : index
    %693 = vector.load %arg12[%c4_300, %c0_301, %c0_302] : memref<8x64x128xbf16, #tpu.memory_space<vmem>>, vector<1x64x128xbf16>
    %694 = vector.shape_cast %693 : vector<1x64x128xbf16> to vector<64x128xbf16>
    %cst_303 = arith.constant dense<0.000000e+00> : vector<16x128xf32>
    %695 = tpu.matmul %692, %694, %cst_303 {dimension_numbers = #tpu.dot_dimension_numbers<[1], [0], [0], [1], [0, 0, 1, 1], [], []>} : vector<16x64xbf16>, vector<64x128xbf16>, vector<16x128xf32> -> vector<16x128xf32>
    %c4_304 = arith.constant 4 : index
    %c0_305 = arith.constant 0 : index
    %c0_306 = arith.constant 0 : index
    %696 = vector.load %arg13[%c4_304, %c0_305, %c0_306] : memref<8x1x128xf32, #tpu.memory_space<vmem>>, vector<1x1x128xf32>
    %697 = vector.shape_cast %696 : vector<1x1x128xf32> to vector<1x128xf32>
    %698 = vector.broadcast %697 : vector<1x128xf32> to vector<16x128xf32>
    %699 = arith.addf %695, %698 : vector<16x128xf32>
    %700 = arith.mulf %699, %699 : vector<16x128xf32>
    %701 = arith.mulf %699, %700 : vector<16x128xf32>
    %cst_307 = arith.constant 4.471500e-02 : f32
    %702 = vector.broadcast %cst_307 : f32 to vector<16x128xf32>
    %703 = arith.mulf %702, %701 : vector<16x128xf32>
    %704 = arith.addf %699, %703 : vector<16x128xf32>
    %cst_308 = arith.constant 0.797884583 : f32
    %705 = vector.broadcast %cst_308 : f32 to vector<16x128xf32>
    %706 = arith.mulf %705, %704 : vector<16x128xf32>
    %707 = math.tanh %706 : vector<16x128xf32>
    %cst_309 = arith.constant 1.000000e+00 : f32
    %708 = vector.broadcast %cst_309 : f32 to vector<16x128xf32>
    %709 = arith.addf %708, %707 : vector<16x128xf32>
    %cst_310 = arith.constant 5.000000e-01 : f32
    %710 = vector.broadcast %cst_310 : f32 to vector<16x128xf32>
    %711 = arith.mulf %710, %709 : vector<16x128xf32>
    %712 = arith.mulf %699, %711 : vector<16x128xf32>
    %713 = arith.truncf %712 : vector<16x128xf32> to vector<16x128xbf16>
    %c4_311 = arith.constant 4 : index
    %c0_312 = arith.constant 0 : index
    %c0_313 = arith.constant 0 : index
    %714 = vector.load %arg14[%c4_311, %c0_312, %c0_313] : memref<8x128x64xbf16, #tpu.memory_space<vmem>>, vector<1x128x64xbf16>
    %715 = vector.shape_cast %714 : vector<1x128x64xbf16> to vector<128x64xbf16>
    %cst_314 = arith.constant dense<0.000000e+00> : vector<16x64xf32>
    %716 = tpu.matmul %713, %715, %cst_314 {dimension_numbers = #tpu.dot_dimension_numbers<[1], [0], [0], [1], [0, 0, 1, 1], [], []>} : vector<16x128xbf16>, vector<128x64xbf16>, vector<16x64xf32> -> vector<16x64xf32>
    %c4_315 = arith.constant 4 : index
    %c0_316 = arith.constant 0 : index
    %c0_317 = arith.constant 0 : index
    %717 = vector.load %arg15[%c4_315, %c0_316, %c0_317] : memref<8x1x64xf32, #tpu.memory_space<vmem>>, vector<1x1x64xf32>
    %718 = vector.shape_cast %717 : vector<1x1x64xf32> to vector<1x64xf32>
    %719 = vector.broadcast %718 : vector<1x64xf32> to vector<16x64xf32>
    %720 = arith.addf %716, %719 : vector<16x64xf32>
    %721 = arith.addf %691, %720 : vector<16x64xf32>
    %c4_318 = arith.constant 4 : index
    %c0_319 = arith.constant 0 : index
    %c0_320 = arith.constant 0 : index
    %722 = vector.load %arg16[%c4_318, %c0_319, %c0_320] : memref<8x1x64xf32, #tpu.memory_space<vmem>>, vector<1x1x64xf32>
    %723 = vector.shape_cast %722 : vector<1x1x64xf32> to vector<1x64xf32>
    %c4_321 = arith.constant 4 : index
    %c0_322 = arith.constant 0 : index
    %c0_323 = arith.constant 0 : index
    %724 = vector.load %arg17[%c4_321, %c0_322, %c0_323] : memref<8x1x64xf32, #tpu.memory_space<vmem>>, vector<1x1x64xf32>
    %725 = vector.shape_cast %724 : vector<1x1x64xf32> to vector<1x64xf32>
    %cst_324 = arith.constant dense<0.000000e+00> : vector<16xf32>
    %726 = vector.multi_reduction <add>, %721, %cst_324 [1] : vector<16x64xf32> to vector<16xf32>
    %727 = vector.shape_cast %726 : vector<16xf32> to vector<16x1xf32>
    %cst_325 = arith.constant 6.400000e+01 : f32
    %728 = vector.broadcast %cst_325 : f32 to vector<16x1xf32>
    %729 = arith.divf %727, %728 : vector<16x1xf32>
    %730 = vector.broadcast %729 : vector<16x1xf32> to vector<16x64xf32>
    %731 = arith.subf %721, %730 : vector<16x64xf32>
    %732 = arith.mulf %731, %731 : vector<16x64xf32>
    %cst_326 = arith.constant dense<0.000000e+00> : vector<16xf32>
    %733 = vector.multi_reduction <add>, %732, %cst_326 [1] : vector<16x64xf32> to vector<16xf32>
    %734 = vector.shape_cast %733 : vector<16xf32> to vector<16x1xf32>
    %cst_327 = arith.constant 6.400000e+01 : f32
    %735 = vector.broadcast %cst_327 : f32 to vector<16x1xf32>
    %736 = arith.divf %734, %735 : vector<16x1xf32>
    %737 = vector.broadcast %729 : vector<16x1xf32> to vector<16x64xf32>
    %738 = arith.subf %721, %737 : vector<16x64xf32>
    %cst_328 = arith.constant 9.99999996E-13 : f32
    %739 = vector.broadcast %cst_328 : f32 to vector<16x1xf32>
    %740 = arith.addf %736, %739 : vector<16x1xf32>
    %741 = math.rsqrt %740 : vector<16x1xf32>
    %742 = vector.broadcast %741 : vector<16x1xf32> to vector<16x64xf32>
    %743 = arith.mulf %738, %742 : vector<16x64xf32>
    %744 = vector.broadcast %723 : vector<1x64xf32> to vector<16x64xf32>
    %745 = arith.mulf %743, %744 : vector<16x64xf32>
    %746 = vector.broadcast %725 : vector<1x64xf32> to vector<16x64xf32>
    %747 = arith.addf %745, %746 : vector<16x64xf32>
    %748 = arith.addf %603, %747 : vector<16x64xf32>
    %749 = arith.truncf %747 : vector<16x64xf32> to vector<16x64xbf16>
    %c5 = arith.constant 5 : index
    %c0_329 = arith.constant 0 : index
    %c0_330 = arith.constant 0 : index
    %750 = vector.load %arg6[%c5, %c0_329, %c0_330] : memref<8x64x256xbf16, #tpu.memory_space<vmem>>, vector<1x64x256xbf16>
    %751 = vector.shape_cast %750 : vector<1x64x256xbf16> to vector<64x256xbf16>
    %cst_331 = arith.constant dense<0.000000e+00> : vector<16x256xf32>
    %752 = tpu.matmul %749, %751, %cst_331 {dimension_numbers = #tpu.dot_dimension_numbers<[1], [0], [0], [1], [0, 0, 1, 1], [], []>} : vector<16x64xbf16>, vector<64x256xbf16>, vector<16x256xf32> -> vector<16x256xf32>
    %c5_332 = arith.constant 5 : index
    %c0_333 = arith.constant 0 : index
    %c0_334 = arith.constant 0 : index
    %753 = vector.load %arg7[%c5_332, %c0_333, %c0_334] : memref<8x1x256xf32, #tpu.memory_space<vmem>>, vector<1x1x256xf32>
    %754 = vector.shape_cast %753 : vector<1x1x256xf32> to vector<1x256xf32>
    %755 = vector.broadcast %754 : vector<1x256xf32> to vector<16x256xf32>
    %756 = arith.addf %752, %755 : vector<16x256xf32>
    %757 = vector.extract_strided_slice %756 {offsets = [0, 0], sizes = [16, 32], strides = [1, 1]} : vector<16x256xf32> to vector<16x32xf32>
    %758 = arith.truncf %757 : vector<16x32xf32> to vector<16x32xbf16>
    %759 = vector.extract_strided_slice %756 {offsets = [0, 32], sizes = [16, 32], strides = [1, 1]} : vector<16x256xf32> to vector<16x32xf32>
    %760 = arith.truncf %759 : vector<16x32xf32> to vector<16x32xbf16>
    %761 = vector.extract_strided_slice %756 {offsets = [0, 64], sizes = [16, 32], strides = [1, 1]} : vector<16x256xf32> to vector<16x32xf32>
    %762 = arith.truncf %761 : vector<16x32xf32> to vector<16x32xbf16>
    "tpu.trace_start"() <{level = 10 : i32, message = "qd,kd->qk"}> : () -> ()
    %cst_335 = arith.constant dense<0.000000e+00> : vector<16x16xf32>
    %763 = tpu.matmul %758, %760, %cst_335 {dimension_numbers = #tpu.dot_dimension_numbers<[1], [1], [0], [0], [0, 0, 1, 0], [], []>} : vector<16x32xbf16>, vector<16x32xbf16>, vector<16x16xf32> -> vector<16x16xf32>
    "tpu.trace_stop"() : () -> ()
    %cst_336 = arith.constant 0.176776692 : f32
    %764 = vector.broadcast %cst_336 : f32 to vector<16x16xf32>
    %765 = arith.mulf %763, %764 : vector<16x16xf32>
    %766 = arith.addf %765, %0 : vector<16x16xf32>
    %cst_337 = arith.constant dense<0xFF800000> : vector<16xf32>
    %767 = vector.multi_reduction <maximumf>, %766, %cst_337 [1] : vector<16x16xf32> to vector<16xf32>
    %768 = vector.shape_cast %767 : vector<16xf32> to vector<16x1xf32>
    %769 = vector.broadcast %768 : vector<16x1xf32> to vector<16x16xf32>
    %770 = arith.subf %766, %769 : vector<16x16xf32>
    %771 = math.exp %770 : vector<16x16xf32>
    %cst_338 = arith.constant dense<0.000000e+00> : vector<16xf32>
    %772 = vector.multi_reduction <add>, %771, %cst_338 [1] : vector<16x16xf32> to vector<16xf32>
    %773 = vector.shape_cast %772 : vector<16xf32> to vector<16x1xf32>
    %774 = tpu.reciprocal %773 {approx = true} : vector<16x1xf32> -> vector<16x1xf32>
    %775 = vector.broadcast %774 : vector<16x1xf32> to vector<16x16xf32>
    %776 = arith.mulf %771, %775 : vector<16x16xf32>
    %777 = arith.truncf %776 : vector<16x16xf32> to vector<16x16xbf16>
    %cst_339 = arith.constant dense<0.000000e+00> : vector<16x32xf32>
    %778 = tpu.matmul %777, %762, %cst_339 {dimension_numbers = #tpu.dot_dimension_numbers<[1], [0], [0], [1], [0, 0, 1, 1], [], []>} : vector<16x16xbf16>, vector<16x32xbf16>, vector<16x32xf32> -> vector<16x32xf32>
    %779 = vector.extract_strided_slice %756 {offsets = [0, 128], sizes = [16, 32], strides = [1, 1]} : vector<16x256xf32> to vector<16x32xf32>
    %780 = arith.truncf %779 : vector<16x32xf32> to vector<16x32xbf16>
    %781 = vector.extract_strided_slice %756 {offsets = [0, 160], sizes = [16, 32], strides = [1, 1]} : vector<16x256xf32> to vector<16x32xf32>
    %782 = arith.truncf %781 : vector<16x32xf32> to vector<16x32xbf16>
    %783 = vector.extract_strided_slice %756 {offsets = [0, 192], sizes = [16, 32], strides = [1, 1]} : vector<16x256xf32> to vector<16x32xf32>
    %784 = arith.truncf %783 : vector<16x32xf32> to vector<16x32xbf16>
    "tpu.trace_start"() <{level = 10 : i32, message = "qd,kd->qk"}> : () -> ()
    %cst_340 = arith.constant dense<0.000000e+00> : vector<16x16xf32>
    %785 = tpu.matmul %780, %782, %cst_340 {dimension_numbers = #tpu.dot_dimension_numbers<[1], [1], [0], [0], [0, 0, 1, 0], [], []>} : vector<16x32xbf16>, vector<16x32xbf16>, vector<16x16xf32> -> vector<16x16xf32>
    "tpu.trace_stop"() : () -> ()
    %cst_341 = arith.constant 0.176776692 : f32
    %786 = vector.broadcast %cst_341 : f32 to vector<16x16xf32>
    %787 = arith.mulf %785, %786 : vector<16x16xf32>
    %788 = arith.addf %787, %0 : vector<16x16xf32>
    %cst_342 = arith.constant dense<0xFF800000> : vector<16xf32>
    %789 = vector.multi_reduction <maximumf>, %788, %cst_342 [1] : vector<16x16xf32> to vector<16xf32>
    %790 = vector.shape_cast %789 : vector<16xf32> to vector<16x1xf32>
    %791 = vector.broadcast %790 : vector<16x1xf32> to vector<16x16xf32>
    %792 = arith.subf %788, %791 : vector<16x16xf32>
    %793 = math.exp %792 : vector<16x16xf32>
    %cst_343 = arith.constant dense<0.000000e+00> : vector<16xf32>
    %794 = vector.multi_reduction <add>, %793, %cst_343 [1] : vector<16x16xf32> to vector<16xf32>
    %795 = vector.shape_cast %794 : vector<16xf32> to vector<16x1xf32>
    %796 = tpu.reciprocal %795 {approx = true} : vector<16x1xf32> -> vector<16x1xf32>
    %797 = vector.broadcast %796 : vector<16x1xf32> to vector<16x16xf32>
    %798 = arith.mulf %793, %797 : vector<16x16xf32>
    %799 = arith.truncf %798 : vector<16x16xf32> to vector<16x16xbf16>
    %cst_344 = arith.constant dense<0.000000e+00> : vector<16x32xf32>
    %800 = tpu.matmul %799, %784, %cst_344 {dimension_numbers = #tpu.dot_dimension_numbers<[1], [0], [0], [1], [0, 0, 1, 1], [], []>} : vector<16x16xbf16>, vector<16x32xbf16>, vector<16x32xf32> -> vector<16x32xf32>
    %801 = tpu.concatenate %778, %800 in 1 : vector<16x32xf32>, vector<16x32xf32> -> vector<16x64xf32>
    %802 = arith.truncf %801 : vector<16x64xf32> to vector<16x64xbf16>
    %c5_345 = arith.constant 5 : index
    %c0_346 = arith.constant 0 : index
    %c0_347 = arith.constant 0 : index
    %803 = vector.load %arg8[%c5_345, %c0_346, %c0_347] : memref<8x64x64xbf16, #tpu.memory_space<vmem>>, vector<1x64x64xbf16>
    %804 = vector.shape_cast %803 : vector<1x64x64xbf16> to vector<64x64xbf16>
    %cst_348 = arith.constant dense<0.000000e+00> : vector<16x64xf32>
    %805 = tpu.matmul %802, %804, %cst_348 {dimension_numbers = #tpu.dot_dimension_numbers<[1], [0], [0], [1], [0, 0, 1, 1], [], []>} : vector<16x64xbf16>, vector<64x64xbf16>, vector<16x64xf32> -> vector<16x64xf32>
    %c5_349 = arith.constant 5 : index
    %c0_350 = arith.constant 0 : index
    %c0_351 = arith.constant 0 : index
    %806 = vector.load %arg9[%c5_349, %c0_350, %c0_351] : memref<8x1x64xf32, #tpu.memory_space<vmem>>, vector<1x1x64xf32>
    %807 = vector.shape_cast %806 : vector<1x1x64xf32> to vector<1x64xf32>
    %808 = vector.broadcast %807 : vector<1x64xf32> to vector<16x64xf32>
    %809 = arith.addf %805, %808 : vector<16x64xf32>
    %810 = arith.addf %747, %809 : vector<16x64xf32>
    %c5_352 = arith.constant 5 : index
    %c0_353 = arith.constant 0 : index
    %c0_354 = arith.constant 0 : index
    %811 = vector.load %arg10[%c5_352, %c0_353, %c0_354] : memref<8x1x64xf32, #tpu.memory_space<vmem>>, vector<1x1x64xf32>
    %812 = vector.shape_cast %811 : vector<1x1x64xf32> to vector<1x64xf32>
    %c5_355 = arith.constant 5 : index
    %c0_356 = arith.constant 0 : index
    %c0_357 = arith.constant 0 : index
    %813 = vector.load %arg11[%c5_355, %c0_356, %c0_357] : memref<8x1x64xf32, #tpu.memory_space<vmem>>, vector<1x1x64xf32>
    %814 = vector.shape_cast %813 : vector<1x1x64xf32> to vector<1x64xf32>
    %cst_358 = arith.constant dense<0.000000e+00> : vector<16xf32>
    %815 = vector.multi_reduction <add>, %810, %cst_358 [1] : vector<16x64xf32> to vector<16xf32>
    %816 = vector.shape_cast %815 : vector<16xf32> to vector<16x1xf32>
    %cst_359 = arith.constant 6.400000e+01 : f32
    %817 = vector.broadcast %cst_359 : f32 to vector<16x1xf32>
    %818 = arith.divf %816, %817 : vector<16x1xf32>
    %819 = vector.broadcast %818 : vector<16x1xf32> to vector<16x64xf32>
    %820 = arith.subf %810, %819 : vector<16x64xf32>
    %821 = arith.mulf %820, %820 : vector<16x64xf32>
    %cst_360 = arith.constant dense<0.000000e+00> : vector<16xf32>
    %822 = vector.multi_reduction <add>, %821, %cst_360 [1] : vector<16x64xf32> to vector<16xf32>
    %823 = vector.shape_cast %822 : vector<16xf32> to vector<16x1xf32>
    %cst_361 = arith.constant 6.400000e+01 : f32
    %824 = vector.broadcast %cst_361 : f32 to vector<16x1xf32>
    %825 = arith.divf %823, %824 : vector<16x1xf32>
    %826 = vector.broadcast %818 : vector<16x1xf32> to vector<16x64xf32>
    %827 = arith.subf %810, %826 : vector<16x64xf32>
    %cst_362 = arith.constant 9.99999996E-13 : f32
    %828 = vector.broadcast %cst_362 : f32 to vector<16x1xf32>
    %829 = arith.addf %825, %828 : vector<16x1xf32>
    %830 = math.rsqrt %829 : vector<16x1xf32>
    %831 = vector.broadcast %830 : vector<16x1xf32> to vector<16x64xf32>
    %832 = arith.mulf %827, %831 : vector<16x64xf32>
    %833 = vector.broadcast %812 : vector<1x64xf32> to vector<16x64xf32>
    %834 = arith.mulf %832, %833 : vector<16x64xf32>
    %835 = vector.broadcast %814 : vector<1x64xf32> to vector<16x64xf32>
    %836 = arith.addf %834, %835 : vector<16x64xf32>
    %837 = arith.truncf %836 : vector<16x64xf32> to vector<16x64xbf16>
    %c5_363 = arith.constant 5 : index
    %c0_364 = arith.constant 0 : index
    %c0_365 = arith.constant 0 : index
    %838 = vector.load %arg12[%c5_363, %c0_364, %c0_365] : memref<8x64x128xbf16, #tpu.memory_space<vmem>>, vector<1x64x128xbf16>
    %839 = vector.shape_cast %838 : vector<1x64x128xbf16> to vector<64x128xbf16>
    %cst_366 = arith.constant dense<0.000000e+00> : vector<16x128xf32>
    %840 = tpu.matmul %837, %839, %cst_366 {dimension_numbers = #tpu.dot_dimension_numbers<[1], [0], [0], [1], [0, 0, 1, 1], [], []>} : vector<16x64xbf16>, vector<64x128xbf16>, vector<16x128xf32> -> vector<16x128xf32>
    %c5_367 = arith.constant 5 : index
    %c0_368 = arith.constant 0 : index
    %c0_369 = arith.constant 0 : index
    %841 = vector.load %arg13[%c5_367, %c0_368, %c0_369] : memref<8x1x128xf32, #tpu.memory_space<vmem>>, vector<1x1x128xf32>
    %842 = vector.shape_cast %841 : vector<1x1x128xf32> to vector<1x128xf32>
    %843 = vector.broadcast %842 : vector<1x128xf32> to vector<16x128xf32>
    %844 = arith.addf %840, %843 : vector<16x128xf32>
    %845 = arith.mulf %844, %844 : vector<16x128xf32>
    %846 = arith.mulf %844, %845 : vector<16x128xf32>
    %cst_370 = arith.constant 4.471500e-02 : f32
    %847 = vector.broadcast %cst_370 : f32 to vector<16x128xf32>
    %848 = arith.mulf %847, %846 : vector<16x128xf32>
    %849 = arith.addf %844, %848 : vector<16x128xf32>
    %cst_371 = arith.constant 0.797884583 : f32
    %850 = vector.broadcast %cst_371 : f32 to vector<16x128xf32>
    %851 = arith.mulf %850, %849 : vector<16x128xf32>
    %852 = math.tanh %851 : vector<16x128xf32>
    %cst_372 = arith.constant 1.000000e+00 : f32
    %853 = vector.broadcast %cst_372 : f32 to vector<16x128xf32>
    %854 = arith.addf %853, %852 : vector<16x128xf32>
    %cst_373 = arith.constant 5.000000e-01 : f32
    %855 = vector.broadcast %cst_373 : f32 to vector<16x128xf32>
    %856 = arith.mulf %855, %854 : vector<16x128xf32>
    %857 = arith.mulf %844, %856 : vector<16x128xf32>
    %858 = arith.truncf %857 : vector<16x128xf32> to vector<16x128xbf16>
    %c5_374 = arith.constant 5 : index
    %c0_375 = arith.constant 0 : index
    %c0_376 = arith.constant 0 : index
    %859 = vector.load %arg14[%c5_374, %c0_375, %c0_376] : memref<8x128x64xbf16, #tpu.memory_space<vmem>>, vector<1x128x64xbf16>
    %860 = vector.shape_cast %859 : vector<1x128x64xbf16> to vector<128x64xbf16>
    %cst_377 = arith.constant dense<0.000000e+00> : vector<16x64xf32>
    %861 = tpu.matmul %858, %860, %cst_377 {dimension_numbers = #tpu.dot_dimension_numbers<[1], [0], [0], [1], [0, 0, 1, 1], [], []>} : vector<16x128xbf16>, vector<128x64xbf16>, vector<16x64xf32> -> vector<16x64xf32>
    %c5_378 = arith.constant 5 : index
    %c0_379 = arith.constant 0 : index
    %c0_380 = arith.constant 0 : index
    %862 = vector.load %arg15[%c5_378, %c0_379, %c0_380] : memref<8x1x64xf32, #tpu.memory_space<vmem>>, vector<1x1x64xf32>
    %863 = vector.shape_cast %862 : vector<1x1x64xf32> to vector<1x64xf32>
    %864 = vector.broadcast %863 : vector<1x64xf32> to vector<16x64xf32>
    %865 = arith.addf %861, %864 : vector<16x64xf32>
    %866 = arith.addf %836, %865 : vector<16x64xf32>
    %c5_381 = arith.constant 5 : index
    %c0_382 = arith.constant 0 : index
    %c0_383 = arith.constant 0 : index
    %867 = vector.load %arg16[%c5_381, %c0_382, %c0_383] : memref<8x1x64xf32, #tpu.memory_space<vmem>>, vector<1x1x64xf32>
    %868 = vector.shape_cast %867 : vector<1x1x64xf32> to vector<1x64xf32>
    %c5_384 = arith.constant 5 : index
    %c0_385 = arith.constant 0 : index
    %c0_386 = arith.constant 0 : index
    %869 = vector.load %arg17[%c5_384, %c0_385, %c0_386] : memref<8x1x64xf32, #tpu.memory_space<vmem>>, vector<1x1x64xf32>
    %870 = vector.shape_cast %869 : vector<1x1x64xf32> to vector<1x64xf32>
    %cst_387 = arith.constant dense<0.000000e+00> : vector<16xf32>
    %871 = vector.multi_reduction <add>, %866, %cst_387 [1] : vector<16x64xf32> to vector<16xf32>
    %872 = vector.shape_cast %871 : vector<16xf32> to vector<16x1xf32>
    %cst_388 = arith.constant 6.400000e+01 : f32
    %873 = vector.broadcast %cst_388 : f32 to vector<16x1xf32>
    %874 = arith.divf %872, %873 : vector<16x1xf32>
    %875 = vector.broadcast %874 : vector<16x1xf32> to vector<16x64xf32>
    %876 = arith.subf %866, %875 : vector<16x64xf32>
    %877 = arith.mulf %876, %876 : vector<16x64xf32>
    %cst_389 = arith.constant dense<0.000000e+00> : vector<16xf32>
    %878 = vector.multi_reduction <add>, %877, %cst_389 [1] : vector<16x64xf32> to vector<16xf32>
    %879 = vector.shape_cast %878 : vector<16xf32> to vector<16x1xf32>
    %cst_390 = arith.constant 6.400000e+01 : f32
    %880 = vector.broadcast %cst_390 : f32 to vector<16x1xf32>
    %881 = arith.divf %879, %880 : vector<16x1xf32>
    %882 = vector.broadcast %874 : vector<16x1xf32> to vector<16x64xf32>
    %883 = arith.subf %866, %882 : vector<16x64xf32>
    %cst_391 = arith.constant 9.99999996E-13 : f32
    %884 = vector.broadcast %cst_391 : f32 to vector<16x1xf32>
    %885 = arith.addf %881, %884 : vector<16x1xf32>
    %886 = math.rsqrt %885 : vector<16x1xf32>
    %887 = vector.broadcast %886 : vector<16x1xf32> to vector<16x64xf32>
    %888 = arith.mulf %883, %887 : vector<16x64xf32>
    %889 = vector.broadcast %868 : vector<1x64xf32> to vector<16x64xf32>
    %890 = arith.mulf %888, %889 : vector<16x64xf32>
    %891 = vector.broadcast %870 : vector<1x64xf32> to vector<16x64xf32>
    %892 = arith.addf %890, %891 : vector<16x64xf32>
    %893 = arith.addf %748, %892 : vector<16x64xf32>
    %894 = arith.truncf %892 : vector<16x64xf32> to vector<16x64xbf16>
    %c6 = arith.constant 6 : index
    %c0_392 = arith.constant 0 : index
    %c0_393 = arith.constant 0 : index
    %895 = vector.load %arg6[%c6, %c0_392, %c0_393] : memref<8x64x256xbf16, #tpu.memory_space<vmem>>, vector<1x64x256xbf16>
    %896 = vector.shape_cast %895 : vector<1x64x256xbf16> to vector<64x256xbf16>
    %cst_394 = arith.constant dense<0.000000e+00> : vector<16x256xf32>
    %897 = tpu.matmul %894, %896, %cst_394 {dimension_numbers = #tpu.dot_dimension_numbers<[1], [0], [0], [1], [0, 0, 1, 1], [], []>} : vector<16x64xbf16>, vector<64x256xbf16>, vector<16x256xf32> -> vector<16x256xf32>
    %c6_395 = arith.constant 6 : index
    %c0_396 = arith.constant 0 : index
    %c0_397 = arith.constant 0 : index
    %898 = vector.load %arg7[%c6_395, %c0_396, %c0_397] : memref<8x1x256xf32, #tpu.memory_space<vmem>>, vector<1x1x256xf32>
    %899 = vector.shape_cast %898 : vector<1x1x256xf32> to vector<1x256xf32>
    %900 = vector.broadcast %899 : vector<1x256xf32> to vector<16x256xf32>
    %901 = arith.addf %897, %900 : vector<16x256xf32>
    %902 = vector.extract_strided_slice %901 {offsets = [0, 0], sizes = [16, 32], strides = [1, 1]} : vector<16x256xf32> to vector<16x32xf32>
    %903 = arith.truncf %902 : vector<16x32xf32> to vector<16x32xbf16>
    %904 = vector.extract_strided_slice %901 {offsets = [0, 32], sizes = [16, 32], strides = [1, 1]} : vector<16x256xf32> to vector<16x32xf32>
    %905 = arith.truncf %904 : vector<16x32xf32> to vector<16x32xbf16>
    %906 = vector.extract_strided_slice %901 {offsets = [0, 64], sizes = [16, 32], strides = [1, 1]} : vector<16x256xf32> to vector<16x32xf32>
    %907 = arith.truncf %906 : vector<16x32xf32> to vector<16x32xbf16>
    "tpu.trace_start"() <{level = 10 : i32, message = "qd,kd->qk"}> : () -> ()
    %cst_398 = arith.constant dense<0.000000e+00> : vector<16x16xf32>
    %908 = tpu.matmul %903, %905, %cst_398 {dimension_numbers = #tpu.dot_dimension_numbers<[1], [1], [0], [0], [0, 0, 1, 0], [], []>} : vector<16x32xbf16>, vector<16x32xbf16>, vector<16x16xf32> -> vector<16x16xf32>
    "tpu.trace_stop"() : () -> ()
    %cst_399 = arith.constant 0.176776692 : f32
    %909 = vector.broadcast %cst_399 : f32 to vector<16x16xf32>
    %910 = arith.mulf %908, %909 : vector<16x16xf32>
    %911 = arith.addf %910, %0 : vector<16x16xf32>
    %cst_400 = arith.constant dense<0xFF800000> : vector<16xf32>
    %912 = vector.multi_reduction <maximumf>, %911, %cst_400 [1] : vector<16x16xf32> to vector<16xf32>
    %913 = vector.shape_cast %912 : vector<16xf32> to vector<16x1xf32>
    %914 = vector.broadcast %913 : vector<16x1xf32> to vector<16x16xf32>
    %915 = arith.subf %911, %914 : vector<16x16xf32>
    %916 = math.exp %915 : vector<16x16xf32>
    %cst_401 = arith.constant dense<0.000000e+00> : vector<16xf32>
    %917 = vector.multi_reduction <add>, %916, %cst_401 [1] : vector<16x16xf32> to vector<16xf32>
    %918 = vector.shape_cast %917 : vector<16xf32> to vector<16x1xf32>
    %919 = tpu.reciprocal %918 {approx = true} : vector<16x1xf32> -> vector<16x1xf32>
    %920 = vector.broadcast %919 : vector<16x1xf32> to vector<16x16xf32>
    %921 = arith.mulf %916, %920 : vector<16x16xf32>
    %922 = arith.truncf %921 : vector<16x16xf32> to vector<16x16xbf16>
    %cst_402 = arith.constant dense<0.000000e+00> : vector<16x32xf32>
    %923 = tpu.matmul %922, %907, %cst_402 {dimension_numbers = #tpu.dot_dimension_numbers<[1], [0], [0], [1], [0, 0, 1, 1], [], []>} : vector<16x16xbf16>, vector<16x32xbf16>, vector<16x32xf32> -> vector<16x32xf32>
    %924 = vector.extract_strided_slice %901 {offsets = [0, 128], sizes = [16, 32], strides = [1, 1]} : vector<16x256xf32> to vector<16x32xf32>
    %925 = arith.truncf %924 : vector<16x32xf32> to vector<16x32xbf16>
    %926 = vector.extract_strided_slice %901 {offsets = [0, 160], sizes = [16, 32], strides = [1, 1]} : vector<16x256xf32> to vector<16x32xf32>
    %927 = arith.truncf %926 : vector<16x32xf32> to vector<16x32xbf16>
    %928 = vector.extract_strided_slice %901 {offsets = [0, 192], sizes = [16, 32], strides = [1, 1]} : vector<16x256xf32> to vector<16x32xf32>
    %929 = arith.truncf %928 : vector<16x32xf32> to vector<16x32xbf16>
    "tpu.trace_start"() <{level = 10 : i32, message = "qd,kd->qk"}> : () -> ()
    %cst_403 = arith.constant dense<0.000000e+00> : vector<16x16xf32>
    %930 = tpu.matmul %925, %927, %cst_403 {dimension_numbers = #tpu.dot_dimension_numbers<[1], [1], [0], [0], [0, 0, 1, 0], [], []>} : vector<16x32xbf16>, vector<16x32xbf16>, vector<16x16xf32> -> vector<16x16xf32>
    "tpu.trace_stop"() : () -> ()
    %cst_404 = arith.constant 0.176776692 : f32
    %931 = vector.broadcast %cst_404 : f32 to vector<16x16xf32>
    %932 = arith.mulf %930, %931 : vector<16x16xf32>
    %933 = arith.addf %932, %0 : vector<16x16xf32>
    %cst_405 = arith.constant dense<0xFF800000> : vector<16xf32>
    %934 = vector.multi_reduction <maximumf>, %933, %cst_405 [1] : vector<16x16xf32> to vector<16xf32>
    %935 = vector.shape_cast %934 : vector<16xf32> to vector<16x1xf32>
    %936 = vector.broadcast %935 : vector<16x1xf32> to vector<16x16xf32>
    %937 = arith.subf %933, %936 : vector<16x16xf32>
    %938 = math.exp %937 : vector<16x16xf32>
    %cst_406 = arith.constant dense<0.000000e+00> : vector<16xf32>
    %939 = vector.multi_reduction <add>, %938, %cst_406 [1] : vector<16x16xf32> to vector<16xf32>
    %940 = vector.shape_cast %939 : vector<16xf32> to vector<16x1xf32>
    %941 = tpu.reciprocal %940 {approx = true} : vector<16x1xf32> -> vector<16x1xf32>
    %942 = vector.broadcast %941 : vector<16x1xf32> to vector<16x16xf32>
    %943 = arith.mulf %938, %942 : vector<16x16xf32>
    %944 = arith.truncf %943 : vector<16x16xf32> to vector<16x16xbf16>
    %cst_407 = arith.constant dense<0.000000e+00> : vector<16x32xf32>
    %945 = tpu.matmul %944, %929, %cst_407 {dimension_numbers = #tpu.dot_dimension_numbers<[1], [0], [0], [1], [0, 0, 1, 1], [], []>} : vector<16x16xbf16>, vector<16x32xbf16>, vector<16x32xf32> -> vector<16x32xf32>
    %946 = tpu.concatenate %923, %945 in 1 : vector<16x32xf32>, vector<16x32xf32> -> vector<16x64xf32>
    %947 = arith.truncf %946 : vector<16x64xf32> to vector<16x64xbf16>
    %c6_408 = arith.constant 6 : index
    %c0_409 = arith.constant 0 : index
    %c0_410 = arith.constant 0 : index
    %948 = vector.load %arg8[%c6_408, %c0_409, %c0_410] : memref<8x64x64xbf16, #tpu.memory_space<vmem>>, vector<1x64x64xbf16>
    %949 = vector.shape_cast %948 : vector<1x64x64xbf16> to vector<64x64xbf16>
    %cst_411 = arith.constant dense<0.000000e+00> : vector<16x64xf32>
    %950 = tpu.matmul %947, %949, %cst_411 {dimension_numbers = #tpu.dot_dimension_numbers<[1], [0], [0], [1], [0, 0, 1, 1], [], []>} : vector<16x64xbf16>, vector<64x64xbf16>, vector<16x64xf32> -> vector<16x64xf32>
    %c6_412 = arith.constant 6 : index
    %c0_413 = arith.constant 0 : index
    %c0_414 = arith.constant 0 : index
    %951 = vector.load %arg9[%c6_412, %c0_413, %c0_414] : memref<8x1x64xf32, #tpu.memory_space<vmem>>, vector<1x1x64xf32>
    %952 = vector.shape_cast %951 : vector<1x1x64xf32> to vector<1x64xf32>
    %953 = vector.broadcast %952 : vector<1x64xf32> to vector<16x64xf32>
    %954 = arith.addf %950, %953 : vector<16x64xf32>
    %955 = arith.addf %892, %954 : vector<16x64xf32>
    %c6_415 = arith.constant 6 : index
    %c0_416 = arith.constant 0 : index
    %c0_417 = arith.constant 0 : index
    %956 = vector.load %arg10[%c6_415, %c0_416, %c0_417] : memref<8x1x64xf32, #tpu.memory_space<vmem>>, vector<1x1x64xf32>
    %957 = vector.shape_cast %956 : vector<1x1x64xf32> to vector<1x64xf32>
    %c6_418 = arith.constant 6 : index
    %c0_419 = arith.constant 0 : index
    %c0_420 = arith.constant 0 : index
    %958 = vector.load %arg11[%c6_418, %c0_419, %c0_420] : memref<8x1x64xf32, #tpu.memory_space<vmem>>, vector<1x1x64xf32>
    %959 = vector.shape_cast %958 : vector<1x1x64xf32> to vector<1x64xf32>
    %cst_421 = arith.constant dense<0.000000e+00> : vector<16xf32>
    %960 = vector.multi_reduction <add>, %955, %cst_421 [1] : vector<16x64xf32> to vector<16xf32>
    %961 = vector.shape_cast %960 : vector<16xf32> to vector<16x1xf32>
    %cst_422 = arith.constant 6.400000e+01 : f32
    %962 = vector.broadcast %cst_422 : f32 to vector<16x1xf32>
    %963 = arith.divf %961, %962 : vector<16x1xf32>
    %964 = vector.broadcast %963 : vector<16x1xf32> to vector<16x64xf32>
    %965 = arith.subf %955, %964 : vector<16x64xf32>
    %966 = arith.mulf %965, %965 : vector<16x64xf32>
    %cst_423 = arith.constant dense<0.000000e+00> : vector<16xf32>
    %967 = vector.multi_reduction <add>, %966, %cst_423 [1] : vector<16x64xf32> to vector<16xf32>
    %968 = vector.shape_cast %967 : vector<16xf32> to vector<16x1xf32>
    %cst_424 = arith.constant 6.400000e+01 : f32
    %969 = vector.broadcast %cst_424 : f32 to vector<16x1xf32>
    %970 = arith.divf %968, %969 : vector<16x1xf32>
    %971 = vector.broadcast %963 : vector<16x1xf32> to vector<16x64xf32>
    %972 = arith.subf %955, %971 : vector<16x64xf32>
    %cst_425 = arith.constant 9.99999996E-13 : f32
    %973 = vector.broadcast %cst_425 : f32 to vector<16x1xf32>
    %974 = arith.addf %970, %973 : vector<16x1xf32>
    %975 = math.rsqrt %974 : vector<16x1xf32>
    %976 = vector.broadcast %975 : vector<16x1xf32> to vector<16x64xf32>
    %977 = arith.mulf %972, %976 : vector<16x64xf32>
    %978 = vector.broadcast %957 : vector<1x64xf32> to vector<16x64xf32>
    %979 = arith.mulf %977, %978 : vector<16x64xf32>
    %980 = vector.broadcast %959 : vector<1x64xf32> to vector<16x64xf32>
    %981 = arith.addf %979, %980 : vector<16x64xf32>
    %982 = arith.truncf %981 : vector<16x64xf32> to vector<16x64xbf16>
    %c6_426 = arith.constant 6 : index
    %c0_427 = arith.constant 0 : index
    %c0_428 = arith.constant 0 : index
    %983 = vector.load %arg12[%c6_426, %c0_427, %c0_428] : memref<8x64x128xbf16, #tpu.memory_space<vmem>>, vector<1x64x128xbf16>
    %984 = vector.shape_cast %983 : vector<1x64x128xbf16> to vector<64x128xbf16>
    %cst_429 = arith.constant dense<0.000000e+00> : vector<16x128xf32>
    %985 = tpu.matmul %982, %984, %cst_429 {dimension_numbers = #tpu.dot_dimension_numbers<[1], [0], [0], [1], [0, 0, 1, 1], [], []>} : vector<16x64xbf16>, vector<64x128xbf16>, vector<16x128xf32> -> vector<16x128xf32>
    %c6_430 = arith.constant 6 : index
    %c0_431 = arith.constant 0 : index
    %c0_432 = arith.constant 0 : index
    %986 = vector.load %arg13[%c6_430, %c0_431, %c0_432] : memref<8x1x128xf32, #tpu.memory_space<vmem>>, vector<1x1x128xf32>
    %987 = vector.shape_cast %986 : vector<1x1x128xf32> to vector<1x128xf32>
    %988 = vector.broadcast %987 : vector<1x128xf32> to vector<16x128xf32>
    %989 = arith.addf %985, %988 : vector<16x128xf32>
    %990 = arith.mulf %989, %989 : vector<16x128xf32>
    %991 = arith.mulf %989, %990 : vector<16x128xf32>
    %cst_433 = arith.constant 4.471500e-02 : f32
    %992 = vector.broadcast %cst_433 : f32 to vector<16x128xf32>
    %993 = arith.mulf %992, %991 : vector<16x128xf32>
    %994 = arith.addf %989, %993 : vector<16x128xf32>
    %cst_434 = arith.constant 0.797884583 : f32
    %995 = vector.broadcast %cst_434 : f32 to vector<16x128xf32>
    %996 = arith.mulf %995, %994 : vector<16x128xf32>
    %997 = math.tanh %996 : vector<16x128xf32>
    %cst_435 = arith.constant 1.000000e+00 : f32
    %998 = vector.broadcast %cst_435 : f32 to vector<16x128xf32>
    %999 = arith.addf %998, %997 : vector<16x128xf32>
    %cst_436 = arith.constant 5.000000e-01 : f32
    %1000 = vector.broadcast %cst_436 : f32 to vector<16x128xf32>
    %1001 = arith.mulf %1000, %999 : vector<16x128xf32>
    %1002 = arith.mulf %989, %1001 : vector<16x128xf32>
    %1003 = arith.truncf %1002 : vector<16x128xf32> to vector<16x128xbf16>
    %c6_437 = arith.constant 6 : index
    %c0_438 = arith.constant 0 : index
    %c0_439 = arith.constant 0 : index
    %1004 = vector.load %arg14[%c6_437, %c0_438, %c0_439] : memref<8x128x64xbf16, #tpu.memory_space<vmem>>, vector<1x128x64xbf16>
    %1005 = vector.shape_cast %1004 : vector<1x128x64xbf16> to vector<128x64xbf16>
    %cst_440 = arith.constant dense<0.000000e+00> : vector<16x64xf32>
    %1006 = tpu.matmul %1003, %1005, %cst_440 {dimension_numbers = #tpu.dot_dimension_numbers<[1], [0], [0], [1], [0, 0, 1, 1], [], []>} : vector<16x128xbf16>, vector<128x64xbf16>, vector<16x64xf32> -> vector<16x64xf32>
    %c6_441 = arith.constant 6 : index
    %c0_442 = arith.constant 0 : index
    %c0_443 = arith.constant 0 : index
    %1007 = vector.load %arg15[%c6_441, %c0_442, %c0_443] : memref<8x1x64xf32, #tpu.memory_space<vmem>>, vector<1x1x64xf32>
    %1008 = vector.shape_cast %1007 : vector<1x1x64xf32> to vector<1x64xf32>
    %1009 = vector.broadcast %1008 : vector<1x64xf32> to vector<16x64xf32>
    %1010 = arith.addf %1006, %1009 : vector<16x64xf32>
    %1011 = arith.addf %981, %1010 : vector<16x64xf32>
    %c6_444 = arith.constant 6 : index
    %c0_445 = arith.constant 0 : index
    %c0_446 = arith.constant 0 : index
    %1012 = vector.load %arg16[%c6_444, %c0_445, %c0_446] : memref<8x1x64xf32, #tpu.memory_space<vmem>>, vector<1x1x64xf32>
    %1013 = vector.shape_cast %1012 : vector<1x1x64xf32> to vector<1x64xf32>
    %c6_447 = arith.constant 6 : index
    %c0_448 = arith.constant 0 : index
    %c0_449 = arith.constant 0 : index
    %1014 = vector.load %arg17[%c6_447, %c0_448, %c0_449] : memref<8x1x64xf32, #tpu.memory_space<vmem>>, vector<1x1x64xf32>
    %1015 = vector.shape_cast %1014 : vector<1x1x64xf32> to vector<1x64xf32>
    %cst_450 = arith.constant dense<0.000000e+00> : vector<16xf32>
    %1016 = vector.multi_reduction <add>, %1011, %cst_450 [1] : vector<16x64xf32> to vector<16xf32>
    %1017 = vector.shape_cast %1016 : vector<16xf32> to vector<16x1xf32>
    %cst_451 = arith.constant 6.400000e+01 : f32
    %1018 = vector.broadcast %cst_451 : f32 to vector<16x1xf32>
    %1019 = arith.divf %1017, %1018 : vector<16x1xf32>
    %1020 = vector.broadcast %1019 : vector<16x1xf32> to vector<16x64xf32>
    %1021 = arith.subf %1011, %1020 : vector<16x64xf32>
    %1022 = arith.mulf %1021, %1021 : vector<16x64xf32>
    %cst_452 = arith.constant dense<0.000000e+00> : vector<16xf32>
    %1023 = vector.multi_reduction <add>, %1022, %cst_452 [1] : vector<16x64xf32> to vector<16xf32>
    %1024 = vector.shape_cast %1023 : vector<16xf32> to vector<16x1xf32>
    %cst_453 = arith.constant 6.400000e+01 : f32
    %1025 = vector.broadcast %cst_453 : f32 to vector<16x1xf32>
    %1026 = arith.divf %1024, %1025 : vector<16x1xf32>
    %1027 = vector.broadcast %1019 : vector<16x1xf32> to vector<16x64xf32>
    %1028 = arith.subf %1011, %1027 : vector<16x64xf32>
    %cst_454 = arith.constant 9.99999996E-13 : f32
    %1029 = vector.broadcast %cst_454 : f32 to vector<16x1xf32>
    %1030 = arith.addf %1026, %1029 : vector<16x1xf32>
    %1031 = math.rsqrt %1030 : vector<16x1xf32>
    %1032 = vector.broadcast %1031 : vector<16x1xf32> to vector<16x64xf32>
    %1033 = arith.mulf %1028, %1032 : vector<16x64xf32>
    %1034 = vector.broadcast %1013 : vector<1x64xf32> to vector<16x64xf32>
    %1035 = arith.mulf %1033, %1034 : vector<16x64xf32>
    %1036 = vector.broadcast %1015 : vector<1x64xf32> to vector<16x64xf32>
    %1037 = arith.addf %1035, %1036 : vector<16x64xf32>
    %1038 = arith.addf %893, %1037 : vector<16x64xf32>
    %cst_455 = arith.constant 2.500000e-01 : f32
    %1039 = vector.broadcast %cst_455 : f32 to vector<16x64xf32>
    %1040 = arith.mulf %1038, %1039 : vector<16x64xf32>
    %cst_456 = arith.constant 0.000000e+00 : f32
    %1041 = vector.broadcast %cst_456 : f32 to vector<16x64xf32>
    %1042 = tpu.concatenate %1040, %1041 in 1 : vector<16x64xf32>, vector<16x64xf32> -> vector<16x128xf32>
    %c32_i32 = arith.constant 32 : i32
    %1043 = tpu.dynamic_rotate %1042 by %c32_i32 dim 1 : vector<16x128xf32>, i32 -> vector<16x128xf32>
    %1044 = arith.addf %20, %1043 : vector<16x128xf32>
    %1045 = vector.shape_cast %1044 : vector<16x128xf32> to vector<2x8x128xf32>
    %c0_457 = arith.constant 0 : index
    %c0_458 = arith.constant 0 : index
    %c0_459 = arith.constant 0 : index
    %1046 = vector.load %arg18[%c0_457, %c0_458, %c0_459] : memref<2x8x128xf32, #tpu.memory_space<vmem>>, vector<2x8x128xf32>
    tpu.vector_store %arg18[%c0_457, %c0_458, %c0_459], %1045 {strides = array<i32>} : memref<2x8x128xf32, #tpu.memory_space<vmem>>, vector<2x8x128xf32>,
    return
  }
}

</mosaic_0001>

<llo_original>
// kernel: bert_base_lexer_forward.1
$region0: #{bert_base_lexer_forward.1}
  #allocation0 [shape = 'u32[]', space=smem, size = 0x4, offset = 0x4, fixed_abs, tag = 'smem constant byte address 0x4 - core index']
  #allocation1 [shape = 'u32[144,128]{1,0:T(1,128)}', space=vmem, size = 0x12000, scoped, tag = 'internal scratch']
  %s0 = inlined_call_operand.hbm [shape: s32[2,8], index: 0, kind: input, shape index: {}]
  %s1 = inlined_call_operand.hbm [shape: s32[2,8], index: 1, kind: input, shape index: {}]
  %s2 = inlined_call_operand.hbm [shape: f32[16,16], index: 2, kind: input, shape index: {}]
  %s3 = inlined_call_operand.vmem [shape: f32[64,128], index: 3, kind: input, shape index: {}]
  %s4 = inlined_call_operand.hbm [shape: bf16[64,64], index: 4, kind: input, shape index: {}]
  %s5 = inlined_call_operand.hbm [shape: f32[16,64], index: 5, kind: input, shape index: {}]
  %s6 = inlined_call_operand.vmem [shape: bf16[8,64,256], index: 6, kind: input, shape index: {}]
  %s7 = inlined_call_operand.hbm [shape: f32[8,1,256], index: 7, kind: input, shape index: {}]
  %s8 = inlined_call_operand.vmem [shape: bf16[8,64,64], index: 8, kind: input, shape index: {}]
  %s9 = inlined_call_operand.hbm [shape: f32[8,1,64], index: 9, kind: input, shape index: {}]
  %s10 = inlined_call_operand.hbm [shape: f32[8,1,64], index: 10, kind: input, shape index: {}]
  %s11 = inlined_call_operand.hbm [shape: f32[8,1,64], index: 11, kind: input, shape index: {}]
  %s12 = inlined_call_operand.hbm [shape: bf16[8,64,128], index: 12, kind: input, shape index: {}]
  %s13 = inlined_call_operand.hbm [shape: f32[8,1,128], index: 13, kind: input, shape index: {}]
  %s14 = inlined_call_operand.vmem [shape: bf16[8,128,64], index: 14, kind: input, shape index: {}]
  %s15 = inlined_call_operand.hbm [shape: f32[8,1,64], index: 15, kind: input, shape index: {}]
  %s16 = inlined_call_operand.hbm [shape: f32[8,1,64], index: 16, kind: input, shape index: {}]
  %s17 = inlined_call_operand.hbm [shape: f32[8,1,64], index: 17, kind: input, shape index: {}]
  %s18 = inlined_call_operand.hbm [shape: f32[2,8,128], index: 18, kind: output, shape index: {}]
  %s19 = sld [smem:[#allocation0]]
  $region138: #{bert_base_lexer_forward.1} parent=0
    _
  %s21 = ssub.s32 1, %s19
  %s22 = scalar_select 0, %s21, %s19
  $region1: #{bert_base_lexer_forward.1} parent=0
    #allocation2 [shape = 'u8[1024]{0}', space=vmem, size = 0x400, scoped, tag = 'input window, operand 0, single buffered']
    #allocation3 [shape = 's32[1]{0}', space=sflag, size = 0x4, scoped, tag = 'scoped memory for bert_base_lexer_forward.1']
    #allocation4 [shape = 's32[1]{0}', space=sflag, size = 0x4, scoped, tag = 'scoped memory for bert_base_lexer_forward.1']
    #allocation5 [shape = 'u8[1024]{0}', space=vmem, size = 0x400, scoped, tag = 'input window, operand 1, single buffered']
    #allocation6 [shape = 's32[1]{0}', space=sflag, size = 0x4, scoped, tag = 'scoped memory for bert_base_lexer_forward.1']
    #allocation7 [shape = 'u8[8192]{0}', space=vmem, size = 0x2000, scoped, tag = 'input window, operand 2, single buffered']
    #allocation8 [shape = 'u8[16384]{0}', space=vmem, size = 0x4000, scoped, tag = 'input window, operand 4, single buffered']
    #allocation9 [shape = 's32[1]{0}', space=sflag, size = 0x4, scoped, tag = 'scoped memory for bert_base_lexer_forward.1']
    #allocation10 [shape = 'u8[8192]{0}', space=vmem, size = 0x2000, scoped, tag = 'input window, operand 5, single buffered']
    #allocation11 [shape = 'u8[8192]{0}', space=vmem, size = 0x2000, scoped, tag = 'input window, operand 7, single buffered']
    #allocation12 [shape = 's32[1]{0}', space=sflag, size = 0x4, scoped, tag = 'scoped memory for bert_base_lexer_forward.1']
    #allocation13 [shape = 'u8[4096]{0}', space=vmem, size = 0x1000, scoped, tag = 'input window, operand 9, single buffered']
    #allocation14 [shape = 'u8[4096]{0}', space=vmem, size = 0x1000, scoped, tag = 'input window, operand 10, single buffered']
    #allocation15 [shape = 's32[1]{0}', space=sflag, size = 0x4, scoped, tag = 'scoped memory for bert_base_lexer_forward.1']
    #allocation16 [shape = 'u8[4096]{0}', space=vmem, size = 0x1000, scoped, tag = 'input window, operand 11, single buffered']
    #allocation17 [shape = 'u8[131072]{0}', space=vmem, size = 0x20000, scoped, tag = 'input window, operand 12, single buffered']
    #allocation18 [shape = 's32[1]{0}', space=sflag, size = 0x4, scoped, tag = 'scoped memory for bert_base_lexer_forward.1']
    #allocation19 [shape = 'u8[4096]{0}', space=vmem, size = 0x1000, scoped, tag = 'input window, operand 13, single buffered']
    #allocation20 [shape = 'u8[4096]{0}', space=vmem, size = 0x1000, scoped, tag = 'input window, operand 15, single buffered']
    #allocation21 [shape = 's32[1]{0}', space=sflag, size = 0x4, scoped, tag = 'scoped memory for bert_base_lexer_forward.1']
    #allocation22 [shape = 'u8[4096]{0}', space=vmem, size = 0x1000, scoped, tag = 'input window, operand 16, single buffered']
    #allocation23 [shape = 'u8[4096]{0}', space=vmem, size = 0x1000, scoped, tag = 'input window, operand 17, single buffered']
    #allocation24 [shape = 's32[1]{0}', space=sflag, size = 0x4, scoped, tag = 'scoped memory for bert_base_lexer_forward.1']
    #allocation25 [shape = 'u8[8192]{0}', space=vmem, size = 0x2000, scoped, tag = 'output window, operand 0, single buffered']
    %23 = vsyncpa [#allocation3], 0
    %24 = vsyncpa [#allocation6], 0
    %25 = vsyncpa [#allocation9], 0
    %26 = vsyncpa [#allocation12], 0
    %27 = vsyncpa [#allocation15], 0
    %28 = vsyncpa [#allocation18], 0
    %29 = vsyncpa [#allocation21], 0
    %30 = vsyncpa [#allocation24], 0
    %31 = vsyncpa [#allocation4], 0
    // Predicated region
    $region2: #{bert_base_lexer_forward.1} parent=1 // pred_check
      _
    $region3: #{bert_base_lexer_forward.1} parent=1 // pred_check_branch
      %33 = sbr.rel (0) target = $region5
    $region4: #{bert_base_lexer_forward.1} parent=1 // pred_region
      %s35 = ssub.s32 32, 32
      %36 = vsyncadd [#allocation3], %s35
      %s38 = sshll.u32 [#allocation2], 4
      %s39 = int_to_ptr.vmem [resolvable:$true] %s38
      %41 = dma.hbm_to_vmem [thread:$0]  %s0, 32, %s39, [#allocation3]
    $region5: #{bert_base_lexer_forward.1} parent=1 // pred_fallthru
      _
    // Predicated region
    $region6: #{bert_base_lexer_forward.1} parent=1 // pred_check
      _
    $region7: #{bert_base_lexer_forward.1} parent=1 // pred_check_branch
      %43 = sbr.rel (0) target = $region9
    $region8: #{bert_base_lexer_forward.1} parent=1 // pred_region
      %s45 = ssub.s32 32, 32
      %46 = vsyncadd [#allocation6], %s45
      %s48 = sshll.u32 [#allocation5], 4
      %s49 = int_to_ptr.vmem [resolvable:$true] %s48
      %51 = dma.hbm_to_vmem [thread:$0]  %s1, 32, %s49, [#allocation6]
    $region9: #{bert_base_lexer_forward.1} parent=1 // pred_fallthru
      _
    // Predicated region
    $region10: #{bert_base_lexer_forward.1} parent=1 // pred_check
      _
    $region11: #{bert_base_lexer_forward.1} parent=1 // pred_check_branch
      %53 = sbr.rel (0) target = $region13
    $region12: #{bert_base_lexer_forward.1} parent=1 // pred_region
      %s55 = ssub.s32 256, 256
      %56 = vsyncadd [#allocation6], %s55
      %s57 = sshll.u32 [#allocation7], 4
      %s58 = int_to_ptr.vmem [resolvable:$true] %s57
      %63 = dma.hbm_to_vmem [thread:$0]  %s2, 256, %s58, [#allocation6], 128, 128, 8
    $region13: #{bert_base_lexer_forward.1} parent=1 // pred_fallthru
      _
    // Predicated region
    $region14: #{bert_base_lexer_forward.1} parent=1 // pred_check
      _
    $region15: #{bert_base_lexer_forward.1} parent=1 // pred_check_branch
      %65 = sbr.rel (0) target = $region17
    $region16: #{bert_base_lexer_forward.1} parent=1 // pred_region
      _
    $region17: #{bert_base_lexer_forward.1} parent=1 // pred_fallthru
      _
    // Predicated region
    $region18: #{bert_base_lexer_forward.1} parent=1 // pred_check
      _
    $region19: #{bert_base_lexer_forward.1} parent=1 // pred_check_branch
      %67 = sbr.rel (0) target = $region21
    $region20: #{bert_base_lexer_forward.1} parent=1 // pred_region
      %s69 = ssub.s32 512, 512
      %70 = vsyncadd [#allocation9], %s69
      %s71 = sshll.u32 [#allocation8], 4
      %s72 = int_to_ptr.vmem [resolvable:$true] %s71
      %77 = dma.hbm_to_vmem [thread:$0]  %s4, 512, %s72, [#allocation9], 64, 64, 4
    $region21: #{bert_base_lexer_forward.1} parent=1 // pred_fallthru
      _
    // Predicated region
    $region22: #{bert_base_lexer_forward.1} parent=1 // pred_check
      _
    $region23: #{bert_base_lexer_forward.1} parent=1 // pred_check_branch
      %79 = sbr.rel (0) target = $region25
    $region24: #{bert_base_lexer_forward.1} parent=1 // pred_region
      %s81 = ssub.s32 256, 256
      %82 = vsyncadd [#allocation9], %s81
      %s83 = sshll.u32 [#allocation10], 4
      %s84 = int_to_ptr.vmem [resolvable:$true] %s83
      %89 = dma.hbm_to_vmem [thread:$0]  %s5, 256, %s84, [#allocation9], 128, 128, 8
    $region25: #{bert_base_lexer_forward.1} parent=1 // pred_fallthru
      _
    // Predicated region
    $region26: #{bert_base_lexer_forward.1} parent=1 // pred_check
      _
    $region27: #{bert_base_lexer_forward.1} parent=1 // pred_check_branch
      %91 = sbr.rel (0) target = $region29
    $region28: #{bert_base_lexer_forward.1} parent=1 // pred_region
      _
    $region29: #{bert_base_lexer_forward.1} parent=1 // pred_fallthru
      _
    // Predicated region
    $region30: #{bert_base_lexer_forward.1} parent=1 // pred_check
      _
    $region31: #{bert_base_lexer_forward.1} parent=1 // pred_check_branch
      %93 = sbr.rel (0) target = $region33
    $region32: #{bert_base_lexer_forward.1} parent=1 // pred_region
      %s95 = ssub.s32 256, 256
      %96 = vsyncadd [#allocation12], %s95
      %s97 = sshll.u32 [#allocation11], 4
      %s98 = int_to_ptr.vmem [resolvable:$true] %s97
      %103 = dma.hbm_to_vmem [thread:$0]  %s7, 256, %s98, [#allocation12], 32, 32, 2
    $region33: #{bert_base_lexer_forward.1} parent=1 // pred_fallthru
      _
    // Predicated region
    $region34: #{bert_base_lexer_forward.1} parent=1 // pred_check
      _
    $region35: #{bert_base_lexer_forward.1} parent=1 // pred_check_branch
      %105 = sbr.rel (0) target = $region37
    $region36: #{bert_base_lexer_forward.1} parent=1 // pred_region
      _
    $region37: #{bert_base_lexer_forward.1} parent=1 // pred_fallthru
      _
    // Predicated region
    $region38: #{bert_base_lexer_forward.1} parent=1 // pred_check
      _
    $region39: #{bert_base_lexer_forward.1} parent=1 // pred_check_branch
      %107 = sbr.rel (0) target = $region41
    $region40: #{bert_base_lexer_forward.1} parent=1 // pred_region
      %s109 = ssub.s32 128, 128
      %110 = vsyncadd [#allocation12], %s109
      %s111 = sshll.u32 [#allocation13], 4
      %s112 = int_to_ptr.vmem [resolvable:$true] %s111
      %117 = dma.hbm_to_vmem [thread:$0]  %s9, 128, %s112, [#allocation12], 16, 16, 1
    $region41: #{bert_base_lexer_forward.1} parent=1 // pred_fallthru
      _
    // Predicated region
    $region42: #{bert_base_lexer_forward.1} parent=1 // pred_check
      _
    $region43: #{bert_base_lexer_forward.1} parent=1 // pred_check_branch
      %119 = sbr.rel (0) target = $region45
    $region44: #{bert_base_lexer_forward.1} parent=1 // pred_region
      %s121 = ssub.s32 128, 128
      %122 = vsyncadd [#allocation15], %s121
      %s123 = sshll.u32 [#allocation14], 4
      %s124 = int_to_ptr.vmem [resolvable:$true] %s123
      %129 = dma.hbm_to_vmem [thread:$0]  %s10, 128, %s124, [#allocation15], 16, 16, 1
    $region45: #{bert_base_lexer_forward.1} parent=1 // pred_fallthru
      _
    // Predicated region
    $region46: #{bert_base_lexer_forward.1} parent=1 // pred_check
      _
    $region47: #{bert_base_lexer_forward.1} parent=1 // pred_check_branch
      %131 = sbr.rel (0) target = $region49
    $region48: #{bert_base_lexer_forward.1} parent=1 // pred_region
      %s133 = ssub.s32 128, 128
      %134 = vsyncadd [#allocation15], %s133
      %s135 = sshll.u32 [#allocation16], 4
      %s136 = int_to_ptr.vmem [resolvable:$true] %s135
      %141 = dma.hbm_to_vmem [thread:$0]  %s11, 128, %s136, [#allocation15], 16, 16, 1
    $region49: #{bert_base_lexer_forward.1} parent=1 // pred_fallthru
      _
    // Predicated region
    $region50: #{bert_base_lexer_forward.1} parent=1 // pred_check
      _
    $region51: #{bert_base_lexer_forward.1} parent=1 // pred_check_branch
      %143 = sbr.rel (0) target = $region53
    $region52: #{bert_base_lexer_forward.1} parent=1 // pred_region
      %s145 = ssub.s32 4096, 4096
      %146 = vsyncadd [#allocation18], %s145
      %s147 = sshll.u32 [#allocation17], 4
      %s148 = int_to_ptr.vmem [resolvable:$true] %s147
      %153 = dma.hbm_to_vmem [thread:$0]  %s12, 4096, %s148, [#allocation18], 64, 64, 4
    $region53: #{bert_base_lexer_forward.1} parent=1 // pred_fallthru
      _
    // Predicated region
    $region54: #{bert_base_lexer_forward.1} parent=1 // pred_check
      _
    $region55: #{bert_base_lexer_forward.1} parent=1 // pred_check_branch
      %155 = sbr.rel (0) target = $region57
    $region56: #{bert_base_lexer_forward.1} parent=1 // pred_region
      %s157 = ssub.s32 128, 128
      %158 = vsyncadd [#allocation18], %s157
      %s159 = sshll.u32 [#allocation19], 4
      %s160 = int_to_ptr.vmem [resolvable:$true] %s159
      %165 = dma.hbm_to_vmem [thread:$0]  %s13, 128, %s160, [#allocation18], 16, 16, 1
    $region57: #{bert_base_lexer_forward.1} parent=1 // pred_fallthru
      _
    // Predicated region
    $region58: #{bert_base_lexer_forward.1} parent=1 // pred_check
      _
    $region59: #{bert_base_lexer_forward.1} parent=1 // pred_check_branch
      %167 = sbr.rel (0) target = $region61
    $region60: #{bert_base_lexer_forward.1} parent=1 // pred_region
      _
    $region61: #{bert_base_lexer_forward.1} parent=1 // pred_fallthru
      _
    // Predicated region
    $region62: #{bert_base_lexer_forward.1} parent=1 // pred_check
      _
    $region63: #{bert_base_lexer_forward.1} parent=1 // pred_check_branch
      %169 = sbr.rel (0) target = $region65
    $region64: #{bert_base_lexer_forward.1} parent=1 // pred_region
      %s171 = ssub.s32 128, 128
      %172 = vsyncadd [#allocation21], %s171
      %s173 = sshll.u32 [#allocation20], 4
      %s174 = int_to_ptr.vmem [resolvable:$true] %s173
      %179 = dma.hbm_to_vmem [thread:$0]  %s15, 128, %s174, [#allocation21], 16, 16, 1
    $region65: #{bert_base_lexer_forward.1} parent=1 // pred_fallthru
      _
    // Predicated region
    $region66: #{bert_base_lexer_forward.1} parent=1 // pred_check
      _
    $region67: #{bert_base_lexer_forward.1} parent=1 // pred_check_branch
      %181 = sbr.rel (0) target = $region69
    $region68: #{bert_base_lexer_forward.1} parent=1 // pred_region
      %s183 = ssub.s32 128, 128
      %184 = vsyncadd [#allocation21], %s183
      %s185 = sshll.u32 [#allocation22], 4
      %s186 = int_to_ptr.vmem [resolvable:$true] %s185
      %191 = dma.hbm_to_vmem [thread:$0]  %s16, 128, %s186, [#allocation21], 16, 16, 1
    $region69: #{bert_base_lexer_forward.1} parent=1 // pred_fallthru
      _
    // Predicated region
    $region70: #{bert_base_lexer_forward.1} parent=1 // pred_check
      _
    $region71: #{bert_base_lexer_forward.1} parent=1 // pred_check_branch
      %193 = sbr.rel (0) target = $region73
    $region72: #{bert_base_lexer_forward.1} parent=1 // pred_region
      %s195 = ssub.s32 128, 128
      %196 = vsyncadd [#allocation24], %s195
      %s197 = sshll.u32 [#allocation23], 4
      %s198 = int_to_ptr.vmem [resolvable:$true] %s197
      %203 = dma.hbm_to_vmem [thread:$0]  %s17, 128, %s198, [#allocation24], 16, 16, 1
    $region73: #{bert_base_lexer_forward.1} parent=1 // pred_fallthru
      _
    // Predicated region
    $region74: #{bert_base_lexer_forward.1} parent=1 // pred_check
      _
    $region75: #{bert_base_lexer_forward.1} parent=1 // pred_check_branch
      %205 = sbr.rel (0) target = $region77
    $region76: #{bert_base_lexer_forward.1} parent=1 // pred_region
      %206 = dma.done [#allocation3], 32
    $region77: #{bert_base_lexer_forward.1} parent=1 // pred_fallthru
      _
    // Predicated region
    $region78: #{bert_base_lexer_forward.1} parent=1 // pred_check
      _
    $region79: #{bert_base_lexer_forward.1} parent=1 // pred_check_branch
      %208 = sbr.rel (0) target = $region81
    $region80: #{bert_base_lexer_forward.1} parent=1 // pred_region
      %209 = dma.done [#allocation6], 32
    $region81: #{bert_base_lexer_forward.1} parent=1 // pred_fallthru
      _
    // Predicated region
    $region82: #{bert_base_lexer_forward.1} parent=1 // pred_check
      _
    $region83: #{bert_base_lexer_forward.1} parent=1 // pred_check_branch
      %211 = sbr.rel (0) target = $region85
    $region84: #{bert_base_lexer_forward.1} parent=1 // pred_region
      %212 = dma.done [#allocation6], 256
    $region85: #{bert_base_lexer_forward.1} parent=1 // pred_fallthru
      _
    // Predicated region
    $region86: #{bert_base_lexer_forward.1} parent=1 // pred_check
      _
    $region87: #{bert_base_lexer_forward.1} parent=1 // pred_check_branch
      %214 = sbr.rel (0) target = $region89
    $region88: #{bert_base_lexer_forward.1} parent=1 // pred_region
      %215 = dma.done [#allocation9], 512
    $region89: #{bert_base_lexer_forward.1} parent=1 // pred_fallthru
      _
    // Predicated region
    $region90: #{bert_base_lexer_forward.1} parent=1 // pred_check
      _
    $region91: #{bert_base_lexer_forward.1} parent=1 // pred_check_branch
      %217 = sbr.rel (0) target = $region93
    $region92: #{bert_base_lexer_forward.1} parent=1 // pred_region
      %218 = dma.done [#allocation9], 256
    $region93: #{bert_base_lexer_forward.1} parent=1 // pred_fallthru
      _
    // Predicated region
    $region94: #{bert_base_lexer_forward.1} parent=1 // pred_check
      _
    $region95: #{bert_base_lexer_forward.1} parent=1 // pred_check_branch
      %220 = sbr.rel (0) target = $region97
    $region96: #{bert_base_lexer_forward.1} parent=1 // pred_region
      %221 = dma.done [#allocation12], 256
    $region97: #{bert_base_lexer_forward.1} parent=1 // pred_fallthru
      _
    // Predicated region
    $region98: #{bert_base_lexer_forward.1} parent=1 // pred_check
      _
    $region99: #{bert_base_lexer_forward.1} parent=1 // pred_check_branch
      %223 = sbr.rel (0) target = $region101
    $region100: #{bert_base_lexer_forward.1} parent=1 // pred_region
      %224 = dma.done [#allocation12], 128
    $region101: #{bert_base_lexer_forward.1} parent=1 // pred_fallthru
      _
    // Predicated region
    $region102: #{bert_base_lexer_forward.1} parent=1 // pred_check
      _
    $region103: #{bert_base_lexer_forward.1} parent=1 // pred_check_branch
      %226 = sbr.rel (0) target = $region105
    $region104: #{bert_base_lexer_forward.1} parent=1 // pred_region
      %227 = dma.done [#allocation15], 128
    $region105: #{bert_base_lexer_forward.1} parent=1 // pred_fallthru
      _
    // Predicated region
    $region106: #{bert_base_lexer_forward.1} parent=1 // pred_check
      _
    $region107: #{bert_base_lexer_forward.1} parent=1 // pred_check_branch
      %229 = sbr.rel (0) target = $region109
    $region108: #{bert_base_lexer_forward.1} parent=1 // pred_region
      %230 = dma.done [#allocation15], 128
    $region109: #{bert_base_lexer_forward.1} parent=1 // pred_fallthru
      _
    // Predicated region
    $region110: #{bert_base_lexer_forward.1} parent=1 // pred_check
      _
    $region111: #{bert_base_lexer_forward.1} parent=1 // pred_check_branch
      %232 = sbr.rel (0) target = $region113
    $region112: #{bert_base_lexer_forward.1} parent=1 // pred_region
      %233 = dma.done [#allocation18], 4096
    $region113: #{bert_base_lexer_forward.1} parent=1 // pred_fallthru
      _
    // Predicated region
    $region114: #{bert_base_lexer_forward.1} parent=1 // pred_check
      _
    $region115: #{bert_base_lexer_forward.1} parent=1 // pred_check_branch
      %235 = sbr.rel (0) target = $region117
    $region116: #{bert_base_lexer_forward.1} parent=1 // pred_region
      %236 = dma.done [#allocation18], 128
    $region117: #{bert_base_lexer_forward.1} parent=1 // pred_fallthru
      _
    // Predicated region
    $region118: #{bert_base_lexer_forward.1} parent=1 // pred_check
      _
    $region119: #{bert_base_lexer_forward.1} parent=1 // pred_check_branch
      %238 = sbr.rel (0) target = $region121
    $region120: #{bert_base_lexer_forward.1} parent=1 // pred_region
      %239 = dma.done [#allocation21], 128
    $region121: #{bert_base_lexer_forward.1} parent=1 // pred_fallthru
      _
    // Predicated region
    $region122: #{bert_base_lexer_forward.1} parent=1 // pred_check
      _
    $region123: #{bert_base_lexer_forward.1} parent=1 // pred_check_branch
      %241 = sbr.rel (0) target = $region125
    $region124: #{bert_base_lexer_forward.1} parent=1 // pred_region
      %242 = dma.done [#allocation21], 128
    $region125: #{bert_base_lexer_forward.1} parent=1 // pred_fallthru
      _
    // Predicated region
    $region126: #{bert_base_lexer_forward.1} parent=1 // pred_check
      _
    $region127: #{bert_base_lexer_forward.1} parent=1 // pred_check_branch
      %244 = sbr.rel (0) target = $region129
    $region128: #{bert_base_lexer_forward.1} parent=1 // pred_region
      %245 = dma.done [#allocation24], 128
    $region129: #{bert_base_lexer_forward.1} parent=1 // pred_fallthru
      _
    %v247 = vld [vmem:[#allocation7] sm:$0xff]
    %v248 = vld [vmem:[#allocation7 + $0x8] sm:$0xff]
    %v249 = vld [vmem:[#allocation2] sm:$0x3]
    %v250 = vlaneseq
    %v251 = vshrl.u32 %v250, 7
    %v252 = vsub.s32 0, %v251
    %v253 = vrot.slane %v249, %v252
    %255 = vbcast.lane.b32.xlu0 %v253, 256
    %v256 = vpop.permute.xlu0 %255
    %v257 = vlaneseq
    %v258 = vshrl.u32 %v257, 7
    %v259 = vsub.s32 1, %v258
    %v260 = vrot.slane %v249, %v259
    %262 = vbcast.lane.b32.xlu0 %v260, 256
    %v263 = vpop.permute.xlu0 %262
    %v264 = vlaneseq
    %v265 = vand.u32 %v264, 127
    %vm266 = vcmp.eq.s32.totalorder %v256, %v265
    %vm267 = vcmp.eq.s32.totalorder %v263, %v265
    %v268 = vsel %vm266, 1, 0
    %v269 = vsel %vm267, 1, 0
    %v270 = vcvt.s32.f32 %v268
    %v271 = vcvt.s32.f32 %v269
    %v272 = vld [vmem:[#allocation5] sm:$0x3]
    %v273 = vlaneseq
    %v274 = vshrl.u32 %v273, 7
    %v275 = vsub.s32 0, %v274
    %v276 = vrot.slane %v272, %v275
    %278 = vbcast.lane.b32.xlu0 %v276, 256
    %v279 = vpop.permute.xlu0 %278
    %v280 = vlaneseq
    %v281 = vshrl.u32 %v280, 7
    %v282 = vsub.s32 1, %v281
    %v283 = vrot.slane %v272, %v282
    %285 = vbcast.lane.b32.xlu0 %v283, 256
    %v286 = vpop.permute.xlu0 %285
    %vm287 = vcmp.eq.s32.totalorder %v279, %v265
    %vm288 = vcmp.eq.s32.totalorder %v286, %v265
    %v289 = vsel %vm287, 1, 0
    %v290 = vsel %vm288, 1, 0
    %v291 = vcvt.s32.f32 %v289
    %v292 = vcvt.s32.f32 %v290
    %v293 = vpack.c.bf16 %v291, %v291
    %v294 = vpack.c.bf16 %v292, %v292
    %v295 = vld [vmem:[%s3] sm:$0xff]
    %v296 = vld [vmem:[%s3 + $0x8] sm:$0xff]
    %v297 = vld [vmem:[%s3 + $0x10] sm:$0xff]
    %v298 = vld [vmem:[%s3 + $0x18] sm:$0xff]
    %v299 = vld [vmem:[%s3 + $0x20] sm:$0xff]
    %v300 = vld [vmem:[%s3 + $0x28] sm:$0xff]
    %v301 = vld [vmem:[%s3 + $0x30] sm:$0xff]
    %v302 = vld [vmem:[%s3 + $0x38] sm:$0xff]
    %v303 = vld [vmem:[#allocation8] sm:$0xf]
    %v304 = vld [vmem:[#allocation8 + $0x4] sm:$0xf]
    %v305 = vld [vmem:[#allocation8 + $0x8] sm:$0xf]
    %v306 = vld [vmem:[#allocation8 + $0xc] sm:$0xf]
    %v307 = vld [vmem:[#allocation8 + $0x10] sm:$0xf]
    %v308 = vld [vmem:[#allocation8 + $0x14] sm:$0xf]
    %v309 = vld [vmem:[#allocation8 + $0x18] sm:$0xf]
    %v310 = vld [vmem:[#allocation8 + $0x1c] sm:$0xf]
    %v311 = vld [vmem:[#allocation10] sm:$0xff]
    %v312 = vld [vmem:[#allocation10 + $0x8] sm:$0xff]
    %v315 = vunpack.c.l.b16 %v293
    %v316 = vunpack.c.l.b16 %v294
    %v317 = vpack.c.b16 %v316, %v315
    %v326 = vunpack.c.l.b16 %v303
    %v327 = vunpack.c.l.b16 %v304
    %v328 = vunpack.c.l.b16 %v305
    %v329 = vunpack.c.l.b16 %v306
    %v330 = vunpack.c.l.b16 %v307
    %v331 = vunpack.c.l.b16 %v308
    %v332 = vunpack.c.l.b16 %v309
    %v333 = vunpack.c.l.b16 %v310
    %v334 = vpack.c.b16 %v327, %v326
    %v335 = vpack.c.b16 %v329, %v328
    %v336 = vpack.c.b16 %v331, %v330
    %v337 = vpack.c.b16 %v333, %v332
    %vm342 = vcmask 523264
    %v344 = vsel %vm342, %v317, 0
    %346 = vmatprep.subr.bf16.mxu0 0
    %347 = vmatpush1.bf16.msra.mxu0 %v334
    %348 = vmatprep.subr.bf16.mxu0 0
    %349 = vmatpush1.bf16.msra.mxu0 %v335
    %350 = vmatprep.subr.bf16.mxu0 0
    %351 = vmatpush1.bf16.msra.mxu0 %v336
    %352 = vmatprep.subr.bf16.mxu0 0
    %353 = vmatpush1.bf16.msra.mxu0 %v337
    %354 = vmatprep.subr.bf16.mxu0 0
    %355 = vmatpush1.bf16.msra.mxu0 0
    %356 = vmatprep.subr.bf16.mxu0 0
    %357 = vmatpush1.bf16.msra.mxu0 0
    %358 = vmatprep.subr.bf16.mxu0 0
    %359 = vmatpush1.bf16.msra.mxu0 0
    %360 = vmatprep.subr.bf16.mxu0 0
    %361 = vmatpush1.bf16.msra.mxu0 0
    %362 = vmatprep.subr.bf16.mxu0 0
    %363 = vmatpush1.bf16.msra.mxu0 0
    %364 = vmatprep.subr.bf16.mxu0 0
    %365 = vmatpush1.bf16.msra.mxu0 0
    %366 = vmatprep.subr.bf16.mxu0 0
    %367 = vmatpush1.bf16.msra.mxu0 0
    %368 = vmatprep.subr.bf16.mxu0 0
    %369 = vmatpush1.bf16.msra.mxu0 0
    %370 = vmatprep.subr.bf16.mxu0 0
    %371 = vmatpush1.bf16.msra.mxu0 0
    %372 = vmatprep.subr.bf16.mxu0 0
    %373 = vmatpush1.bf16.msra.mxu0 0
    %374 = vmatprep.subr.bf16.mxu0 0
    %375 = vmatpush1.bf16.msra.mxu0 0
    %376 = vmatprep.subr.bf16.mxu0 0
    %377 = vmatpush1.bf16.msra.mxu0 0
    %378 = vmatprep.mubr.bf16.mxu0 0
    %379 = vmatmul.mubr.bf16.gmra.mrb[0].mxu0 %v344
    %v380 = vpop.f32.mrb[0].mxu0
    %v381 = vadd.f32 %v311, %v380
    %v382 = vpop.f32.mrb[0].mxu0
    %v383 = vpop.f32.mrb[0].mxu0
    %v384 = vadd.f32 %v312, %v383
    %v385 = vpop.f32.mrb[0].mxu0
    %386 = vdwg.mxu0
    %v387 = vpack.c.bf16 %v384, %v381
    %v388 = vld [vmem:[%s6] sm:$0xff]
    %v389 = vld [vmem:[%s6 + $0x8] sm:$0xff]
    %v390 = vld [vmem:[%s6 + $0x10] sm:$0xff]
    %v391 = vld [vmem:[%s6 + $0x18] sm:$0xff]
    %v392 = vld [vmem:[%s6 + $0x20] sm:$0xff]
    %v393 = vld [vmem:[%s6 + $0x28] sm:$0xff]
    %v394 = vld [vmem:[%s6 + $0x30] sm:$0xff]
    %v395 = vld [vmem:[%s6 + $0x38] sm:$0xff]
    %v396 = vld [vmem:[#allocation11] sm:$0x3]
    %v398 = vlaneseq
    %v399 = vshrl.u32 %v398, 7
    %v400 = vsub.s32 0, %v399
    %v401 = vrot.slane %v396, %v400
    %v402 = vlaneseq
    %v403 = vshrl.u32 %v402, 7
    %v404 = vsub.s32 1, %v403
    %v405 = vrot.slane %v396, %v404
    %v416 = vunpack.c.l.b16 %v388
    %v417 = vunpack.c.h.b16 %v388
    %v418 = vunpack.c.l.b16 %v389
    %v419 = vunpack.c.h.b16 %v389
    %v420 = vunpack.c.l.b16 %v390
    %v421 = vunpack.c.h.b16 %v390
    %v422 = vunpack.c.l.b16 %v391
    %v423 = vunpack.c.h.b16 %v391
    %v424 = vunpack.c.l.b16 %v392
    %v425 = vunpack.c.h.b16 %v392
    %v426 = vunpack.c.l.b16 %v393
    %v427 = vunpack.c.h.b16 %v393
    %v428 = vunpack.c.l.b16 %v394
    %v429 = vunpack.c.h.b16 %v394
    %v430 = vunpack.c.l.b16 %v395
    %v431 = vunpack.c.h.b16 %v395
    %v432 = vpack.c.b16 %v418, %v416
    %v433 = vpack.c.b16 %v419, %v417
    %v434 = vpack.c.b16 %v422, %v420
    %v435 = vpack.c.b16 %v423, %v421
    %v436 = vpack.c.b16 %v426, %v424
    %v437 = vpack.c.b16 %v427, %v425
    %v438 = vpack.c.b16 %v430, %v428
    %v439 = vpack.c.b16 %v431, %v429
    %v449 = vsel %vm342, %v387, 0
    %451 = vmatprep.subr.bf16.mxu0 %v433
    %452 = vmatpush1.bf16.msra.mxu0 %v432
    %453 = vmatprep.subr.bf16.mxu0 %v435
    %454 = vmatpush1.bf16.msra.mxu0 %v434
    %455 = vmatprep.subr.bf16.mxu0 %v437
    %456 = vmatpush1.bf16.msra.mxu0 %v436
    %457 = vmatprep.subr.bf16.mxu0 %v439
    %458 = vmatpush1.bf16.msra.mxu0 %v438
    %459 = vmatprep.subr.bf16.mxu0 0
    %460 = vmatpush1.bf16.msra.mxu0 0
    %461 = vmatprep.subr.bf16.mxu0 0
    %462 = vmatpush1.bf16.msra.mxu0 0
    %463 = vmatprep.subr.bf16.mxu0 0
    %464 = vmatpush1.bf16.msra.mxu0 0
    %465 = vmatprep.subr.bf16.mxu0 0
    %466 = vmatpush1.bf16.msra.mxu0 0
    %467 = vmatprep.subr.bf16.mxu0 0
    %468 = vmatpush1.bf16.msra.mxu0 0
    %469 = vmatprep.subr.bf16.mxu0 0
    %470 = vmatpush1.bf16.msra.mxu0 0
    %471 = vmatprep.subr.bf16.mxu0 0
    %472 = vmatpush1.bf16.msra.mxu0 0
    %473 = vmatprep.subr.bf16.mxu0 0
    %474 = vmatpush1.bf16.msra.mxu0 0
    %475 = vmatprep.subr.bf16.mxu0 0
    %476 = vmatpush1.bf16.msra.mxu0 0
    %477 = vmatprep.subr.bf16.mxu0 0
    %478 = vmatpush1.bf16.msra.mxu0 0
    %479 = vmatprep.subr.bf16.mxu0 0
    %480 = vmatpush1.bf16.msra.mxu0 0
    %481 = vmatprep.subr.bf16.mxu0 0
    %482 = vmatpush1.bf16.msra.mxu0 0
    %483 = vmatprep.mubr.bf16.mxu0 0
    %484 = vmatmul.mubr.bf16.gmra.mrb[0].mxu0 %v449
    %v485 = vpop.f32.mrb[0].mxu0
    %v486 = vadd.f32 %v401, %v485
    %v487 = vpop.f32.mrb[0].mxu0
    %v488 = vadd.f32 %v405, %v487
    %v489 = vpop.f32.mrb[0].mxu0
    %v490 = vadd.f32 %v401, %v489
    %v491 = vpop.f32.mrb[0].mxu0
    %v492 = vadd.f32 %v405, %v491
    %493 = vdwg.mxu0
    %v494 = vpack.c.bf16 %v490, %v486
    %496 = vrot.lane.b32.xlu0 %v494, 96
    %v497 = vpop.permute.xlu0 %496
    %vm498 = vcmask 261120
    %v500 = vsel %vm498, %v494, 0
    %v503 = vsel %vm498, %v497, 0
    %505 = vmatprep.subr.bf16.mxu0 0
    %506 = vmatpush1.bf16.xpose.msra.mxu0 %v503
    %507 = vmatprep.subr.bf16.mxu0 0
    %508 = vmatpush1.bf16.xpose.msra.mxu0 0
    %509 = vmatprep.subr.bf16.mxu0 0
    %510 = vmatpush1.bf16.xpose.msra.mxu0 0
    %511 = vmatprep.subr.bf16.mxu0 0
    %512 = vmatpush1.bf16.xpose.msra.mxu0 0
    %513 = vmatprep.subr.bf16.mxu0 0
    %514 = vmatpush1.bf16.xpose.msra.mxu0 0
    %515 = vmatprep.subr.bf16.mxu0 0
    %516 = vmatpush1.bf16.xpose.msra.mxu0 0
    %517 = vmatprep.subr.bf16.mxu0 0
    %518 = vmatpush1.bf16.xpose.msra.mxu0 0
    %519 = vmatprep.subr.bf16.mxu0 0
    %520 = vmatpush1.bf16.xpose.msra.mxu0 0
    %521 = vmatprep.subr.bf16.mxu0 0
    %522 = vmatpush1.bf16.xpose.msra.mxu0 0
    %523 = vmatprep.subr.bf16.mxu0 0
    %524 = vmatpush1.bf16.xpose.msra.mxu0 0
    %525 = vmatprep.subr.bf16.mxu0 0
    %526 = vmatpush1.bf16.xpose.msra.mxu0 0
    %527 = vmatprep.subr.bf16.mxu0 0
    %528 = vmatpush1.bf16.xpose.msra.mxu0 0
    %529 = vmatprep.subr.bf16.mxu0 0
    %530 = vmatpush1.bf16.xpose.msra.mxu0 0
    %531 = vmatprep.subr.bf16.mxu0 0
    %532 = vmatpush1.bf16.xpose.msra.mxu0 0
    %533 = vmatprep.subr.bf16.mxu0 0
    %534 = vmatpush1.bf16.xpose.msra.mxu0 0
    %535 = vmatprep.subr.bf16.mxu0 0
    %536 = vmatpush1.bf16.xpose.msra.mxu0 0
    %537 = vmatprep.mubr.bf16.mxu0 0
    %538 = vmatmul.mubr.bf16.gmra.mrb[0].mxu0 %v500
    %v539 = vpop.f32.mrb[0].mxu0
    %v540 = vadd.f32 0.0, %v539
    %v541 = vpop.f32.mrb[0].mxu0
    %v542 = vpop.f32.mrb[0].mxu0
    %v543 = vadd.f32 0.0, %v542
    %v544 = vpop.f32.mrb[0].mxu0
    %545 = vdwg.mxu0
    %v546 = vmul.f32 %v540, 0.17677669
    %v547 = vmul.f32 %v543, 0.17677669
    %v548 = vadd.f32 %v546, %v247
    %v549 = vadd.f32 %v547, %v248
    %vm550 = vcmask 130048
    %v551 = vsel %vm550, %v548, -inf
    %552 = vmax.xlane.f32.xlu0 %v551
    %v553 = vpop.xlane.xlu0 %552
    %v554 = vsel %vm550, %v549, -inf
    %555 = vmax.xlane.f32.xlu0 %v554
    %v556 = vpop.xlane.xlu0 %555
    %v557 = vsub.f32 %v548, %v553
    %v558 = vsub.f32 %v549, %v556
    %v559 = vmul.f32 %v557, 1.442695
    %v560 = vpow.pop %v559
    %v561 = vmul.f32 %v558, 1.442695
    %v562 = vpow.pop %v561
    %v563 = vsel %vm550, %v560, 0.0
    %564 = vadd.xlane.f32.xlu0 %v563
    %v565 = vpop.xlane.xlu0 %564
    %v566 = vsel %vm550, %v562, 0.0
    %567 = vadd.xlane.f32.xlu0 %v566
    %v568 = vpop.xlane.xlu0 %567
    %v569 = vrcp.pop %v565
    %v570 = vrcp.pop %v568
    %v571 = vmul.f32 %v560, %v569
    %v572 = vmul.f32 %v562, %v570
    %v573 = vpack.c.bf16 %v572, %v571
    %574 = vrot.lane.b32.xlu0 %v494, 64
    %v575 = vpop.permute.xlu0 %574
    %v578 = vsel %vm550, %v573, 0
    %580 = vmatprep.subr.bf16.mxu0 0
    %581 = vmatpush1.bf16.msra.mxu0 %v575
    %582 = vmatprep.subr.bf16.mxu0 0
    %583 = vmatpush1.bf16.msra.mxu0 0
    %584 = vmatprep.subr.bf16.mxu0 0
    %585 = vmatpush1.bf16.msra.mxu0 0
    %586 = vmatprep.subr.bf16.mxu0 0
    %587 = vmatpush1.bf16.msra.mxu0 0
    %588 = vmatprep.subr.bf16.mxu0 0
    %589 = vmatpush1.bf16.msra.mxu0 0
    %590 = vmatprep.subr.bf16.mxu0 0
    %591 = vmatpush1.bf16.msra.mxu0 0
    %592 = vmatprep.subr.bf16.mxu0 0
    %593 = vmatpush1.bf16.msra.mxu0 0
    %594 = vmatprep.subr.bf16.mxu0 0
    %595 = vmatpush1.bf16.msra.mxu0 0
    %596 = vmatprep.subr.bf16.mxu0 0
    %597 = vmatpush1.bf16.msra.mxu0 0
    %598 = vmatprep.subr.bf16.mxu0 0
    %599 = vmatpush1.bf16.msra.mxu0 0
    %600 = vmatprep.subr.bf16.mxu0 0
    %601 = vmatpush1.bf16.msra.mxu0 0
    %602 = vmatprep.subr.bf16.mxu0 0
    %603 = vmatpush1.bf16.msra.mxu0 0
    %604 = vmatprep.subr.bf16.mxu0 0
    %605 = vmatpush1.bf16.msra.mxu0 0
    %606 = vmatprep.subr.bf16.mxu0 0
    %607 = vmatpush1.bf16.msra.mxu0 0
    %608 = vmatprep.subr.bf16.mxu0 0
    %609 = vmatpush1.bf16.msra.mxu0 0
    %610 = vmatprep.subr.bf16.mxu0 0
    %611 = vmatpush1.bf16.msra.mxu0 0
    %612 = vmatprep.mubr.bf16.mxu0 0
    %613 = vmatmul.mubr.bf16.gmra.mrb[0].mxu0 %v578
    %v614 = vpop.f32.mrb[0].mxu0
    %v615 = vadd.f32 0.0, %v614
    %v616 = vpop.f32.mrb[0].mxu0
    %v617 = vpop.f32.mrb[0].mxu0
    %v618 = vadd.f32 0.0, %v617
    %v619 = vpop.f32.mrb[0].mxu0
    %620 = vdwg.mxu0
    %v621 = vpack.c.bf16 %v492, %v488
    %623 = vrot.lane.b32.xlu0 %v621, 96
    %v624 = vpop.permute.xlu0 %623
    %v626 = vsel %vm498, %v621, 0
    %v629 = vsel %vm498, %v624, 0
    %631 = vmatprep.subr.bf16.mxu0 0
    %632 = vmatpush1.bf16.xpose.msra.mxu0 %v629
    %633 = vmatprep.subr.bf16.mxu0 0
    %634 = vmatpush1.bf16.xpose.msra.mxu0 0
    %635 = vmatprep.subr.bf16.mxu0 0
    %636 = vmatpush1.bf16.xpose.msra.mxu0 0
    %637 = vmatprep.subr.bf16.mxu0 0
    %638 = vmatpush1.bf16.xpose.msra.mxu0 0
    %639 = vmatprep.subr.bf16.mxu0 0
    %640 = vmatpush1.bf16.xpose.msra.mxu0 0
    %641 = vmatprep.subr.bf16.mxu0 0
    %642 = vmatpush1.bf16.xpose.msra.mxu0 0
    %643 = vmatprep.subr.bf16.mxu0 0
    %644 = vmatpush1.bf16.xpose.msra.mxu0 0
    %645 = vmatprep.subr.bf16.mxu0 0
    %646 = vmatpush1.bf16.xpose.msra.mxu0 0
    %647 = vmatprep.subr.bf16.mxu0 0
    %648 = vmatpush1.bf16.xpose.msra.mxu0 0
    %649 = vmatprep.subr.bf16.mxu0 0
    %650 = vmatpush1.bf16.xpose.msra.mxu0 0
    %651 = vmatprep.subr.bf16.mxu0 0
    %652 = vmatpush1.bf16.xpose.msra.mxu0 0
    %653 = vmatprep.subr.bf16.mxu0 0
    %654 = vmatpush1.bf16.xpose.msra.mxu0 0
    %655 = vmatprep.subr.bf16.mxu0 0
    %656 = vmatpush1.bf16.xpose.msra.mxu0 0
    %657 = vmatprep.subr.bf16.mxu0 0
    %658 = vmatpush1.bf16.xpose.msra.mxu0 0
    %659 = vmatprep.subr.bf16.mxu0 0
    %660 = vmatpush1.bf16.xpose.msra.mxu0 0
    %661 = vmatprep.subr.bf16.mxu0 0
    %662 = vmatpush1.bf16.xpose.msra.mxu0 0
    %663 = vmatprep.mubr.bf16.mxu0 0
    %664 = vmatmul.mubr.bf16.gmra.mrb[0].mxu0 %v626
    %v665 = vpop.f32.mrb[0].mxu0
    %v666 = vadd.f32 0.0, %v665
    %v667 = vpop.f32.mrb[0].mxu0
    %v668 = vpop.f32.mrb[0].mxu0
    %v669 = vadd.f32 0.0, %v668
    %v670 = vpop.f32.mrb[0].mxu0
    %671 = vdwg.mxu0
    %v672 = vmul.f32 %v666, 0.17677669
    %v673 = vmul.f32 %v669, 0.17677669
    %v674 = vadd.f32 %v672, %v247
    %v675 = vadd.f32 %v673, %v248
    %v676 = vsel %vm550, %v674, -inf
    %677 = vmax.xlane.f32.xlu0 %v676
    %v678 = vpop.xlane.xlu0 %677
    %v679 = vsel %vm550, %v675, -inf
    %680 = vmax.xlane.f32.xlu0 %v679
    %v681 = vpop.xlane.xlu0 %680
    %v682 = vsub.f32 %v674, %v678
    %v683 = vsub.f32 %v675, %v681
    %v684 = vmul.f32 %v682, 1.442695
    %v685 = vpow.pop %v684
    %v686 = vmul.f32 %v683, 1.442695
    %v687 = vpow.pop %v686
    %v688 = vsel %vm550, %v685, 0.0
    %689 = vadd.xlane.f32.xlu0 %v688
    %v690 = vpop.xlane.xlu0 %689
    %v691 = vsel %vm550, %v687, 0.0
    %692 = vadd.xlane.f32.xlu0 %v691
    %v693 = vpop.xlane.xlu0 %692
    %v694 = vrcp.pop %v690
    %v695 = vrcp.pop %v693
    %v696 = vmul.f32 %v685, %v694
    %v697 = vmul.f32 %v687, %v695
    %v698 = vpack.c.bf16 %v697, %v696
    %699 = vrot.lane.b32.xlu0 %v621, 64
    %v700 = vpop.permute.xlu0 %699
    %v703 = vsel %vm550, %v698, 0
    %705 = vmatprep.subr.bf16.mxu0 0
    %706 = vmatpush1.bf16.msra.mxu0 %v700
    %707 = vmatprep.subr.bf16.mxu0 0
    %708 = vmatpush1.bf16.msra.mxu0 0
    %709 = vmatprep.subr.bf16.mxu0 0
    %710 = vmatpush1.bf16.msra.mxu0 0
    %711 = vmatprep.subr.bf16.mxu0 0
    %712 = vmatpush1.bf16.msra.mxu0 0
    %713 = vmatprep.subr.bf16.mxu0 0
    %714 = vmatpush1.bf16.msra.mxu0 0
    %715 = vmatprep.subr.bf16.mxu0 0
    %716 = vmatpush1.bf16.msra.mxu0 0
    %717 = vmatprep.subr.bf16.mxu0 0
    %718 = vmatpush1.bf16.msra.mxu0 0
    %719 = vmatprep.subr.bf16.mxu0 0
    %720 = vmatpush1.bf16.msra.mxu0 0
    %721 = vmatprep.subr.bf16.mxu0 0
    %722 = vmatpush1.bf16.msra.mxu0 0
    %723 = vmatprep.subr.bf16.mxu0 0
    %724 = vmatpush1.bf16.msra.mxu0 0
    %725 = vmatprep.subr.bf16.mxu0 0
    %726 = vmatpush1.bf16.msra.mxu0 0
    %727 = vmatprep.subr.bf16.mxu0 0
    %728 = vmatpush1.bf16.msra.mxu0 0
    %729 = vmatprep.subr.bf16.mxu0 0
    %730 = vmatpush1.bf16.msra.mxu0 0
    %731 = vmatprep.subr.bf16.mxu0 0
    %732 = vmatpush1.bf16.msra.mxu0 0
    %733 = vmatprep.subr.bf16.mxu0 0
    %734 = vmatpush1.bf16.msra.mxu0 0
    %735 = vmatprep.subr.bf16.mxu0 0
    %736 = vmatpush1.bf16.msra.mxu0 0
    %737 = vmatprep.mubr.bf16.mxu0 0
    %738 = vmatmul.mubr.bf16.gmra.mrb[0].mxu0 %v703
    %v739 = vpop.f32.mrb[0].mxu0
    %v740 = vadd.f32 0.0, %v739
    %v741 = vpop.f32.mrb[0].mxu0
    %v742 = vpop.f32.mrb[0].mxu0
    %v743 = vadd.f32 0.0, %v742
    %v744 = vpop.f32.mrb[0].mxu0
    %745 = vdwg.mxu0
    %748 = vrot.lane.b32.xlu0 %v740, 32
    %v749 = vpop.permute.xlu0 %748
    %750 = vrot.lane.b32.xlu0 %v743, 32
    %v751 = vpop.permute.xlu0 %750
    %v754 = vsel %vm498, %v615, %v749
    %v755 = vsel %vm498, %v618, %v751
    %v756 = vpack.c.bf16 %v755, %v754
    %v757 = vld [vmem:[%s8] sm:$0xf]
    %v758 = vld [vmem:[%s8 + $0x4] sm:$0xf]
    %v759 = vld [vmem:[%s8 + $0x8] sm:$0xf]
    %v760 = vld [vmem:[%s8 + $0xc] sm:$0xf]
    %v761 = vld [vmem:[%s8 + $0x10] sm:$0xf]
    %v762 = vld [vmem:[%s8 + $0x14] sm:$0xf]
    %v763 = vld [vmem:[%s8 + $0x18] sm:$0xf]
    %v764 = vld [vmem:[%s8 + $0x1c] sm:$0xf]
    %v765 = vld [vmem:[#allocation13] sm:$0x1]
    %v767 = vlaneseq
    %v768 = vshrl.u32 %v767, 7
    %v769 = vsub.s32 0, %v768
    %v770 = vrot.slane %v765, %v769
    %v780 = vunpack.c.l.b16 %v757
    %v781 = vunpack.c.l.b16 %v758
    %v782 = vunpack.c.l.b16 %v759
    %v783 = vunpack.c.l.b16 %v760
    %v784 = vunpack.c.l.b16 %v761
    %v785 = vunpack.c.l.b16 %v762
    %v786 = vunpack.c.l.b16 %v763
    %v787 = vunpack.c.l.b16 %v764
    %v788 = vpack.c.b16 %v781, %v780
    %v789 = vpack.c.b16 %v783, %v782
    %v790 = vpack.c.b16 %v785, %v784
    %v791 = vpack.c.b16 %v787, %v786
    %v797 = vsel %vm342, %v756, 0
    %799 = vmatprep.subr.bf16.mxu0 0
    %800 = vmatpush1.bf16.msra.mxu0 %v788
    %801 = vmatprep.subr.bf16.mxu0 0
    %802 = vmatpush1.bf16.msra.mxu0 %v789
    %803 = vmatprep.subr.bf16.mxu0 0
    %804 = vmatpush1.bf16.msra.mxu0 %v790
    %805 = vmatprep.subr.bf16.mxu0 0
    %806 = vmatpush1.bf16.msra.mxu0 %v791
    %807 = vmatprep.subr.bf16.mxu0 0
    %808 = vmatpush1.bf16.msra.mxu0 0
    %809 = vmatprep.subr.bf16.mxu0 0
    %810 = vmatpush1.bf16.msra.mxu0 0
    %811 = vmatprep.subr.bf16.mxu0 0
    %812 = vmatpush1.bf16.msra.mxu0 0
    %813 = vmatprep.subr.bf16.mxu0 0
    %814 = vmatpush1.bf16.msra.mxu0 0
    %815 = vmatprep.subr.bf16.mxu0 0
    %816 = vmatpush1.bf16.msra.mxu0 0
    %817 = vmatprep.subr.bf16.mxu0 0
    %818 = vmatpush1.bf16.msra.mxu0 0
    %819 = vmatprep.subr.bf16.mxu0 0
    %820 = vmatpush1.bf16.msra.mxu0 0
    %821 = vmatprep.subr.bf16.mxu0 0
    %822 = vmatpush1.bf16.msra.mxu0 0
    %823 = vmatprep.subr.bf16.mxu0 0
    %824 = vmatpush1.bf16.msra.mxu0 0
    %825 = vmatprep.subr.bf16.mxu0 0
    %826 = vmatpush1.bf16.msra.mxu0 0
    %827 = vmatprep.subr.bf16.mxu0 0
    %828 = vmatpush1.bf16.msra.mxu0 0
    %829 = vmatprep.subr.bf16.mxu0 0
    %830 = vmatpush1.bf16.msra.mxu0 0
    %831 = vmatprep.mubr.bf16.mxu0 0
    %832 = vmatmul.mubr.bf16.gmra.mrb[0].mxu0 %v797
    %v833 = vpop.f32.mrb[0].mxu0
    %v834 = vadd.f32 %v770, %v833
    %v835 = vpop.f32.mrb[0].mxu0
    %v836 = vpop.f32.mrb[0].mxu0
    %v837 = vadd.f32 %v770, %v836
    %v838 = vpop.f32.mrb[0].mxu0
    %839 = vdwg.mxu0
    %v840 = vadd.f32 %v381, %v834
    %v841 = vadd.f32 %v384, %v837
    %v842 = vld [vmem:[#allocation14] sm:$0x1]
    %v843 = vld [vmem:[#allocation16] sm:$0x1]
    %v844 = vsel %vm342, %v840, 0.0
    %845 = vadd.xlane.f32.xlu0 %v844
    %v846 = vpop.xlane.xlu0 %845
    %v847 = vsel %vm342, %v841, 0.0
    %848 = vadd.xlane.f32.xlu0 %v847
    %v849 = vpop.xlane.xlu0 %848
    %v850 = vrcp.pop 64.0
    %v851 = vmul.f32 %v846, %v850
    %v852 = vmul.f32 %v849, %v850
    %v853 = vsub.f32 %v840, %v851
    %v854 = vsub.f32 %v841, %v852
    %v855 = vmul.f32 %v853, %v853
    %v856 = vmul.f32 %v854, %v854
    %v857 = vsel %vm342, %v855, 0.0
    %858 = vadd.xlane.f32.xlu0 %v857
    %v859 = vpop.xlane.xlu0 %858
    %v860 = vsel %vm342, %v856, 0.0
    %861 = vadd.xlane.f32.xlu0 %v860
    %v862 = vpop.xlane.xlu0 %861
    %v863 = vmul.f32 %v859, %v850
    %v864 = vmul.f32 %v862, %v850
    %v865 = vadd.f32 %v863, 1e-12
    %v866 = vadd.f32 %v864, 1e-12
    %v867 = vrsqrt.pop %v865
    %v868 = vrsqrt.pop %v866
    %v869 = vmul.f32 %v853, %v867
    %v870 = vmul.f32 %v854, %v868
    %v872 = vlaneseq
    %v873 = vshrl.u32 %v872, 7
    %v874 = vsub.s32 0, %v873
    %v875 = vrot.slane %v842, %v874
    %v877 = vmul.f32 %v869, %v875
    %v878 = vmul.f32 %v870, %v875
    %v880 = vlaneseq
    %v881 = vshrl.u32 %v880, 7
    %v882 = vsub.s32 0, %v881
    %v883 = vrot.slane %v843, %v882
    %v885 = vadd.f32 %v877, %v883
    %v886 = vadd.f32 %v878, %v883
    %v887 = vpack.c.bf16 %v886, %v885
    %v888 = vld [vmem:[#allocation17] sm:$0xf]
    %v889 = vld [vmem:[#allocation17 + $0x4] sm:$0xf]
    %v890 = vld [vmem:[#allocation17 + $0x8] sm:$0xf]
    %v891 = vld [vmem:[#allocation17 + $0xc] sm:$0xf]
    %v892 = vld [vmem:[#allocation17 + $0x10] sm:$0xf]
    %v893 = vld [vmem:[#allocation17 + $0x14] sm:$0xf]
    %v894 = vld [vmem:[#allocation17 + $0x18] sm:$0xf]
    %v895 = vld [vmem:[#allocation17 + $0x1c] sm:$0xf]
    %v896 = vld [vmem:[#allocation19] sm:$0x1]
    %v898 = vlaneseq
    %v899 = vshrl.u32 %v898, 7
    %v900 = vsub.s32 0, %v899
    %v901 = vrot.slane %v896, %v900
    %v911 = vunpack.c.l.b16 %v888
    %v912 = vunpack.c.l.b16 %v889
    %v913 = vunpack.c.l.b16 %v890
    %v914 = vunpack.c.l.b16 %v891
    %v915 = vunpack.c.l.b16 %v892
    %v916 = vunpack.c.l.b16 %v893
    %v917 = vunpack.c.l.b16 %v894
    %v918 = vunpack.c.l.b16 %v895
    %v919 = vpack.c.b16 %v912, %v911
    %v920 = vpack.c.b16 %v914, %v913
    %v921 = vpack.c.b16 %v916, %v915
    %v922 = vpack.c.b16 %v918, %v917
    %v928 = vsel %vm342, %v887, 0
    %930 = vmatprep.subr.bf16.mxu0 0
    %931 = vmatpush1.bf16.msra.mxu0 %v919
    %932 = vmatprep.subr.bf16.mxu0 0
    %933 = vmatpush1.bf16.msra.mxu0 %v920
    %934 = vmatprep.subr.bf16.mxu0 0
    %935 = vmatpush1.bf16.msra.mxu0 %v921
    %936 = vmatprep.subr.bf16.mxu0 0
    %937 = vmatpush1.bf16.msra.mxu0 %v922
    %938 = vmatprep.subr.bf16.mxu0 0
    %939 = vmatpush1.bf16.msra.mxu0 0
    %940 = vmatprep.subr.bf16.mxu0 0
    %941 = vmatpush1.bf16.msra.mxu0 0
    %942 = vmatprep.subr.bf16.mxu0 0
    %943 = vmatpush1.bf16.msra.mxu0 0
    %944 = vmatprep.subr.bf16.mxu0 0
    %945 = vmatpush1.bf16.msra.mxu0 0
    %946 = vmatprep.subr.bf16.mxu0 0
    %947 = vmatpush1.bf16.msra.mxu0 0
    %948 = vmatprep.subr.bf16.mxu0 0
    %949 = vmatpush1.bf16.msra.mxu0 0
    %950 = vmatprep.subr.bf16.mxu0 0
    %951 = vmatpush1.bf16.msra.mxu0 0
    %952 = vmatprep.subr.bf16.mxu0 0
    %953 = vmatpush1.bf16.msra.mxu0 0
    %954 = vmatprep.subr.bf16.mxu0 0
    %955 = vmatpush1.bf16.msra.mxu0 0
    %956 = vmatprep.subr.bf16.mxu0 0
    %957 = vmatpush1.bf16.msra.mxu0 0
    %958 = vmatprep.subr.bf16.mxu0 0
    %959 = vmatpush1.bf16.msra.mxu0 0
    %960 = vmatprep.subr.bf16.mxu0 0
    %961 = vmatpush1.bf16.msra.mxu0 0
    %962 = vmatprep.mubr.bf16.mxu0 0
    %963 = vmatmul.mubr.bf16.gmra.mrb[0].mxu0 %v928
    %v964 = vpop.f32.mrb[0].mxu0
    %v965 = vadd.f32 %v901, %v964
    %v966 = vpop.f32.mrb[0].mxu0
    %v967 = vpop.f32.mrb[0].mxu0
    %v968 = vadd.f32 %v901, %v967
    %v969 = vpop.f32.mrb[0].mxu0
    %970 = vdwg.mxu0
    %v971 = vmul.f32 %v965, %v965
    %v972 = vmul.f32 %v968, %v968
    %v973 = vmul.f32 %v965, %v971
    %v974 = vmul.f32 %v968, %v972
    %v975 = vmul.f32 %v973, 0.044715
    %v976 = vmul.f32 %v974, 0.044715
    %v977 = vadd.f32 %v965, %v975
    %v978 = vadd.f32 %v968, %v976
    %v979 = vmul.f32 %v977, 0.7978846
    %v980 = vmul.f32 %v978, 0.7978846
    %v981 = vtanh.pop %v979
    %v982 = vtanh.pop %v980
    %v983 = vadd.f32 %v981, 1.0
    %v984 = vadd.f32 %v982, 1.0
    %v985 = vmul.f32 %v983, 0.5
    %v986 = vmul.f32 %v984, 0.5
    %v987 = vmul.f32 %v965, %v985
    %v988 = vmul.f32 %v968, %v986
    %v989 = vpack.c.bf16 %v988, %v987
    %v990 = vld [vmem:[%s14] sm:$0xf]
    %v991 = vld [vmem:[%s14 + $0x4] sm:$0xf]
    %v992 = vld [vmem:[%s14 + $0x8] sm:$0xf]
    %v993 = vld [vmem:[%s14 + $0xc] sm:$0xf]
    %v994 = vld [vmem:[%s14 + $0x10] sm:$0xf]
    %v995 = vld [vmem:[%s14 + $0x14] sm:$0xf]
    %v996 = vld [vmem:[%s14 + $0x18] sm:$0xf]
    %v997 = vld [vmem:[%s14 + $0x1c] sm:$0xf]
    %v998 = vld [vmem:[%s14 + $0x20] sm:$0xf]
    %v999 = vld [vmem:[%s14 + $0x24] sm:$0xf]
    %v1000 = vld [vmem:[%s14 + $0x28] sm:$0xf]
    %v1001 = vld [vmem:[%s14 + $0x2c] sm:$0xf]
    %v1002 = vld [vmem:[%s14 + $0x30] sm:$0xf]
    %v1003 = vld [vmem:[%s14 + $0x34] sm:$0xf]
    %v1004 = vld [vmem:[%s14 + $0x38] sm:$0xf]
    %v1005 = vld [vmem:[%s14 + $0x3c] sm:$0xf]
    %v1006 = vld [vmem:[#allocation20] sm:$0x1]
    %v1008 = vlaneseq
    %v1009 = vshrl.u32 %v1008, 7
    %v1010 = vsub.s32 0, %v1009
    %v1011 = vrot.slane %v1006, %v1010
    %v1029 = vunpack.c.l.b16 %v990
    %v1030 = vunpack.c.l.b16 %v991
    %v1031 = vunpack.c.l.b16 %v992
    %v1032 = vunpack.c.l.b16 %v993
    %v1033 = vunpack.c.l.b16 %v994
    %v1034 = vunpack.c.l.b16 %v995
    %v1035 = vunpack.c.l.b16 %v996
    %v1036 = vunpack.c.l.b16 %v997
    %v1037 = vunpack.c.l.b16 %v998
    %v1038 = vunpack.c.l.b16 %v999
    %v1039 = vunpack.c.l.b16 %v1000
    %v1040 = vunpack.c.l.b16 %v1001
    %v1041 = vunpack.c.l.b16 %v1002
    %v1042 = vunpack.c.l.b16 %v1003
    %v1043 = vunpack.c.l.b16 %v1004
    %v1044 = vunpack.c.l.b16 %v1005
    %v1045 = vpack.c.b16 %v1030, %v1029
    %v1046 = vpack.c.b16 %v1032, %v1031
    %v1047 = vpack.c.b16 %v1034, %v1033
    %v1048 = vpack.c.b16 %v1036, %v1035
    %v1049 = vpack.c.b16 %v1038, %v1037
    %v1050 = vpack.c.b16 %v1040, %v1039
    %v1051 = vpack.c.b16 %v1042, %v1041
    %v1052 = vpack.c.b16 %v1044, %v1043
    %1061 = vmatprep.subr.bf16.mxu0 0
    %1062 = vmatpush1.bf16.msra.mxu0 %v1045
    %1063 = vmatprep.subr.bf16.mxu0 0
    %1064 = vmatpush1.bf16.msra.mxu0 %v1046
    %1065 = vmatprep.subr.bf16.mxu0 0
    %1066 = vmatpush1.bf16.msra.mxu0 %v1047
    %1067 = vmatprep.subr.bf16.mxu0 0
    %1068 = vmatpush1.bf16.msra.mxu0 %v1048
    %1069 = vmatprep.subr.bf16.mxu0 0
    %1070 = vmatpush1.bf16.msra.mxu0 %v1049
    %1071 = vmatprep.subr.bf16.mxu0 0
    %1072 = vmatpush1.bf16.msra.mxu0 %v1050
    %1073 = vmatprep.subr.bf16.mxu0 0
    %1074 = vmatpush1.bf16.msra.mxu0 %v1051
    %1075 = vmatprep.subr.bf16.mxu0 0
    %1076 = vmatpush1.bf16.msra.mxu0 %v1052
    %1077 = vmatprep.subr.bf16.mxu0 0
    %1078 = vmatpush1.bf16.msra.mxu0 0
    %1079 = vmatprep.subr.bf16.mxu0 0
    %1080 = vmatpush1.bf16.msra.mxu0 0
    %1081 = vmatprep.subr.bf16.mxu0 0
    %1082 = vmatpush1.bf16.msra.mxu0 0
    %1083 = vmatprep.subr.bf16.mxu0 0
    %1084 = vmatpush1.bf16.msra.mxu0 0
    %1085 = vmatprep.subr.bf16.mxu0 0
    %1086 = vmatpush1.bf16.msra.mxu0 0
    %1087 = vmatprep.subr.bf16.mxu0 0
    %1088 = vmatpush1.bf16.msra.mxu0 0
    %1089 = vmatprep.subr.bf16.mxu0 0
    %1090 = vmatpush1.bf16.msra.mxu0 0
    %1091 = vmatprep.subr.bf16.mxu0 0
    %1092 = vmatpush1.bf16.msra.mxu0 0
    %1093 = vmatprep.mubr.bf16.mxu0 0
    %1094 = vmatmul.mubr.bf16.gmra.mrb[0].mxu0 %v989
    %v1095 = vpop.f32.mrb[0].mxu0
    %v1096 = vadd.f32 %v1011, %v1095
    %v1097 = vpop.f32.mrb[0].mxu0
    %v1098 = vpop.f32.mrb[0].mxu0
    %v1099 = vadd.f32 %v1011, %v1098
    %v1100 = vpop.f32.mrb[0].mxu0
    %1101 = vdwg.mxu0
    %v1102 = vadd.f32 %v885, %v1096
    %v1103 = vadd.f32 %v886, %v1099
    %v1104 = vld [vmem:[#allocation22] sm:$0x1]
    %v1105 = vld [vmem:[#allocation23] sm:$0x1]
    %v1106 = vsel %vm342, %v1102, 0.0
    %1107 = vadd.xlane.f32.xlu0 %v1106
    %v1108 = vpop.xlane.xlu0 %1107
    %v1109 = vsel %vm342, %v1103, 0.0
    %1110 = vadd.xlane.f32.xlu0 %v1109
    %v1111 = vpop.xlane.xlu0 %1110
    %v1112 = vmul.f32 %v1108, %v850
    %v1113 = vmul.f32 %v1111, %v850
    %v1114 = vsub.f32 %v1102, %v1112
    %v1115 = vsub.f32 %v1103, %v1113
    %v1116 = vmul.f32 %v1114, %v1114
    %v1117 = vmul.f32 %v1115, %v1115
    %v1118 = vsel %vm342, %v1116, 0.0
    %1119 = vadd.xlane.f32.xlu0 %v1118
    %v1120 = vpop.xlane.xlu0 %1119
    %v1121 = vsel %vm342, %v1117, 0.0
    %1122 = vadd.xlane.f32.xlu0 %v1121
    %v1123 = vpop.xlane.xlu0 %1122
    %v1124 = vmul.f32 %v1120, %v850
    %v1125 = vmul.f32 %v1123, %v850
    %v1126 = vadd.f32 %v1124, 1e-12
    %v1127 = vadd.f32 %v1125, 1e-12
    %v1128 = vrsqrt.pop %v1126
    %v1129 = vrsqrt.pop %v1127
    %v1130 = vmul.f32 %v1114, %v1128
    %v1131 = vmul.f32 %v1115, %v1129
    %v1133 = vlaneseq
    %v1134 = vshrl.u32 %v1133, 7
    %v1135 = vsub.s32 0, %v1134
    %v1136 = vrot.slane %v1104, %v1135
    %v1138 = vmul.f32 %v1130, %v1136
    %v1139 = vmul.f32 %v1131, %v1136
    %v1141 = vlaneseq
    %v1142 = vshrl.u32 %v1141, 7
    %v1143 = vsub.s32 0, %v1142
    %v1144 = vrot.slane %v1105, %v1143
    %v1146 = vadd.f32 %v1138, %v1144
    %v1147 = vadd.f32 %v1139, %v1144
    %v1148 = vpack.c.bf16 %v1147, %v1146
    %s1149 = scalar_lea.vmem %s6, 64
    %v1150 = vld [vmem:[%s1149] sm:$0xff]
    %v1151 = vld [vmem:[%s1149 + $0x8] sm:$0xff]
    %v1152 = vld [vmem:[%s1149 + $0x10] sm:$0xff]
    %v1153 = vld [vmem:[%s1149 + $0x18] sm:$0xff]
    %v1154 = vld [vmem:[%s1149 + $0x20] sm:$0xff]
    %v1155 = vld [vmem:[%s1149 + $0x28] sm:$0xff]
    %v1156 = vld [vmem:[%s1149 + $0x30] sm:$0xff]
    %v1157 = vld [vmem:[%s1149 + $0x38] sm:$0xff]
    %s1158 = scalar_lea.vmem [#allocation11], 2
    %v1159 = vld [vmem:[%s1158] sm:$0x3]
    %v1161 = vlaneseq
    %v1162 = vshrl.u32 %v1161, 7
    %v1163 = vsub.s32 0, %v1162
    %v1164 = vrot.slane %v1159, %v1163
    %v1165 = vlaneseq
    %v1166 = vshrl.u32 %v1165, 7
    %v1167 = vsub.s32 1, %v1166
    %v1168 = vrot.slane %v1159, %v1167
    %v1179 = vunpack.c.l.b16 %v1150
    %v1180 = vunpack.c.h.b16 %v1150
    %v1181 = vunpack.c.l.b16 %v1151
    %v1182 = vunpack.c.h.b16 %v1151
    %v1183 = vunpack.c.l.b16 %v1152
    %v1184 = vunpack.c.h.b16 %v1152
    %v1185 = vunpack.c.l.b16 %v1153
    %v1186 = vunpack.c.h.b16 %v1153
    %v1187 = vunpack.c.l.b16 %v1154
    %v1188 = vunpack.c.h.b16 %v1154
    %v1189 = vunpack.c.l.b16 %v1155
    %v1190 = vunpack.c.h.b16 %v1155
    %v1191 = vunpack.c.l.b16 %v1156
    %v1192 = vunpack.c.h.b16 %v1156
    %v1193 = vunpack.c.l.b16 %v1157
    %v1194 = vunpack.c.h.b16 %v1157
    %v1195 = vpack.c.b16 %v1181, %v1179
    %v1196 = vpack.c.b16 %v1182, %v1180
    %v1197 = vpack.c.b16 %v1185, %v1183
    %v1198 = vpack.c.b16 %v1186, %v1184
    %v1199 = vpack.c.b16 %v1189, %v1187
    %v1200 = vpack.c.b16 %v1190, %v1188
    %v1201 = vpack.c.b16 %v1193, %v1191
    %v1202 = vpack.c.b16 %v1194, %v1192
    %v1212 = vsel %vm342, %v1148, 0
    %1214 = vmatprep.subr.bf16.mxu0 %v1196
    %1215 = vmatpush1.bf16.msra.mxu0 %v1195
    %1216 = vmatprep.subr.bf16.mxu0 %v1198
    %1217 = vmatpush1.bf16.msra.mxu0 %v1197
    %1218 = vmatprep.subr.bf16.mxu0 %v1200
    %1219 = vmatpush1.bf16.msra.mxu0 %v1199
    %1220 = vmatprep.subr.bf16.mxu0 %v1202
    %1221 = vmatpush1.bf16.msra.mxu0 %v1201
    %1222 = vmatprep.subr.bf16.mxu0 0
    %1223 = vmatpush1.bf16.msra.mxu0 0
    %1224 = vmatprep.subr.bf16.mxu0 0
    %1225 = vmatpush1.bf16.msra.mxu0 0
    %1226 = vmatprep.subr.bf16.mxu0 0
    %1227 = vmatpush1.bf16.msra.mxu0 0
    %1228 = vmatprep.subr.bf16.mxu0 0
    %1229 = vmatpush1.bf16.msra.mxu0 0
    %1230 = vmatprep.subr.bf16.mxu0 0
    %1231 = vmatpush1.bf16.msra.mxu0 0
    %1232 = vmatprep.subr.bf16.mxu0 0
    %1233 = vmatpush1.bf16.msra.mxu0 0
    %1234 = vmatprep.subr.bf16.mxu0 0
    %1235 = vmatpush1.bf16.msra.mxu0 0
    %1236 = vmatprep.subr.bf16.mxu0 0
    %1237 = vmatpush1.bf16.msra.mxu0 0
    %1238 = vmatprep.subr.bf16.mxu0 0
    %1239 = vmatpush1.bf16.msra.mxu0 0
    %1240 = vmatprep.subr.bf16.mxu0 0
    %1241 = vmatpush1.bf16.msra.mxu0 0
    %1242 = vmatprep.subr.bf16.mxu0 0
    %1243 = vmatpush1.bf16.msra.mxu0 0
    %1244 = vmatprep.subr.bf16.mxu0 0
    %1245 = vmatpush1.bf16.msra.mxu0 0
    %1246 = vmatprep.mubr.bf16.mxu0 0
    %1247 = vmatmul.mubr.bf16.gmra.mrb[0].mxu0 %v1212
    %v1248 = vpop.f32.mrb[0].mxu0
    %v1249 = vadd.f32 %v1164, %v1248
    %v1250 = vpop.f32.mrb[0].mxu0
    %v1251 = vadd.f32 %v1168, %v1250
    %v1252 = vpop.f32.mrb[0].mxu0
    %v1253 = vadd.f32 %v1164, %v1252
    %v1254 = vpop.f32.mrb[0].mxu0
    %v1255 = vadd.f32 %v1168, %v1254
    %1256 = vdwg.mxu0
    %v1257 = vpack.c.bf16 %v1253, %v1249
    %1259 = vrot.lane.b32.xlu0 %v1257, 96
    %v1260 = vpop.permute.xlu0 %1259
    %v1262 = vsel %vm498, %v1257, 0
    %v1265 = vsel %vm498, %v1260, 0
    %1267 = vmatprep.subr.bf16.mxu0 0
    %1268 = vmatpush1.bf16.xpose.msra.mxu0 %v1265
    %1269 = vmatprep.subr.bf16.mxu0 0
    %1270 = vmatpush1.bf16.xpose.msra.mxu0 0
    %1271 = vmatprep.subr.bf16.mxu0 0
    %1272 = vmatpush1.bf16.xpose.msra.mxu0 0
    %1273 = vmatprep.subr.bf16.mxu0 0
    %1274 = vmatpush1.bf16.xpose.msra.mxu0 0
    %1275 = vmatprep.subr.bf16.mxu0 0
    %1276 = vmatpush1.bf16.xpose.msra.mxu0 0
    %1277 = vmatprep.subr.bf16.mxu0 0
    %1278 = vmatpush1.bf16.xpose.msra.mxu0 0
    %1279 = vmatprep.subr.bf16.mxu0 0
    %1280 = vmatpush1.bf16.xpose.msra.mxu0 0
    %1281 = vmatprep.subr.bf16.mxu0 0
    %1282 = vmatpush1.bf16.xpose.msra.mxu0 0
    %1283 = vmatprep.subr.bf16.mxu0 0
    %1284 = vmatpush1.bf16.xpose.msra.mxu0 0
    %1285 = vmatprep.subr.bf16.mxu0 0
    %1286 = vmatpush1.bf16.xpose.msra.mxu0 0
    %1287 = vmatprep.subr.bf16.mxu0 0
    %1288 = vmatpush1.bf16.xpose.msra.mxu0 0
    %1289 = vmatprep.subr.bf16.mxu0 0
    %1290 = vmatpush1.bf16.xpose.msra.mxu0 0
    %1291 = vmatprep.subr.bf16.mxu0 0
    %1292 = vmatpush1.bf16.xpose.msra.mxu0 0
    %1293 = vmatprep.subr.bf16.mxu0 0
    %1294 = vmatpush1.bf16.xpose.msra.mxu0 0
    %1295 = vmatprep.subr.bf16.mxu0 0
    %1296 = vmatpush1.bf16.xpose.msra.mxu0 0
    %1297 = vmatprep.subr.bf16.mxu0 0
    %1298 = vmatpush1.bf16.xpose.msra.mxu0 0
    %1299 = vmatprep.mubr.bf16.mxu0 0
    %1300 = vmatmul.mubr.bf16.gmra.mrb[0].mxu0 %v1262
    %v1301 = vpop.f32.mrb[0].mxu0
    %v1302 = vadd.f32 0.0, %v1301
    %v1303 = vpop.f32.mrb[0].mxu0
    %v1304 = vpop.f32.mrb[0].mxu0
    %v1305 = vadd.f32 0.0, %v1304
    %v1306 = vpop.f32.mrb[0].mxu0
    %1307 = vdwg.mxu0
    %v1308 = vmul.f32 %v1302, 0.17677669
    %v1309 = vmul.f32 %v1305, 0.17677669
    %v1310 = vadd.f32 %v1308, %v247
    %v1311 = vadd.f32 %v1309, %v248
    %v1312 = vsel %vm550, %v1310, -inf
    %1313 = vmax.xlane.f32.xlu0 %v1312
    %v1314 = vpop.xlane.xlu0 %1313
    %v1315 = vsel %vm550, %v1311, -inf
    %1316 = vmax.xlane.f32.xlu0 %v1315
    %v1317 = vpop.xlane.xlu0 %1316
    %v1318 = vsub.f32 %v1310, %v1314
    %v1319 = vsub.f32 %v1311, %v1317
    %v1320 = vmul.f32 %v1318, 1.442695
    %v1321 = vpow.pop %v1320
    %v1322 = vmul.f32 %v1319, 1.442695
    %v1323 = vpow.pop %v1322
    %v1324 = vsel %vm550, %v1321, 0.0
    %1325 = vadd.xlane.f32.xlu0 %v1324
    %v1326 = vpop.xlane.xlu0 %1325
    %v1327 = vsel %vm550, %v1323, 0.0
    %1328 = vadd.xlane.f32.xlu0 %v1327
    %v1329 = vpop.xlane.xlu0 %1328
    %v1330 = vrcp.pop %v1326
    %v1331 = vrcp.pop %v1329
    %v1332 = vmul.f32 %v1321, %v1330
    %v1333 = vmul.f32 %v1323, %v1331
    %v1334 = vpack.c.bf16 %v1333, %v1332
    %1335 = vrot.lane.b32.xlu0 %v1257, 64
    %v1336 = vpop.permute.xlu0 %1335
    %v1339 = vsel %vm550, %v1334, 0
    %1341 = vmatprep.subr.bf16.mxu0 0
    %1342 = vmatpush1.bf16.msra.mxu0 %v1336
    %1343 = vmatprep.subr.bf16.mxu0 0
    %1344 = vmatpush1.bf16.msra.mxu0 0
    %1345 = vmatprep.subr.bf16.mxu0 0
    %1346 = vmatpush1.bf16.msra.mxu0 0
    %1347 = vmatprep.subr.bf16.mxu0 0
    %1348 = vmatpush1.bf16.msra.mxu0 0
    %1349 = vmatprep.subr.bf16.mxu0 0
    %1350 = vmatpush1.bf16.msra.mxu0 0
    %1351 = vmatprep.subr.bf16.mxu0 0
    %1352 = vmatpush1.bf16.msra.mxu0 0
    %1353 = vmatprep.subr.bf16.mxu0 0
    %1354 = vmatpush1.bf16.msra.mxu0 0
    %1355 = vmatprep.subr.bf16.mxu0 0
    %1356 = vmatpush1.bf16.msra.mxu0 0
    %1357 = vmatprep.subr.bf16.mxu0 0
    %1358 = vmatpush1.bf16.msra.mxu0 0
    %1359 = vmatprep.subr.bf16.mxu0 0
    %1360 = vmatpush1.bf16.msra.mxu0 0
    %1361 = vmatprep.subr.bf16.mxu0 0
    %1362 = vmatpush1.bf16.msra.mxu0 0
    %1363 = vmatprep.subr.bf16.mxu0 0
    %1364 = vmatpush1.bf16.msra.mxu0 0
    %1365 = vmatprep.subr.bf16.mxu0 0
    %1366 = vmatpush1.bf16.msra.mxu0 0
    %1367 = vmatprep.subr.bf16.mxu0 0
    %1368 = vmatpush1.bf16.msra.mxu0 0
    %1369 = vmatprep.subr.bf16.mxu0 0
    %1370 = vmatpush1.bf16.msra.mxu0 0
    %1371 = vmatprep.subr.bf16.mxu0 0
    %1372 = vmatpush1.bf16.msra.mxu0 0
    %1373 = vmatprep.mubr.bf16.mxu0 0
    %1374 = vmatmul.mubr.bf16.gmra.mrb[0].mxu0 %v1339
    %v1375 = vpop.f32.mrb[0].mxu0
    %v1376 = vadd.f32 0.0, %v1375
    %v1377 = vpop.f32.mrb[0].mxu0
    %v1378 = vpop.f32.mrb[0].mxu0
    %v1379 = vadd.f32 0.0, %v1378
    %v1380 = vpop.f32.mrb[0].mxu0
    %1381 = vdwg.mxu0
    %v1382 = vpack.c.bf16 %v1255, %v1251
    %1384 = vrot.lane.b32.xlu0 %v1382, 96
    %v1385 = vpop.permute.xlu0 %1384
    %v1387 = vsel %vm498, %v1382, 0
    %v1390 = vsel %vm498, %v1385, 0
    %1392 = vmatprep.subr.bf16.mxu0 0
    %1393 = vmatpush1.bf16.xpose.msra.mxu0 %v1390
    %1394 = vmatprep.subr.bf16.mxu0 0
    %1395 = vmatpush1.bf16.xpose.msra.mxu0 0
    %1396 = vmatprep.subr.bf16.mxu0 0
    %1397 = vmatpush1.bf16.xpose.msra.mxu0 0
    %1398 = vmatprep.subr.bf16.mxu0 0
    %1399 = vmatpush1.bf16.xpose.msra.mxu0 0
    %1400 = vmatprep.subr.bf16.mxu0 0
    %1401 = vmatpush1.bf16.xpose.msra.mxu0 0
    %1402 = vmatprep.subr.bf16.mxu0 0
    %1403 = vmatpush1.bf16.xpose.msra.mxu0 0
    %1404 = vmatprep.subr.bf16.mxu0 0
    %1405 = vmatpush1.bf16.xpose.msra.mxu0 0
    %1406 = vmatprep.subr.bf16.mxu0 0
    %1407 = vmatpush1.bf16.xpose.msra.mxu0 0
    %1408 = vmatprep.subr.bf16.mxu0 0
    %1409 = vmatpush1.bf16.xpose.msra.mxu0 0
    %1410 = vmatprep.subr.bf16.mxu0 0
    %1411 = vmatpush1.bf16.xpose.msra.mxu0 0
    %1412 = vmatprep.subr.bf16.mxu0 0
    %1413 = vmatpush1.bf16.xpose.msra.mxu0 0
    %1414 = vmatprep.subr.bf16.mxu0 0
    %1415 = vmatpush1.bf16.xpose.msra.mxu0 0
    %1416 = vmatprep.subr.bf16.mxu0 0
    %1417 = vmatpush1.bf16.xpose.msra.mxu0 0
    %1418 = vmatprep.subr.bf16.mxu0 0
    %1419 = vmatpush1.bf16.xpose.msra.mxu0 0
    %1420 = vmatprep.subr.bf16.mxu0 0
    %1421 = vmatpush1.bf16.xpose.msra.mxu0 0
    %1422 = vmatprep.subr.bf16.mxu0 0
    %1423 = vmatpush1.bf16.xpose.msra.mxu0 0
    %1424 = vmatprep.mubr.bf16.mxu0 0
    %1425 = vmatmul.mubr.bf16.gmra.mrb[0].mxu0 %v1387
    %v1426 = vpop.f32.mrb[0].mxu0
    %v1427 = vadd.f32 0.0, %v1426
    %v1428 = vpop.f32.mrb[0].mxu0
    %v1429 = vpop.f32.mrb[0].mxu0
    %v1430 = vadd.f32 0.0, %v1429
    %v1431 = vpop.f32.mrb[0].mxu0
    %1432 = vdwg.mxu0
    %v1433 = vmul.f32 %v1427, 0.17677669
    %v1434 = vmul.f32 %v1430, 0.17677669
    %v1435 = vadd.f32 %v1433, %v247
    %v1436 = vadd.f32 %v1434, %v248
    %v1437 = vsel %vm550, %v1435, -inf
    %1438 = vmax.xlane.f32.xlu0 %v1437
    %v1439 = vpop.xlane.xlu0 %1438
    %v1440 = vsel %vm550, %v1436, -inf
    %1441 = vmax.xlane.f32.xlu0 %v1440
    %v1442 = vpop.xlane.xlu0 %1441
    %v1443 = vsub.f32 %v1435, %v1439
    %v1444 = vsub.f32 %v1436, %v1442
    %v1445 = vmul.f32 %v1443, 1.442695
    %v1446 = vpow.pop %v1445
    %v1447 = vmul.f32 %v1444, 1.442695
    %v1448 = vpow.pop %v1447
    %v1449 = vsel %vm550, %v1446, 0.0
    %1450 = vadd.xlane.f32.xlu0 %v1449
    %v1451 = vpop.xlane.xlu0 %1450
    %v1452 = vsel %vm550, %v1448, 0.0
    %1453 = vadd.xlane.f32.xlu0 %v1452
    %v1454 = vpop.xlane.xlu0 %1453
    %v1455 = vrcp.pop %v1451
    %v1456 = vrcp.pop %v1454
    %v1457 = vmul.f32 %v1446, %v1455
    %v1458 = vmul.f32 %v1448, %v1456
    %v1459 = vpack.c.bf16 %v1458, %v1457
    %1460 = vrot.lane.b32.xlu0 %v1382, 64
    %v1461 = vpop.permute.xlu0 %1460
    %v1464 = vsel %vm550, %v1459, 0
    %1466 = vmatprep.subr.bf16.mxu0 0
    %1467 = vmatpush1.bf16.msra.mxu0 %v1461
    %1468 = vmatprep.subr.bf16.mxu0 0
    %1469 = vmatpush1.bf16.msra.mxu0 0
    %1470 = vmatprep.subr.bf16.mxu0 0
    %1471 = vmatpush1.bf16.msra.mxu0 0
    %1472 = vmatprep.subr.bf16.mxu0 0
    %1473 = vmatpush1.bf16.msra.mxu0 0
    %1474 = vmatprep.subr.bf16.mxu0 0
    %1475 = vmatpush1.bf16.msra.mxu0 0
    %1476 = vmatprep.subr.bf16.mxu0 0
    %1477 = vmatpush1.bf16.msra.mxu0 0
    %1478 = vmatprep.subr.bf16.mxu0 0
    %1479 = vmatpush1.bf16.msra.mxu0 0
    %1480 = vmatprep.subr.bf16.mxu0 0
    %1481 = vmatpush1.bf16.msra.mxu0 0
    %1482 = vmatprep.subr.bf16.mxu0 0
    %1483 = vmatpush1.bf16.msra.mxu0 0
    %1484 = vmatprep.subr.bf16.mxu0 0
    %1485 = vmatpush1.bf16.msra.mxu0 0
    %1486 = vmatprep.subr.bf16.mxu0 0
    %1487 = vmatpush1.bf16.msra.mxu0 0
    %1488 = vmatprep.subr.bf16.mxu0 0
    %1489 = vmatpush1.bf16.msra.mxu0 0
    %1490 = vmatprep.subr.bf16.mxu0 0
    %1491 = vmatpush1.bf16.msra.mxu0 0
    %1492 = vmatprep.subr.bf16.mxu0 0
    %1493 = vmatpush1.bf16.msra.mxu0 0
    %1494 = vmatprep.subr.bf16.mxu0 0
    %1495 = vmatpush1.bf16.msra.mxu0 0
    %1496 = vmatprep.subr.bf16.mxu0 0
    %1497 = vmatpush1.bf16.msra.mxu0 0
    %1498 = vmatprep.mubr.bf16.mxu0 0
    %1499 = vmatmul.mubr.bf16.gmra.mrb[0].mxu0 %v1464
    %v1500 = vpop.f32.mrb[0].mxu0
    %v1501 = vadd.f32 0.0, %v1500
    %v1502 = vpop.f32.mrb[0].mxu0
    %v1503 = vpop.f32.mrb[0].mxu0
    %v1504 = vadd.f32 0.0, %v1503
    %v1505 = vpop.f32.mrb[0].mxu0
    %1506 = vdwg.mxu0
    %1509 = vrot.lane.b32.xlu0 %v1501, 32
    %v1510 = vpop.permute.xlu0 %1509
    %1511 = vrot.lane.b32.xlu0 %v1504, 32
    %v1512 = vpop.permute.xlu0 %1511
    %v1515 = vsel %vm498, %v1376, %v1510
    %v1516 = vsel %vm498, %v1379, %v1512
    %v1517 = vpack.c.bf16 %v1516, %v1515
    %s1518 = scalar_lea.vmem %s8, 32
    %v1519 = vld [vmem:[%s1518] sm:$0xf]
    %v1520 = vld [vmem:[%s1518 + $0x4] sm:$0xf]
    %v1521 = vld [vmem:[%s1518 + $0x8] sm:$0xf]
    %v1522 = vld [vmem:[%s1518 + $0xc] sm:$0xf]
    %v1523 = vld [vmem:[%s1518 + $0x10] sm:$0xf]
    %v1524 = vld [vmem:[%s1518 + $0x14] sm:$0xf]
    %v1525 = vld [vmem:[%s1518 + $0x18] sm:$0xf]
    %v1526 = vld [vmem:[%s1518 + $0x1c] sm:$0xf]
    %s1527 = scalar_lea.vmem [#allocation13], 1
    %v1528 = vld [vmem:[%s1527] sm:$0x1]
    %v1530 = vlaneseq
    %v1531 = vshrl.u32 %v1530, 7
    %v1532 = vsub.s32 0, %v1531
    %v1533 = vrot.slane %v1528, %v1532
    %v1543 = vunpack.c.l.b16 %v1519
    %v1544 = vunpack.c.l.b16 %v1520
    %v1545 = vunpack.c.l.b16 %v1521
    %v1546 = vunpack.c.l.b16 %v1522
    %v1547 = vunpack.c.l.b16 %v1523
    %v1548 = vunpack.c.l.b16 %v1524
    %v1549 = vunpack.c.l.b16 %v1525
    %v1550 = vunpack.c.l.b16 %v1526
    %v1551 = vpack.c.b16 %v1544, %v1543
    %v1552 = vpack.c.b16 %v1546, %v1545
    %v1553 = vpack.c.b16 %v1548, %v1547
    %v1554 = vpack.c.b16 %v1550, %v1549
    %v1560 = vsel %vm342, %v1517, 0
    %1562 = vmatprep.subr.bf16.mxu0 0
    %1563 = vmatpush1.bf16.msra.mxu0 %v1551
    %1564 = vmatprep.subr.bf16.mxu0 0
    %1565 = vmatpush1.bf16.msra.mxu0 %v1552
    %1566 = vmatprep.subr.bf16.mxu0 0
    %1567 = vmatpush1.bf16.msra.mxu0 %v1553
    %1568 = vmatprep.subr.bf16.mxu0 0
    %1569 = vmatpush1.bf16.msra.mxu0 %v1554
    %1570 = vmatprep.subr.bf16.mxu0 0
    %1571 = vmatpush1.bf16.msra.mxu0 0
    %1572 = vmatprep.subr.bf16.mxu0 0
    %1573 = vmatpush1.bf16.msra.mxu0 0
    %1574 = vmatprep.subr.bf16.mxu0 0
    %1575 = vmatpush1.bf16.msra.mxu0 0
    %1576 = vmatprep.subr.bf16.mxu0 0
    %1577 = vmatpush1.bf16.msra.mxu0 0
    %1578 = vmatprep.subr.bf16.mxu0 0
    %1579 = vmatpush1.bf16.msra.mxu0 0
    %1580 = vmatprep.subr.bf16.mxu0 0
    %1581 = vmatpush1.bf16.msra.mxu0 0
    %1582 = vmatprep.subr.bf16.mxu0 0
    %1583 = vmatpush1.bf16.msra.mxu0 0
    %1584 = vmatprep.subr.bf16.mxu0 0
    %1585 = vmatpush1.bf16.msra.mxu0 0
    %1586 = vmatprep.subr.bf16.mxu0 0
    %1587 = vmatpush1.bf16.msra.mxu0 0
    %1588 = vmatprep.subr.bf16.mxu0 0
    %1589 = vmatpush1.bf16.msra.mxu0 0
    %1590 = vmatprep.subr.bf16.mxu0 0
    %1591 = vmatpush1.bf16.msra.mxu0 0
    %1592 = vmatprep.subr.bf16.mxu0 0
    %1593 = vmatpush1.bf16.msra.mxu0 0
    %1594 = vmatprep.mubr.bf16.mxu0 0
    %1595 = vmatmul.mubr.bf16.gmra.mrb[0].mxu0 %v1560
    %v1596 = vpop.f32.mrb[0].mxu0
    %v1597 = vadd.f32 %v1533, %v1596
    %v1598 = vpop.f32.mrb[0].mxu0
    %v1599 = vpop.f32.mrb[0].mxu0
    %v1600 = vadd.f32 %v1533, %v1599
    %v1601 = vpop.f32.mrb[0].mxu0
    %1602 = vdwg.mxu0
    %v1603 = vadd.f32 %v1146, %v1597
    %v1604 = vadd.f32 %v1147, %v1600
    %s1605 = scalar_lea.vmem [#allocation14], 1
    %v1606 = vld [vmem:[%s1605] sm:$0x1]
    %s1607 = scalar_lea.vmem [#allocation16], 1
    %v1608 = vld [vmem:[%s1607] sm:$0x1]
    %v1609 = vsel %vm342, %v1603, 0.0
    %1610 = vadd.xlane.f32.xlu0 %v1609
    %v1611 = vpop.xlane.xlu0 %1610
    %v1612 = vsel %vm342, %v1604, 0.0
    %1613 = vadd.xlane.f32.xlu0 %v1612
    %v1614 = vpop.xlane.xlu0 %1613
    %v1615 = vmul.f32 %v1611, %v850
    %v1616 = vmul.f32 %v1614, %v850
    %v1617 = vsub.f32 %v1603, %v1615
    %v1618 = vsub.f32 %v1604, %v1616
    %v1619 = vmul.f32 %v1617, %v1617
    %v1620 = vmul.f32 %v1618, %v1618
    %v1621 = vsel %vm342, %v1619, 0.0
    %1622 = vadd.xlane.f32.xlu0 %v1621
    %v1623 = vpop.xlane.xlu0 %1622
    %v1624 = vsel %vm342, %v1620, 0.0
    %1625 = vadd.xlane.f32.xlu0 %v1624
    %v1626 = vpop.xlane.xlu0 %1625
    %v1627 = vmul.f32 %v1623, %v850
    %v1628 = vmul.f32 %v1626, %v850
    %v1629 = vadd.f32 %v1627, 1e-12
    %v1630 = vadd.f32 %v1628, 1e-12
    %v1631 = vrsqrt.pop %v1629
    %v1632 = vrsqrt.pop %v1630
    %v1633 = vmul.f32 %v1617, %v1631
    %v1634 = vmul.f32 %v1618, %v1632
    %v1636 = vlaneseq
    %v1637 = vshrl.u32 %v1636, 7
    %v1638 = vsub.s32 0, %v1637
    %v1639 = vrot.slane %v1606, %v1638
    %v1641 = vmul.f32 %v1633, %v1639
    %v1642 = vmul.f32 %v1634, %v1639
    %v1644 = vlaneseq
    %v1645 = vshrl.u32 %v1644, 7
    %v1646 = vsub.s32 0, %v1645
    %v1647 = vrot.slane %v1608, %v1646
    %v1649 = vadd.f32 %v1641, %v1647
    %v1650 = vadd.f32 %v1642, %v1647
    %v1651 = vpack.c.bf16 %v1650, %v1649
    %s1652 = scalar_lea.vmem [#allocation17], 32
    %v1653 = vld [vmem:[%s1652] sm:$0xf]
    %v1654 = vld [vmem:[%s1652 + $0x4] sm:$0xf]
    %v1655 = vld [vmem:[%s1652 + $0x8] sm:$0xf]
    %v1656 = vld [vmem:[%s1652 + $0xc] sm:$0xf]
    %v1657 = vld [vmem:[%s1652 + $0x10] sm:$0xf]
    %v1658 = vld [vmem:[%s1652 + $0x14] sm:$0xf]
    %v1659 = vld [vmem:[%s1652 + $0x18] sm:$0xf]
    %v1660 = vld [vmem:[%s1652 + $0x1c] sm:$0xf]
    %s1661 = scalar_lea.vmem [#allocation19], 1
    %v1662 = vld [vmem:[%s1661] sm:$0x1]
    %v1664 = vlaneseq
    %v1665 = vshrl.u32 %v1664, 7
    %v1666 = vsub.s32 0, %v1665
    %v1667 = vrot.slane %v1662, %v1666
    %v1677 = vunpack.c.l.b16 %v1653
    %v1678 = vunpack.c.l.b16 %v1654
    %v1679 = vunpack.c.l.b16 %v1655
    %v1680 = vunpack.c.l.b16 %v1656
    %v1681 = vunpack.c.l.b16 %v1657
    %v1682 = vunpack.c.l.b16 %v1658
    %v1683 = vunpack.c.l.b16 %v1659
    %v1684 = vunpack.c.l.b16 %v1660
    %v1685 = vpack.c.b16 %v1678, %v1677
    %v1686 = vpack.c.b16 %v1680, %v1679
    %v1687 = vpack.c.b16 %v1682, %v1681
    %v1688 = vpack.c.b16 %v1684, %v1683
    %v1694 = vsel %vm342, %v1651, 0
    %1696 = vmatprep.subr.bf16.mxu0 0
    %1697 = vmatpush1.bf16.msra.mxu0 %v1685
    %1698 = vmatprep.subr.bf16.mxu0 0
    %1699 = vmatpush1.bf16.msra.mxu0 %v1686
    %1700 = vmatprep.subr.bf16.mxu0 0
    %1701 = vmatpush1.bf16.msra.mxu0 %v1687
    %1702 = vmatprep.subr.bf16.mxu0 0
    %1703 = vmatpush1.bf16.msra.mxu0 %v1688
    %1704 = vmatprep.subr.bf16.mxu0 0
    %1705 = vmatpush1.bf16.msra.mxu0 0
    %1706 = vmatprep.subr.bf16.mxu0 0
    %1707 = vmatpush1.bf16.msra.mxu0 0
    %1708 = vmatprep.subr.bf16.mxu0 0
    %1709 = vmatpush1.bf16.msra.mxu0 0
    %1710 = vmatprep.subr.bf16.mxu0 0
    %1711 = vmatpush1.bf16.msra.mxu0 0
    %1712 = vmatprep.subr.bf16.mxu0 0
    %1713 = vmatpush1.bf16.msra.mxu0 0
    %1714 = vmatprep.subr.bf16.mxu0 0
    %1715 = vmatpush1.bf16.msra.mxu0 0
    %1716 = vmatprep.subr.bf16.mxu0 0
    %1717 = vmatpush1.bf16.msra.mxu0 0
    %1718 = vmatprep.subr.bf16.mxu0 0
    %1719 = vmatpush1.bf16.msra.mxu0 0
    %1720 = vmatprep.subr.bf16.mxu0 0
    %1721 = vmatpush1.bf16.msra.mxu0 0
    %1722 = vmatprep.subr.bf16.mxu0 0
    %1723 = vmatpush1.bf16.msra.mxu0 0
    %1724 = vmatprep.subr.bf16.mxu0 0
    %1725 = vmatpush1.bf16.msra.mxu0 0
    %1726 = vmatprep.subr.bf16.mxu0 0
    %1727 = vmatpush1.bf16.msra.mxu0 0
    %1728 = vmatprep.mubr.bf16.mxu0 0
    %1729 = vmatmul.mubr.bf16.gmra.mrb[0].mxu0 %v1694
    %v1730 = vpop.f32.mrb[0].mxu0
    %v1731 = vadd.f32 %v1667, %v1730
    %v1732 = vpop.f32.mrb[0].mxu0
    %v1733 = vpop.f32.mrb[0].mxu0
    %v1734 = vadd.f32 %v1667, %v1733
    %v1735 = vpop.f32.mrb[0].mxu0
    %1736 = vdwg.mxu0
    %v1737 = vmul.f32 %v1731, %v1731
    %v1738 = vmul.f32 %v1734, %v1734
    %v1739 = vmul.f32 %v1731, %v1737
    %v1740 = vmul.f32 %v1734, %v1738
    %v1741 = vmul.f32 %v1739, 0.044715
    %v1742 = vmul.f32 %v1740, 0.044715
    %v1743 = vadd.f32 %v1731, %v1741
    %v1744 = vadd.f32 %v1734, %v1742
    %v1745 = vmul.f32 %v1743, 0.7978846
    %v1746 = vmul.f32 %v1744, 0.7978846
    %v1747 = vtanh.pop %v1745
    %v1748 = vtanh.pop %v1746
    %v1749 = vadd.f32 %v1747, 1.0
    %v1750 = vadd.f32 %v1748, 1.0
    %v1751 = vmul.f32 %v1749, 0.5
    %v1752 = vmul.f32 %v1750, 0.5
    %v1753 = vmul.f32 %v1731, %v1751
    %v1754 = vmul.f32 %v1734, %v1752
    %v1755 = vpack.c.bf16 %v1754, %v1753
    %s1756 = scalar_lea.vmem %s14, 64
    %v1757 = vld [vmem:[%s1756] sm:$0xf]
    %v1758 = vld [vmem:[%s1756 + $0x4] sm:$0xf]
    %v1759 = vld [vmem:[%s1756 + $0x8] sm:$0xf]
    %v1760 = vld [vmem:[%s1756 + $0xc] sm:$0xf]
    %v1761 = vld [vmem:[%s1756 + $0x10] sm:$0xf]
    %v1762 = vld [vmem:[%s1756 + $0x14] sm:$0xf]
    %v1763 = vld [vmem:[%s1756 + $0x18] sm:$0xf]
    %v1764 = vld [vmem:[%s1756 + $0x1c] sm:$0xf]
    %v1765 = vld [vmem:[%s1756 + $0x20] sm:$0xf]
    %v1766 = vld [vmem:[%s1756 + $0x24] sm:$0xf]
    %v1767 = vld [vmem:[%s1756 + $0x28] sm:$0xf]
    %v1768 = vld [vmem:[%s1756 + $0x2c] sm:$0xf]
    %v1769 = vld [vmem:[%s1756 + $0x30] sm:$0xf]
    %v1770 = vld [vmem:[%s1756 + $0x34] sm:$0xf]
    %v1771 = vld [vmem:[%s1756 + $0x38] sm:$0xf]
    %v1772 = vld [vmem:[%s1756 + $0x3c] sm:$0xf]
    %s1773 = scalar_lea.vmem [#allocation20], 1
    %v1774 = vld [vmem:[%s1773] sm:$0x1]
    %v1776 = vlaneseq
    %v1777 = vshrl.u32 %v1776, 7
    %v1778 = vsub.s32 0, %v1777
    %v1779 = vrot.slane %v1774, %v1778
    %v1797 = vunpack.c.l.b16 %v1757
    %v1798 = vunpack.c.l.b16 %v1758
    %v1799 = vunpack.c.l.b16 %v1759
    %v1800 = vunpack.c.l.b16 %v1760
    %v1801 = vunpack.c.l.b16 %v1761
    %v1802 = vunpack.c.l.b16 %v1762
    %v1803 = vunpack.c.l.b16 %v1763
    %v1804 = vunpack.c.l.b16 %v1764
    %v1805 = vunpack.c.l.b16 %v1765
    %v1806 = vunpack.c.l.b16 %v1766
    %v1807 = vunpack.c.l.b16 %v1767
    %v1808 = vunpack.c.l.b16 %v1768
    %v1809 = vunpack.c.l.b16 %v1769
    %v1810 = vunpack.c.l.b16 %v1770
    %v1811 = vunpack.c.l.b16 %v1771
    %v1812 = vunpack.c.l.b16 %v1772
    %v1813 = vpack.c.b16 %v1798, %v1797
    %v1814 = vpack.c.b16 %v1800, %v1799
    %v1815 = vpack.c.b16 %v1802, %v1801
    %v1816 = vpack.c.b16 %v1804, %v1803
    %v1817 = vpack.c.b16 %v1806, %v1805
    %v1818 = vpack.c.b16 %v1808, %v1807
    %v1819 = vpack.c.b16 %v1810, %v1809
    %v1820 = vpack.c.b16 %v1812, %v1811
    %1829 = vmatprep.subr.bf16.mxu0 0
    %1830 = vmatpush1.bf16.msra.mxu0 %v1813
    %1831 = vmatprep.subr.bf16.mxu0 0
    %1832 = vmatpush1.bf16.msra.mxu0 %v1814
    %1833 = vmatprep.subr.bf16.mxu0 0
    %1834 = vmatpush1.bf16.msra.mxu0 %v1815
    %1835 = vmatprep.subr.bf16.mxu0 0
    %1836 = vmatpush1.bf16.msra.mxu0 %v1816
    %1837 = vmatprep.subr.bf16.mxu0 0
    %1838 = vmatpush1.bf16.msra.mxu0 %v1817
    %1839 = vmatprep.subr.bf16.mxu0 0
    %1840 = vmatpush1.bf16.msra.mxu0 %v1818
    %1841 = vmatprep.subr.bf16.mxu0 0
    %1842 = vmatpush1.bf16.msra.mxu0 %v1819
    %1843 = vmatprep.subr.bf16.mxu0 0
    %1844 = vmatpush1.bf16.msra.mxu0 %v1820
    %1845 = vmatprep.subr.bf16.mxu0 0
    %1846 = vmatpush1.bf16.msra.mxu0 0
    %1847 = vmatprep.subr.bf16.mxu0 0
    %1848 = vmatpush1.bf16.msra.mxu0 0
    %1849 = vmatprep.subr.bf16.mxu0 0
    %1850 = vmatpush1.bf16.msra.mxu0 0
    %1851 = vmatprep.subr.bf16.mxu0 0
    %1852 = vmatpush1.bf16.msra.mxu0 0
    %1853 = vmatprep.subr.bf16.mxu0 0
    %1854 = vmatpush1.bf16.msra.mxu0 0
    %1855 = vmatprep.subr.bf16.mxu0 0
    %1856 = vmatpush1.bf16.msra.mxu0 0
    %1857 = vmatprep.subr.bf16.mxu0 0
    %1858 = vmatpush1.bf16.msra.mxu0 0
    %1859 = vmatprep.subr.bf16.mxu0 0
    %1860 = vmatpush1.bf16.msra.mxu0 0
    %1861 = vmatprep.mubr.bf16.mxu0 0
    %1862 = vmatmul.mubr.bf16.gmra.mrb[0].mxu0 %v1755
    %v1863 = vpop.f32.mrb[0].mxu0
    %v1864 = vadd.f32 %v1779, %v1863
    %v1865 = vpop.f32.mrb[0].mxu0
    %v1866 = vpop.f32.mrb[0].mxu0
    %v1867 = vadd.f32 %v1779, %v1866
    %v1868 = vpop.f32.mrb[0].mxu0
    %1869 = vdwg.mxu0
    %v1870 = vadd.f32 %v1649, %v1864
    %v1871 = vadd.f32 %v1650, %v1867
    %s1872 = scalar_lea.vmem [#allocation22], 1
    %v1873 = vld [vmem:[%s1872] sm:$0x1]
    %s1874 = scalar_lea.vmem [#allocation23], 1
    %v1875 = vld [vmem:[%s1874] sm:$0x1]
    %v1876 = vsel %vm342, %v1870, 0.0
    %1877 = vadd.xlane.f32.xlu0 %v1876
    %v1878 = vpop.xlane.xlu0 %1877
    %v1879 = vsel %vm342, %v1871, 0.0
    %1880 = vadd.xlane.f32.xlu0 %v1879
    %v1881 = vpop.xlane.xlu0 %1880
    %v1882 = vmul.f32 %v1878, %v850
    %v1883 = vmul.f32 %v1881, %v850
    %v1884 = vsub.f32 %v1870, %v1882
    %v1885 = vsub.f32 %v1871, %v1883
    %v1886 = vmul.f32 %v1884, %v1884
    %v1887 = vmul.f32 %v1885, %v1885
    %v1888 = vsel %vm342, %v1886, 0.0
    %1889 = vadd.xlane.f32.xlu0 %v1888
    %v1890 = vpop.xlane.xlu0 %1889
    %v1891 = vsel %vm342, %v1887, 0.0
    %1892 = vadd.xlane.f32.xlu0 %v1891
    %v1893 = vpop.xlane.xlu0 %1892
    %v1894 = vmul.f32 %v1890, %v850
    %v1895 = vmul.f32 %v1893, %v850
    %v1896 = vadd.f32 %v1894, 1e-12
    %v1897 = vadd.f32 %v1895, 1e-12
    %v1898 = vrsqrt.pop %v1896
    %v1899 = vrsqrt.pop %v1897
    %v1900 = vmul.f32 %v1884, %v1898
    %v1901 = vmul.f32 %v1885, %v1899
    %v1903 = vlaneseq
    %v1904 = vshrl.u32 %v1903, 7
    %v1905 = vsub.s32 0, %v1904
    %v1906 = vrot.slane %v1873, %v1905
    %v1908 = vmul.f32 %v1900, %v1906
    %v1909 = vmul.f32 %v1901, %v1906
    %v1911 = vlaneseq
    %v1912 = vshrl.u32 %v1911, 7
    %v1913 = vsub.s32 0, %v1912
    %v1914 = vrot.slane %v1875, %v1913
    %v1916 = vadd.f32 %v1908, %v1914
    %v1917 = vadd.f32 %v1909, %v1914
    %v1918 = vpack.c.bf16 %v1917, %v1916
    %s1919 = scalar_lea.vmem %s6, 128
    %v1920 = vld [vmem:[%s1919] sm:$0xff]
    %v1921 = vld [vmem:[%s1919 + $0x8] sm:$0xff]
    %v1922 = vld [vmem:[%s1919 + $0x10] sm:$0xff]
    %v1923 = vld [vmem:[%s1919 + $0x18] sm:$0xff]
    %v1924 = vld [vmem:[%s1919 + $0x20] sm:$0xff]
    %v1925 = vld [vmem:[%s1919 + $0x28] sm:$0xff]
    %v1926 = vld [vmem:[%s1919 + $0x30] sm:$0xff]
    %v1927 = vld [vmem:[%s1919 + $0x38] sm:$0xff]
    %s1928 = scalar_lea.vmem [#allocation11], 4
    %v1929 = vld [vmem:[%s1928] sm:$0x3]
    %v1931 = vlaneseq
    %v1932 = vshrl.u32 %v1931, 7
    %v1933 = vsub.s32 0, %v1932
    %v1934 = vrot.slane %v1929, %v1933
    %v1935 = vlaneseq
    %v1936 = vshrl.u32 %v1935, 7
    %v1937 = vsub.s32 1, %v1936
    %v1938 = vrot.slane %v1929, %v1937
    %v1949 = vunpack.c.l.b16 %v1920
    %v1950 = vunpack.c.h.b16 %v1920
    %v1951 = vunpack.c.l.b16 %v1921
    %v1952 = vunpack.c.h.b16 %v1921
    %v1953 = vunpack.c.l.b16 %v1922
    %v1954 = vunpack.c.h.b16 %v1922
    %v1955 = vunpack.c.l.b16 %v1923
    %v1956 = vunpack.c.h.b16 %v1923
    %v1957 = vunpack.c.l.b16 %v1924
    %v1958 = vunpack.c.h.b16 %v1924
    %v1959 = vunpack.c.l.b16 %v1925
    %v1960 = vunpack.c.h.b16 %v1925
    %v1961 = vunpack.c.l.b16 %v1926
    %v1962 = vunpack.c.h.b16 %v1926
    %v1963 = vunpack.c.l.b16 %v1927
    %v1964 = vunpack.c.h.b16 %v1927
    %v1965 = vpack.c.b16 %v1951, %v1949
    %v1966 = vpack.c.b16 %v1952, %v1950
    %v1967 = vpack.c.b16 %v1955, %v1953
    %v1968 = vpack.c.b16 %v1956, %v1954
    %v1969 = vpack.c.b16 %v1959, %v1957
    %v1970 = vpack.c.b16 %v1960, %v1958
    %v1971 = vpack.c.b16 %v1963, %v1961
    %v1972 = vpack.c.b16 %v1964, %v1962
    %v1982 = vsel %vm342, %v1918, 0
    %1984 = vmatprep.subr.bf16.mxu0 %v1966
    %1985 = vmatpush1.bf16.msra.mxu0 %v1965
    %1986 = vmatprep.subr.bf16.mxu0 %v1968
    %1987 = vmatpush1.bf16.msra.mxu0 %v1967
    %1988 = vmatprep.subr.bf16.mxu0 %v1970
    %1989 = vmatpush1.bf16.msra.mxu0 %v1969
    %1990 = vmatprep.subr.bf16.mxu0 %v1972
    %1991 = vmatpush1.bf16.msra.mxu0 %v1971
    %1992 = vmatprep.subr.bf16.mxu0 0
    %1993 = vmatpush1.bf16.msra.mxu0 0
    %1994 = vmatprep.subr.bf16.mxu0 0
    %1995 = vmatpush1.bf16.msra.mxu0 0
    %1996 = vmatprep.subr.bf16.mxu0 0
    %1997 = vmatpush1.bf16.msra.mxu0 0
    %1998 = vmatprep.subr.bf16.mxu0 0
    %1999 = vmatpush1.bf16.msra.mxu0 0
    %2000 = vmatprep.subr.bf16.mxu0 0
    %2001 = vmatpush1.bf16.msra.mxu0 0
    %2002 = vmatprep.subr.bf16.mxu0 0
    %2003 = vmatpush1.bf16.msra.mxu0 0
    %2004 = vmatprep.subr.bf16.mxu0 0
    %2005 = vmatpush1.bf16.msra.mxu0 0
    %2006 = vmatprep.subr.bf16.mxu0 0
    %2007 = vmatpush1.bf16.msra.mxu0 0
    %2008 = vmatprep.subr.bf16.mxu0 0
    %2009 = vmatpush1.bf16.msra.mxu0 0
    %2010 = vmatprep.subr.bf16.mxu0 0
    %2011 = vmatpush1.bf16.msra.mxu0 0
    %2012 = vmatprep.subr.bf16.mxu0 0
    %2013 = vmatpush1.bf16.msra.mxu0 0
    %2014 = vmatprep.subr.bf16.mxu0 0
    %2015 = vmatpush1.bf16.msra.mxu0 0
    %2016 = vmatprep.mubr.bf16.mxu0 0
    %2017 = vmatmul.mubr.bf16.gmra.mrb[0].mxu0 %v1982
    %v2018 = vpop.f32.mrb[0].mxu0
    %v2019 = vadd.f32 %v1934, %v2018
    %v2020 = vpop.f32.mrb[0].mxu0
    %v2021 = vadd.f32 %v1938, %v2020
    %v2022 = vpop.f32.mrb[0].mxu0
    %v2023 = vadd.f32 %v1934, %v2022
    %v2024 = vpop.f32.mrb[0].mxu0
    %v2025 = vadd.f32 %v1938, %v2024
    %2026 = vdwg.mxu0
    %v2027 = vpack.c.bf16 %v2023, %v2019
    %2029 = vrot.lane.b32.xlu0 %v2027, 96
    %v2030 = vpop.permute.xlu0 %2029
    %v2032 = vsel %vm498, %v2027, 0
    %v2035 = vsel %vm498, %v2030, 0
    %2037 = vmatprep.subr.bf16.mxu0 0
    %2038 = vmatpush1.bf16.xpose.msra.mxu0 %v2035
    %2039 = vmatprep.subr.bf16.mxu0 0
    %2040 = vmatpush1.bf16.xpose.msra.mxu0 0
    %2041 = vmatprep.subr.bf16.mxu0 0
    %2042 = vmatpush1.bf16.xpose.msra.mxu0 0
    %2043 = vmatprep.subr.bf16.mxu0 0
    %2044 = vmatpush1.bf16.xpose.msra.mxu0 0
    %2045 = vmatprep.subr.bf16.mxu0 0
    %2046 = vmatpush1.bf16.xpose.msra.mxu0 0
    %2047 = vmatprep.subr.bf16.mxu0 0
    %2048 = vmatpush1.bf16.xpose.msra.mxu0 0
    %2049 = vmatprep.subr.bf16.mxu0 0
    %2050 = vmatpush1.bf16.xpose.msra.mxu0 0
    %2051 = vmatprep.subr.bf16.mxu0 0
    %2052 = vmatpush1.bf16.xpose.msra.mxu0 0
    %2053 = vmatprep.subr.bf16.mxu0 0
    %2054 = vmatpush1.bf16.xpose.msra.mxu0 0
    %2055 = vmatprep.subr.bf16.mxu0 0
    %2056 = vmatpush1.bf16.xpose.msra.mxu0 0
    %2057 = vmatprep.subr.bf16.mxu0 0
    %2058 = vmatpush1.bf16.xpose.msra.mxu0 0
    %2059 = vmatprep.subr.bf16.mxu0 0
    %2060 = vmatpush1.bf16.xpose.msra.mxu0 0
    %2061 = vmatprep.subr.bf16.mxu0 0
    %2062 = vmatpush1.bf16.xpose.msra.mxu0 0
    %2063 = vmatprep.subr.bf16.mxu0 0
    %2064 = vmatpush1.bf16.xpose.msra.mxu0 0
    %2065 = vmatprep.subr.bf16.mxu0 0
    %2066 = vmatpush1.bf16.xpose.msra.mxu0 0
    %2067 = vmatprep.subr.bf16.mxu0 0
    %2068 = vmatpush1.bf16.xpose.msra.mxu0 0
    %2069 = vmatprep.mubr.bf16.mxu0 0
    %2070 = vmatmul.mubr.bf16.gmra.mrb[0].mxu0 %v2032
    %v2071 = vpop.f32.mrb[0].mxu0
    %v2072 = vadd.f32 0.0, %v2071
    %v2073 = vpop.f32.mrb[0].mxu0
    %v2074 = vpop.f32.mrb[0].mxu0
    %v2075 = vadd.f32 0.0, %v2074
    %v2076 = vpop.f32.mrb[0].mxu0
    %2077 = vdwg.mxu0
    %v2078 = vmul.f32 %v2072, 0.17677669
    %v2079 = vmul.f32 %v2075, 0.17677669
    %v2080 = vadd.f32 %v2078, %v247
    %v2081 = vadd.f32 %v2079, %v248
    %v2082 = vsel %vm550, %v2080, -inf
    %2083 = vmax.xlane.f32.xlu0 %v2082
    %v2084 = vpop.xlane.xlu0 %2083
    %v2085 = vsel %vm550, %v2081, -inf
    %2086 = vmax.xlane.f32.xlu0 %v2085
    %v2087 = vpop.xlane.xlu0 %2086
    %v2088 = vsub.f32 %v2080, %v2084
    %v2089 = vsub.f32 %v2081, %v2087
    %v2090 = vmul.f32 %v2088, 1.442695
    %v2091 = vpow.pop %v2090
    %v2092 = vmul.f32 %v2089, 1.442695
    %v2093 = vpow.pop %v2092
    %v2094 = vsel %vm550, %v2091, 0.0
    %2095 = vadd.xlane.f32.xlu0 %v2094
    %v2096 = vpop.xlane.xlu0 %2095
    %v2097 = vsel %vm550, %v2093, 0.0
    %2098 = vadd.xlane.f32.xlu0 %v2097
    %v2099 = vpop.xlane.xlu0 %2098
    %v2100 = vrcp.pop %v2096
    %v2101 = vrcp.pop %v2099
    %v2102 = vmul.f32 %v2091, %v2100
    %v2103 = vmul.f32 %v2093, %v2101
    %v2104 = vpack.c.bf16 %v2103, %v2102
    %2105 = vrot.lane.b32.xlu0 %v2027, 64
    %v2106 = vpop.permute.xlu0 %2105
    %v2109 = vsel %vm550, %v2104, 0
    %2111 = vmatprep.subr.bf16.mxu0 0
    %2112 = vmatpush1.bf16.msra.mxu0 %v2106
    %2113 = vmatprep.subr.bf16.mxu0 0
    %2114 = vmatpush1.bf16.msra.mxu0 0
    %2115 = vmatprep.subr.bf16.mxu0 0
    %2116 = vmatpush1.bf16.msra.mxu0 0
    %2117 = vmatprep.subr.bf16.mxu0 0
    %2118 = vmatpush1.bf16.msra.mxu0 0
    %2119 = vmatprep.subr.bf16.mxu0 0
    %2120 = vmatpush1.bf16.msra.mxu0 0
    %2121 = vmatprep.subr.bf16.mxu0 0
    %2122 = vmatpush1.bf16.msra.mxu0 0
    %2123 = vmatprep.subr.bf16.mxu0 0
    %2124 = vmatpush1.bf16.msra.mxu0 0
    %2125 = vmatprep.subr.bf16.mxu0 0
    %2126 = vmatpush1.bf16.msra.mxu0 0
    %2127 = vmatprep.subr.bf16.mxu0 0
    %2128 = vmatpush1.bf16.msra.mxu0 0
    %2129 = vmatprep.subr.bf16.mxu0 0
    %2130 = vmatpush1.bf16.msra.mxu0 0
    %2131 = vmatprep.subr.bf16.mxu0 0
    %2132 = vmatpush1.bf16.msra.mxu0 0
    %2133 = vmatprep.subr.bf16.mxu0 0
    %2134 = vmatpush1.bf16.msra.mxu0 0
    %2135 = vmatprep.subr.bf16.mxu0 0
    %2136 = vmatpush1.bf16.msra.mxu0 0
    %2137 = vmatprep.subr.bf16.mxu0 0
    %2138 = vmatpush1.bf16.msra.mxu0 0
    %2139 = vmatprep.subr.bf16.mxu0 0
    %2140 = vmatpush1.bf16.msra.mxu0 0
    %2141 = vmatprep.subr.bf16.mxu0 0
    %2142 = vmatpush1.bf16.msra.mxu0 0
    %2143 = vmatprep.mubr.bf16.mxu0 0
    %2144 = vmatmul.mubr.bf16.gmra.mrb[0].mxu0 %v2109
    %v2145 = vpop.f32.mrb[0].mxu0
    %v2146 = vadd.f32 0.0, %v2145
    %v2147 = vpop.f32.mrb[0].mxu0
    %v2148 = vpop.f32.mrb[0].mxu0
    %v2149 = vadd.f32 0.0, %v2148
    %v2150 = vpop.f32.mrb[0].mxu0
    %2151 = vdwg.mxu0
    %v2152 = vpack.c.bf16 %v2025, %v2021
    %2154 = vrot.lane.b32.xlu0 %v2152, 96
    %v2155 = vpop.permute.xlu0 %2154
    %v2157 = vsel %vm498, %v2152, 0
    %v2160 = vsel %vm498, %v2155, 0
    %2162 = vmatprep.subr.bf16.mxu0 0
    %2163 = vmatpush1.bf16.xpose.msra.mxu0 %v2160
    %2164 = vmatprep.subr.bf16.mxu0 0
    %2165 = vmatpush1.bf16.xpose.msra.mxu0 0
    %2166 = vmatprep.subr.bf16.mxu0 0
    %2167 = vmatpush1.bf16.xpose.msra.mxu0 0
    %2168 = vmatprep.subr.bf16.mxu0 0
    %2169 = vmatpush1.bf16.xpose.msra.mxu0 0
    %2170 = vmatprep.subr.bf16.mxu0 0
    %2171 = vmatpush1.bf16.xpose.msra.mxu0 0
    %2172 = vmatprep.subr.bf16.mxu0 0
    %2173 = vmatpush1.bf16.xpose.msra.mxu0 0
    %2174 = vmatprep.subr.bf16.mxu0 0
    %2175 = vmatpush1.bf16.xpose.msra.mxu0 0
    %2176 = vmatprep.subr.bf16.mxu0 0
    %2177 = vmatpush1.bf16.xpose.msra.mxu0 0
    %2178 = vmatprep.subr.bf16.mxu0 0
    %2179 = vmatpush1.bf16.xpose.msra.mxu0 0
    %2180 = vmatprep.subr.bf16.mxu0 0
    %2181 = vmatpush1.bf16.xpose.msra.mxu0 0
    %2182 = vmatprep.subr.bf16.mxu0 0
    %2183 = vmatpush1.bf16.xpose.msra.mxu0 0
    %2184 = vmatprep.subr.bf16.mxu0 0
    %2185 = vmatpush1.bf16.xpose.msra.mxu0 0
    %2186 = vmatprep.subr.bf16.mxu0 0
    %2187 = vmatpush1.bf16.xpose.msra.mxu0 0
    %2188 = vmatprep.subr.bf16.mxu0 0
    %2189 = vmatpush1.bf16.xpose.msra.mxu0 0
    %2190 = vmatprep.subr.bf16.mxu0 0
    %2191 = vmatpush1.bf16.xpose.msra.mxu0 0
    %2192 = vmatprep.subr.bf16.mxu0 0
    %2193 = vmatpush1.bf16.xpose.msra.mxu0 0
    %2194 = vmatprep.mubr.bf16.mxu0 0
    %2195 = vmatmul.mubr.bf16.gmra.mrb[0].mxu0 %v2157
    %v2196 = vpop.f32.mrb[0].mxu0
    %v2197 = vadd.f32 0.0, %v2196
    %v2198 = vpop.f32.mrb[0].mxu0
    %v2199 = vpop.f32.mrb[0].mxu0
    %v2200 = vadd.f32 0.0, %v2199
    %v2201 = vpop.f32.mrb[0].mxu0
    %2202 = vdwg.mxu0
    %v2203 = vmul.f32 %v2197, 0.17677669
    %v2204 = vmul.f32 %v2200, 0.17677669
    %v2205 = vadd.f32 %v2203, %v247
    %v2206 = vadd.f32 %v2204, %v248
    %v2207 = vsel %vm550, %v2205, -inf
    %2208 = vmax.xlane.f32.xlu0 %v2207
    %v2209 = vpop.xlane.xlu0 %2208
    %v2210 = vsel %vm550, %v2206, -inf
    %2211 = vmax.xlane.f32.xlu0 %v2210
    %v2212 = vpop.xlane.xlu0 %2211
    %v2213 = vsub.f32 %v2205, %v2209
    %v2214 = vsub.f32 %v2206, %v2212
    %v2215 = vmul.f32 %v2213, 1.442695
    %v2216 = vpow.pop %v2215
    %v2217 = vmul.f32 %v2214, 1.442695
    %v2218 = vpow.pop %v2217
    %v2219 = vsel %vm550, %v2216, 0.0
    %2220 = vadd.xlane.f32.xlu0 %v2219
    %v2221 = vpop.xlane.xlu0 %2220
    %v2222 = vsel %vm550, %v2218, 0.0
    %2223 = vadd.xlane.f32.xlu0 %v2222
    %v2224 = vpop.xlane.xlu0 %2223
    %v2225 = vrcp.pop %v2221
    %v2226 = vrcp.pop %v2224
    %v2227 = vmul.f32 %v2216, %v2225
    %v2228 = vmul.f32 %v2218, %v2226
    %v2229 = vpack.c.bf16 %v2228, %v2227
    %2230 = vrot.lane.b32.xlu0 %v2152, 64
    %v2231 = vpop.permute.xlu0 %2230
    %v2234 = vsel %vm550, %v2229, 0
    %2236 = vmatprep.subr.bf16.mxu0 0
    %2237 = vmatpush1.bf16.msra.mxu0 %v2231
    %2238 = vmatprep.subr.bf16.mxu0 0
    %2239 = vmatpush1.bf16.msra.mxu0 0
    %2240 = vmatprep.subr.bf16.mxu0 0
    %2241 = vmatpush1.bf16.msra.mxu0 0
    %2242 = vmatprep.subr.bf16.mxu0 0
    %2243 = vmatpush1.bf16.msra.mxu0 0
    %2244 = vmatprep.subr.bf16.mxu0 0
    %2245 = vmatpush1.bf16.msra.mxu0 0
    %2246 = vmatprep.subr.bf16.mxu0 0
    %2247 = vmatpush1.bf16.msra.mxu0 0
    %2248 = vmatprep.subr.bf16.mxu0 0
    %2249 = vmatpush1.bf16.msra.mxu0 0
    %2250 = vmatprep.subr.bf16.mxu0 0
    %2251 = vmatpush1.bf16.msra.mxu0 0
    %2252 = vmatprep.subr.bf16.mxu0 0
    %2253 = vmatpush1.bf16.msra.mxu0 0
    %2254 = vmatprep.subr.bf16.mxu0 0
    %2255 = vmatpush1.bf16.msra.mxu0 0
    %2256 = vmatprep.subr.bf16.mxu0 0
    %2257 = vmatpush1.bf16.msra.mxu0 0
    %2258 = vmatprep.subr.bf16.mxu0 0
    %2259 = vmatpush1.bf16.msra.mxu0 0
    %2260 = vmatprep.subr.bf16.mxu0 0
    %2261 = vmatpush1.bf16.msra.mxu0 0
    %2262 = vmatprep.subr.bf16.mxu0 0
    %2263 = vmatpush1.bf16.msra.mxu0 0
    %2264 = vmatprep.subr.bf16.mxu0 0
    %2265 = vmatpush1.bf16.msra.mxu0 0
    %2266 = vmatprep.subr.bf16.mxu0 0
    %2267 = vmatpush1.bf16.msra.mxu0 0
    %2268 = vmatprep.mubr.bf16.mxu0 0
    %2269 = vmatmul.mubr.bf16.gmra.mrb[0].mxu0 %v2234
    %v2270 = vpop.f32.mrb[0].mxu0
    %v2271 = vadd.f32 0.0, %v2270
    %v2272 = vpop.f32.mrb[0].mxu0
    %v2273 = vpop.f32.mrb[0].mxu0
    %v2274 = vadd.f32 0.0, %v2273
    %v2275 = vpop.f32.mrb[0].mxu0
    %2276 = vdwg.mxu0
    %2279 = vrot.lane.b32.xlu0 %v2271, 32
    %v2280 = vpop.permute.xlu0 %2279
    %2281 = vrot.lane.b32.xlu0 %v2274, 32
    %v2282 = vpop.permute.xlu0 %2281
    %v2285 = vsel %vm498, %v2146, %v2280
    %v2286 = vsel %vm498, %v2149, %v2282
    %v2287 = vpack.c.bf16 %v2286, %v2285
    %s2288 = scalar_lea.vmem %s8, 64
    %v2289 = vld [vmem:[%s2288] sm:$0xf]
    %v2290 = vld [vmem:[%s2288 + $0x4] sm:$0xf]
    %v2291 = vld [vmem:[%s2288 + $0x8] sm:$0xf]
    %v2292 = vld [vmem:[%s2288 + $0xc] sm:$0xf]
    %v2293 = vld [vmem:[%s2288 + $0x10] sm:$0xf]
    %v2294 = vld [vmem:[%s2288 + $0x14] sm:$0xf]
    %v2295 = vld [vmem:[%s2288 + $0x18] sm:$0xf]
    %v2296 = vld [vmem:[%s2288 + $0x1c] sm:$0xf]
    %s2297 = scalar_lea.vmem [#allocation13], 2
    %v2298 = vld [vmem:[%s2297] sm:$0x1]
    %v2300 = vlaneseq
    %v2301 = vshrl.u32 %v2300, 7
    %v2302 = vsub.s32 0, %v2301
    %v2303 = vrot.slane %v2298, %v2302
    %v2313 = vunpack.c.l.b16 %v2289
    %v2314 = vunpack.c.l.b16 %v2290
    %v2315 = vunpack.c.l.b16 %v2291
    %v2316 = vunpack.c.l.b16 %v2292
    %v2317 = vunpack.c.l.b16 %v2293
    %v2318 = vunpack.c.l.b16 %v2294
    %v2319 = vunpack.c.l.b16 %v2295
    %v2320 = vunpack.c.l.b16 %v2296
    %v2321 = vpack.c.b16 %v2314, %v2313
    %v2322 = vpack.c.b16 %v2316, %v2315
    %v2323 = vpack.c.b16 %v2318, %v2317
    %v2324 = vpack.c.b16 %v2320, %v2319
    %v2330 = vsel %vm342, %v2287, 0
    %2332 = vmatprep.subr.bf16.mxu0 0
    %2333 = vmatpush1.bf16.msra.mxu0 %v2321
    %2334 = vmatprep.subr.bf16.mxu0 0
    %2335 = vmatpush1.bf16.msra.mxu0 %v2322
    %2336 = vmatprep.subr.bf16.mxu0 0
    %2337 = vmatpush1.bf16.msra.mxu0 %v2323
    %2338 = vmatprep.subr.bf16.mxu0 0
    %2339 = vmatpush1.bf16.msra.mxu0 %v2324
    %2340 = vmatprep.subr.bf16.mxu0 0
    %2341 = vmatpush1.bf16.msra.mxu0 0
    %2342 = vmatprep.subr.bf16.mxu0 0
    %2343 = vmatpush1.bf16.msra.mxu0 0
    %2344 = vmatprep.subr.bf16.mxu0 0
    %2345 = vmatpush1.bf16.msra.mxu0 0
    %2346 = vmatprep.subr.bf16.mxu0 0
    %2347 = vmatpush1.bf16.msra.mxu0 0
    %2348 = vmatprep.subr.bf16.mxu0 0
    %2349 = vmatpush1.bf16.msra.mxu0 0
    %2350 = vmatprep.subr.bf16.mxu0 0
    %2351 = vmatpush1.bf16.msra.mxu0 0
    %2352 = vmatprep.subr.bf16.mxu0 0
    %2353 = vmatpush1.bf16.msra.mxu0 0
    %2354 = vmatprep.subr.bf16.mxu0 0
    %2355 = vmatpush1.bf16.msra.mxu0 0
    %2356 = vmatprep.subr.bf16.mxu0 0
    %2357 = vmatpush1.bf16.msra.mxu0 0
    %2358 = vmatprep.subr.bf16.mxu0 0
    %2359 = vmatpush1.bf16.msra.mxu0 0
    %2360 = vmatprep.subr.bf16.mxu0 0
    %2361 = vmatpush1.bf16.msra.mxu0 0
    %2362 = vmatprep.subr.bf16.mxu0 0
    %2363 = vmatpush1.bf16.msra.mxu0 0
    %2364 = vmatprep.mubr.bf16.mxu0 0
    %2365 = vmatmul.mubr.bf16.gmra.mrb[0].mxu0 %v2330
    %v2366 = vpop.f32.mrb[0].mxu0
    %v2367 = vadd.f32 %v2303, %v2366
    %v2368 = vpop.f32.mrb[0].mxu0
    %v2369 = vpop.f32.mrb[0].mxu0
    %v2370 = vadd.f32 %v2303, %v2369
    %v2371 = vpop.f32.mrb[0].mxu0
    %2372 = vdwg.mxu0
    %v2373 = vadd.f32 %v1916, %v2367
    %v2374 = vadd.f32 %v1917, %v2370
    %s2375 = scalar_lea.vmem [#allocation14], 2
    %v2376 = vld [vmem:[%s2375] sm:$0x1]
    %s2377 = scalar_lea.vmem [#allocation16], 2
    %v2378 = vld [vmem:[%s2377] sm:$0x1]
    %v2379 = vsel %vm342, %v2373, 0.0
    %2380 = vadd.xlane.f32.xlu0 %v2379
    %v2381 = vpop.xlane.xlu0 %2380
    %v2382 = vsel %vm342, %v2374, 0.0
    %2383 = vadd.xlane.f32.xlu0 %v2382
    %v2384 = vpop.xlane.xlu0 %2383
    %v2385 = vmul.f32 %v2381, %v850
    %v2386 = vmul.f32 %v2384, %v850
    %v2387 = vsub.f32 %v2373, %v2385
    %v2388 = vsub.f32 %v2374, %v2386
    %v2389 = vmul.f32 %v2387, %v2387
    %v2390 = vmul.f32 %v2388, %v2388
    %v2391 = vsel %vm342, %v2389, 0.0
    %2392 = vadd.xlane.f32.xlu0 %v2391
    %v2393 = vpop.xlane.xlu0 %2392
    %v2394 = vsel %vm342, %v2390, 0.0
    %2395 = vadd.xlane.f32.xlu0 %v2394
    %v2396 = vpop.xlane.xlu0 %2395
    %v2397 = vmul.f32 %v2393, %v850
    %v2398 = vmul.f32 %v2396, %v850
    %v2399 = vadd.f32 %v2397, 1e-12
    %v2400 = vadd.f32 %v2398, 1e-12
    %v2401 = vrsqrt.pop %v2399
    %v2402 = vrsqrt.pop %v2400
    %v2403 = vmul.f32 %v2387, %v2401
    %v2404 = vmul.f32 %v2388, %v2402
    %v2406 = vlaneseq
    %v2407 = vshrl.u32 %v2406, 7
    %v2408 = vsub.s32 0, %v2407
    %v2409 = vrot.slane %v2376, %v2408
    %v2411 = vmul.f32 %v2403, %v2409
    %v2412 = vmul.f32 %v2404, %v2409
    %v2414 = vlaneseq
    %v2415 = vshrl.u32 %v2414, 7
    %v2416 = vsub.s32 0, %v2415
    %v2417 = vrot.slane %v2378, %v2416
    %v2419 = vadd.f32 %v2411, %v2417
    %v2420 = vadd.f32 %v2412, %v2417
    %v2421 = vpack.c.bf16 %v2420, %v2419
    %s2422 = scalar_lea.vmem [#allocation17], 64
    %v2423 = vld [vmem:[%s2422] sm:$0xf]
    %v2424 = vld [vmem:[%s2422 + $0x4] sm:$0xf]
    %v2425 = vld [vmem:[%s2422 + $0x8] sm:$0xf]
    %v2426 = vld [vmem:[%s2422 + $0xc] sm:$0xf]
    %v2427 = vld [vmem:[%s2422 + $0x10] sm:$0xf]
    %v2428 = vld [vmem:[%s2422 + $0x14] sm:$0xf]
    %v2429 = vld [vmem:[%s2422 + $0x18] sm:$0xf]
    %v2430 = vld [vmem:[%s2422 + $0x1c] sm:$0xf]
    %s2431 = scalar_lea.vmem [#allocation19], 2
    %v2432 = vld [vmem:[%s2431] sm:$0x1]
    %v2434 = vlaneseq
    %v2435 = vshrl.u32 %v2434, 7
    %v2436 = vsub.s32 0, %v2435
    %v2437 = vrot.slane %v2432, %v2436
    %v2447 = vunpack.c.l.b16 %v2423
    %v2448 = vunpack.c.l.b16 %v2424
    %v2449 = vunpack.c.l.b16 %v2425
    %v2450 = vunpack.c.l.b16 %v2426
    %v2451 = vunpack.c.l.b16 %v2427
    %v2452 = vunpack.c.l.b16 %v2428
    %v2453 = vunpack.c.l.b16 %v2429
    %v2454 = vunpack.c.l.b16 %v2430
    %v2455 = vpack.c.b16 %v2448, %v2447
    %v2456 = vpack.c.b16 %v2450, %v2449
    %v2457 = vpack.c.b16 %v2452, %v2451
    %v2458 = vpack.c.b16 %v2454, %v2453
    %v2464 = vsel %vm342, %v2421, 0
    %2466 = vmatprep.subr.bf16.mxu0 0
    %2467 = vmatpush1.bf16.msra.mxu0 %v2455
    %2468 = vmatprep.subr.bf16.mxu0 0
    %2469 = vmatpush1.bf16.msra.mxu0 %v2456
    %2470 = vmatprep.subr.bf16.mxu0 0
    %2471 = vmatpush1.bf16.msra.mxu0 %v2457
    %2472 = vmatprep.subr.bf16.mxu0 0
    %2473 = vmatpush1.bf16.msra.mxu0 %v2458
    %2474 = vmatprep.subr.bf16.mxu0 0
    %2475 = vmatpush1.bf16.msra.mxu0 0
    %2476 = vmatprep.subr.bf16.mxu0 0
    %2477 = vmatpush1.bf16.msra.mxu0 0
    %2478 = vmatprep.subr.bf16.mxu0 0
    %2479 = vmatpush1.bf16.msra.mxu0 0
    %2480 = vmatprep.subr.bf16.mxu0 0
    %2481 = vmatpush1.bf16.msra.mxu0 0
    %2482 = vmatprep.subr.bf16.mxu0 0
    %2483 = vmatpush1.bf16.msra.mxu0 0
    %2484 = vmatprep.subr.bf16.mxu0 0
    %2485 = vmatpush1.bf16.msra.mxu0 0
    %2486 = vmatprep.subr.bf16.mxu0 0
    %2487 = vmatpush1.bf16.msra.mxu0 0
    %2488 = vmatprep.subr.bf16.mxu0 0
    %2489 = vmatpush1.bf16.msra.mxu0 0
    %2490 = vmatprep.subr.bf16.mxu0 0
    %2491 = vmatpush1.bf16.msra.mxu0 0
    %2492 = vmatprep.subr.bf16.mxu0 0
    %2493 = vmatpush1.bf16.msra.mxu0 0
    %2494 = vmatprep.subr.bf16.mxu0 0
    %2495 = vmatpush1.bf16.msra.mxu0 0
    %2496 = vmatprep.subr.bf16.mxu0 0
    %2497 = vmatpush1.bf16.msra.mxu0 0
    %2498 = vmatprep.mubr.bf16.mxu0 0
    %2499 = vmatmul.mubr.bf16.gmra.mrb[0].mxu0 %v2464
    %v2500 = vpop.f32.mrb[0].mxu0
    %v2501 = vadd.f32 %v2437, %v2500
    %v2502 = vpop.f32.mrb[0].mxu0
    %v2503 = vpop.f32.mrb[0].mxu0
    %v2504 = vadd.f32 %v2437, %v2503
    %v2505 = vpop.f32.mrb[0].mxu0
    %2506 = vdwg.mxu0
    %v2507 = vmul.f32 %v2501, %v2501
    %v2508 = vmul.f32 %v2504, %v2504
    %v2509 = vmul.f32 %v2501, %v2507
    %v2510 = vmul.f32 %v2504, %v2508
    %v2511 = vmul.f32 %v2509, 0.044715
    %v2512 = vmul.f32 %v2510, 0.044715
    %v2513 = vadd.f32 %v2501, %v2511
    %v2514 = vadd.f32 %v2504, %v2512
    %v2515 = vmul.f32 %v2513, 0.7978846
    %v2516 = vmul.f32 %v2514, 0.7978846
    %v2517 = vtanh.pop %v2515
    %v2518 = vtanh.pop %v2516
    %v2519 = vadd.f32 %v2517, 1.0
    %v2520 = vadd.f32 %v2518, 1.0
    %v2521 = vmul.f32 %v2519, 0.5
    %v2522 = vmul.f32 %v2520, 0.5
    %v2523 = vmul.f32 %v2501, %v2521
    %v2524 = vmul.f32 %v2504, %v2522
    %v2525 = vpack.c.bf16 %v2524, %v2523
    %s2526 = scalar_lea.vmem %s14, 128
    %v2527 = vld [vmem:[%s2526] sm:$0xf]
    %v2528 = vld [vmem:[%s2526 + $0x4] sm:$0xf]
    %v2529 = vld [vmem:[%s2526 + $0x8] sm:$0xf]
    %v2530 = vld [vmem:[%s2526 + $0xc] sm:$0xf]
    %v2531 = vld [vmem:[%s2526 + $0x10] sm:$0xf]
    %v2532 = vld [vmem:[%s2526 + $0x14] sm:$0xf]
    %v2533 = vld [vmem:[%s2526 + $0x18] sm:$0xf]
    %v2534 = vld [vmem:[%s2526 + $0x1c] sm:$0xf]
    %v2535 = vld [vmem:[%s2526 + $0x20] sm:$0xf]
    %v2536 = vld [vmem:[%s2526 + $0x24] sm:$0xf]
    %v2537 = vld [vmem:[%s2526 + $0x28] sm:$0xf]
    %v2538 = vld [vmem:[%s2526 + $0x2c] sm:$0xf]
    %v2539 = vld [vmem:[%s2526 + $0x30] sm:$0xf]
    %v2540 = vld [vmem:[%s2526 + $0x34] sm:$0xf]
    %v2541 = vld [vmem:[%s2526 + $0x38] sm:$0xf]
    %v2542 = vld [vmem:[%s2526 + $0x3c] sm:$0xf]
    %s2543 = scalar_lea.vmem [#allocation20], 2
    %v2544 = vld [vmem:[%s2543] sm:$0x1]
    %v2546 = vlaneseq
    %v2547 = vshrl.u32 %v2546, 7
    %v2548 = vsub.s32 0, %v2547
    %v2549 = vrot.slane %v2544, %v2548
    %v2567 = vunpack.c.l.b16 %v2527
    %v2568 = vunpack.c.l.b16 %v2528
    %v2569 = vunpack.c.l.b16 %v2529
    %v2570 = vunpack.c.l.b16 %v2530
    %v2571 = vunpack.c.l.b16 %v2531
    %v2572 = vunpack.c.l.b16 %v2532
    %v2573 = vunpack.c.l.b16 %v2533
    %v2574 = vunpack.c.l.b16 %v2534
    %v2575 = vunpack.c.l.b16 %v2535
    %v2576 = vunpack.c.l.b16 %v2536
    %v2577 = vunpack.c.l.b16 %v2537
    %v2578 = vunpack.c.l.b16 %v2538
    %v2579 = vunpack.c.l.b16 %v2539
    %v2580 = vunpack.c.l.b16 %v2540
    %v2581 = vunpack.c.l.b16 %v2541
    %v2582 = vunpack.c.l.b16 %v2542
    %v2583 = vpack.c.b16 %v2568, %v2567
    %v2584 = vpack.c.b16 %v2570, %v2569
    %v2585 = vpack.c.b16 %v2572, %v2571
    %v2586 = vpack.c.b16 %v2574, %v2573
    %v2587 = vpack.c.b16 %v2576, %v2575
    %v2588 = vpack.c.b16 %v2578, %v2577
    %v2589 = vpack.c.b16 %v2580, %v2579
    %v2590 = vpack.c.b16 %v2582, %v2581
    %2599 = vmatprep.subr.bf16.mxu0 0
    %2600 = vmatpush1.bf16.msra.mxu0 %v2583
    %2601 = vmatprep.subr.bf16.mxu0 0
    %2602 = vmatpush1.bf16.msra.mxu0 %v2584
    %2603 = vmatprep.subr.bf16.mxu0 0
    %2604 = vmatpush1.bf16.msra.mxu0 %v2585
    %2605 = vmatprep.subr.bf16.mxu0 0
    %2606 = vmatpush1.bf16.msra.mxu0 %v2586
    %2607 = vmatprep.subr.bf16.mxu0 0
    %2608 = vmatpush1.bf16.msra.mxu0 %v2587
    %2609 = vmatprep.subr.bf16.mxu0 0
    %2610 = vmatpush1.bf16.msra.mxu0 %v2588
    %2611 = vmatprep.subr.bf16.mxu0 0
    %2612 = vmatpush1.bf16.msra.mxu0 %v2589
    %2613 = vmatprep.subr.bf16.mxu0 0
    %2614 = vmatpush1.bf16.msra.mxu0 %v2590
    %2615 = vmatprep.subr.bf16.mxu0 0
    %2616 = vmatpush1.bf16.msra.mxu0 0
    %2617 = vmatprep.subr.bf16.mxu0 0
    %2618 = vmatpush1.bf16.msra.mxu0 0
    %2619 = vmatprep.subr.bf16.mxu0 0
    %2620 = vmatpush1.bf16.msra.mxu0 0
    %2621 = vmatprep.subr.bf16.mxu0 0
    %2622 = vmatpush1.bf16.msra.mxu0 0
    %2623 = vmatprep.subr.bf16.mxu0 0
    %2624 = vmatpush1.bf16.msra.mxu0 0
    %2625 = vmatprep.subr.bf16.mxu0 0
    %2626 = vmatpush1.bf16.msra.mxu0 0
    %2627 = vmatprep.subr.bf16.mxu0 0
    %2628 = vmatpush1.bf16.msra.mxu0 0
    %2629 = vmatprep.subr.bf16.mxu0 0
    %2630 = vmatpush1.bf16.msra.mxu0 0
    %2631 = vmatprep.mubr.bf16.mxu0 0
    %2632 = vmatmul.mubr.bf16.gmra.mrb[0].mxu0 %v2525
    %v2633 = vpop.f32.mrb[0].mxu0
    %v2634 = vadd.f32 %v2549, %v2633
    %v2635 = vpop.f32.mrb[0].mxu0
    %v2636 = vpop.f32.mrb[0].mxu0
    %v2637 = vadd.f32 %v2549, %v2636
    %v2638 = vpop.f32.mrb[0].mxu0
    %2639 = vdwg.mxu0
    %v2640 = vadd.f32 %v2419, %v2634
    %v2641 = vadd.f32 %v2420, %v2637
    %s2642 = scalar_lea.vmem [#allocation22], 2
    %v2643 = vld [vmem:[%s2642] sm:$0x1]
    %s2644 = scalar_lea.vmem [#allocation23], 2
    %v2645 = vld [vmem:[%s2644] sm:$0x1]
    %v2646 = vsel %vm342, %v2640, 0.0
    %2647 = vadd.xlane.f32.xlu0 %v2646
    %v2648 = vpop.xlane.xlu0 %2647
    %v2649 = vsel %vm342, %v2641, 0.0
    %2650 = vadd.xlane.f32.xlu0 %v2649
    %v2651 = vpop.xlane.xlu0 %2650
    %v2652 = vmul.f32 %v2648, %v850
    %v2653 = vmul.f32 %v2651, %v850
    %v2654 = vsub.f32 %v2640, %v2652
    %v2655 = vsub.f32 %v2641, %v2653
    %v2656 = vmul.f32 %v2654, %v2654
    %v2657 = vmul.f32 %v2655, %v2655
    %v2658 = vsel %vm342, %v2656, 0.0
    %2659 = vadd.xlane.f32.xlu0 %v2658
    %v2660 = vpop.xlane.xlu0 %2659
    %v2661 = vsel %vm342, %v2657, 0.0
    %2662 = vadd.xlane.f32.xlu0 %v2661
    %v2663 = vpop.xlane.xlu0 %2662
    %v2664 = vmul.f32 %v2660, %v850
    %v2665 = vmul.f32 %v2663, %v850
    %v2666 = vadd.f32 %v2664, 1e-12
    %v2667 = vadd.f32 %v2665, 1e-12
    %v2668 = vrsqrt.pop %v2666
    %v2669 = vrsqrt.pop %v2667
    %v2670 = vmul.f32 %v2654, %v2668
    %v2671 = vmul.f32 %v2655, %v2669
    %v2673 = vlaneseq
    %v2674 = vshrl.u32 %v2673, 7
    %v2675 = vsub.s32 0, %v2674
    %v2676 = vrot.slane %v2643, %v2675
    %v2678 = vmul.f32 %v2670, %v2676
    %v2679 = vmul.f32 %v2671, %v2676
    %v2681 = vlaneseq
    %v2682 = vshrl.u32 %v2681, 7
    %v2683 = vsub.s32 0, %v2682
    %v2684 = vrot.slane %v2645, %v2683
    %v2686 = vadd.f32 %v2678, %v2684
    %v2687 = vadd.f32 %v2679, %v2684
    %v2688 = vpack.c.bf16 %v2687, %v2686
    %s2689 = scalar_lea.vmem %s6, 192
    %v2690 = vld [vmem:[%s2689] sm:$0xff]
    %v2691 = vld [vmem:[%s2689 + $0x8] sm:$0xff]
    %v2692 = vld [vmem:[%s2689 + $0x10] sm:$0xff]
    %v2693 = vld [vmem:[%s2689 + $0x18] sm:$0xff]
    %v2694 = vld [vmem:[%s2689 + $0x20] sm:$0xff]
    %v2695 = vld [vmem:[%s2689 + $0x28] sm:$0xff]
    %v2696 = vld [vmem:[%s2689 + $0x30] sm:$0xff]
    %v2697 = vld [vmem:[%s2689 + $0x38] sm:$0xff]
    %s2698 = scalar_lea.vmem [#allocation11], 6
    %v2699 = vld [vmem:[%s2698] sm:$0x3]
    %v2701 = vlaneseq
    %v2702 = vshrl.u32 %v2701, 7
    %v2703 = vsub.s32 0, %v2702
    %v2704 = vrot.slane %v2699, %v2703
    %v2705 = vlaneseq
    %v2706 = vshrl.u32 %v2705, 7
    %v2707 = vsub.s32 1, %v2706
    %v2708 = vrot.slane %v2699, %v2707
    %v2719 = vunpack.c.l.b16 %v2690
    %v2720 = vunpack.c.h.b16 %v2690
    %v2721 = vunpack.c.l.b16 %v2691
    %v2722 = vunpack.c.h.b16 %v2691
    %v2723 = vunpack.c.l.b16 %v2692
    %v2724 = vunpack.c.h.b16 %v2692
    %v2725 = vunpack.c.l.b16 %v2693
    %v2726 = vunpack.c.h.b16 %v2693
    %v2727 = vunpack.c.l.b16 %v2694
    %v2728 = vunpack.c.h.b16 %v2694
    %v2729 = vunpack.c.l.b16 %v2695
    %v2730 = vunpack.c.h.b16 %v2695
    %v2731 = vunpack.c.l.b16 %v2696
    %v2732 = vunpack.c.h.b16 %v2696
    %v2733 = vunpack.c.l.b16 %v2697
    %v2734 = vunpack.c.h.b16 %v2697
    %v2735 = vpack.c.b16 %v2721, %v2719
    %v2736 = vpack.c.b16 %v2722, %v2720
    %v2737 = vpack.c.b16 %v2725, %v2723
    %v2738 = vpack.c.b16 %v2726, %v2724
    %v2739 = vpack.c.b16 %v2729, %v2727
    %v2740 = vpack.c.b16 %v2730, %v2728
    %v2741 = vpack.c.b16 %v2733, %v2731
    %v2742 = vpack.c.b16 %v2734, %v2732
    %v2752 = vsel %vm342, %v2688, 0
    %2754 = vmatprep.subr.bf16.mxu0 %v2736
    %2755 = vmatpush1.bf16.msra.mxu0 %v2735
    %2756 = vmatprep.subr.bf16.mxu0 %v2738
    %2757 = vmatpush1.bf16.msra.mxu0 %v2737
    %2758 = vmatprep.subr.bf16.mxu0 %v2740
    %2759 = vmatpush1.bf16.msra.mxu0 %v2739
    %2760 = vmatprep.subr.bf16.mxu0 %v2742
    %2761 = vmatpush1.bf16.msra.mxu0 %v2741
    %2762 = vmatprep.subr.bf16.mxu0 0
    %2763 = vmatpush1.bf16.msra.mxu0 0
    %2764 = vmatprep.subr.bf16.mxu0 0
    %2765 = vmatpush1.bf16.msra.mxu0 0
    %2766 = vmatprep.subr.bf16.mxu0 0
    %2767 = vmatpush1.bf16.msra.mxu0 0
    %2768 = vmatprep.subr.bf16.mxu0 0
    %2769 = vmatpush1.bf16.msra.mxu0 0
    %2770 = vmatprep.subr.bf16.mxu0 0
    %2771 = vmatpush1.bf16.msra.mxu0 0
    %2772 = vmatprep.subr.bf16.mxu0 0
    %2773 = vmatpush1.bf16.msra.mxu0 0
    %2774 = vmatprep.subr.bf16.mxu0 0
    %2775 = vmatpush1.bf16.msra.mxu0 0
    %2776 = vmatprep.subr.bf16.mxu0 0
    %2777 = vmatpush1.bf16.msra.mxu0 0
    %2778 = vmatprep.subr.bf16.mxu0 0
    %2779 = vmatpush1.bf16.msra.mxu0 0
    %2780 = vmatprep.subr.bf16.mxu0 0
    %2781 = vmatpush1.bf16.msra.mxu0 0
    %2782 = vmatprep.subr.bf16.mxu0 0
    %2783 = vmatpush1.bf16.msra.mxu0 0
    %2784 = vmatprep.subr.bf16.mxu0 0
    %2785 = vmatpush1.bf16.msra.mxu0 0
    %2786 = vmatprep.mubr.bf16.mxu0 0
    %2787 = vmatmul.mubr.bf16.gmra.mrb[0].mxu0 %v2752
    %v2788 = vpop.f32.mrb[0].mxu0
    %v2789 = vadd.f32 %v2704, %v2788
    %v2790 = vpop.f32.mrb[0].mxu0
    %v2791 = vadd.f32 %v2708, %v2790
    %v2792 = vpop.f32.mrb[0].mxu0
    %v2793 = vadd.f32 %v2704, %v2792
    %v2794 = vpop.f32.mrb[0].mxu0
    %v2795 = vadd.f32 %v2708, %v2794
    %2796 = vdwg.mxu0
    %v2797 = vpack.c.bf16 %v2793, %v2789
    %2799 = vrot.lane.b32.xlu0 %v2797, 96
    %v2800 = vpop.permute.xlu0 %2799
    %v2802 = vsel %vm498, %v2797, 0
    %v2805 = vsel %vm498, %v2800, 0
    %2807 = vmatprep.subr.bf16.mxu0 0
    %2808 = vmatpush1.bf16.xpose.msra.mxu0 %v2805
    %2809 = vmatprep.subr.bf16.mxu0 0
    %2810 = vmatpush1.bf16.xpose.msra.mxu0 0
    %2811 = vmatprep.subr.bf16.mxu0 0
    %2812 = vmatpush1.bf16.xpose.msra.mxu0 0
    %2813 = vmatprep.subr.bf16.mxu0 0
    %2814 = vmatpush1.bf16.xpose.msra.mxu0 0
    %2815 = vmatprep.subr.bf16.mxu0 0
    %2816 = vmatpush1.bf16.xpose.msra.mxu0 0
    %2817 = vmatprep.subr.bf16.mxu0 0
    %2818 = vmatpush1.bf16.xpose.msra.mxu0 0
    %2819 = vmatprep.subr.bf16.mxu0 0
    %2820 = vmatpush1.bf16.xpose.msra.mxu0 0
    %2821 = vmatprep.subr.bf16.mxu0 0
    %2822 = vmatpush1.bf16.xpose.msra.mxu0 0
    %2823 = vmatprep.subr.bf16.mxu0 0
    %2824 = vmatpush1.bf16.xpose.msra.mxu0 0
    %2825 = vmatprep.subr.bf16.mxu0 0
    %2826 = vmatpush1.bf16.xpose.msra.mxu0 0
    %2827 = vmatprep.subr.bf16.mxu0 0
    %2828 = vmatpush1.bf16.xpose.msra.mxu0 0
    %2829 = vmatprep.subr.bf16.mxu0 0
    %2830 = vmatpush1.bf16.xpose.msra.mxu0 0
    %2831 = vmatprep.subr.bf16.mxu0 0
    %2832 = vmatpush1.bf16.xpose.msra.mxu0 0
    %2833 = vmatprep.subr.bf16.mxu0 0
    %2834 = vmatpush1.bf16.xpose.msra.mxu0 0
    %2835 = vmatprep.subr.bf16.mxu0 0
    %2836 = vmatpush1.bf16.xpose.msra.mxu0 0
    %2837 = vmatprep.subr.bf16.mxu0 0
    %2838 = vmatpush1.bf16.xpose.msra.mxu0 0
    %2839 = vmatprep.mubr.bf16.mxu0 0
    %2840 = vmatmul.mubr.bf16.gmra.mrb[0].mxu0 %v2802
    %v2841 = vpop.f32.mrb[0].mxu0
    %v2842 = vadd.f32 0.0, %v2841
    %v2843 = vpop.f32.mrb[0].mxu0
    %v2844 = vpop.f32.mrb[0].mxu0
    %v2845 = vadd.f32 0.0, %v2844
    %v2846 = vpop.f32.mrb[0].mxu0
    %2847 = vdwg.mxu0
    %v2848 = vmul.f32 %v2842, 0.17677669
    %v2849 = vmul.f32 %v2845, 0.17677669
    %v2850 = vadd.f32 %v2848, %v247
    %v2851 = vadd.f32 %v2849, %v248
    %v2852 = vsel %vm550, %v2850, -inf
    %2853 = vmax.xlane.f32.xlu0 %v2852
    %v2854 = vpop.xlane.xlu0 %2853
    %v2855 = vsel %vm550, %v2851, -inf
    %2856 = vmax.xlane.f32.xlu0 %v2855
    %v2857 = vpop.xlane.xlu0 %2856
    %v2858 = vsub.f32 %v2850, %v2854
    %v2859 = vsub.f32 %v2851, %v2857
    %v2860 = vmul.f32 %v2858, 1.442695
    %v2861 = vpow.pop %v2860
    %v2862 = vmul.f32 %v2859, 1.442695
    %v2863 = vpow.pop %v2862
    %v2864 = vsel %vm550, %v2861, 0.0
    %2865 = vadd.xlane.f32.xlu0 %v2864
    %v2866 = vpop.xlane.xlu0 %2865
    %v2867 = vsel %vm550, %v2863, 0.0
    %2868 = vadd.xlane.f32.xlu0 %v2867
    %v2869 = vpop.xlane.xlu0 %2868
    %v2870 = vrcp.pop %v2866
    %v2871 = vrcp.pop %v2869
    %v2872 = vmul.f32 %v2861, %v2870
    %v2873 = vmul.f32 %v2863, %v2871
    %v2874 = vpack.c.bf16 %v2873, %v2872
    %2875 = vrot.lane.b32.xlu0 %v2797, 64
    %v2876 = vpop.permute.xlu0 %2875
    %v2879 = vsel %vm550, %v2874, 0
    %2881 = vmatprep.subr.bf16.mxu0 0
    %2882 = vmatpush1.bf16.msra.mxu0 %v2876
    %2883 = vmatprep.subr.bf16.mxu0 0
    %2884 = vmatpush1.bf16.msra.mxu0 0
    %2885 = vmatprep.subr.bf16.mxu0 0
    %2886 = vmatpush1.bf16.msra.mxu0 0
    %2887 = vmatprep.subr.bf16.mxu0 0
    %2888 = vmatpush1.bf16.msra.mxu0 0
    %2889 = vmatprep.subr.bf16.mxu0 0
    %2890 = vmatpush1.bf16.msra.mxu0 0
    %2891 = vmatprep.subr.bf16.mxu0 0
    %2892 = vmatpush1.bf16.msra.mxu0 0
    %2893 = vmatprep.subr.bf16.mxu0 0
    %2894 = vmatpush1.bf16.msra.mxu0 0
    %2895 = vmatprep.subr.bf16.mxu0 0
    %2896 = vmatpush1.bf16.msra.mxu0 0
    %2897 = vmatprep.subr.bf16.mxu0 0
    %2898 = vmatpush1.bf16.msra.mxu0 0
    %2899 = vmatprep.subr.bf16.mxu0 0
    %2900 = vmatpush1.bf16.msra.mxu0 0
    %2901 = vmatprep.subr.bf16.mxu0 0
    %2902 = vmatpush1.bf16.msra.mxu0 0
    %2903 = vmatprep.subr.bf16.mxu0 0
    %2904 = vmatpush1.bf16.msra.mxu0 0
    %2905 = vmatprep.subr.bf16.mxu0 0
    %2906 = vmatpush1.bf16.msra.mxu0 0
    %2907 = vmatprep.subr.bf16.mxu0 0
    %2908 = vmatpush1.bf16.msra.mxu0 0
    %2909 = vmatprep.subr.bf16.mxu0 0
    %2910 = vmatpush1.bf16.msra.mxu0 0
    %2911 = vmatprep.subr.bf16.mxu0 0
    %2912 = vmatpush1.bf16.msra.mxu0 0
    %2913 = vmatprep.mubr.bf16.mxu0 0
    %2914 = vmatmul.mubr.bf16.gmra.mrb[0].mxu0 %v2879
    %v2915 = vpop.f32.mrb[0].mxu0
    %v2916 = vadd.f32 0.0, %v2915
    %v2917 = vpop.f32.mrb[0].mxu0
    %v2918 = vpop.f32.mrb[0].mxu0
    %v2919 = vadd.f32 0.0, %v2918
    %v2920 = vpop.f32.mrb[0].mxu0
    %2921 = vdwg.mxu0
    %v2922 = vpack.c.bf16 %v2795, %v2791
    %2924 = vrot.lane.b32.xlu0 %v2922, 96
    %v2925 = vpop.permute.xlu0 %2924
    %v2927 = vsel %vm498, %v2922, 0
    %v2930 = vsel %vm498, %v2925, 0
    %2932 = vmatprep.subr.bf16.mxu0 0
    %2933 = vmatpush1.bf16.xpose.msra.mxu0 %v2930
    %2934 = vmatprep.subr.bf16.mxu0 0
    %2935 = vmatpush1.bf16.xpose.msra.mxu0 0
    %2936 = vmatprep.subr.bf16.mxu0 0
    %2937 = vmatpush1.bf16.xpose.msra.mxu0 0
    %2938 = vmatprep.subr.bf16.mxu0 0
    %2939 = vmatpush1.bf16.xpose.msra.mxu0 0
    %2940 = vmatprep.subr.bf16.mxu0 0
    %2941 = vmatpush1.bf16.xpose.msra.mxu0 0
    %2942 = vmatprep.subr.bf16.mxu0 0
    %2943 = vmatpush1.bf16.xpose.msra.mxu0 0
    %2944 = vmatprep.subr.bf16.mxu0 0
    %2945 = vmatpush1.bf16.xpose.msra.mxu0 0
    %2946 = vmatprep.subr.bf16.mxu0 0
    %2947 = vmatpush1.bf16.xpose.msra.mxu0 0
    %2948 = vmatprep.subr.bf16.mxu0 0
    %2949 = vmatpush1.bf16.xpose.msra.mxu0 0
    %2950 = vmatprep.subr.bf16.mxu0 0
    %2951 = vmatpush1.bf16.xpose.msra.mxu0 0
    %2952 = vmatprep.subr.bf16.mxu0 0
    %2953 = vmatpush1.bf16.xpose.msra.mxu0 0
    %2954 = vmatprep.subr.bf16.mxu0 0
    %2955 = vmatpush1.bf16.xpose.msra.mxu0 0
    %2956 = vmatprep.subr.bf16.mxu0 0
    %2957 = vmatpush1.bf16.xpose.msra.mxu0 0
    %2958 = vmatprep.subr.bf16.mxu0 0
    %2959 = vmatpush1.bf16.xpose.msra.mxu0 0
    %2960 = vmatprep.subr.bf16.mxu0 0
    %2961 = vmatpush1.bf16.xpose.msra.mxu0 0
    %2962 = vmatprep.subr.bf16.mxu0 0
    %2963 = vmatpush1.bf16.xpose.msra.mxu0 0
    %2964 = vmatprep.mubr.bf16.mxu0 0
    %2965 = vmatmul.mubr.bf16.gmra.mrb[0].mxu0 %v2927
    %v2966 = vpop.f32.mrb[0].mxu0
    %v2967 = vadd.f32 0.0, %v2966
    %v2968 = vpop.f32.mrb[0].mxu0
    %v2969 = vpop.f32.mrb[0].mxu0
    %v2970 = vadd.f32 0.0, %v2969
    %v2971 = vpop.f32.mrb[0].mxu0
    %2972 = vdwg.mxu0
    %v2973 = vmul.f32 %v2967, 0.17677669
    %v2974 = vmul.f32 %v2970, 0.17677669
    %v2975 = vadd.f32 %v2973, %v247
    %v2976 = vadd.f32 %v2974, %v248
    %v2977 = vsel %vm550, %v2975, -inf
    %2978 = vmax.xlane.f32.xlu0 %v2977
    %v2979 = vpop.xlane.xlu0 %2978
    %v2980 = vsel %vm550, %v2976, -inf
    %2981 = vmax.xlane.f32.xlu0 %v2980
    %v2982 = vpop.xlane.xlu0 %2981
    %v2983 = vsub.f32 %v2975, %v2979
    %v2984 = vsub.f32 %v2976, %v2982
    %v2985 = vmul.f32 %v2983, 1.442695
    %v2986 = vpow.pop %v2985
    %v2987 = vmul.f32 %v2984, 1.442695
    %v2988 = vpow.pop %v2987
    %v2989 = vsel %vm550, %v2986, 0.0
    %2990 = vadd.xlane.f32.xlu0 %v2989
    %v2991 = vpop.xlane.xlu0 %2990
    %v2992 = vsel %vm550, %v2988, 0.0
    %2993 = vadd.xlane.f32.xlu0 %v2992
    %v2994 = vpop.xlane.xlu0 %2993
    %v2995 = vrcp.pop %v2991
    %v2996 = vrcp.pop %v2994
    %v2997 = vmul.f32 %v2986, %v2995
    %v2998 = vmul.f32 %v2988, %v2996
    %v2999 = vpack.c.bf16 %v2998, %v2997
    %3000 = vrot.lane.b32.xlu0 %v2922, 64
    %v3001 = vpop.permute.xlu0 %3000
    %v3004 = vsel %vm550, %v2999, 0
    %3006 = vmatprep.subr.bf16.mxu0 0
    %3007 = vmatpush1.bf16.msra.mxu0 %v3001
    %3008 = vmatprep.subr.bf16.mxu0 0
    %3009 = vmatpush1.bf16.msra.mxu0 0
    %3010 = vmatprep.subr.bf16.mxu0 0
    %3011 = vmatpush1.bf16.msra.mxu0 0
    %3012 = vmatprep.subr.bf16.mxu0 0
    %3013 = vmatpush1.bf16.msra.mxu0 0
    %3014 = vmatprep.subr.bf16.mxu0 0
    %3015 = vmatpush1.bf16.msra.mxu0 0
    %3016 = vmatprep.subr.bf16.mxu0 0
    %3017 = vmatpush1.bf16.msra.mxu0 0
    %3018 = vmatprep.subr.bf16.mxu0 0
    %3019 = vmatpush1.bf16.msra.mxu0 0
    %3020 = vmatprep.subr.bf16.mxu0 0
    %3021 = vmatpush1.bf16.msra.mxu0 0
    %3022 = vmatprep.subr.bf16.mxu0 0
    %3023 = vmatpush1.bf16.msra.mxu0 0
    %3024 = vmatprep.subr.bf16.mxu0 0
    %3025 = vmatpush1.bf16.msra.mxu0 0
    %3026 = vmatprep.subr.bf16.mxu0 0
    %3027 = vmatpush1.bf16.msra.mxu0 0
    %3028 = vmatprep.subr.bf16.mxu0 0
    %3029 = vmatpush1.bf16.msra.mxu0 0
    %3030 = vmatprep.subr.bf16.mxu0 0
    %3031 = vmatpush1.bf16.msra.mxu0 0
    %3032 = vmatprep.subr.bf16.mxu0 0
    %3033 = vmatpush1.bf16.msra.mxu0 0
    %3034 = vmatprep.subr.bf16.mxu0 0
    %3035 = vmatpush1.bf16.msra.mxu0 0
    %3036 = vmatprep.subr.bf16.mxu0 0
    %3037 = vmatpush1.bf16.msra.mxu0 0
    %3038 = vmatprep.mubr.bf16.mxu0 0
    %3039 = vmatmul.mubr.bf16.gmra.mrb[0].mxu0 %v3004
    %v3040 = vpop.f32.mrb[0].mxu0
    %v3041 = vadd.f32 0.0, %v3040
    %v3042 = vpop.f32.mrb[0].mxu0
    %v3043 = vpop.f32.mrb[0].mxu0
    %v3044 = vadd.f32 0.0, %v3043
    %v3045 = vpop.f32.mrb[0].mxu0
    %3046 = vdwg.mxu0
    %3049 = vrot.lane.b32.xlu0 %v3041, 32
    %v3050 = vpop.permute.xlu0 %3049
    %3051 = vrot.lane.b32.xlu0 %v3044, 32
    %v3052 = vpop.permute.xlu0 %3051
    %v3055 = vsel %vm498, %v2916, %v3050
    %v3056 = vsel %vm498, %v2919, %v3052
    %v3057 = vpack.c.bf16 %v3056, %v3055
    %s3058 = scalar_lea.vmem %s8, 96
    %v3059 = vld [vmem:[%s3058] sm:$0xf]
    %v3060 = vld [vmem:[%s3058 + $0x4] sm:$0xf]
    %v3061 = vld [vmem:[%s3058 + $0x8] sm:$0xf]
    %v3062 = vld [vmem:[%s3058 + $0xc] sm:$0xf]
    %v3063 = vld [vmem:[%s3058 + $0x10] sm:$0xf]
    %v3064 = vld [vmem:[%s3058 + $0x14] sm:$0xf]
    %v3065 = vld [vmem:[%s3058 + $0x18] sm:$0xf]
    %v3066 = vld [vmem:[%s3058 + $0x1c] sm:$0xf]
    %s3067 = scalar_lea.vmem [#allocation13], 3
    %v3068 = vld [vmem:[%s3067] sm:$0x1]
    %v3070 = vlaneseq
    %v3071 = vshrl.u32 %v3070, 7
    %v3072 = vsub.s32 0, %v3071
    %v3073 = vrot.slane %v3068, %v3072
    %v3083 = vunpack.c.l.b16 %v3059
    %v3084 = vunpack.c.l.b16 %v3060
    %v3085 = vunpack.c.l.b16 %v3061
    %v3086 = vunpack.c.l.b16 %v3062
    %v3087 = vunpack.c.l.b16 %v3063
    %v3088 = vunpack.c.l.b16 %v3064
    %v3089 = vunpack.c.l.b16 %v3065
    %v3090 = vunpack.c.l.b16 %v3066
    %v3091 = vpack.c.b16 %v3084, %v3083
    %v3092 = vpack.c.b16 %v3086, %v3085
    %v3093 = vpack.c.b16 %v3088, %v3087
    %v3094 = vpack.c.b16 %v3090, %v3089
    %v3100 = vsel %vm342, %v3057, 0
    %3102 = vmatprep.subr.bf16.mxu0 0
    %3103 = vmatpush1.bf16.msra.mxu0 %v3091
    %3104 = vmatprep.subr.bf16.mxu0 0
    %3105 = vmatpush1.bf16.msra.mxu0 %v3092
    %3106 = vmatprep.subr.bf16.mxu0 0
    %3107 = vmatpush1.bf16.msra.mxu0 %v3093
    %3108 = vmatprep.subr.bf16.mxu0 0
    %3109 = vmatpush1.bf16.msra.mxu0 %v3094
    %3110 = vmatprep.subr.bf16.mxu0 0
    %3111 = vmatpush1.bf16.msra.mxu0 0
    %3112 = vmatprep.subr.bf16.mxu0 0
    %3113 = vmatpush1.bf16.msra.mxu0 0
    %3114 = vmatprep.subr.bf16.mxu0 0
    %3115 = vmatpush1.bf16.msra.mxu0 0
    %3116 = vmatprep.subr.bf16.mxu0 0
    %3117 = vmatpush1.bf16.msra.mxu0 0
    %3118 = vmatprep.subr.bf16.mxu0 0
    %3119 = vmatpush1.bf16.msra.mxu0 0
    %3120 = vmatprep.subr.bf16.mxu0 0
    %3121 = vmatpush1.bf16.msra.mxu0 0
    %3122 = vmatprep.subr.bf16.mxu0 0
    %3123 = vmatpush1.bf16.msra.mxu0 0
    %3124 = vmatprep.subr.bf16.mxu0 0
    %3125 = vmatpush1.bf16.msra.mxu0 0
    %3126 = vmatprep.subr.bf16.mxu0 0
    %3127 = vmatpush1.bf16.msra.mxu0 0
    %3128 = vmatprep.subr.bf16.mxu0 0
    %3129 = vmatpush1.bf16.msra.mxu0 0
    %3130 = vmatprep.subr.bf16.mxu0 0
    %3131 = vmatpush1.bf16.msra.mxu0 0
    %3132 = vmatprep.subr.bf16.mxu0 0
    %3133 = vmatpush1.bf16.msra.mxu0 0
    %3134 = vmatprep.mubr.bf16.mxu0 0
    %3135 = vmatmul.mubr.bf16.gmra.mrb[0].mxu0 %v3100
    %v3136 = vpop.f32.mrb[0].mxu0
    %v3137 = vadd.f32 %v3073, %v3136
    %v3138 = vpop.f32.mrb[0].mxu0
    %v3139 = vpop.f32.mrb[0].mxu0
    %v3140 = vadd.f32 %v3073, %v3139
    %v3141 = vpop.f32.mrb[0].mxu0
    %3142 = vdwg.mxu0
    %v3143 = vadd.f32 %v2686, %v3137
    %v3144 = vadd.f32 %v2687, %v3140
    %s3145 = scalar_lea.vmem [#allocation14], 3
    %v3146 = vld [vmem:[%s3145] sm:$0x1]
    %s3147 = scalar_lea.vmem [#allocation16], 3
    %v3148 = vld [vmem:[%s3147] sm:$0x1]
    %v3149 = vsel %vm342, %v3143, 0.0
    %3150 = vadd.xlane.f32.xlu0 %v3149
    %v3151 = vpop.xlane.xlu0 %3150
    %v3152 = vsel %vm342, %v3144, 0.0
    %3153 = vadd.xlane.f32.xlu0 %v3152
    %v3154 = vpop.xlane.xlu0 %3153
    %v3155 = vmul.f32 %v3151, %v850
    %v3156 = vmul.f32 %v3154, %v850
    %v3157 = vsub.f32 %v3143, %v3155
    %v3158 = vsub.f32 %v3144, %v3156
    %v3159 = vmul.f32 %v3157, %v3157
    %v3160 = vmul.f32 %v3158, %v3158
    %v3161 = vsel %vm342, %v3159, 0.0
    %3162 = vadd.xlane.f32.xlu0 %v3161
    %v3163 = vpop.xlane.xlu0 %3162
    %v3164 = vsel %vm342, %v3160, 0.0
    %3165 = vadd.xlane.f32.xlu0 %v3164
    %v3166 = vpop.xlane.xlu0 %3165
    %v3167 = vmul.f32 %v3163, %v850
    %v3168 = vmul.f32 %v3166, %v850
    %v3169 = vadd.f32 %v3167, 1e-12
    %v3170 = vadd.f32 %v3168, 1e-12
    %v3171 = vrsqrt.pop %v3169
    %v3172 = vrsqrt.pop %v3170
    %v3173 = vmul.f32 %v3157, %v3171
    %v3174 = vmul.f32 %v3158, %v3172
    %v3176 = vlaneseq
    %v3177 = vshrl.u32 %v3176, 7
    %v3178 = vsub.s32 0, %v3177
    %v3179 = vrot.slane %v3146, %v3178
    %v3181 = vmul.f32 %v3173, %v3179
    %v3182 = vmul.f32 %v3174, %v3179
    %v3184 = vlaneseq
    %v3185 = vshrl.u32 %v3184, 7
    %v3186 = vsub.s32 0, %v3185
    %v3187 = vrot.slane %v3148, %v3186
    %v3189 = vadd.f32 %v3181, %v3187
    %v3190 = vadd.f32 %v3182, %v3187
    %v3191 = vpack.c.bf16 %v3190, %v3189
    %s3192 = scalar_lea.vmem [#allocation17], 96
    %v3193 = vld [vmem:[%s3192] sm:$0xf]
    %v3194 = vld [vmem:[%s3192 + $0x4] sm:$0xf]
    %v3195 = vld [vmem:[%s3192 + $0x8] sm:$0xf]
    %v3196 = vld [vmem:[%s3192 + $0xc] sm:$0xf]
    %v3197 = vld [vmem:[%s3192 + $0x10] sm:$0xf]
    %v3198 = vld [vmem:[%s3192 + $0x14] sm:$0xf]
    %v3199 = vld [vmem:[%s3192 + $0x18] sm:$0xf]
    %v3200 = vld [vmem:[%s3192 + $0x1c] sm:$0xf]
    %s3201 = scalar_lea.vmem [#allocation19], 3
    %v3202 = vld [vmem:[%s3201] sm:$0x1]
    %v3204 = vlaneseq
    %v3205 = vshrl.u32 %v3204, 7
    %v3206 = vsub.s32 0, %v3205
    %v3207 = vrot.slane %v3202, %v3206
    %v3217 = vunpack.c.l.b16 %v3193
    %v3218 = vunpack.c.l.b16 %v3194
    %v3219 = vunpack.c.l.b16 %v3195
    %v3220 = vunpack.c.l.b16 %v3196
    %v3221 = vunpack.c.l.b16 %v3197
    %v3222 = vunpack.c.l.b16 %v3198
    %v3223 = vunpack.c.l.b16 %v3199
    %v3224 = vunpack.c.l.b16 %v3200
    %v3225 = vpack.c.b16 %v3218, %v3217
    %v3226 = vpack.c.b16 %v3220, %v3219
    %v3227 = vpack.c.b16 %v3222, %v3221
    %v3228 = vpack.c.b16 %v3224, %v3223
    %v3234 = vsel %vm342, %v3191, 0
    %3236 = vmatprep.subr.bf16.mxu0 0
    %3237 = vmatpush1.bf16.msra.mxu0 %v3225
    %3238 = vmatprep.subr.bf16.mxu0 0
    %3239 = vmatpush1.bf16.msra.mxu0 %v3226
    %3240 = vmatprep.subr.bf16.mxu0 0
    %3241 = vmatpush1.bf16.msra.mxu0 %v3227
    %3242 = vmatprep.subr.bf16.mxu0 0
    %3243 = vmatpush1.bf16.msra.mxu0 %v3228
    %3244 = vmatprep.subr.bf16.mxu0 0
    %3245 = vmatpush1.bf16.msra.mxu0 0
    %3246 = vmatprep.subr.bf16.mxu0 0
    %3247 = vmatpush1.bf16.msra.mxu0 0
    %3248 = vmatprep.subr.bf16.mxu0 0
    %3249 = vmatpush1.bf16.msra.mxu0 0
    %3250 = vmatprep.subr.bf16.mxu0 0
    %3251 = vmatpush1.bf16.msra.mxu0 0
    %3252 = vmatprep.subr.bf16.mxu0 0
    %3253 = vmatpush1.bf16.msra.mxu0 0
    %3254 = vmatprep.subr.bf16.mxu0 0
    %3255 = vmatpush1.bf16.msra.mxu0 0
    %3256 = vmatprep.subr.bf16.mxu0 0
    %3257 = vmatpush1.bf16.msra.mxu0 0
    %3258 = vmatprep.subr.bf16.mxu0 0
    %3259 = vmatpush1.bf16.msra.mxu0 0
    %3260 = vmatprep.subr.bf16.mxu0 0
    %3261 = vmatpush1.bf16.msra.mxu0 0
    %3262 = vmatprep.subr.bf16.mxu0 0
    %3263 = vmatpush1.bf16.msra.mxu0 0
    %3264 = vmatprep.subr.bf16.mxu0 0
    %3265 = vmatpush1.bf16.msra.mxu0 0
    %3266 = vmatprep.subr.bf16.mxu0 0
    %3267 = vmatpush1.bf16.msra.mxu0 0
    %3268 = vmatprep.mubr.bf16.mxu0 0
    %3269 = vmatmul.mubr.bf16.gmra.mrb[0].mxu0 %v3234
    %v3270 = vpop.f32.mrb[0].mxu0
    %v3271 = vadd.f32 %v3207, %v3270
    %v3272 = vpop.f32.mrb[0].mxu0
    %v3273 = vpop.f32.mrb[0].mxu0
    %v3274 = vadd.f32 %v3207, %v3273
    %v3275 = vpop.f32.mrb[0].mxu0
    %3276 = vdwg.mxu0
    %v3277 = vmul.f32 %v3271, %v3271
    %v3278 = vmul.f32 %v3274, %v3274
    %v3279 = vmul.f32 %v3271, %v3277
    %v3280 = vmul.f32 %v3274, %v3278
    %v3281 = vmul.f32 %v3279, 0.044715
    %v3282 = vmul.f32 %v3280, 0.044715
    %v3283 = vadd.f32 %v3271, %v3281
    %v3284 = vadd.f32 %v3274, %v3282
    %v3285 = vmul.f32 %v3283, 0.7978846
    %v3286 = vmul.f32 %v3284, 0.7978846
    %v3287 = vtanh.pop %v3285
    %v3288 = vtanh.pop %v3286
    %v3289 = vadd.f32 %v3287, 1.0
    %v3290 = vadd.f32 %v3288, 1.0
    %v3291 = vmul.f32 %v3289, 0.5
    %v3292 = vmul.f32 %v3290, 0.5
    %v3293 = vmul.f32 %v3271, %v3291
    %v3294 = vmul.f32 %v3274, %v3292
    %v3295 = vpack.c.bf16 %v3294, %v3293
    %s3296 = scalar_lea.vmem %s14, 192
    %v3297 = vld [vmem:[%s3296] sm:$0xf]
    %v3298 = vld [vmem:[%s3296 + $0x4] sm:$0xf]
    %v3299 = vld [vmem:[%s3296 + $0x8] sm:$0xf]
    %v3300 = vld [vmem:[%s3296 + $0xc] sm:$0xf]
    %v3301 = vld [vmem:[%s3296 + $0x10] sm:$0xf]
    %v3302 = vld [vmem:[%s3296 + $0x14] sm:$0xf]
    %v3303 = vld [vmem:[%s3296 + $0x18] sm:$0xf]
    %v3304 = vld [vmem:[%s3296 + $0x1c] sm:$0xf]
    %v3305 = vld [vmem:[%s3296 + $0x20] sm:$0xf]
    %v3306 = vld [vmem:[%s3296 + $0x24] sm:$0xf]
    %v3307 = vld [vmem:[%s3296 + $0x28] sm:$0xf]
    %v3308 = vld [vmem:[%s3296 + $0x2c] sm:$0xf]
    %v3309 = vld [vmem:[%s3296 + $0x30] sm:$0xf]
    %v3310 = vld [vmem:[%s3296 + $0x34] sm:$0xf]
    %v3311 = vld [vmem:[%s3296 + $0x38] sm:$0xf]
    %v3312 = vld [vmem:[%s3296 + $0x3c] sm:$0xf]
    %s3313 = scalar_lea.vmem [#allocation20], 3
    %v3314 = vld [vmem:[%s3313] sm:$0x1]
    %v3316 = vlaneseq
    %v3317 = vshrl.u32 %v3316, 7
    %v3318 = vsub.s32 0, %v3317
    %v3319 = vrot.slane %v3314, %v3318
    %v3337 = vunpack.c.l.b16 %v3297
    %v3338 = vunpack.c.l.b16 %v3298
    %v3339 = vunpack.c.l.b16 %v3299
    %v3340 = vunpack.c.l.b16 %v3300
    %v3341 = vunpack.c.l.b16 %v3301
    %v3342 = vunpack.c.l.b16 %v3302
    %v3343 = vunpack.c.l.b16 %v3303
    %v3344 = vunpack.c.l.b16 %v3304
    %v3345 = vunpack.c.l.b16 %v3305
    %v3346 = vunpack.c.l.b16 %v3306
    %v3347 = vunpack.c.l.b16 %v3307
    %v3348 = vunpack.c.l.b16 %v3308
    %v3349 = vunpack.c.l.b16 %v3309
    %v3350 = vunpack.c.l.b16 %v3310
    %v3351 = vunpack.c.l.b16 %v3311
    %v3352 = vunpack.c.l.b16 %v3312
    %v3353 = vpack.c.b16 %v3338, %v3337
    %v3354 = vpack.c.b16 %v3340, %v3339
    %v3355 = vpack.c.b16 %v3342, %v3341
    %v3356 = vpack.c.b16 %v3344, %v3343
    %v3357 = vpack.c.b16 %v3346, %v3345
    %v3358 = vpack.c.b16 %v3348, %v3347
    %v3359 = vpack.c.b16 %v3350, %v3349
    %v3360 = vpack.c.b16 %v3352, %v3351
    %3369 = vmatprep.subr.bf16.mxu0 0
    %3370 = vmatpush1.bf16.msra.mxu0 %v3353
    %3371 = vmatprep.subr.bf16.mxu0 0
    %3372 = vmatpush1.bf16.msra.mxu0 %v3354
    %3373 = vmatprep.subr.bf16.mxu0 0
    %3374 = vmatpush1.bf16.msra.mxu0 %v3355
    %3375 = vmatprep.subr.bf16.mxu0 0
    %3376 = vmatpush1.bf16.msra.mxu0 %v3356
    %3377 = vmatprep.subr.bf16.mxu0 0
    %3378 = vmatpush1.bf16.msra.mxu0 %v3357
    %3379 = vmatprep.subr.bf16.mxu0 0
    %3380 = vmatpush1.bf16.msra.mxu0 %v3358
    %3381 = vmatprep.subr.bf16.mxu0 0
    %3382 = vmatpush1.bf16.msra.mxu0 %v3359
    %3383 = vmatprep.subr.bf16.mxu0 0
    %3384 = vmatpush1.bf16.msra.mxu0 %v3360
    %3385 = vmatprep.subr.bf16.mxu0 0
    %3386 = vmatpush1.bf16.msra.mxu0 0
    %3387 = vmatprep.subr.bf16.mxu0 0
    %3388 = vmatpush1.bf16.msra.mxu0 0
    %3389 = vmatprep.subr.bf16.mxu0 0
    %3390 = vmatpush1.bf16.msra.mxu0 0
    %3391 = vmatprep.subr.bf16.mxu0 0
    %3392 = vmatpush1.bf16.msra.mxu0 0
    %3393 = vmatprep.subr.bf16.mxu0 0
    %3394 = vmatpush1.bf16.msra.mxu0 0
    %3395 = vmatprep.subr.bf16.mxu0 0
    %3396 = vmatpush1.bf16.msra.mxu0 0
    %3397 = vmatprep.subr.bf16.mxu0 0
    %3398 = vmatpush1.bf16.msra.mxu0 0
    %3399 = vmatprep.subr.bf16.mxu0 0
    %3400 = vmatpush1.bf16.msra.mxu0 0
    %3401 = vmatprep.mubr.bf16.mxu0 0
    %3402 = vmatmul.mubr.bf16.gmra.mrb[0].mxu0 %v3295
    %v3403 = vpop.f32.mrb[0].mxu0
    %v3404 = vadd.f32 %v3319, %v3403
    %v3405 = vpop.f32.mrb[0].mxu0
    %v3406 = vpop.f32.mrb[0].mxu0
    %v3407 = vadd.f32 %v3319, %v3406
    %v3408 = vpop.f32.mrb[0].mxu0
    %3409 = vdwg.mxu0
    %v3410 = vadd.f32 %v3189, %v3404
    %v3411 = vadd.f32 %v3190, %v3407
    %s3412 = scalar_lea.vmem [#allocation22], 3
    %v3413 = vld [vmem:[%s3412] sm:$0x1]
    %s3414 = scalar_lea.vmem [#allocation23], 3
    %v3415 = vld [vmem:[%s3414] sm:$0x1]
    %v3416 = vsel %vm342, %v3410, 0.0
    %3417 = vadd.xlane.f32.xlu0 %v3416
    %v3418 = vpop.xlane.xlu0 %3417
    %v3419 = vsel %vm342, %v3411, 0.0
    %3420 = vadd.xlane.f32.xlu0 %v3419
    %v3421 = vpop.xlane.xlu0 %3420
    %v3422 = vmul.f32 %v3418, %v850
    %v3423 = vmul.f32 %v3421, %v850
    %v3424 = vsub.f32 %v3410, %v3422
    %v3425 = vsub.f32 %v3411, %v3423
    %v3426 = vmul.f32 %v3424, %v3424
    %v3427 = vmul.f32 %v3425, %v3425
    %v3428 = vsel %vm342, %v3426, 0.0
    %3429 = vadd.xlane.f32.xlu0 %v3428
    %v3430 = vpop.xlane.xlu0 %3429
    %v3431 = vsel %vm342, %v3427, 0.0
    %3432 = vadd.xlane.f32.xlu0 %v3431
    %v3433 = vpop.xlane.xlu0 %3432
    %v3434 = vmul.f32 %v3430, %v850
    %v3435 = vmul.f32 %v3433, %v850
    %v3436 = vadd.f32 %v3434, 1e-12
    %v3437 = vadd.f32 %v3435, 1e-12
    %v3438 = vrsqrt.pop %v3436
    %v3439 = vrsqrt.pop %v3437
    %v3440 = vmul.f32 %v3424, %v3438
    %v3441 = vmul.f32 %v3425, %v3439
    %v3443 = vlaneseq
    %v3444 = vshrl.u32 %v3443, 7
    %v3445 = vsub.s32 0, %v3444
    %v3446 = vrot.slane %v3413, %v3445
    %v3448 = vmul.f32 %v3440, %v3446
    %v3449 = vmul.f32 %v3441, %v3446
    %v3451 = vlaneseq
    %v3452 = vshrl.u32 %v3451, 7
    %v3453 = vsub.s32 0, %v3452
    %v3454 = vrot.slane %v3415, %v3453
    %v3456 = vadd.f32 %v3448, %v3454
    %v3457 = vadd.f32 %v3449, %v3454
    %v3458 = vadd.f32 %v3456, 0.0
    %v3459 = vadd.f32 %v3457, 0.0
    %v3460 = vpack.c.bf16 %v3457, %v3456
    %s3461 = scalar_lea.vmem %s6, 256
    %v3462 = vld [vmem:[%s3461] sm:$0xff]
    %v3463 = vld [vmem:[%s3461 + $0x8] sm:$0xff]
    %v3464 = vld [vmem:[%s3461 + $0x10] sm:$0xff]
    %v3465 = vld [vmem:[%s3461 + $0x18] sm:$0xff]
    %v3466 = vld [vmem:[%s3461 + $0x20] sm:$0xff]
    %v3467 = vld [vmem:[%s3461 + $0x28] sm:$0xff]
    %v3468 = vld [vmem:[%s3461 + $0x30] sm:$0xff]
    %v3469 = vld [vmem:[%s3461 + $0x38] sm:$0xff]
    %s3470 = scalar_lea.vmem [#allocation11], 8
    %v3471 = vld [vmem:[%s3470] sm:$0x3]
    %v3473 = vlaneseq
    %v3474 = vshrl.u32 %v3473, 7
    %v3475 = vsub.s32 0, %v3474
    %v3476 = vrot.slane %v3471, %v3475
    %v3477 = vlaneseq
    %v3478 = vshrl.u32 %v3477, 7
    %v3479 = vsub.s32 1, %v3478
    %v3480 = vrot.slane %v3471, %v3479
    %v3491 = vunpack.c.l.b16 %v3462
    %v3492 = vunpack.c.h.b16 %v3462
    %v3493 = vunpack.c.l.b16 %v3463
    %v3494 = vunpack.c.h.b16 %v3463
    %v3495 = vunpack.c.l.b16 %v3464
    %v3496 = vunpack.c.h.b16 %v3464
    %v3497 = vunpack.c.l.b16 %v3465
    %v3498 = vunpack.c.h.b16 %v3465
    %v3499 = vunpack.c.l.b16 %v3466
    %v3500 = vunpack.c.h.b16 %v3466
    %v3501 = vunpack.c.l.b16 %v3467
    %v3502 = vunpack.c.h.b16 %v3467
    %v3503 = vunpack.c.l.b16 %v3468
    %v3504 = vunpack.c.h.b16 %v3468
    %v3505 = vunpack.c.l.b16 %v3469
    %v3506 = vunpack.c.h.b16 %v3469
    %v3507 = vpack.c.b16 %v3493, %v3491
    %v3508 = vpack.c.b16 %v3494, %v3492
    %v3509 = vpack.c.b16 %v3497, %v3495
    %v3510 = vpack.c.b16 %v3498, %v3496
    %v3511 = vpack.c.b16 %v3501, %v3499
    %v3512 = vpack.c.b16 %v3502, %v3500
    %v3513 = vpack.c.b16 %v3505, %v3503
    %v3514 = vpack.c.b16 %v3506, %v3504
    %v3524 = vsel %vm342, %v3460, 0
    %3526 = vmatprep.subr.bf16.mxu0 %v3508
    %3527 = vmatpush1.bf16.msra.mxu0 %v3507
    %3528 = vmatprep.subr.bf16.mxu0 %v3510
    %3529 = vmatpush1.bf16.msra.mxu0 %v3509
    %3530 = vmatprep.subr.bf16.mxu0 %v3512
    %3531 = vmatpush1.bf16.msra.mxu0 %v3511
    %3532 = vmatprep.subr.bf16.mxu0 %v3514
    %3533 = vmatpush1.bf16.msra.mxu0 %v3513
    %3534 = vmatprep.subr.bf16.mxu0 0
    %3535 = vmatpush1.bf16.msra.mxu0 0
    %3536 = vmatprep.subr.bf16.mxu0 0
    %3537 = vmatpush1.bf16.msra.mxu0 0
    %3538 = vmatprep.subr.bf16.mxu0 0
    %3539 = vmatpush1.bf16.msra.mxu0 0
    %3540 = vmatprep.subr.bf16.mxu0 0
    %3541 = vmatpush1.bf16.msra.mxu0 0
    %3542 = vmatprep.subr.bf16.mxu0 0
    %3543 = vmatpush1.bf16.msra.mxu0 0
    %3544 = vmatprep.subr.bf16.mxu0 0
    %3545 = vmatpush1.bf16.msra.mxu0 0
    %3546 = vmatprep.subr.bf16.mxu0 0
    %3547 = vmatpush1.bf16.msra.mxu0 0
    %3548 = vmatprep.subr.bf16.mxu0 0
    %3549 = vmatpush1.bf16.msra.mxu0 0
    %3550 = vmatprep.subr.bf16.mxu0 0
    %3551 = vmatpush1.bf16.msra.mxu0 0
    %3552 = vmatprep.subr.bf16.mxu0 0
    %3553 = vmatpush1.bf16.msra.mxu0 0
    %3554 = vmatprep.subr.bf16.mxu0 0
    %3555 = vmatpush1.bf16.msra.mxu0 0
    %3556 = vmatprep.subr.bf16.mxu0 0
    %3557 = vmatpush1.bf16.msra.mxu0 0
    %3558 = vmatprep.mubr.bf16.mxu0 0
    %3559 = vmatmul.mubr.bf16.gmra.mrb[0].mxu0 %v3524
    %v3560 = vpop.f32.mrb[0].mxu0
    %v3561 = vadd.f32 %v3476, %v3560
    %v3562 = vpop.f32.mrb[0].mxu0
    %v3563 = vadd.f32 %v3480, %v3562
    %v3564 = vpop.f32.mrb[0].mxu0
    %v3565 = vadd.f32 %v3476, %v3564
    %v3566 = vpop.f32.mrb[0].mxu0
    %v3567 = vadd.f32 %v3480, %v3566
    %3568 = vdwg.mxu0
    %v3569 = vpack.c.bf16 %v3565, %v3561
    %3571 = vrot.lane.b32.xlu0 %v3569, 96
    %v3572 = vpop.permute.xlu0 %3571
    %v3574 = vsel %vm498, %v3569, 0
    %v3577 = vsel %vm498, %v3572, 0
    %3579 = vmatprep.subr.bf16.mxu0 0
    %3580 = vmatpush1.bf16.xpose.msra.mxu0 %v3577
    %3581 = vmatprep.subr.bf16.mxu0 0
    %3582 = vmatpush1.bf16.xpose.msra.mxu0 0
    %3583 = vmatprep.subr.bf16.mxu0 0
    %3584 = vmatpush1.bf16.xpose.msra.mxu0 0
    %3585 = vmatprep.subr.bf16.mxu0 0
    %3586 = vmatpush1.bf16.xpose.msra.mxu0 0
    %3587 = vmatprep.subr.bf16.mxu0 0
    %3588 = vmatpush1.bf16.xpose.msra.mxu0 0
    %3589 = vmatprep.subr.bf16.mxu0 0
    %3590 = vmatpush1.bf16.xpose.msra.mxu0 0
    %3591 = vmatprep.subr.bf16.mxu0 0
    %3592 = vmatpush1.bf16.xpose.msra.mxu0 0
    %3593 = vmatprep.subr.bf16.mxu0 0
    %3594 = vmatpush1.bf16.xpose.msra.mxu0 0
    %3595 = vmatprep.subr.bf16.mxu0 0
    %3596 = vmatpush1.bf16.xpose.msra.mxu0 0
    %3597 = vmatprep.subr.bf16.mxu0 0
    %3598 = vmatpush1.bf16.xpose.msra.mxu0 0
    %3599 = vmatprep.subr.bf16.mxu0 0
    %3600 = vmatpush1.bf16.xpose.msra.mxu0 0
    %3601 = vmatprep.subr.bf16.mxu0 0
    %3602 = vmatpush1.bf16.xpose.msra.mxu0 0
    %3603 = vmatprep.subr.bf16.mxu0 0
    %3604 = vmatpush1.bf16.xpose.msra.mxu0 0
    %3605 = vmatprep.subr.bf16.mxu0 0
    %3606 = vmatpush1.bf16.xpose.msra.mxu0 0
    %3607 = vmatprep.subr.bf16.mxu0 0
    %3608 = vmatpush1.bf16.xpose.msra.mxu0 0
    %3609 = vmatprep.subr.bf16.mxu0 0
    %3610 = vmatpush1.bf16.xpose.msra.mxu0 0
    %3611 = vmatprep.mubr.bf16.mxu0 0
    %3612 = vmatmul.mubr.bf16.gmra.mrb[0].mxu0 %v3574
    %v3613 = vpop.f32.mrb[0].mxu0
    %v3614 = vadd.f32 0.0, %v3613
    %v3615 = vpop.f32.mrb[0].mxu0
    %v3616 = vpop.f32.mrb[0].mxu0
    %v3617 = vadd.f32 0.0, %v3616
    %v3618 = vpop.f32.mrb[0].mxu0
    %3619 = vdwg.mxu0
    %v3620 = vmul.f32 %v3614, 0.17677669
    %v3621 = vmul.f32 %v3617, 0.17677669
    %v3622 = vadd.f32 %v3620, %v247
    %v3623 = vadd.f32 %v3621, %v248
    %v3624 = vsel %vm550, %v3622, -inf
    %3625 = vmax.xlane.f32.xlu0 %v3624
    %v3626 = vpop.xlane.xlu0 %3625
    %v3627 = vsel %vm550, %v3623, -inf
    %3628 = vmax.xlane.f32.xlu0 %v3627
    %v3629 = vpop.xlane.xlu0 %3628
    %v3630 = vsub.f32 %v3622, %v3626
    %v3631 = vsub.f32 %v3623, %v3629
    %v3632 = vmul.f32 %v3630, 1.442695
    %v3633 = vpow.pop %v3632
    %v3634 = vmul.f32 %v3631, 1.442695
    %v3635 = vpow.pop %v3634
    %v3636 = vsel %vm550, %v3633, 0.0
    %3637 = vadd.xlane.f32.xlu0 %v3636
    %v3638 = vpop.xlane.xlu0 %3637
    %v3639 = vsel %vm550, %v3635, 0.0
    %3640 = vadd.xlane.f32.xlu0 %v3639
    %v3641 = vpop.xlane.xlu0 %3640
    %v3642 = vrcp.pop %v3638
    %v3643 = vrcp.pop %v3641
    %v3644 = vmul.f32 %v3633, %v3642
    %v3645 = vmul.f32 %v3635, %v3643
    %v3646 = vpack.c.bf16 %v3645, %v3644
    %3647 = vrot.lane.b32.xlu0 %v3569, 64
    %v3648 = vpop.permute.xlu0 %3647
    %v3651 = vsel %vm550, %v3646, 0
    %3653 = vmatprep.subr.bf16.mxu0 0
    %3654 = vmatpush1.bf16.msra.mxu0 %v3648
    %3655 = vmatprep.subr.bf16.mxu0 0
    %3656 = vmatpush1.bf16.msra.mxu0 0
    %3657 = vmatprep.subr.bf16.mxu0 0
    %3658 = vmatpush1.bf16.msra.mxu0 0
    %3659 = vmatprep.subr.bf16.mxu0 0
    %3660 = vmatpush1.bf16.msra.mxu0 0
    %3661 = vmatprep.subr.bf16.mxu0 0
    %3662 = vmatpush1.bf16.msra.mxu0 0
    %3663 = vmatprep.subr.bf16.mxu0 0
    %3664 = vmatpush1.bf16.msra.mxu0 0
    %3665 = vmatprep.subr.bf16.mxu0 0
    %3666 = vmatpush1.bf16.msra.mxu0 0
    %3667 = vmatprep.subr.bf16.mxu0 0
    %3668 = vmatpush1.bf16.msra.mxu0 0
    %3669 = vmatprep.subr.bf16.mxu0 0
    %3670 = vmatpush1.bf16.msra.mxu0 0
    %3671 = vmatprep.subr.bf16.mxu0 0
    %3672 = vmatpush1.bf16.msra.mxu0 0
    %3673 = vmatprep.subr.bf16.mxu0 0
    %3674 = vmatpush1.bf16.msra.mxu0 0
    %3675 = vmatprep.subr.bf16.mxu0 0
    %3676 = vmatpush1.bf16.msra.mxu0 0
    %3677 = vmatprep.subr.bf16.mxu0 0
    %3678 = vmatpush1.bf16.msra.mxu0 0
    %3679 = vmatprep.subr.bf16.mxu0 0
    %3680 = vmatpush1.bf16.msra.mxu0 0
    %3681 = vmatprep.subr.bf16.mxu0 0
    %3682 = vmatpush1.bf16.msra.mxu0 0
    %3683 = vmatprep.subr.bf16.mxu0 0
    %3684 = vmatpush1.bf16.msra.mxu0 0
    %3685 = vmatprep.mubr.bf16.mxu0 0
    %3686 = vmatmul.mubr.bf16.gmra.mrb[0].mxu0 %v3651
    %v3687 = vpop.f32.mrb[0].mxu0
    %v3688 = vadd.f32 0.0, %v3687
    %v3689 = vpop.f32.mrb[0].mxu0
    %v3690 = vpop.f32.mrb[0].mxu0
    %v3691 = vadd.f32 0.0, %v3690
    %v3692 = vpop.f32.mrb[0].mxu0
    %3693 = vdwg.mxu0
    %v3694 = vpack.c.bf16 %v3567, %v3563
    %3696 = vrot.lane.b32.xlu0 %v3694, 96
    %v3697 = vpop.permute.xlu0 %3696
    %v3699 = vsel %vm498, %v3694, 0
    %v3702 = vsel %vm498, %v3697, 0
    %3704 = vmatprep.subr.bf16.mxu0 0
    %3705 = vmatpush1.bf16.xpose.msra.mxu0 %v3702
    %3706 = vmatprep.subr.bf16.mxu0 0
    %3707 = vmatpush1.bf16.xpose.msra.mxu0 0
    %3708 = vmatprep.subr.bf16.mxu0 0
    %3709 = vmatpush1.bf16.xpose.msra.mxu0 0
    %3710 = vmatprep.subr.bf16.mxu0 0
    %3711 = vmatpush1.bf16.xpose.msra.mxu0 0
    %3712 = vmatprep.subr.bf16.mxu0 0
    %3713 = vmatpush1.bf16.xpose.msra.mxu0 0
    %3714 = vmatprep.subr.bf16.mxu0 0
    %3715 = vmatpush1.bf16.xpose.msra.mxu0 0
    %3716 = vmatprep.subr.bf16.mxu0 0
    %3717 = vmatpush1.bf16.xpose.msra.mxu0 0
    %3718 = vmatprep.subr.bf16.mxu0 0
    %3719 = vmatpush1.bf16.xpose.msra.mxu0 0
    %3720 = vmatprep.subr.bf16.mxu0 0
    %3721 = vmatpush1.bf16.xpose.msra.mxu0 0
    %3722 = vmatprep.subr.bf16.mxu0 0
    %3723 = vmatpush1.bf16.xpose.msra.mxu0 0
    %3724 = vmatprep.subr.bf16.mxu0 0
    %3725 = vmatpush1.bf16.xpose.msra.mxu0 0
    %3726 = vmatprep.subr.bf16.mxu0 0
    %3727 = vmatpush1.bf16.xpose.msra.mxu0 0
    %3728 = vmatprep.subr.bf16.mxu0 0
    %3729 = vmatpush1.bf16.xpose.msra.mxu0 0
    %3730 = vmatprep.subr.bf16.mxu0 0
    %3731 = vmatpush1.bf16.xpose.msra.mxu0 0
    %3732 = vmatprep.subr.bf16.mxu0 0
    %3733 = vmatpush1.bf16.xpose.msra.mxu0 0
    %3734 = vmatprep.subr.bf16.mxu0 0
    %3735 = vmatpush1.bf16.xpose.msra.mxu0 0
    %3736 = vmatprep.mubr.bf16.mxu0 0
    %3737 = vmatmul.mubr.bf16.gmra.mrb[0].mxu0 %v3699
    %v3738 = vpop.f32.mrb[0].mxu0
    %v3739 = vadd.f32 0.0, %v3738
    %v3740 = vpop.f32.mrb[0].mxu0
    %v3741 = vpop.f32.mrb[0].mxu0
    %v3742 = vadd.f32 0.0, %v3741
    %v3743 = vpop.f32.mrb[0].mxu0
    %3744 = vdwg.mxu0
    %v3745 = vmul.f32 %v3739, 0.17677669
    %v3746 = vmul.f32 %v3742, 0.17677669
    %v3747 = vadd.f32 %v3745, %v247
    %v3748 = vadd.f32 %v3746, %v248
    %v3749 = vsel %vm550, %v3747, -inf
    %3750 = vmax.xlane.f32.xlu0 %v3749
    %v3751 = vpop.xlane.xlu0 %3750
    %v3752 = vsel %vm550, %v3748, -inf
    %3753 = vmax.xlane.f32.xlu0 %v3752
    %v3754 = vpop.xlane.xlu0 %3753
    %v3755 = vsub.f32 %v3747, %v3751
    %v3756 = vsub.f32 %v3748, %v3754
    %v3757 = vmul.f32 %v3755, 1.442695
    %v3758 = vpow.pop %v3757
    %v3759 = vmul.f32 %v3756, 1.442695
    %v3760 = vpow.pop %v3759
    %v3761 = vsel %vm550, %v3758, 0.0
    %3762 = vadd.xlane.f32.xlu0 %v3761
    %v3763 = vpop.xlane.xlu0 %3762
    %v3764 = vsel %vm550, %v3760, 0.0
    %3765 = vadd.xlane.f32.xlu0 %v3764
    %v3766 = vpop.xlane.xlu0 %3765
    %v3767 = vrcp.pop %v3763
    %v3768 = vrcp.pop %v3766
    %v3769 = vmul.f32 %v3758, %v3767
    %v3770 = vmul.f32 %v3760, %v3768
    %v3771 = vpack.c.bf16 %v3770, %v3769
    %3772 = vrot.lane.b32.xlu0 %v3694, 64
    %v3773 = vpop.permute.xlu0 %3772
    %v3776 = vsel %vm550, %v3771, 0
    %3778 = vmatprep.subr.bf16.mxu0 0
    %3779 = vmatpush1.bf16.msra.mxu0 %v3773
    %3780 = vmatprep.subr.bf16.mxu0 0
    %3781 = vmatpush1.bf16.msra.mxu0 0
    %3782 = vmatprep.subr.bf16.mxu0 0
    %3783 = vmatpush1.bf16.msra.mxu0 0
    %3784 = vmatprep.subr.bf16.mxu0 0
    %3785 = vmatpush1.bf16.msra.mxu0 0
    %3786 = vmatprep.subr.bf16.mxu0 0
    %3787 = vmatpush1.bf16.msra.mxu0 0
    %3788 = vmatprep.subr.bf16.mxu0 0
    %3789 = vmatpush1.bf16.msra.mxu0 0
    %3790 = vmatprep.subr.bf16.mxu0 0
    %3791 = vmatpush1.bf16.msra.mxu0 0
    %3792 = vmatprep.subr.bf16.mxu0 0
    %3793 = vmatpush1.bf16.msra.mxu0 0
    %3794 = vmatprep.subr.bf16.mxu0 0
    %3795 = vmatpush1.bf16.msra.mxu0 0
    %3796 = vmatprep.subr.bf16.mxu0 0
    %3797 = vmatpush1.bf16.msra.mxu0 0
    %3798 = vmatprep.subr.bf16.mxu0 0
    %3799 = vmatpush1.bf16.msra.mxu0 0
    %3800 = vmatprep.subr.bf16.mxu0 0
    %3801 = vmatpush1.bf16.msra.mxu0 0
    %3802 = vmatprep.subr.bf16.mxu0 0
    %3803 = vmatpush1.bf16.msra.mxu0 0
    %3804 = vmatprep.subr.bf16.mxu0 0
    %3805 = vmatpush1.bf16.msra.mxu0 0
    %3806 = vmatprep.subr.bf16.mxu0 0
    %3807 = vmatpush1.bf16.msra.mxu0 0
    %3808 = vmatprep.subr.bf16.mxu0 0
    %3809 = vmatpush1.bf16.msra.mxu0 0
    %3810 = vmatprep.mubr.bf16.mxu0 0
    %3811 = vmatmul.mubr.bf16.gmra.mrb[0].mxu0 %v3776
    %v3812 = vpop.f32.mrb[0].mxu0
    %v3813 = vadd.f32 0.0, %v3812
    %v3814 = vpop.f32.mrb[0].mxu0
    %v3815 = vpop.f32.mrb[0].mxu0
    %v3816 = vadd.f32 0.0, %v3815
    %v3817 = vpop.f32.mrb[0].mxu0
    %3818 = vdwg.mxu0
    %3821 = vrot.lane.b32.xlu0 %v3813, 32
    %v3822 = vpop.permute.xlu0 %3821
    %3823 = vrot.lane.b32.xlu0 %v3816, 32
    %v3824 = vpop.permute.xlu0 %3823
    %v3827 = vsel %vm498, %v3688, %v3822
    %v3828 = vsel %vm498, %v3691, %v3824
    %v3829 = vpack.c.bf16 %v3828, %v3827
    %s3830 = scalar_lea.vmem %s8, 128
    %v3831 = vld [vmem:[%s3830] sm:$0xf]
    %v3832 = vld [vmem:[%s3830 + $0x4] sm:$0xf]
    %v3833 = vld [vmem:[%s3830 + $0x8] sm:$0xf]
    %v3834 = vld [vmem:[%s3830 + $0xc] sm:$0xf]
    %v3835 = vld [vmem:[%s3830 + $0x10] sm:$0xf]
    %v3836 = vld [vmem:[%s3830 + $0x14] sm:$0xf]
    %v3837 = vld [vmem:[%s3830 + $0x18] sm:$0xf]
    %v3838 = vld [vmem:[%s3830 + $0x1c] sm:$0xf]
    %s3839 = scalar_lea.vmem [#allocation13], 4
    %v3840 = vld [vmem:[%s3839] sm:$0x1]
    %v3842 = vlaneseq
    %v3843 = vshrl.u32 %v3842, 7
    %v3844 = vsub.s32 0, %v3843
    %v3845 = vrot.slane %v3840, %v3844
    %v3855 = vunpack.c.l.b16 %v3831
    %v3856 = vunpack.c.l.b16 %v3832
    %v3857 = vunpack.c.l.b16 %v3833
    %v3858 = vunpack.c.l.b16 %v3834
    %v3859 = vunpack.c.l.b16 %v3835
    %v3860 = vunpack.c.l.b16 %v3836
    %v3861 = vunpack.c.l.b16 %v3837
    %v3862 = vunpack.c.l.b16 %v3838
    %v3863 = vpack.c.b16 %v3856, %v3855
    %v3864 = vpack.c.b16 %v3858, %v3857
    %v3865 = vpack.c.b16 %v3860, %v3859
    %v3866 = vpack.c.b16 %v3862, %v3861
    %v3872 = vsel %vm342, %v3829, 0
    %3874 = vmatprep.subr.bf16.mxu0 0
    %3875 = vmatpush1.bf16.msra.mxu0 %v3863
    %3876 = vmatprep.subr.bf16.mxu0 0
    %3877 = vmatpush1.bf16.msra.mxu0 %v3864
    %3878 = vmatprep.subr.bf16.mxu0 0
    %3879 = vmatpush1.bf16.msra.mxu0 %v3865
    %3880 = vmatprep.subr.bf16.mxu0 0
    %3881 = vmatpush1.bf16.msra.mxu0 %v3866
    %3882 = vmatprep.subr.bf16.mxu0 0
    %3883 = vmatpush1.bf16.msra.mxu0 0
    %3884 = vmatprep.subr.bf16.mxu0 0
    %3885 = vmatpush1.bf16.msra.mxu0 0
    %3886 = vmatprep.subr.bf16.mxu0 0
    %3887 = vmatpush1.bf16.msra.mxu0 0
    %3888 = vmatprep.subr.bf16.mxu0 0
    %3889 = vmatpush1.bf16.msra.mxu0 0
    %3890 = vmatprep.subr.bf16.mxu0 0
    %3891 = vmatpush1.bf16.msra.mxu0 0
    %3892 = vmatprep.subr.bf16.mxu0 0
    %3893 = vmatpush1.bf16.msra.mxu0 0
    %3894 = vmatprep.subr.bf16.mxu0 0
    %3895 = vmatpush1.bf16.msra.mxu0 0
    %3896 = vmatprep.subr.bf16.mxu0 0
    %3897 = vmatpush1.bf16.msra.mxu0 0
    %3898 = vmatprep.subr.bf16.mxu0 0
    %3899 = vmatpush1.bf16.msra.mxu0 0
    %3900 = vmatprep.subr.bf16.mxu0 0
    %3901 = vmatpush1.bf16.msra.mxu0 0
    %3902 = vmatprep.subr.bf16.mxu0 0
    %3903 = vmatpush1.bf16.msra.mxu0 0
    %3904 = vmatprep.subr.bf16.mxu0 0
    %3905 = vmatpush1.bf16.msra.mxu0 0
    %3906 = vmatprep.mubr.bf16.mxu0 0
    %3907 = vmatmul.mubr.bf16.gmra.mrb[0].mxu0 %v3872
    %v3908 = vpop.f32.mrb[0].mxu0
    %v3909 = vadd.f32 %v3845, %v3908
    %v3910 = vpop.f32.mrb[0].mxu0
    %v3911 = vpop.f32.mrb[0].mxu0
    %v3912 = vadd.f32 %v3845, %v3911
    %v3913 = vpop.f32.mrb[0].mxu0
    %3914 = vdwg.mxu0
    %v3915 = vadd.f32 %v3456, %v3909
    %v3916 = vadd.f32 %v3457, %v3912
    %s3917 = scalar_lea.vmem [#allocation14], 4
    %v3918 = vld [vmem:[%s3917] sm:$0x1]
    %s3919 = scalar_lea.vmem [#allocation16], 4
    %v3920 = vld [vmem:[%s3919] sm:$0x1]
    %v3921 = vsel %vm342, %v3915, 0.0
    %3922 = vadd.xlane.f32.xlu0 %v3921
    %v3923 = vpop.xlane.xlu0 %3922
    %v3924 = vsel %vm342, %v3916, 0.0
    %3925 = vadd.xlane.f32.xlu0 %v3924
    %v3926 = vpop.xlane.xlu0 %3925
    %v3927 = vmul.f32 %v3923, %v850
    %v3928 = vmul.f32 %v3926, %v850
    %v3929 = vsub.f32 %v3915, %v3927
    %v3930 = vsub.f32 %v3916, %v3928
    %v3931 = vmul.f32 %v3929, %v3929
    %v3932 = vmul.f32 %v3930, %v3930
    %v3933 = vsel %vm342, %v3931, 0.0
    %3934 = vadd.xlane.f32.xlu0 %v3933
    %v3935 = vpop.xlane.xlu0 %3934
    %v3936 = vsel %vm342, %v3932, 0.0
    %3937 = vadd.xlane.f32.xlu0 %v3936
    %v3938 = vpop.xlane.xlu0 %3937
    %v3939 = vmul.f32 %v3935, %v850
    %v3940 = vmul.f32 %v3938, %v850
    %v3941 = vadd.f32 %v3939, 1e-12
    %v3942 = vadd.f32 %v3940, 1e-12
    %v3943 = vrsqrt.pop %v3941
    %v3944 = vrsqrt.pop %v3942
    %v3945 = vmul.f32 %v3929, %v3943
    %v3946 = vmul.f32 %v3930, %v3944
    %v3948 = vlaneseq
    %v3949 = vshrl.u32 %v3948, 7
    %v3950 = vsub.s32 0, %v3949
    %v3951 = vrot.slane %v3918, %v3950
    %v3953 = vmul.f32 %v3945, %v3951
    %v3954 = vmul.f32 %v3946, %v3951
    %v3956 = vlaneseq
    %v3957 = vshrl.u32 %v3956, 7
    %v3958 = vsub.s32 0, %v3957
    %v3959 = vrot.slane %v3920, %v3958
    %v3961 = vadd.f32 %v3953, %v3959
    %v3962 = vadd.f32 %v3954, %v3959
    %v3963 = vpack.c.bf16 %v3962, %v3961
    %s3964 = scalar_lea.vmem [#allocation17], 128
    %v3965 = vld [vmem:[%s3964] sm:$0xf]
    %v3966 = vld [vmem:[%s3964 + $0x4] sm:$0xf]
    %v3967 = vld [vmem:[%s3964 + $0x8] sm:$0xf]
    %v3968 = vld [vmem:[%s3964 + $0xc] sm:$0xf]
    %v3969 = vld [vmem:[%s3964 + $0x10] sm:$0xf]
    %v3970 = vld [vmem:[%s3964 + $0x14] sm:$0xf]
    %v3971 = vld [vmem:[%s3964 + $0x18] sm:$0xf]
    %v3972 = vld [vmem:[%s3964 + $0x1c] sm:$0xf]
    %s3973 = scalar_lea.vmem [#allocation19], 4
    %v3974 = vld [vmem:[%s3973] sm:$0x1]
    %v3976 = vlaneseq
    %v3977 = vshrl.u32 %v3976, 7
    %v3978 = vsub.s32 0, %v3977
    %v3979 = vrot.slane %v3974, %v3978
    %v3989 = vunpack.c.l.b16 %v3965
    %v3990 = vunpack.c.l.b16 %v3966
    %v3991 = vunpack.c.l.b16 %v3967
    %v3992 = vunpack.c.l.b16 %v3968
    %v3993 = vunpack.c.l.b16 %v3969
    %v3994 = vunpack.c.l.b16 %v3970
    %v3995 = vunpack.c.l.b16 %v3971
    %v3996 = vunpack.c.l.b16 %v3972
    %v3997 = vpack.c.b16 %v3990, %v3989
    %v3998 = vpack.c.b16 %v3992, %v3991
    %v3999 = vpack.c.b16 %v3994, %v3993
    %v4000 = vpack.c.b16 %v3996, %v3995
    %v4006 = vsel %vm342, %v3963, 0
    %4008 = vmatprep.subr.bf16.mxu0 0
    %4009 = vmatpush1.bf16.msra.mxu0 %v3997
    %4010 = vmatprep.subr.bf16.mxu0 0
    %4011 = vmatpush1.bf16.msra.mxu0 %v3998
    %4012 = vmatprep.subr.bf16.mxu0 0
    %4013 = vmatpush1.bf16.msra.mxu0 %v3999
    %4014 = vmatprep.subr.bf16.mxu0 0
    %4015 = vmatpush1.bf16.msra.mxu0 %v4000
    %4016 = vmatprep.subr.bf16.mxu0 0
    %4017 = vmatpush1.bf16.msra.mxu0 0
    %4018 = vmatprep.subr.bf16.mxu0 0
    %4019 = vmatpush1.bf16.msra.mxu0 0
    %4020 = vmatprep.subr.bf16.mxu0 0
    %4021 = vmatpush1.bf16.msra.mxu0 0
    %4022 = vmatprep.subr.bf16.mxu0 0
    %4023 = vmatpush1.bf16.msra.mxu0 0
    %4024 = vmatprep.subr.bf16.mxu0 0
    %4025 = vmatpush1.bf16.msra.mxu0 0
    %4026 = vmatprep.subr.bf16.mxu0 0
    %4027 = vmatpush1.bf16.msra.mxu0 0
    %4028 = vmatprep.subr.bf16.mxu0 0
    %4029 = vmatpush1.bf16.msra.mxu0 0
    %4030 = vmatprep.subr.bf16.mxu0 0
    %4031 = vmatpush1.bf16.msra.mxu0 0
    %4032 = vmatprep.subr.bf16.mxu0 0
    %4033 = vmatpush1.bf16.msra.mxu0 0
    %4034 = vmatprep.subr.bf16.mxu0 0
    %4035 = vmatpush1.bf16.msra.mxu0 0
    %4036 = vmatprep.subr.bf16.mxu0 0
    %4037 = vmatpush1.bf16.msra.mxu0 0
    %4038 = vmatprep.subr.bf16.mxu0 0
    %4039 = vmatpush1.bf16.msra.mxu0 0
    %4040 = vmatprep.mubr.bf16.mxu0 0
    %4041 = vmatmul.mubr.bf16.gmra.mrb[0].mxu0 %v4006
    %v4042 = vpop.f32.mrb[0].mxu0
    %v4043 = vadd.f32 %v3979, %v4042
    %v4044 = vpop.f32.mrb[0].mxu0
    %v4045 = vpop.f32.mrb[0].mxu0
    %v4046 = vadd.f32 %v3979, %v4045
    %v4047 = vpop.f32.mrb[0].mxu0
    %4048 = vdwg.mxu0
    %v4049 = vmul.f32 %v4043, %v4043
    %v4050 = vmul.f32 %v4046, %v4046
    %v4051 = vmul.f32 %v4043, %v4049
    %v4052 = vmul.f32 %v4046, %v4050
    %v4053 = vmul.f32 %v4051, 0.044715
    %v4054 = vmul.f32 %v4052, 0.044715
    %v4055 = vadd.f32 %v4043, %v4053
    %v4056 = vadd.f32 %v4046, %v4054
    %v4057 = vmul.f32 %v4055, 0.7978846
    %v4058 = vmul.f32 %v4056, 0.7978846
    %v4059 = vtanh.pop %v4057
    %v4060 = vtanh.pop %v4058
    %v4061 = vadd.f32 %v4059, 1.0
    %v4062 = vadd.f32 %v4060, 1.0
    %v4063 = vmul.f32 %v4061, 0.5
    %v4064 = vmul.f32 %v4062, 0.5
    %v4065 = vmul.f32 %v4043, %v4063
    %v4066 = vmul.f32 %v4046, %v4064
    %v4067 = vpack.c.bf16 %v4066, %v4065
    %s4068 = scalar_lea.vmem %s14, 256
    %v4069 = vld [vmem:[%s4068] sm:$0xf]
    %v4070 = vld [vmem:[%s4068 + $0x4] sm:$0xf]
    %v4071 = vld [vmem:[%s4068 + $0x8] sm:$0xf]
    %v4072 = vld [vmem:[%s4068 + $0xc] sm:$0xf]
    %v4073 = vld [vmem:[%s4068 + $0x10] sm:$0xf]
    %v4074 = vld [vmem:[%s4068 + $0x14] sm:$0xf]
    %v4075 = vld [vmem:[%s4068 + $0x18] sm:$0xf]
    %v4076 = vld [vmem:[%s4068 + $0x1c] sm:$0xf]
    %v4077 = vld [vmem:[%s4068 + $0x20] sm:$0xf]
    %v4078 = vld [vmem:[%s4068 + $0x24] sm:$0xf]
    %v4079 = vld [vmem:[%s4068 + $0x28] sm:$0xf]
    %v4080 = vld [vmem:[%s4068 + $0x2c] sm:$0xf]
    %v4081 = vld [vmem:[%s4068 + $0x30] sm:$0xf]
    %v4082 = vld [vmem:[%s4068 + $0x34] sm:$0xf]
    %v4083 = vld [vmem:[%s4068 + $0x38] sm:$0xf]
    %v4084 = vld [vmem:[%s4068 + $0x3c] sm:$0xf]
    %s4085 = scalar_lea.vmem [#allocation20], 4
    %v4086 = vld [vmem:[%s4085] sm:$0x1]
    %v4088 = vlaneseq
    %v4089 = vshrl.u32 %v4088, 7
    %v4090 = vsub.s32 0, %v4089
    %v4091 = vrot.slane %v4086, %v4090
    %v4109 = vunpack.c.l.b16 %v4069
    %v4110 = vunpack.c.l.b16 %v4070
    %v4111 = vunpack.c.l.b16 %v4071
    %v4112 = vunpack.c.l.b16 %v4072
    %v4113 = vunpack.c.l.b16 %v4073
    %v4114 = vunpack.c.l.b16 %v4074
    %v4115 = vunpack.c.l.b16 %v4075
    %v4116 = vunpack.c.l.b16 %v4076
    %v4117 = vunpack.c.l.b16 %v4077
    %v4118 = vunpack.c.l.b16 %v4078
    %v4119 = vunpack.c.l.b16 %v4079
    %v4120 = vunpack.c.l.b16 %v4080
    %v4121 = vunpack.c.l.b16 %v4081
    %v4122 = vunpack.c.l.b16 %v4082
    %v4123 = vunpack.c.l.b16 %v4083
    %v4124 = vunpack.c.l.b16 %v4084
    %v4125 = vpack.c.b16 %v4110, %v4109
    %v4126 = vpack.c.b16 %v4112, %v4111
    %v4127 = vpack.c.b16 %v4114, %v4113
    %v4128 = vpack.c.b16 %v4116, %v4115
    %v4129 = vpack.c.b16 %v4118, %v4117
    %v4130 = vpack.c.b16 %v4120, %v4119
    %v4131 = vpack.c.b16 %v4122, %v4121
    %v4132 = vpack.c.b16 %v4124, %v4123
    %4141 = vmatprep.subr.bf16.mxu0 0
    %4142 = vmatpush1.bf16.msra.mxu0 %v4125
    %4143 = vmatprep.subr.bf16.mxu0 0
    %4144 = vmatpush1.bf16.msra.mxu0 %v4126
    %4145 = vmatprep.subr.bf16.mxu0 0
    %4146 = vmatpush1.bf16.msra.mxu0 %v4127
    %4147 = vmatprep.subr.bf16.mxu0 0
    %4148 = vmatpush1.bf16.msra.mxu0 %v4128
    %4149 = vmatprep.subr.bf16.mxu0 0
    %4150 = vmatpush1.bf16.msra.mxu0 %v4129
    %4151 = vmatprep.subr.bf16.mxu0 0
    %4152 = vmatpush1.bf16.msra.mxu0 %v4130
    %4153 = vmatprep.subr.bf16.mxu0 0
    %4154 = vmatpush1.bf16.msra.mxu0 %v4131
    %4155 = vmatprep.subr.bf16.mxu0 0
    %4156 = vmatpush1.bf16.msra.mxu0 %v4132
    %4157 = vmatprep.subr.bf16.mxu0 0
    %4158 = vmatpush1.bf16.msra.mxu0 0
    %4159 = vmatprep.subr.bf16.mxu0 0
    %4160 = vmatpush1.bf16.msra.mxu0 0
    %4161 = vmatprep.subr.bf16.mxu0 0
    %4162 = vmatpush1.bf16.msra.mxu0 0
    %4163 = vmatprep.subr.bf16.mxu0 0
    %4164 = vmatpush1.bf16.msra.mxu0 0
    %4165 = vmatprep.subr.bf16.mxu0 0
    %4166 = vmatpush1.bf16.msra.mxu0 0
    %4167 = vmatprep.subr.bf16.mxu0 0
    %4168 = vmatpush1.bf16.msra.mxu0 0
    %4169 = vmatprep.subr.bf16.mxu0 0
    %4170 = vmatpush1.bf16.msra.mxu0 0
    %4171 = vmatprep.subr.bf16.mxu0 0
    %4172 = vmatpush1.bf16.msra.mxu0 0
    %4173 = vmatprep.mubr.bf16.mxu0 0
    %4174 = vmatmul.mubr.bf16.gmra.mrb[0].mxu0 %v4067
    %v4175 = vpop.f32.mrb[0].mxu0
    %v4176 = vadd.f32 %v4091, %v4175
    %v4177 = vpop.f32.mrb[0].mxu0
    %v4178 = vpop.f32.mrb[0].mxu0
    %v4179 = vadd.f32 %v4091, %v4178
    %v4180 = vpop.f32.mrb[0].mxu0
    %4181 = vdwg.mxu0
    %v4182 = vadd.f32 %v3961, %v4176
    %v4183 = vadd.f32 %v3962, %v4179
    %s4184 = scalar_lea.vmem [#allocation22], 4
    %v4185 = vld [vmem:[%s4184] sm:$0x1]
    %s4186 = scalar_lea.vmem [#allocation23], 4
    %v4187 = vld [vmem:[%s4186] sm:$0x1]
    %v4188 = vsel %vm342, %v4182, 0.0
    %4189 = vadd.xlane.f32.xlu0 %v4188
    %v4190 = vpop.xlane.xlu0 %4189
    %v4191 = vsel %vm342, %v4183, 0.0
    %4192 = vadd.xlane.f32.xlu0 %v4191
    %v4193 = vpop.xlane.xlu0 %4192
    %v4194 = vmul.f32 %v4190, %v850
    %v4195 = vmul.f32 %v4193, %v850
    %v4196 = vsub.f32 %v4182, %v4194
    %v4197 = vsub.f32 %v4183, %v4195
    %v4198 = vmul.f32 %v4196, %v4196
    %v4199 = vmul.f32 %v4197, %v4197
    %v4200 = vsel %vm342, %v4198, 0.0
    %4201 = vadd.xlane.f32.xlu0 %v4200
    %v4202 = vpop.xlane.xlu0 %4201
    %v4203 = vsel %vm342, %v4199, 0.0
    %4204 = vadd.xlane.f32.xlu0 %v4203
    %v4205 = vpop.xlane.xlu0 %4204
    %v4206 = vmul.f32 %v4202, %v850
    %v4207 = vmul.f32 %v4205, %v850
    %v4208 = vadd.f32 %v4206, 1e-12
    %v4209 = vadd.f32 %v4207, 1e-12
    %v4210 = vrsqrt.pop %v4208
    %v4211 = vrsqrt.pop %v4209
    %v4212 = vmul.f32 %v4196, %v4210
    %v4213 = vmul.f32 %v4197, %v4211
    %v4215 = vlaneseq
    %v4216 = vshrl.u32 %v4215, 7
    %v4217 = vsub.s32 0, %v4216
    %v4218 = vrot.slane %v4185, %v4217
    %v4220 = vmul.f32 %v4212, %v4218
    %v4221 = vmul.f32 %v4213, %v4218
    %v4223 = vlaneseq
    %v4224 = vshrl.u32 %v4223, 7
    %v4225 = vsub.s32 0, %v4224
    %v4226 = vrot.slane %v4187, %v4225
    %v4228 = vadd.f32 %v4220, %v4226
    %v4229 = vadd.f32 %v4221, %v4226
    %v4230 = vadd.f32 %v3458, %v4228
    %v4231 = vadd.f32 %v3459, %v4229
    %v4232 = vpack.c.bf16 %v4229, %v4228
    %s4233 = scalar_lea.vmem %s6, 320
    %v4234 = vld [vmem:[%s4233] sm:$0xff]
    %v4235 = vld [vmem:[%s4233 + $0x8] sm:$0xff]
    %v4236 = vld [vmem:[%s4233 + $0x10] sm:$0xff]
    %v4237 = vld [vmem:[%s4233 + $0x18] sm:$0xff]
    %v4238 = vld [vmem:[%s4233 + $0x20] sm:$0xff]
    %v4239 = vld [vmem:[%s4233 + $0x28] sm:$0xff]
    %v4240 = vld [vmem:[%s4233 + $0x30] sm:$0xff]
    %v4241 = vld [vmem:[%s4233 + $0x38] sm:$0xff]
    %s4242 = scalar_lea.vmem [#allocation11], 10
    %v4243 = vld [vmem:[%s4242] sm:$0x3]
    %v4245 = vlaneseq
    %v4246 = vshrl.u32 %v4245, 7
    %v4247 = vsub.s32 0, %v4246
    %v4248 = vrot.slane %v4243, %v4247
    %v4249 = vlaneseq
    %v4250 = vshrl.u32 %v4249, 7
    %v4251 = vsub.s32 1, %v4250
    %v4252 = vrot.slane %v4243, %v4251
    %v4263 = vunpack.c.l.b16 %v4234
    %v4264 = vunpack.c.h.b16 %v4234
    %v4265 = vunpack.c.l.b16 %v4235
    %v4266 = vunpack.c.h.b16 %v4235
    %v4267 = vunpack.c.l.b16 %v4236
    %v4268 = vunpack.c.h.b16 %v4236
    %v4269 = vunpack.c.l.b16 %v4237
    %v4270 = vunpack.c.h.b16 %v4237
    %v4271 = vunpack.c.l.b16 %v4238
    %v4272 = vunpack.c.h.b16 %v4238
    %v4273 = vunpack.c.l.b16 %v4239
    %v4274 = vunpack.c.h.b16 %v4239
    %v4275 = vunpack.c.l.b16 %v4240
    %v4276 = vunpack.c.h.b16 %v4240
    %v4277 = vunpack.c.l.b16 %v4241
    %v4278 = vunpack.c.h.b16 %v4241
    %v4279 = vpack.c.b16 %v4265, %v4263
    %v4280 = vpack.c.b16 %v4266, %v4264
    %v4281 = vpack.c.b16 %v4269, %v4267
    %v4282 = vpack.c.b16 %v4270, %v4268
    %v4283 = vpack.c.b16 %v4273, %v4271
    %v4284 = vpack.c.b16 %v4274, %v4272
    %v4285 = vpack.c.b16 %v4277, %v4275
    %v4286 = vpack.c.b16 %v4278, %v4276
    %v4296 = vsel %vm342, %v4232, 0
    %4298 = vmatprep.subr.bf16.mxu0 %v4280
    %4299 = vmatpush1.bf16.msra.mxu0 %v4279
    %4300 = vmatprep.subr.bf16.mxu0 %v4282
    %4301 = vmatpush1.bf16.msra.mxu0 %v4281
    %4302 = vmatprep.subr.bf16.mxu0 %v4284
    %4303 = vmatpush1.bf16.msra.mxu0 %v4283
    %4304 = vmatprep.subr.bf16.mxu0 %v4286
    %4305 = vmatpush1.bf16.msra.mxu0 %v4285
    %4306 = vmatprep.subr.bf16.mxu0 0
    %4307 = vmatpush1.bf16.msra.mxu0 0
    %4308 = vmatprep.subr.bf16.mxu0 0
    %4309 = vmatpush1.bf16.msra.mxu0 0
    %4310 = vmatprep.subr.bf16.mxu0 0
    %4311 = vmatpush1.bf16.msra.mxu0 0
    %4312 = vmatprep.subr.bf16.mxu0 0
    %4313 = vmatpush1.bf16.msra.mxu0 0
    %4314 = vmatprep.subr.bf16.mxu0 0
    %4315 = vmatpush1.bf16.msra.mxu0 0
    %4316 = vmatprep.subr.bf16.mxu0 0
    %4317 = vmatpush1.bf16.msra.mxu0 0
    %4318 = vmatprep.subr.bf16.mxu0 0
    %4319 = vmatpush1.bf16.msra.mxu0 0
    %4320 = vmatprep.subr.bf16.mxu0 0
    %4321 = vmatpush1.bf16.msra.mxu0 0
    %4322 = vmatprep.subr.bf16.mxu0 0
    %4323 = vmatpush1.bf16.msra.mxu0 0
    %4324 = vmatprep.subr.bf16.mxu0 0
    %4325 = vmatpush1.bf16.msra.mxu0 0
    %4326 = vmatprep.subr.bf16.mxu0 0
    %4327 = vmatpush1.bf16.msra.mxu0 0
    %4328 = vmatprep.subr.bf16.mxu0 0
    %4329 = vmatpush1.bf16.msra.mxu0 0
    %4330 = vmatprep.mubr.bf16.mxu0 0
    %4331 = vmatmul.mubr.bf16.gmra.mrb[0].mxu0 %v4296
    %v4332 = vpop.f32.mrb[0].mxu0
    %v4333 = vadd.f32 %v4248, %v4332
    %v4334 = vpop.f32.mrb[0].mxu0
    %v4335 = vadd.f32 %v4252, %v4334
    %v4336 = vpop.f32.mrb[0].mxu0
    %v4337 = vadd.f32 %v4248, %v4336
    %v4338 = vpop.f32.mrb[0].mxu0
    %v4339 = vadd.f32 %v4252, %v4338
    %4340 = vdwg.mxu0
    %v4341 = vpack.c.bf16 %v4337, %v4333
    %4343 = vrot.lane.b32.xlu0 %v4341, 96
    %v4344 = vpop.permute.xlu0 %4343
    %v4346 = vsel %vm498, %v4341, 0
    %v4349 = vsel %vm498, %v4344, 0
    %4351 = vmatprep.subr.bf16.mxu0 0
    %4352 = vmatpush1.bf16.xpose.msra.mxu0 %v4349
    %4353 = vmatprep.subr.bf16.mxu0 0
    %4354 = vmatpush1.bf16.xpose.msra.mxu0 0
    %4355 = vmatprep.subr.bf16.mxu0 0
    %4356 = vmatpush1.bf16.xpose.msra.mxu0 0
    %4357 = vmatprep.subr.bf16.mxu0 0
    %4358 = vmatpush1.bf16.xpose.msra.mxu0 0
    %4359 = vmatprep.subr.bf16.mxu0 0
    %4360 = vmatpush1.bf16.xpose.msra.mxu0 0
    %4361 = vmatprep.subr.bf16.mxu0 0
    %4362 = vmatpush1.bf16.xpose.msra.mxu0 0
    %4363 = vmatprep.subr.bf16.mxu0 0
    %4364 = vmatpush1.bf16.xpose.msra.mxu0 0
    %4365 = vmatprep.subr.bf16.mxu0 0
    %4366 = vmatpush1.bf16.xpose.msra.mxu0 0
    %4367 = vmatprep.subr.bf16.mxu0 0
    %4368 = vmatpush1.bf16.xpose.msra.mxu0 0
    %4369 = vmatprep.subr.bf16.mxu0 0
    %4370 = vmatpush1.bf16.xpose.msra.mxu0 0
    %4371 = vmatprep.subr.bf16.mxu0 0
    %4372 = vmatpush1.bf16.xpose.msra.mxu0 0
    %4373 = vmatprep.subr.bf16.mxu0 0
    %4374 = vmatpush1.bf16.xpose.msra.mxu0 0
    %4375 = vmatprep.subr.bf16.mxu0 0
    %4376 = vmatpush1.bf16.xpose.msra.mxu0 0
    %4377 = vmatprep.subr.bf16.mxu0 0
    %4378 = vmatpush1.bf16.xpose.msra.mxu0 0
    %4379 = vmatprep.subr.bf16.mxu0 0
    %4380 = vmatpush1.bf16.xpose.msra.mxu0 0
    %4381 = vmatprep.subr.bf16.mxu0 0
    %4382 = vmatpush1.bf16.xpose.msra.mxu0 0
    %4383 = vmatprep.mubr.bf16.mxu0 0
    %4384 = vmatmul.mubr.bf16.gmra.mrb[0].mxu0 %v4346
    %v4385 = vpop.f32.mrb[0].mxu0
    %v4386 = vadd.f32 0.0, %v4385
    %v4387 = vpop.f32.mrb[0].mxu0
    %v4388 = vpop.f32.mrb[0].mxu0
    %v4389 = vadd.f32 0.0, %v4388
    %v4390 = vpop.f32.mrb[0].mxu0
    %4391 = vdwg.mxu0
    %v4392 = vmul.f32 %v4386, 0.17677669
    %v4393 = vmul.f32 %v4389, 0.17677669
    %v4394 = vadd.f32 %v4392, %v247
    %v4395 = vadd.f32 %v4393, %v248
    %v4396 = vsel %vm550, %v4394, -inf
    %4397 = vmax.xlane.f32.xlu0 %v4396
    %v4398 = vpop.xlane.xlu0 %4397
    %v4399 = vsel %vm550, %v4395, -inf
    %4400 = vmax.xlane.f32.xlu0 %v4399
    %v4401 = vpop.xlane.xlu0 %4400
    %v4402 = vsub.f32 %v4394, %v4398
    %v4403 = vsub.f32 %v4395, %v4401
    %v4404 = vmul.f32 %v4402, 1.442695
    %v4405 = vpow.pop %v4404
    %v4406 = vmul.f32 %v4403, 1.442695
    %v4407 = vpow.pop %v4406
    %v4408 = vsel %vm550, %v4405, 0.0
    %4409 = vadd.xlane.f32.xlu0 %v4408
    %v4410 = vpop.xlane.xlu0 %4409
    %v4411 = vsel %vm550, %v4407, 0.0
    %4412 = vadd.xlane.f32.xlu0 %v4411
    %v4413 = vpop.xlane.xlu0 %4412
    %v4414 = vrcp.pop %v4410
    %v4415 = vrcp.pop %v4413
    %v4416 = vmul.f32 %v4405, %v4414
    %v4417 = vmul.f32 %v4407, %v4415
    %v4418 = vpack.c.bf16 %v4417, %v4416
    %4419 = vrot.lane.b32.xlu0 %v4341, 64
    %v4420 = vpop.permute.xlu0 %4419
    %v4423 = vsel %vm550, %v4418, 0
    %4425 = vmatprep.subr.bf16.mxu0 0
    %4426 = vmatpush1.bf16.msra.mxu0 %v4420
    %4427 = vmatprep.subr.bf16.mxu0 0
    %4428 = vmatpush1.bf16.msra.mxu0 0
    %4429 = vmatprep.subr.bf16.mxu0 0
    %4430 = vmatpush1.bf16.msra.mxu0 0
    %4431 = vmatprep.subr.bf16.mxu0 0
    %4432 = vmatpush1.bf16.msra.mxu0 0
    %4433 = vmatprep.subr.bf16.mxu0 0
    %4434 = vmatpush1.bf16.msra.mxu0 0
    %4435 = vmatprep.subr.bf16.mxu0 0
    %4436 = vmatpush1.bf16.msra.mxu0 0
    %4437 = vmatprep.subr.bf16.mxu0 0
    %4438 = vmatpush1.bf16.msra.mxu0 0
    %4439 = vmatprep.subr.bf16.mxu0 0
    %4440 = vmatpush1.bf16.msra.mxu0 0
    %4441 = vmatprep.subr.bf16.mxu0 0
    %4442 = vmatpush1.bf16.msra.mxu0 0
    %4443 = vmatprep.subr.bf16.mxu0 0
    %4444 = vmatpush1.bf16.msra.mxu0 0
    %4445 = vmatprep.subr.bf16.mxu0 0
    %4446 = vmatpush1.bf16.msra.mxu0 0
    %4447 = vmatprep.subr.bf16.mxu0 0
    %4448 = vmatpush1.bf16.msra.mxu0 0
    %4449 = vmatprep.subr.bf16.mxu0 0
    %4450 = vmatpush1.bf16.msra.mxu0 0
    %4451 = vmatprep.subr.bf16.mxu0 0
    %4452 = vmatpush1.bf16.msra.mxu0 0
    %4453 = vmatprep.subr.bf16.mxu0 0
    %4454 = vmatpush1.bf16.msra.mxu0 0
    %4455 = vmatprep.subr.bf16.mxu0 0
    %4456 = vmatpush1.bf16.msra.mxu0 0
    %4457 = vmatprep.mubr.bf16.mxu0 0
    %4458 = vmatmul.mubr.bf16.gmra.mrb[0].mxu0 %v4423
    %v4459 = vpop.f32.mrb[0].mxu0
    %v4460 = vadd.f32 0.0, %v4459
    %v4461 = vpop.f32.mrb[0].mxu0
    %v4462 = vpop.f32.mrb[0].mxu0
    %v4463 = vadd.f32 0.0, %v4462
    %v4464 = vpop.f32.mrb[0].mxu0
    %4465 = vdwg.mxu0
    %v4466 = vpack.c.bf16 %v4339, %v4335
    %4468 = vrot.lane.b32.xlu0 %v4466, 96
    %v4469 = vpop.permute.xlu0 %4468
    %v4471 = vsel %vm498, %v4466, 0
    %v4474 = vsel %vm498, %v4469, 0
    %4476 = vmatprep.subr.bf16.mxu0 0
    %4477 = vmatpush1.bf16.xpose.msra.mxu0 %v4474
    %4478 = vmatprep.subr.bf16.mxu0 0
    %4479 = vmatpush1.bf16.xpose.msra.mxu0 0
    %4480 = vmatprep.subr.bf16.mxu0 0
    %4481 = vmatpush1.bf16.xpose.msra.mxu0 0
    %4482 = vmatprep.subr.bf16.mxu0 0
    %4483 = vmatpush1.bf16.xpose.msra.mxu0 0
    %4484 = vmatprep.subr.bf16.mxu0 0
    %4485 = vmatpush1.bf16.xpose.msra.mxu0 0
    %4486 = vmatprep.subr.bf16.mxu0 0
    %4487 = vmatpush1.bf16.xpose.msra.mxu0 0
    %4488 = vmatprep.subr.bf16.mxu0 0
    %4489 = vmatpush1.bf16.xpose.msra.mxu0 0
    %4490 = vmatprep.subr.bf16.mxu0 0
    %4491 = vmatpush1.bf16.xpose.msra.mxu0 0
    %4492 = vmatprep.subr.bf16.mxu0 0
    %4493 = vmatpush1.bf16.xpose.msra.mxu0 0
    %4494 = vmatprep.subr.bf16.mxu0 0
    %4495 = vmatpush1.bf16.xpose.msra.mxu0 0
    %4496 = vmatprep.subr.bf16.mxu0 0
    %4497 = vmatpush1.bf16.xpose.msra.mxu0 0
    %4498 = vmatprep.subr.bf16.mxu0 0
    %4499 = vmatpush1.bf16.xpose.msra.mxu0 0
    %4500 = vmatprep.subr.bf16.mxu0 0
    %4501 = vmatpush1.bf16.xpose.msra.mxu0 0
    %4502 = vmatprep.subr.bf16.mxu0 0
    %4503 = vmatpush1.bf16.xpose.msra.mxu0 0
    %4504 = vmatprep.subr.bf16.mxu0 0
    %4505 = vmatpush1.bf16.xpose.msra.mxu0 0
    %4506 = vmatprep.subr.bf16.mxu0 0
    %4507 = vmatpush1.bf16.xpose.msra.mxu0 0
    %4508 = vmatprep.mubr.bf16.mxu0 0
    %4509 = vmatmul.mubr.bf16.gmra.mrb[0].mxu0 %v4471
    %v4510 = vpop.f32.mrb[0].mxu0
    %v4511 = vadd.f32 0.0, %v4510
    %v4512 = vpop.f32.mrb[0].mxu0
    %v4513 = vpop.f32.mrb[0].mxu0
    %v4514 = vadd.f32 0.0, %v4513
    %v4515 = vpop.f32.mrb[0].mxu0
    %4516 = vdwg.mxu0
    %v4517 = vmul.f32 %v4511, 0.17677669
    %v4518 = vmul.f32 %v4514, 0.17677669
    %v4519 = vadd.f32 %v4517, %v247
    %v4520 = vadd.f32 %v4518, %v248
    %v4521 = vsel %vm550, %v4519, -inf
    %4522 = vmax.xlane.f32.xlu0 %v4521
    %v4523 = vpop.xlane.xlu0 %4522
    %v4524 = vsel %vm550, %v4520, -inf
    %4525 = vmax.xlane.f32.xlu0 %v4524
    %v4526 = vpop.xlane.xlu0 %4525
    %v4527 = vsub.f32 %v4519, %v4523
    %v4528 = vsub.f32 %v4520, %v4526
    %v4529 = vmul.f32 %v4527, 1.442695
    %v4530 = vpow.pop %v4529
    %v4531 = vmul.f32 %v4528, 1.442695
    %v4532 = vpow.pop %v4531
    %v4533 = vsel %vm550, %v4530, 0.0
    %4534 = vadd.xlane.f32.xlu0 %v4533
    %v4535 = vpop.xlane.xlu0 %4534
    %v4536 = vsel %vm550, %v4532, 0.0
    %4537 = vadd.xlane.f32.xlu0 %v4536
    %v4538 = vpop.xlane.xlu0 %4537
    %v4539 = vrcp.pop %v4535
    %v4540 = vrcp.pop %v4538
    %v4541 = vmul.f32 %v4530, %v4539
    %v4542 = vmul.f32 %v4532, %v4540
    %v4543 = vpack.c.bf16 %v4542, %v4541
    %4544 = vrot.lane.b32.xlu0 %v4466, 64
    %v4545 = vpop.permute.xlu0 %4544
    %v4548 = vsel %vm550, %v4543, 0
    %4550 = vmatprep.subr.bf16.mxu0 0
    %4551 = vmatpush1.bf16.msra.mxu0 %v4545
    %4552 = vmatprep.subr.bf16.mxu0 0
    %4553 = vmatpush1.bf16.msra.mxu0 0
    %4554 = vmatprep.subr.bf16.mxu0 0
    %4555 = vmatpush1.bf16.msra.mxu0 0
    %4556 = vmatprep.subr.bf16.mxu0 0
    %4557 = vmatpush1.bf16.msra.mxu0 0
    %4558 = vmatprep.subr.bf16.mxu0 0
    %4559 = vmatpush1.bf16.msra.mxu0 0
    %4560 = vmatprep.subr.bf16.mxu0 0
    %4561 = vmatpush1.bf16.msra.mxu0 0
    %4562 = vmatprep.subr.bf16.mxu0 0
    %4563 = vmatpush1.bf16.msra.mxu0 0
    %4564 = vmatprep.subr.bf16.mxu0 0
    %4565 = vmatpush1.bf16.msra.mxu0 0
    %4566 = vmatprep.subr.bf16.mxu0 0
    %4567 = vmatpush1.bf16.msra.mxu0 0
    %4568 = vmatprep.subr.bf16.mxu0 0
    %4569 = vmatpush1.bf16.msra.mxu0 0
    %4570 = vmatprep.subr.bf16.mxu0 0
    %4571 = vmatpush1.bf16.msra.mxu0 0
    %4572 = vmatprep.subr.bf16.mxu0 0
    %4573 = vmatpush1.bf16.msra.mxu0 0
    %4574 = vmatprep.subr.bf16.mxu0 0
    %4575 = vmatpush1.bf16.msra.mxu0 0
    %4576 = vmatprep.subr.bf16.mxu0 0
    %4577 = vmatpush1.bf16.msra.mxu0 0
    %4578 = vmatprep.subr.bf16.mxu0 0
    %4579 = vmatpush1.bf16.msra.mxu0 0
    %4580 = vmatprep.subr.bf16.mxu0 0
    %4581 = vmatpush1.bf16.msra.mxu0 0
    %4582 = vmatprep.mubr.bf16.mxu0 0
    %4583 = vmatmul.mubr.bf16.gmra.mrb[0].mxu0 %v4548
    %v4584 = vpop.f32.mrb[0].mxu0
    %v4585 = vadd.f32 0.0, %v4584
    %v4586 = vpop.f32.mrb[0].mxu0
    %v4587 = vpop.f32.mrb[0].mxu0
    %v4588 = vadd.f32 0.0, %v4587
    %v4589 = vpop.f32.mrb[0].mxu0
    %4590 = vdwg.mxu0
    %4593 = vrot.lane.b32.xlu0 %v4585, 32
    %v4594 = vpop.permute.xlu0 %4593
    %4595 = vrot.lane.b32.xlu0 %v4588, 32
    %v4596 = vpop.permute.xlu0 %4595
    %v4599 = vsel %vm498, %v4460, %v4594
    %v4600 = vsel %vm498, %v4463, %v4596
    %v4601 = vpack.c.bf16 %v4600, %v4599
    %s4602 = scalar_lea.vmem %s8, 160
    %v4603 = vld [vmem:[%s4602] sm:$0xf]
    %v4604 = vld [vmem:[%s4602 + $0x4] sm:$0xf]
    %v4605 = vld [vmem:[%s4602 + $0x8] sm:$0xf]
    %v4606 = vld [vmem:[%s4602 + $0xc] sm:$0xf]
    %v4607 = vld [vmem:[%s4602 + $0x10] sm:$0xf]
    %v4608 = vld [vmem:[%s4602 + $0x14] sm:$0xf]
    %v4609 = vld [vmem:[%s4602 + $0x18] sm:$0xf]
    %v4610 = vld [vmem:[%s4602 + $0x1c] sm:$0xf]
    %s4611 = scalar_lea.vmem [#allocation13], 5
    %v4612 = vld [vmem:[%s4611] sm:$0x1]
    %v4614 = vlaneseq
    %v4615 = vshrl.u32 %v4614, 7
    %v4616 = vsub.s32 0, %v4615
    %v4617 = vrot.slane %v4612, %v4616
    %v4627 = vunpack.c.l.b16 %v4603
    %v4628 = vunpack.c.l.b16 %v4604
    %v4629 = vunpack.c.l.b16 %v4605
    %v4630 = vunpack.c.l.b16 %v4606
    %v4631 = vunpack.c.l.b16 %v4607
    %v4632 = vunpack.c.l.b16 %v4608
    %v4633 = vunpack.c.l.b16 %v4609
    %v4634 = vunpack.c.l.b16 %v4610
    %v4635 = vpack.c.b16 %v4628, %v4627
    %v4636 = vpack.c.b16 %v4630, %v4629
    %v4637 = vpack.c.b16 %v4632, %v4631
    %v4638 = vpack.c.b16 %v4634, %v4633
    %v4644 = vsel %vm342, %v4601, 0
    %4646 = vmatprep.subr.bf16.mxu0 0
    %4647 = vmatpush1.bf16.msra.mxu0 %v4635
    %4648 = vmatprep.subr.bf16.mxu0 0
    %4649 = vmatpush1.bf16.msra.mxu0 %v4636
    %4650 = vmatprep.subr.bf16.mxu0 0
    %4651 = vmatpush1.bf16.msra.mxu0 %v4637
    %4652 = vmatprep.subr.bf16.mxu0 0
    %4653 = vmatpush1.bf16.msra.mxu0 %v4638
    %4654 = vmatprep.subr.bf16.mxu0 0
    %4655 = vmatpush1.bf16.msra.mxu0 0
    %4656 = vmatprep.subr.bf16.mxu0 0
    %4657 = vmatpush1.bf16.msra.mxu0 0
    %4658 = vmatprep.subr.bf16.mxu0 0
    %4659 = vmatpush1.bf16.msra.mxu0 0
    %4660 = vmatprep.subr.bf16.mxu0 0
    %4661 = vmatpush1.bf16.msra.mxu0 0
    %4662 = vmatprep.subr.bf16.mxu0 0
    %4663 = vmatpush1.bf16.msra.mxu0 0
    %4664 = vmatprep.subr.bf16.mxu0 0
    %4665 = vmatpush1.bf16.msra.mxu0 0
    %4666 = vmatprep.subr.bf16.mxu0 0
    %4667 = vmatpush1.bf16.msra.mxu0 0
    %4668 = vmatprep.subr.bf16.mxu0 0
    %4669 = vmatpush1.bf16.msra.mxu0 0
    %4670 = vmatprep.subr.bf16.mxu0 0
    %4671 = vmatpush1.bf16.msra.mxu0 0
    %4672 = vmatprep.subr.bf16.mxu0 0
    %4673 = vmatpush1.bf16.msra.mxu0 0
    %4674 = vmatprep.subr.bf16.mxu0 0
    %4675 = vmatpush1.bf16.msra.mxu0 0
    %4676 = vmatprep.subr.bf16.mxu0 0
    %4677 = vmatpush1.bf16.msra.mxu0 0
    %4678 = vmatprep.mubr.bf16.mxu0 0
    %4679 = vmatmul.mubr.bf16.gmra.mrb[0].mxu0 %v4644
    %v4680 = vpop.f32.mrb[0].mxu0
    %v4681 = vadd.f32 %v4617, %v4680
    %v4682 = vpop.f32.mrb[0].mxu0
    %v4683 = vpop.f32.mrb[0].mxu0
    %v4684 = vadd.f32 %v4617, %v4683
    %v4685 = vpop.f32.mrb[0].mxu0
    %4686 = vdwg.mxu0
    %v4687 = vadd.f32 %v4228, %v4681
    %v4688 = vadd.f32 %v4229, %v4684
    %s4689 = scalar_lea.vmem [#allocation14], 5
    %v4690 = vld [vmem:[%s4689] sm:$0x1]
    %s4691 = scalar_lea.vmem [#allocation16], 5
    %v4692 = vld [vmem:[%s4691] sm:$0x1]
    %v4693 = vsel %vm342, %v4687, 0.0
    %4694 = vadd.xlane.f32.xlu0 %v4693
    %v4695 = vpop.xlane.xlu0 %4694
    %v4696 = vsel %vm342, %v4688, 0.0
    %4697 = vadd.xlane.f32.xlu0 %v4696
    %v4698 = vpop.xlane.xlu0 %4697
    %v4699 = vmul.f32 %v4695, %v850
    %v4700 = vmul.f32 %v4698, %v850
    %v4701 = vsub.f32 %v4687, %v4699
    %v4702 = vsub.f32 %v4688, %v4700
    %v4703 = vmul.f32 %v4701, %v4701
    %v4704 = vmul.f32 %v4702, %v4702
    %v4705 = vsel %vm342, %v4703, 0.0
    %4706 = vadd.xlane.f32.xlu0 %v4705
    %v4707 = vpop.xlane.xlu0 %4706
    %v4708 = vsel %vm342, %v4704, 0.0
    %4709 = vadd.xlane.f32.xlu0 %v4708
    %v4710 = vpop.xlane.xlu0 %4709
    %v4711 = vmul.f32 %v4707, %v850
    %v4712 = vmul.f32 %v4710, %v850
    %v4713 = vadd.f32 %v4711, 1e-12
    %v4714 = vadd.f32 %v4712, 1e-12
    %v4715 = vrsqrt.pop %v4713
    %v4716 = vrsqrt.pop %v4714
    %v4717 = vmul.f32 %v4701, %v4715
    %v4718 = vmul.f32 %v4702, %v4716
    %v4720 = vlaneseq
    %v4721 = vshrl.u32 %v4720, 7
    %v4722 = vsub.s32 0, %v4721
    %v4723 = vrot.slane %v4690, %v4722
    %v4725 = vmul.f32 %v4717, %v4723
    %v4726 = vmul.f32 %v4718, %v4723
    %v4728 = vlaneseq
    %v4729 = vshrl.u32 %v4728, 7
    %v4730 = vsub.s32 0, %v4729
    %v4731 = vrot.slane %v4692, %v4730
    %v4733 = vadd.f32 %v4725, %v4731
    %v4734 = vadd.f32 %v4726, %v4731
    %v4735 = vpack.c.bf16 %v4734, %v4733
    %s4736 = scalar_lea.vmem [#allocation17], 160
    %v4737 = vld [vmem:[%s4736] sm:$0xf]
    %v4738 = vld [vmem:[%s4736 + $0x4] sm:$0xf]
    %v4739 = vld [vmem:[%s4736 + $0x8] sm:$0xf]
    %v4740 = vld [vmem:[%s4736 + $0xc] sm:$0xf]
    %v4741 = vld [vmem:[%s4736 + $0x10] sm:$0xf]
    %v4742 = vld [vmem:[%s4736 + $0x14] sm:$0xf]
    %v4743 = vld [vmem:[%s4736 + $0x18] sm:$0xf]
    %v4744 = vld [vmem:[%s4736 + $0x1c] sm:$0xf]
    %s4745 = scalar_lea.vmem [#allocation19], 5
    %v4746 = vld [vmem:[%s4745] sm:$0x1]
    %v4748 = vlaneseq
    %v4749 = vshrl.u32 %v4748, 7
    %v4750 = vsub.s32 0, %v4749
    %v4751 = vrot.slane %v4746, %v4750
    %v4761 = vunpack.c.l.b16 %v4737
    %v4762 = vunpack.c.l.b16 %v4738
    %v4763 = vunpack.c.l.b16 %v4739
    %v4764 = vunpack.c.l.b16 %v4740
    %v4765 = vunpack.c.l.b16 %v4741
    %v4766 = vunpack.c.l.b16 %v4742
    %v4767 = vunpack.c.l.b16 %v4743
    %v4768 = vunpack.c.l.b16 %v4744
    %v4769 = vpack.c.b16 %v4762, %v4761
    %v4770 = vpack.c.b16 %v4764, %v4763
    %v4771 = vpack.c.b16 %v4766, %v4765
    %v4772 = vpack.c.b16 %v4768, %v4767
    %v4778 = vsel %vm342, %v4735, 0
    %4780 = vmatprep.subr.bf16.mxu0 0
    %4781 = vmatpush1.bf16.msra.mxu0 %v4769
    %4782 = vmatprep.subr.bf16.mxu0 0
    %4783 = vmatpush1.bf16.msra.mxu0 %v4770
    %4784 = vmatprep.subr.bf16.mxu0 0
    %4785 = vmatpush1.bf16.msra.mxu0 %v4771
    %4786 = vmatprep.subr.bf16.mxu0 0
    %4787 = vmatpush1.bf16.msra.mxu0 %v4772
    %4788 = vmatprep.subr.bf16.mxu0 0
    %4789 = vmatpush1.bf16.msra.mxu0 0
    %4790 = vmatprep.subr.bf16.mxu0 0
    %4791 = vmatpush1.bf16.msra.mxu0 0
    %4792 = vmatprep.subr.bf16.mxu0 0
    %4793 = vmatpush1.bf16.msra.mxu0 0
    %4794 = vmatprep.subr.bf16.mxu0 0
    %4795 = vmatpush1.bf16.msra.mxu0 0
    %4796 = vmatprep.subr.bf16.mxu0 0
    %4797 = vmatpush1.bf16.msra.mxu0 0
    %4798 = vmatprep.subr.bf16.mxu0 0
    %4799 = vmatpush1.bf16.msra.mxu0 0
    %4800 = vmatprep.subr.bf16.mxu0 0
    %4801 = vmatpush1.bf16.msra.mxu0 0
    %4802 = vmatprep.subr.bf16.mxu0 0
    %4803 = vmatpush1.bf16.msra.mxu0 0
    %4804 = vmatprep.subr.bf16.mxu0 0
    %4805 = vmatpush1.bf16.msra.mxu0 0
    %4806 = vmatprep.subr.bf16.mxu0 0
    %4807 = vmatpush1.bf16.msra.mxu0 0
    %4808 = vmatprep.subr.bf16.mxu0 0
    %4809 = vmatpush1.bf16.msra.mxu0 0
    %4810 = vmatprep.subr.bf16.mxu0 0
    %4811 = vmatpush1.bf16.msra.mxu0 0
    %4812 = vmatprep.mubr.bf16.mxu0 0
    %4813 = vmatmul.mubr.bf16.gmra.mrb[0].mxu0 %v4778
    %v4814 = vpop.f32.mrb[0].mxu0
    %v4815 = vadd.f32 %v4751, %v4814
    %v4816 = vpop.f32.mrb[0].mxu0
    %v4817 = vpop.f32.mrb[0].mxu0
    %v4818 = vadd.f32 %v4751, %v4817
    %v4819 = vpop.f32.mrb[0].mxu0
    %4820 = vdwg.mxu0
    %v4821 = vmul.f32 %v4815, %v4815
    %v4822 = vmul.f32 %v4818, %v4818
    %v4823 = vmul.f32 %v4815, %v4821
    %v4824 = vmul.f32 %v4818, %v4822
    %v4825 = vmul.f32 %v4823, 0.044715
    %v4826 = vmul.f32 %v4824, 0.044715
    %v4827 = vadd.f32 %v4815, %v4825
    %v4828 = vadd.f32 %v4818, %v4826
    %v4829 = vmul.f32 %v4827, 0.7978846
    %v4830 = vmul.f32 %v4828, 0.7978846
    %v4831 = vtanh.pop %v4829
    %v4832 = vtanh.pop %v4830
    %v4833 = vadd.f32 %v4831, 1.0
    %v4834 = vadd.f32 %v4832, 1.0
    %v4835 = vmul.f32 %v4833, 0.5
    %v4836 = vmul.f32 %v4834, 0.5
    %v4837 = vmul.f32 %v4815, %v4835
    %v4838 = vmul.f32 %v4818, %v4836
    %v4839 = vpack.c.bf16 %v4838, %v4837
    %s4840 = scalar_lea.vmem %s14, 320
    %v4841 = vld [vmem:[%s4840] sm:$0xf]
    %v4842 = vld [vmem:[%s4840 + $0x4] sm:$0xf]
    %v4843 = vld [vmem:[%s4840 + $0x8] sm:$0xf]
    %v4844 = vld [vmem:[%s4840 + $0xc] sm:$0xf]
    %v4845 = vld [vmem:[%s4840 + $0x10] sm:$0xf]
    %v4846 = vld [vmem:[%s4840 + $0x14] sm:$0xf]
    %v4847 = vld [vmem:[%s4840 + $0x18] sm:$0xf]
    %v4848 = vld [vmem:[%s4840 + $0x1c] sm:$0xf]
    %v4849 = vld [vmem:[%s4840 + $0x20] sm:$0xf]
    %v4850 = vld [vmem:[%s4840 + $0x24] sm:$0xf]
    %v4851 = vld [vmem:[%s4840 + $0x28] sm:$0xf]
    %v4852 = vld [vmem:[%s4840 + $0x2c] sm:$0xf]
    %v4853 = vld [vmem:[%s4840 + $0x30] sm:$0xf]
    %v4854 = vld [vmem:[%s4840 + $0x34] sm:$0xf]
    %v4855 = vld [vmem:[%s4840 + $0x38] sm:$0xf]
    %v4856 = vld [vmem:[%s4840 + $0x3c] sm:$0xf]
    %s4857 = scalar_lea.vmem [#allocation20], 5
    %v4858 = vld [vmem:[%s4857] sm:$0x1]
    %v4860 = vlaneseq
    %v4861 = vshrl.u32 %v4860, 7
    %v4862 = vsub.s32 0, %v4861
    %v4863 = vrot.slane %v4858, %v4862
    %v4881 = vunpack.c.l.b16 %v4841
    %v4882 = vunpack.c.l.b16 %v4842
    %v4883 = vunpack.c.l.b16 %v4843
    %v4884 = vunpack.c.l.b16 %v4844
    %v4885 = vunpack.c.l.b16 %v4845
    %v4886 = vunpack.c.l.b16 %v4846
    %v4887 = vunpack.c.l.b16 %v4847
    %v4888 = vunpack.c.l.b16 %v4848
    %v4889 = vunpack.c.l.b16 %v4849
    %v4890 = vunpack.c.l.b16 %v4850
    %v4891 = vunpack.c.l.b16 %v4851
    %v4892 = vunpack.c.l.b16 %v4852
    %v4893 = vunpack.c.l.b16 %v4853
    %v4894 = vunpack.c.l.b16 %v4854
    %v4895 = vunpack.c.l.b16 %v4855
    %v4896 = vunpack.c.l.b16 %v4856
    %v4897 = vpack.c.b16 %v4882, %v4881
    %v4898 = vpack.c.b16 %v4884, %v4883
    %v4899 = vpack.c.b16 %v4886, %v4885
    %v4900 = vpack.c.b16 %v4888, %v4887
    %v4901 = vpack.c.b16 %v4890, %v4889
    %v4902 = vpack.c.b16 %v4892, %v4891
    %v4903 = vpack.c.b16 %v4894, %v4893
    %v4904 = vpack.c.b16 %v4896, %v4895
    %4913 = vmatprep.subr.bf16.mxu0 0
    %4914 = vmatpush1.bf16.msra.mxu0 %v4897
    %4915 = vmatprep.subr.bf16.mxu0 0
    %4916 = vmatpush1.bf16.msra.mxu0 %v4898
    %4917 = vmatprep.subr.bf16.mxu0 0
    %4918 = vmatpush1.bf16.msra.mxu0 %v4899
    %4919 = vmatprep.subr.bf16.mxu0 0
    %4920 = vmatpush1.bf16.msra.mxu0 %v4900
    %4921 = vmatprep.subr.bf16.mxu0 0
    %4922 = vmatpush1.bf16.msra.mxu0 %v4901
    %4923 = vmatprep.subr.bf16.mxu0 0
    %4924 = vmatpush1.bf16.msra.mxu0 %v4902
    %4925 = vmatprep.subr.bf16.mxu0 0
    %4926 = vmatpush1.bf16.msra.mxu0 %v4903
    %4927 = vmatprep.subr.bf16.mxu0 0
    %4928 = vmatpush1.bf16.msra.mxu0 %v4904
    %4929 = vmatprep.subr.bf16.mxu0 0
    %4930 = vmatpush1.bf16.msra.mxu0 0
    %4931 = vmatprep.subr.bf16.mxu0 0
    %4932 = vmatpush1.bf16.msra.mxu0 0
    %4933 = vmatprep.subr.bf16.mxu0 0
    %4934 = vmatpush1.bf16.msra.mxu0 0
    %4935 = vmatprep.subr.bf16.mxu0 0
    %4936 = vmatpush1.bf16.msra.mxu0 0
    %4937 = vmatprep.subr.bf16.mxu0 0
    %4938 = vmatpush1.bf16.msra.mxu0 0
    %4939 = vmatprep.subr.bf16.mxu0 0
    %4940 = vmatpush1.bf16.msra.mxu0 0
    %4941 = vmatprep.subr.bf16.mxu0 0
    %4942 = vmatpush1.bf16.msra.mxu0 0
    %4943 = vmatprep.subr.bf16.mxu0 0
    %4944 = vmatpush1.bf16.msra.mxu0 0
    %4945 = vmatprep.mubr.bf16.mxu0 0
    %4946 = vmatmul.mubr.bf16.gmra.mrb[0].mxu0 %v4839
    %v4947 = vpop.f32.mrb[0].mxu0
    %v4948 = vadd.f32 %v4863, %v4947
    %v4949 = vpop.f32.mrb[0].mxu0
    %v4950 = vpop.f32.mrb[0].mxu0
    %v4951 = vadd.f32 %v4863, %v4950
    %v4952 = vpop.f32.mrb[0].mxu0
    %4953 = vdwg.mxu0
    %v4954 = vadd.f32 %v4733, %v4948
    %v4955 = vadd.f32 %v4734, %v4951
    %s4956 = scalar_lea.vmem [#allocation22], 5
    %v4957 = vld [vmem:[%s4956] sm:$0x1]
    %s4958 = scalar_lea.vmem [#allocation23], 5
    %v4959 = vld [vmem:[%s4958] sm:$0x1]
    %v4960 = vsel %vm342, %v4954, 0.0
    %4961 = vadd.xlane.f32.xlu0 %v4960
    %v4962 = vpop.xlane.xlu0 %4961
    %v4963 = vsel %vm342, %v4955, 0.0
    %4964 = vadd.xlane.f32.xlu0 %v4963
    %v4965 = vpop.xlane.xlu0 %4964
    %v4966 = vmul.f32 %v4962, %v850
    %v4967 = vmul.f32 %v4965, %v850
    %v4968 = vsub.f32 %v4954, %v4966
    %v4969 = vsub.f32 %v4955, %v4967
    %v4970 = vmul.f32 %v4968, %v4968
    %v4971 = vmul.f32 %v4969, %v4969
    %v4972 = vsel %vm342, %v4970, 0.0
    %4973 = vadd.xlane.f32.xlu0 %v4972
    %v4974 = vpop.xlane.xlu0 %4973
    %v4975 = vsel %vm342, %v4971, 0.0
    %4976 = vadd.xlane.f32.xlu0 %v4975
    %v4977 = vpop.xlane.xlu0 %4976
    %v4978 = vmul.f32 %v4974, %v850
    %v4979 = vmul.f32 %v4977, %v850
    %v4980 = vadd.f32 %v4978, 1e-12
    %v4981 = vadd.f32 %v4979, 1e-12
    %v4982 = vrsqrt.pop %v4980
    %v4983 = vrsqrt.pop %v4981
    %v4984 = vmul.f32 %v4968, %v4982
    %v4985 = vmul.f32 %v4969, %v4983
    %v4987 = vlaneseq
    %v4988 = vshrl.u32 %v4987, 7
    %v4989 = vsub.s32 0, %v4988
    %v4990 = vrot.slane %v4957, %v4989
    %v4992 = vmul.f32 %v4984, %v4990
    %v4993 = vmul.f32 %v4985, %v4990
    %v4995 = vlaneseq
    %v4996 = vshrl.u32 %v4995, 7
    %v4997 = vsub.s32 0, %v4996
    %v4998 = vrot.slane %v4959, %v4997
    %v5000 = vadd.f32 %v4992, %v4998
    %v5001 = vadd.f32 %v4993, %v4998
    %v5002 = vadd.f32 %v4230, %v5000
    %v5003 = vadd.f32 %v4231, %v5001
    %v5004 = vpack.c.bf16 %v5001, %v5000
    %s5005 = scalar_lea.vmem %s6, 384
    %v5006 = vld [vmem:[%s5005] sm:$0xff]
    %v5007 = vld [vmem:[%s5005 + $0x8] sm:$0xff]
    %v5008 = vld [vmem:[%s5005 + $0x10] sm:$0xff]
    %v5009 = vld [vmem:[%s5005 + $0x18] sm:$0xff]
    %v5010 = vld [vmem:[%s5005 + $0x20] sm:$0xff]
    %v5011 = vld [vmem:[%s5005 + $0x28] sm:$0xff]
    %v5012 = vld [vmem:[%s5005 + $0x30] sm:$0xff]
    %v5013 = vld [vmem:[%s5005 + $0x38] sm:$0xff]
    %s5014 = scalar_lea.vmem [#allocation11], 12
    %v5015 = vld [vmem:[%s5014] sm:$0x3]
    %v5017 = vlaneseq
    %v5018 = vshrl.u32 %v5017, 7
    %v5019 = vsub.s32 0, %v5018
    %v5020 = vrot.slane %v5015, %v5019
    %v5021 = vlaneseq
    %v5022 = vshrl.u32 %v5021, 7
    %v5023 = vsub.s32 1, %v5022
    %v5024 = vrot.slane %v5015, %v5023
    %v5035 = vunpack.c.l.b16 %v5006
    %v5036 = vunpack.c.h.b16 %v5006
    %v5037 = vunpack.c.l.b16 %v5007
    %v5038 = vunpack.c.h.b16 %v5007
    %v5039 = vunpack.c.l.b16 %v5008
    %v5040 = vunpack.c.h.b16 %v5008
    %v5041 = vunpack.c.l.b16 %v5009
    %v5042 = vunpack.c.h.b16 %v5009
    %v5043 = vunpack.c.l.b16 %v5010
    %v5044 = vunpack.c.h.b16 %v5010
    %v5045 = vunpack.c.l.b16 %v5011
    %v5046 = vunpack.c.h.b16 %v5011
    %v5047 = vunpack.c.l.b16 %v5012
    %v5048 = vunpack.c.h.b16 %v5012
    %v5049 = vunpack.c.l.b16 %v5013
    %v5050 = vunpack.c.h.b16 %v5013
    %v5051 = vpack.c.b16 %v5037, %v5035
    %v5052 = vpack.c.b16 %v5038, %v5036
    %v5053 = vpack.c.b16 %v5041, %v5039
    %v5054 = vpack.c.b16 %v5042, %v5040
    %v5055 = vpack.c.b16 %v5045, %v5043
    %v5056 = vpack.c.b16 %v5046, %v5044
    %v5057 = vpack.c.b16 %v5049, %v5047
    %v5058 = vpack.c.b16 %v5050, %v5048
    %v5068 = vsel %vm342, %v5004, 0
    %5070 = vmatprep.subr.bf16.mxu0 %v5052
    %5071 = vmatpush1.bf16.msra.mxu0 %v5051
    %5072 = vmatprep.subr.bf16.mxu0 %v5054
    %5073 = vmatpush1.bf16.msra.mxu0 %v5053
    %5074 = vmatprep.subr.bf16.mxu0 %v5056
    %5075 = vmatpush1.bf16.msra.mxu0 %v5055
    %5076 = vmatprep.subr.bf16.mxu0 %v5058
    %5077 = vmatpush1.bf16.msra.mxu0 %v5057
    %5078 = vmatprep.subr.bf16.mxu0 0
    %5079 = vmatpush1.bf16.msra.mxu0 0
    %5080 = vmatprep.subr.bf16.mxu0 0
    %5081 = vmatpush1.bf16.msra.mxu0 0
    %5082 = vmatprep.subr.bf16.mxu0 0
    %5083 = vmatpush1.bf16.msra.mxu0 0
    %5084 = vmatprep.subr.bf16.mxu0 0
    %5085 = vmatpush1.bf16.msra.mxu0 0
    %5086 = vmatprep.subr.bf16.mxu0 0
    %5087 = vmatpush1.bf16.msra.mxu0 0
    %5088 = vmatprep.subr.bf16.mxu0 0
    %5089 = vmatpush1.bf16.msra.mxu0 0
    %5090 = vmatprep.subr.bf16.mxu0 0
    %5091 = vmatpush1.bf16.msra.mxu0 0
    %5092 = vmatprep.subr.bf16.mxu0 0
    %5093 = vmatpush1.bf16.msra.mxu0 0
    %5094 = vmatprep.subr.bf16.mxu0 0
    %5095 = vmatpush1.bf16.msra.mxu0 0
    %5096 = vmatprep.subr.bf16.mxu0 0
    %5097 = vmatpush1.bf16.msra.mxu0 0
    %5098 = vmatprep.subr.bf16.mxu0 0
    %5099 = vmatpush1.bf16.msra.mxu0 0
    %5100 = vmatprep.subr.bf16.mxu0 0
    %5101 = vmatpush1.bf16.msra.mxu0 0
    %5102 = vmatprep.mubr.bf16.mxu0 0
    %5103 = vmatmul.mubr.bf16.gmra.mrb[0].mxu0 %v5068
    %v5104 = vpop.f32.mrb[0].mxu0
    %v5105 = vadd.f32 %v5020, %v5104
    %v5106 = vpop.f32.mrb[0].mxu0
    %v5107 = vadd.f32 %v5024, %v5106
    %v5108 = vpop.f32.mrb[0].mxu0
    %v5109 = vadd.f32 %v5020, %v5108
    %v5110 = vpop.f32.mrb[0].mxu0
    %v5111 = vadd.f32 %v5024, %v5110
    %5112 = vdwg.mxu0
    %v5113 = vpack.c.bf16 %v5109, %v5105
    %5115 = vrot.lane.b32.xlu0 %v5113, 96
    %v5116 = vpop.permute.xlu0 %5115
    %v5118 = vsel %vm498, %v5113, 0
    %v5121 = vsel %vm498, %v5116, 0
    %5123 = vmatprep.subr.bf16.mxu0 0
    %5124 = vmatpush1.bf16.xpose.msra.mxu0 %v5121
    %5125 = vmatprep.subr.bf16.mxu0 0
    %5126 = vmatpush1.bf16.xpose.msra.mxu0 0
    %5127 = vmatprep.subr.bf16.mxu0 0
    %5128 = vmatpush1.bf16.xpose.msra.mxu0 0
    %5129 = vmatprep.subr.bf16.mxu0 0
    %5130 = vmatpush1.bf16.xpose.msra.mxu0 0
    %5131 = vmatprep.subr.bf16.mxu0 0
    %5132 = vmatpush1.bf16.xpose.msra.mxu0 0
    %5133 = vmatprep.subr.bf16.mxu0 0
    %5134 = vmatpush1.bf16.xpose.msra.mxu0 0
    %5135 = vmatprep.subr.bf16.mxu0 0
    %5136 = vmatpush1.bf16.xpose.msra.mxu0 0
    %5137 = vmatprep.subr.bf16.mxu0 0
    %5138 = vmatpush1.bf16.xpose.msra.mxu0 0
    %5139 = vmatprep.subr.bf16.mxu0 0
    %5140 = vmatpush1.bf16.xpose.msra.mxu0 0
    %5141 = vmatprep.subr.bf16.mxu0 0
    %5142 = vmatpush1.bf16.xpose.msra.mxu0 0
    %5143 = vmatprep.subr.bf16.mxu0 0
    %5144 = vmatpush1.bf16.xpose.msra.mxu0 0
    %5145 = vmatprep.subr.bf16.mxu0 0
    %5146 = vmatpush1.bf16.xpose.msra.mxu0 0
    %5147 = vmatprep.subr.bf16.mxu0 0
    %5148 = vmatpush1.bf16.xpose.msra.mxu0 0
    %5149 = vmatprep.subr.bf16.mxu0 0
    %5150 = vmatpush1.bf16.xpose.msra.mxu0 0
    %5151 = vmatprep.subr.bf16.mxu0 0
    %5152 = vmatpush1.bf16.xpose.msra.mxu0 0
    %5153 = vmatprep.subr.bf16.mxu0 0
    %5154 = vmatpush1.bf16.xpose.msra.mxu0 0
    %5155 = vmatprep.mubr.bf16.mxu0 0
    %5156 = vmatmul.mubr.bf16.gmra.mrb[0].mxu0 %v5118
    %v5157 = vpop.f32.mrb[0].mxu0
    %v5158 = vadd.f32 0.0, %v5157
    %v5159 = vpop.f32.mrb[0].mxu0
    %v5160 = vpop.f32.mrb[0].mxu0
    %v5161 = vadd.f32 0.0, %v5160
    %v5162 = vpop.f32.mrb[0].mxu0
    %5163 = vdwg.mxu0
    %v5164 = vmul.f32 %v5158, 0.17677669
    %v5165 = vmul.f32 %v5161, 0.17677669
    %v5166 = vadd.f32 %v5164, %v247
    %v5167 = vadd.f32 %v5165, %v248
    %v5168 = vsel %vm550, %v5166, -inf
    %5169 = vmax.xlane.f32.xlu0 %v5168
    %v5170 = vpop.xlane.xlu0 %5169
    %v5171 = vsel %vm550, %v5167, -inf
    %5172 = vmax.xlane.f32.xlu0 %v5171
    %v5173 = vpop.xlane.xlu0 %5172
    %v5174 = vsub.f32 %v5166, %v5170
    %v5175 = vsub.f32 %v5167, %v5173
    %v5176 = vmul.f32 %v5174, 1.442695
    %v5177 = vpow.pop %v5176
    %v5178 = vmul.f32 %v5175, 1.442695
    %v5179 = vpow.pop %v5178
    %v5180 = vsel %vm550, %v5177, 0.0
    %5181 = vadd.xlane.f32.xlu0 %v5180
    %v5182 = vpop.xlane.xlu0 %5181
    %v5183 = vsel %vm550, %v5179, 0.0
    %5184 = vadd.xlane.f32.xlu0 %v5183
    %v5185 = vpop.xlane.xlu0 %5184
    %v5186 = vrcp.pop %v5182
    %v5187 = vrcp.pop %v5185
    %v5188 = vmul.f32 %v5177, %v5186
    %v5189 = vmul.f32 %v5179, %v5187
    %v5190 = vpack.c.bf16 %v5189, %v5188
    %5191 = vrot.lane.b32.xlu0 %v5113, 64
    %v5192 = vpop.permute.xlu0 %5191
    %v5195 = vsel %vm550, %v5190, 0
    %5197 = vmatprep.subr.bf16.mxu0 0
    %5198 = vmatpush1.bf16.msra.mxu0 %v5192
    %5199 = vmatprep.subr.bf16.mxu0 0
    %5200 = vmatpush1.bf16.msra.mxu0 0
    %5201 = vmatprep.subr.bf16.mxu0 0
    %5202 = vmatpush1.bf16.msra.mxu0 0
    %5203 = vmatprep.subr.bf16.mxu0 0
    %5204 = vmatpush1.bf16.msra.mxu0 0
    %5205 = vmatprep.subr.bf16.mxu0 0
    %5206 = vmatpush1.bf16.msra.mxu0 0
    %5207 = vmatprep.subr.bf16.mxu0 0
    %5208 = vmatpush1.bf16.msra.mxu0 0
    %5209 = vmatprep.subr.bf16.mxu0 0
    %5210 = vmatpush1.bf16.msra.mxu0 0
    %5211 = vmatprep.subr.bf16.mxu0 0
    %5212 = vmatpush1.bf16.msra.mxu0 0
    %5213 = vmatprep.subr.bf16.mxu0 0
    %5214 = vmatpush1.bf16.msra.mxu0 0
    %5215 = vmatprep.subr.bf16.mxu0 0
    %5216 = vmatpush1.bf16.msra.mxu0 0
    %5217 = vmatprep.subr.bf16.mxu0 0
    %5218 = vmatpush1.bf16.msra.mxu0 0
    %5219 = vmatprep.subr.bf16.mxu0 0
    %5220 = vmatpush1.bf16.msra.mxu0 0
    %5221 = vmatprep.subr.bf16.mxu0 0
    %5222 = vmatpush1.bf16.msra.mxu0 0
    %5223 = vmatprep.subr.bf16.mxu0 0
    %5224 = vmatpush1.bf16.msra.mxu0 0
    %5225 = vmatprep.subr.bf16.mxu0 0
    %5226 = vmatpush1.bf16.msra.mxu0 0
    %5227 = vmatprep.subr.bf16.mxu0 0
    %5228 = vmatpush1.bf16.msra.mxu0 0
    %5229 = vmatprep.mubr.bf16.mxu0 0
    %5230 = vmatmul.mubr.bf16.gmra.mrb[0].mxu0 %v5195
    %v5231 = vpop.f32.mrb[0].mxu0
    %v5232 = vadd.f32 0.0, %v5231
    %v5233 = vpop.f32.mrb[0].mxu0
    %v5234 = vpop.f32.mrb[0].mxu0
    %v5235 = vadd.f32 0.0, %v5234
    %v5236 = vpop.f32.mrb[0].mxu0
    %5237 = vdwg.mxu0
    %v5238 = vpack.c.bf16 %v5111, %v5107
    %5240 = vrot.lane.b32.xlu0 %v5238, 96
    %v5241 = vpop.permute.xlu0 %5240
    %v5243 = vsel %vm498, %v5238, 0
    %v5246 = vsel %vm498, %v5241, 0
    %5248 = vmatprep.subr.bf16.mxu0 0
    %5249 = vmatpush1.bf16.xpose.msra.mxu0 %v5246
    %5250 = vmatprep.subr.bf16.mxu0 0
    %5251 = vmatpush1.bf16.xpose.msra.mxu0 0
    %5252 = vmatprep.subr.bf16.mxu0 0
    %5253 = vmatpush1.bf16.xpose.msra.mxu0 0
    %5254 = vmatprep.subr.bf16.mxu0 0
    %5255 = vmatpush1.bf16.xpose.msra.mxu0 0
    %5256 = vmatprep.subr.bf16.mxu0 0
    %5257 = vmatpush1.bf16.xpose.msra.mxu0 0
    %5258 = vmatprep.subr.bf16.mxu0 0
    %5259 = vmatpush1.bf16.xpose.msra.mxu0 0
    %5260 = vmatprep.subr.bf16.mxu0 0
    %5261 = vmatpush1.bf16.xpose.msra.mxu0 0
    %5262 = vmatprep.subr.bf16.mxu0 0
    %5263 = vmatpush1.bf16.xpose.msra.mxu0 0
    %5264 = vmatprep.subr.bf16.mxu0 0
    %5265 = vmatpush1.bf16.xpose.msra.mxu0 0
    %5266 = vmatprep.subr.bf16.mxu0 0
    %5267 = vmatpush1.bf16.xpose.msra.mxu0 0
    %5268 = vmatprep.subr.bf16.mxu0 0
    %5269 = vmatpush1.bf16.xpose.msra.mxu0 0
    %5270 = vmatprep.subr.bf16.mxu0 0
    %5271 = vmatpush1.bf16.xpose.msra.mxu0 0
    %5272 = vmatprep.subr.bf16.mxu0 0
    %5273 = vmatpush1.bf16.xpose.msra.mxu0 0
    %5274 = vmatprep.subr.bf16.mxu0 0
    %5275 = vmatpush1.bf16.xpose.msra.mxu0 0
    %5276 = vmatprep.subr.bf16.mxu0 0
    %5277 = vmatpush1.bf16.xpose.msra.mxu0 0
    %5278 = vmatprep.subr.bf16.mxu0 0
    %5279 = vmatpush1.bf16.xpose.msra.mxu0 0
    %5280 = vmatprep.mubr.bf16.mxu0 0
    %5281 = vmatmul.mubr.bf16.gmra.mrb[0].mxu0 %v5243
    %v5282 = vpop.f32.mrb[0].mxu0
    %v5283 = vadd.f32 0.0, %v5282
    %v5284 = vpop.f32.mrb[0].mxu0
    %v5285 = vpop.f32.mrb[0].mxu0
    %v5286 = vadd.f32 0.0, %v5285
    %v5287 = vpop.f32.mrb[0].mxu0
    %5288 = vdwg.mxu0
    %v5289 = vmul.f32 %v5283, 0.17677669
    %v5290 = vmul.f32 %v5286, 0.17677669
    %v5291 = vadd.f32 %v5289, %v247
    %v5292 = vadd.f32 %v5290, %v248
    %v5293 = vsel %vm550, %v5291, -inf
    %5294 = vmax.xlane.f32.xlu0 %v5293
    %v5295 = vpop.xlane.xlu0 %5294
    %v5296 = vsel %vm550, %v5292, -inf
    %5297 = vmax.xlane.f32.xlu0 %v5296
    %v5298 = vpop.xlane.xlu0 %5297
    %v5299 = vsub.f32 %v5291, %v5295
    %v5300 = vsub.f32 %v5292, %v5298
    %v5301 = vmul.f32 %v5299, 1.442695
    %v5302 = vpow.pop %v5301
    %v5303 = vmul.f32 %v5300, 1.442695
    %v5304 = vpow.pop %v5303
    %v5305 = vsel %vm550, %v5302, 0.0
    %5306 = vadd.xlane.f32.xlu0 %v5305
    %v5307 = vpop.xlane.xlu0 %5306
    %v5308 = vsel %vm550, %v5304, 0.0
    %5309 = vadd.xlane.f32.xlu0 %v5308
    %v5310 = vpop.xlane.xlu0 %5309
    %v5311 = vrcp.pop %v5307
    %v5312 = vrcp.pop %v5310
    %v5313 = vmul.f32 %v5302, %v5311
    %v5314 = vmul.f32 %v5304, %v5312
    %v5315 = vpack.c.bf16 %v5314, %v5313
    %5316 = vrot.lane.b32.xlu0 %v5238, 64
    %v5317 = vpop.permute.xlu0 %5316
    %v5320 = vsel %vm550, %v5315, 0
    %5322 = vmatprep.subr.bf16.mxu0 0
    %5323 = vmatpush1.bf16.msra.mxu0 %v5317
    %5324 = vmatprep.subr.bf16.mxu0 0
    %5325 = vmatpush1.bf16.msra.mxu0 0
    %5326 = vmatprep.subr.bf16.mxu0 0
    %5327 = vmatpush1.bf16.msra.mxu0 0
    %5328 = vmatprep.subr.bf16.mxu0 0
    %5329 = vmatpush1.bf16.msra.mxu0 0
    %5330 = vmatprep.subr.bf16.mxu0 0
    %5331 = vmatpush1.bf16.msra.mxu0 0
    %5332 = vmatprep.subr.bf16.mxu0 0
    %5333 = vmatpush1.bf16.msra.mxu0 0
    %5334 = vmatprep.subr.bf16.mxu0 0
    %5335 = vmatpush1.bf16.msra.mxu0 0
    %5336 = vmatprep.subr.bf16.mxu0 0
    %5337 = vmatpush1.bf16.msra.mxu0 0
    %5338 = vmatprep.subr.bf16.mxu0 0
    %5339 = vmatpush1.bf16.msra.mxu0 0
    %5340 = vmatprep.subr.bf16.mxu0 0
    %5341 = vmatpush1.bf16.msra.mxu0 0
    %5342 = vmatprep.subr.bf16.mxu0 0
    %5343 = vmatpush1.bf16.msra.mxu0 0
    %5344 = vmatprep.subr.bf16.mxu0 0
    %5345 = vmatpush1.bf16.msra.mxu0 0
    %5346 = vmatprep.subr.bf16.mxu0 0
    %5347 = vmatpush1.bf16.msra.mxu0 0
    %5348 = vmatprep.subr.bf16.mxu0 0
    %5349 = vmatpush1.bf16.msra.mxu0 0
    %5350 = vmatprep.subr.bf16.mxu0 0
    %5351 = vmatpush1.bf16.msra.mxu0 0
    %5352 = vmatprep.subr.bf16.mxu0 0
    %5353 = vmatpush1.bf16.msra.mxu0 0
    %5354 = vmatprep.mubr.bf16.mxu0 0
    %5355 = vmatmul.mubr.bf16.gmra.mrb[0].mxu0 %v5320
    %v5356 = vpop.f32.mrb[0].mxu0
    %v5357 = vadd.f32 0.0, %v5356
    %v5358 = vpop.f32.mrb[0].mxu0
    %v5359 = vpop.f32.mrb[0].mxu0
    %v5360 = vadd.f32 0.0, %v5359
    %v5361 = vpop.f32.mrb[0].mxu0
    %5362 = vdwg.mxu0
    %5365 = vrot.lane.b32.xlu0 %v5357, 32
    %v5366 = vpop.permute.xlu0 %5365
    %5367 = vrot.lane.b32.xlu0 %v5360, 32
    %v5368 = vpop.permute.xlu0 %5367
    %v5371 = vsel %vm498, %v5232, %v5366
    %v5372 = vsel %vm498, %v5235, %v5368
    %v5373 = vpack.c.bf16 %v5372, %v5371
    %s5374 = scalar_lea.vmem %s8, 192
    %v5375 = vld [vmem:[%s5374] sm:$0xf]
    %v5376 = vld [vmem:[%s5374 + $0x4] sm:$0xf]
    %v5377 = vld [vmem:[%s5374 + $0x8] sm:$0xf]
    %v5378 = vld [vmem:[%s5374 + $0xc] sm:$0xf]
    %v5379 = vld [vmem:[%s5374 + $0x10] sm:$0xf]
    %v5380 = vld [vmem:[%s5374 + $0x14] sm:$0xf]
    %v5381 = vld [vmem:[%s5374 + $0x18] sm:$0xf]
    %v5382 = vld [vmem:[%s5374 + $0x1c] sm:$0xf]
    %s5383 = scalar_lea.vmem [#allocation13], 6
    %v5384 = vld [vmem:[%s5383] sm:$0x1]
    %v5386 = vlaneseq
    %v5387 = vshrl.u32 %v5386, 7
    %v5388 = vsub.s32 0, %v5387
    %v5389 = vrot.slane %v5384, %v5388
    %v5399 = vunpack.c.l.b16 %v5375
    %v5400 = vunpack.c.l.b16 %v5376
    %v5401 = vunpack.c.l.b16 %v5377
    %v5402 = vunpack.c.l.b16 %v5378
    %v5403 = vunpack.c.l.b16 %v5379
    %v5404 = vunpack.c.l.b16 %v5380
    %v5405 = vunpack.c.l.b16 %v5381
    %v5406 = vunpack.c.l.b16 %v5382
    %v5407 = vpack.c.b16 %v5400, %v5399
    %v5408 = vpack.c.b16 %v5402, %v5401
    %v5409 = vpack.c.b16 %v5404, %v5403
    %v5410 = vpack.c.b16 %v5406, %v5405
    %v5416 = vsel %vm342, %v5373, 0
    %5418 = vmatprep.subr.bf16.mxu0 0
    %5419 = vmatpush1.bf16.msra.mxu0 %v5407
    %5420 = vmatprep.subr.bf16.mxu0 0
    %5421 = vmatpush1.bf16.msra.mxu0 %v5408
    %5422 = vmatprep.subr.bf16.mxu0 0
    %5423 = vmatpush1.bf16.msra.mxu0 %v5409
    %5424 = vmatprep.subr.bf16.mxu0 0
    %5425 = vmatpush1.bf16.msra.mxu0 %v5410
    %5426 = vmatprep.subr.bf16.mxu0 0
    %5427 = vmatpush1.bf16.msra.mxu0 0
    %5428 = vmatprep.subr.bf16.mxu0 0
    %5429 = vmatpush1.bf16.msra.mxu0 0
    %5430 = vmatprep.subr.bf16.mxu0 0
    %5431 = vmatpush1.bf16.msra.mxu0 0
    %5432 = vmatprep.subr.bf16.mxu0 0
    %5433 = vmatpush1.bf16.msra.mxu0 0
    %5434 = vmatprep.subr.bf16.mxu0 0
    %5435 = vmatpush1.bf16.msra.mxu0 0
    %5436 = vmatprep.subr.bf16.mxu0 0
    %5437 = vmatpush1.bf16.msra.mxu0 0
    %5438 = vmatprep.subr.bf16.mxu0 0
    %5439 = vmatpush1.bf16.msra.mxu0 0
    %5440 = vmatprep.subr.bf16.mxu0 0
    %5441 = vmatpush1.bf16.msra.mxu0 0
    %5442 = vmatprep.subr.bf16.mxu0 0
    %5443 = vmatpush1.bf16.msra.mxu0 0
    %5444 = vmatprep.subr.bf16.mxu0 0
    %5445 = vmatpush1.bf16.msra.mxu0 0
    %5446 = vmatprep.subr.bf16.mxu0 0
    %5447 = vmatpush1.bf16.msra.mxu0 0
    %5448 = vmatprep.subr.bf16.mxu0 0
    %5449 = vmatpush1.bf16.msra.mxu0 0
    %5450 = vmatprep.mubr.bf16.mxu0 0
    %5451 = vmatmul.mubr.bf16.gmra.mrb[0].mxu0 %v5416
    %v5452 = vpop.f32.mrb[0].mxu0
    %v5453 = vadd.f32 %v5389, %v5452
    %v5454 = vpop.f32.mrb[0].mxu0
    %v5455 = vpop.f32.mrb[0].mxu0
    %v5456 = vadd.f32 %v5389, %v5455
    %v5457 = vpop.f32.mrb[0].mxu0
    %5458 = vdwg.mxu0
    %v5459 = vadd.f32 %v5000, %v5453
    %v5460 = vadd.f32 %v5001, %v5456
    %s5461 = scalar_lea.vmem [#allocation14], 6
    %v5462 = vld [vmem:[%s5461] sm:$0x1]
    %s5463 = scalar_lea.vmem [#allocation16], 6
    %v5464 = vld [vmem:[%s5463] sm:$0x1]
    %v5465 = vsel %vm342, %v5459, 0.0
    %5466 = vadd.xlane.f32.xlu0 %v5465
    %v5467 = vpop.xlane.xlu0 %5466
    %v5468 = vsel %vm342, %v5460, 0.0
    %5469 = vadd.xlane.f32.xlu0 %v5468
    %v5470 = vpop.xlane.xlu0 %5469
    %v5471 = vmul.f32 %v5467, %v850
    %v5472 = vmul.f32 %v5470, %v850
    %v5473 = vsub.f32 %v5459, %v5471
    %v5474 = vsub.f32 %v5460, %v5472
    %v5475 = vmul.f32 %v5473, %v5473
    %v5476 = vmul.f32 %v5474, %v5474
    %v5477 = vsel %vm342, %v5475, 0.0
    %5478 = vadd.xlane.f32.xlu0 %v5477
    %v5479 = vpop.xlane.xlu0 %5478
    %v5480 = vsel %vm342, %v5476, 0.0
    %5481 = vadd.xlane.f32.xlu0 %v5480
    %v5482 = vpop.xlane.xlu0 %5481
    %v5483 = vmul.f32 %v5479, %v850
    %v5484 = vmul.f32 %v5482, %v850
    %v5485 = vadd.f32 %v5483, 1e-12
    %v5486 = vadd.f32 %v5484, 1e-12
    %v5487 = vrsqrt.pop %v5485
    %v5488 = vrsqrt.pop %v5486
    %v5489 = vmul.f32 %v5473, %v5487
    %v5490 = vmul.f32 %v5474, %v5488
    %v5492 = vlaneseq
    %v5493 = vshrl.u32 %v5492, 7
    %v5494 = vsub.s32 0, %v5493
    %v5495 = vrot.slane %v5462, %v5494
    %v5497 = vmul.f32 %v5489, %v5495
    %v5498 = vmul.f32 %v5490, %v5495
    %v5500 = vlaneseq
    %v5501 = vshrl.u32 %v5500, 7
    %v5502 = vsub.s32 0, %v5501
    %v5503 = vrot.slane %v5464, %v5502
    %v5505 = vadd.f32 %v5497, %v5503
    %v5506 = vadd.f32 %v5498, %v5503
    %v5507 = vpack.c.bf16 %v5506, %v5505
    %s5508 = scalar_lea.vmem [#allocation17], 192
    %v5509 = vld [vmem:[%s5508] sm:$0xf]
    %v5510 = vld [vmem:[%s5508 + $0x4] sm:$0xf]
    %v5511 = vld [vmem:[%s5508 + $0x8] sm:$0xf]
    %v5512 = vld [vmem:[%s5508 + $0xc] sm:$0xf]
    %v5513 = vld [vmem:[%s5508 + $0x10] sm:$0xf]
    %v5514 = vld [vmem:[%s5508 + $0x14] sm:$0xf]
    %v5515 = vld [vmem:[%s5508 + $0x18] sm:$0xf]
    %v5516 = vld [vmem:[%s5508 + $0x1c] sm:$0xf]
    %s5517 = scalar_lea.vmem [#allocation19], 6
    %v5518 = vld [vmem:[%s5517] sm:$0x1]
    %v5520 = vlaneseq
    %v5521 = vshrl.u32 %v5520, 7
    %v5522 = vsub.s32 0, %v5521
    %v5523 = vrot.slane %v5518, %v5522
    %v5533 = vunpack.c.l.b16 %v5509
    %v5534 = vunpack.c.l.b16 %v5510
    %v5535 = vunpack.c.l.b16 %v5511
    %v5536 = vunpack.c.l.b16 %v5512
    %v5537 = vunpack.c.l.b16 %v5513
    %v5538 = vunpack.c.l.b16 %v5514
    %v5539 = vunpack.c.l.b16 %v5515
    %v5540 = vunpack.c.l.b16 %v5516
    %v5541 = vpack.c.b16 %v5534, %v5533
    %v5542 = vpack.c.b16 %v5536, %v5535
    %v5543 = vpack.c.b16 %v5538, %v5537
    %v5544 = vpack.c.b16 %v5540, %v5539
    %v5550 = vsel %vm342, %v5507, 0
    %5552 = vmatprep.subr.bf16.mxu0 0
    %5553 = vmatpush1.bf16.msra.mxu0 %v5541
    %5554 = vmatprep.subr.bf16.mxu0 0
    %5555 = vmatpush1.bf16.msra.mxu0 %v5542
    %5556 = vmatprep.subr.bf16.mxu0 0
    %5557 = vmatpush1.bf16.msra.mxu0 %v5543
    %5558 = vmatprep.subr.bf16.mxu0 0
    %5559 = vmatpush1.bf16.msra.mxu0 %v5544
    %5560 = vmatprep.subr.bf16.mxu0 0
    %5561 = vmatpush1.bf16.msra.mxu0 0
    %5562 = vmatprep.subr.bf16.mxu0 0
    %5563 = vmatpush1.bf16.msra.mxu0 0
    %5564 = vmatprep.subr.bf16.mxu0 0
    %5565 = vmatpush1.bf16.msra.mxu0 0
    %5566 = vmatprep.subr.bf16.mxu0 0
    %5567 = vmatpush1.bf16.msra.mxu0 0
    %5568 = vmatprep.subr.bf16.mxu0 0
    %5569 = vmatpush1.bf16.msra.mxu0 0
    %5570 = vmatprep.subr.bf16.mxu0 0
    %5571 = vmatpush1.bf16.msra.mxu0 0
    %5572 = vmatprep.subr.bf16.mxu0 0
    %5573 = vmatpush1.bf16.msra.mxu0 0
    %5574 = vmatprep.subr.bf16.mxu0 0
    %5575 = vmatpush1.bf16.msra.mxu0 0
    %5576 = vmatprep.subr.bf16.mxu0 0
    %5577 = vmatpush1.bf16.msra.mxu0 0
    %5578 = vmatprep.subr.bf16.mxu0 0
    %5579 = vmatpush1.bf16.msra.mxu0 0
    %5580 = vmatprep.subr.bf16.mxu0 0
    %5581 = vmatpush1.bf16.msra.mxu0 0
    %5582 = vmatprep.subr.bf16.mxu0 0
    %5583 = vmatpush1.bf16.msra.mxu0 0
    %5584 = vmatprep.mubr.bf16.mxu0 0
    %5585 = vmatmul.mubr.bf16.gmra.mrb[0].mxu0 %v5550
    %v5586 = vpop.f32.mrb[0].mxu0
    %v5587 = vadd.f32 %v5523, %v5586
    %v5588 = vpop.f32.mrb[0].mxu0
    %v5589 = vpop.f32.mrb[0].mxu0
    %v5590 = vadd.f32 %v5523, %v5589
    %v5591 = vpop.f32.mrb[0].mxu0
    %5592 = vdwg.mxu0
    %v5593 = vmul.f32 %v5587, %v5587
    %v5594 = vmul.f32 %v5590, %v5590
    %v5595 = vmul.f32 %v5587, %v5593
    %v5596 = vmul.f32 %v5590, %v5594
    %v5597 = vmul.f32 %v5595, 0.044715
    %v5598 = vmul.f32 %v5596, 0.044715
    %v5599 = vadd.f32 %v5587, %v5597
    %v5600 = vadd.f32 %v5590, %v5598
    %v5601 = vmul.f32 %v5599, 0.7978846
    %v5602 = vmul.f32 %v5600, 0.7978846
    %v5603 = vtanh.pop %v5601
    %v5604 = vtanh.pop %v5602
    %v5605 = vadd.f32 %v5603, 1.0
    %v5606 = vadd.f32 %v5604, 1.0
    %v5607 = vmul.f32 %v5605, 0.5
    %v5608 = vmul.f32 %v5606, 0.5
    %v5609 = vmul.f32 %v5587, %v5607
    %v5610 = vmul.f32 %v5590, %v5608
    %v5611 = vpack.c.bf16 %v5610, %v5609
    %s5612 = scalar_lea.vmem %s14, 384
    %v5613 = vld [vmem:[%s5612] sm:$0xf]
    %v5614 = vld [vmem:[%s5612 + $0x4] sm:$0xf]
    %v5615 = vld [vmem:[%s5612 + $0x8] sm:$0xf]
    %v5616 = vld [vmem:[%s5612 + $0xc] sm:$0xf]
    %v5617 = vld [vmem:[%s5612 + $0x10] sm:$0xf]
    %v5618 = vld [vmem:[%s5612 + $0x14] sm:$0xf]
    %v5619 = vld [vmem:[%s5612 + $0x18] sm:$0xf]
    %v5620 = vld [vmem:[%s5612 + $0x1c] sm:$0xf]
    %v5621 = vld [vmem:[%s5612 + $0x20] sm:$0xf]
    %v5622 = vld [vmem:[%s5612 + $0x24] sm:$0xf]
    %v5623 = vld [vmem:[%s5612 + $0x28] sm:$0xf]
    %v5624 = vld [vmem:[%s5612 + $0x2c] sm:$0xf]
    %v5625 = vld [vmem:[%s5612 + $0x30] sm:$0xf]
    %v5626 = vld [vmem:[%s5612 + $0x34] sm:$0xf]
    %v5627 = vld [vmem:[%s5612 + $0x38] sm:$0xf]
    %v5628 = vld [vmem:[%s5612 + $0x3c] sm:$0xf]
    %s5629 = scalar_lea.vmem [#allocation20], 6
    %v5630 = vld [vmem:[%s5629] sm:$0x1]
    %v5632 = vlaneseq
    %v5633 = vshrl.u32 %v5632, 7
    %v5634 = vsub.s32 0, %v5633
    %v5635 = vrot.slane %v5630, %v5634
    %v5653 = vunpack.c.l.b16 %v5613
    %v5654 = vunpack.c.l.b16 %v5614
    %v5655 = vunpack.c.l.b16 %v5615
    %v5656 = vunpack.c.l.b16 %v5616
    %v5657 = vunpack.c.l.b16 %v5617
    %v5658 = vunpack.c.l.b16 %v5618
    %v5659 = vunpack.c.l.b16 %v5619
    %v5660 = vunpack.c.l.b16 %v5620
    %v5661 = vunpack.c.l.b16 %v5621
    %v5662 = vunpack.c.l.b16 %v5622
    %v5663 = vunpack.c.l.b16 %v5623
    %v5664 = vunpack.c.l.b16 %v5624
    %v5665 = vunpack.c.l.b16 %v5625
    %v5666 = vunpack.c.l.b16 %v5626
    %v5667 = vunpack.c.l.b16 %v5627
    %v5668 = vunpack.c.l.b16 %v5628
    %v5669 = vpack.c.b16 %v5654, %v5653
    %v5670 = vpack.c.b16 %v5656, %v5655
    %v5671 = vpack.c.b16 %v5658, %v5657
    %v5672 = vpack.c.b16 %v5660, %v5659
    %v5673 = vpack.c.b16 %v5662, %v5661
    %v5674 = vpack.c.b16 %v5664, %v5663
    %v5675 = vpack.c.b16 %v5666, %v5665
    %v5676 = vpack.c.b16 %v5668, %v5667
    %5685 = vmatprep.subr.bf16.mxu0 0
    %5686 = vmatpush1.bf16.msra.mxu0 %v5669
    %5687 = vmatprep.subr.bf16.mxu0 0
    %5688 = vmatpush1.bf16.msra.mxu0 %v5670
    %5689 = vmatprep.subr.bf16.mxu0 0
    %5690 = vmatpush1.bf16.msra.mxu0 %v5671
    %5691 = vmatprep.subr.bf16.mxu0 0
    %5692 = vmatpush1.bf16.msra.mxu0 %v5672
    %5693 = vmatprep.subr.bf16.mxu0 0
    %5694 = vmatpush1.bf16.msra.mxu0 %v5673
    %5695 = vmatprep.subr.bf16.mxu0 0
    %5696 = vmatpush1.bf16.msra.mxu0 %v5674
    %5697 = vmatprep.subr.bf16.mxu0 0
    %5698 = vmatpush1.bf16.msra.mxu0 %v5675
    %5699 = vmatprep.subr.bf16.mxu0 0
    %5700 = vmatpush1.bf16.msra.mxu0 %v5676
    %5701 = vmatprep.subr.bf16.mxu0 0
    %5702 = vmatpush1.bf16.msra.mxu0 0
    %5703 = vmatprep.subr.bf16.mxu0 0
    %5704 = vmatpush1.bf16.msra.mxu0 0
    %5705 = vmatprep.subr.bf16.mxu0 0
    %5706 = vmatpush1.bf16.msra.mxu0 0
    %5707 = vmatprep.subr.bf16.mxu0 0
    %5708 = vmatpush1.bf16.msra.mxu0 0
    %5709 = vmatprep.subr.bf16.mxu0 0
    %5710 = vmatpush1.bf16.msra.mxu0 0
    %5711 = vmatprep.subr.bf16.mxu0 0
    %5712 = vmatpush1.bf16.msra.mxu0 0
    %5713 = vmatprep.subr.bf16.mxu0 0
    %5714 = vmatpush1.bf16.msra.mxu0 0
    %5715 = vmatprep.subr.bf16.mxu0 0
    %5716 = vmatpush1.bf16.msra.mxu0 0
    %5717 = vmatprep.mubr.bf16.mxu0 0
    %5718 = vmatmul.mubr.bf16.gmra.mrb[0].mxu0 %v5611
    %v5719 = vpop.f32.mrb[0].mxu0
    %v5720 = vadd.f32 %v5635, %v5719
    %v5721 = vpop.f32.mrb[0].mxu0
    %v5722 = vpop.f32.mrb[0].mxu0
    %v5723 = vadd.f32 %v5635, %v5722
    %v5724 = vpop.f32.mrb[0].mxu0
    %5725 = vdwg.mxu0
    %v5726 = vadd.f32 %v5505, %v5720
    %v5727 = vadd.f32 %v5506, %v5723
    %s5728 = scalar_lea.vmem [#allocation22], 6
    %v5729 = vld [vmem:[%s5728] sm:$0x1]
    %s5730 = scalar_lea.vmem [#allocation23], 6
    %v5731 = vld [vmem:[%s5730] sm:$0x1]
    %v5732 = vsel %vm342, %v5726, 0.0
    %5733 = vadd.xlane.f32.xlu0 %v5732
    %v5734 = vpop.xlane.xlu0 %5733
    %v5735 = vsel %vm342, %v5727, 0.0
    %5736 = vadd.xlane.f32.xlu0 %v5735
    %v5737 = vpop.xlane.xlu0 %5736
    %v5738 = vmul.f32 %v5734, %v850
    %v5739 = vmul.f32 %v5737, %v850
    %v5740 = vsub.f32 %v5726, %v5738
    %v5741 = vsub.f32 %v5727, %v5739
    %v5742 = vmul.f32 %v5740, %v5740
    %v5743 = vmul.f32 %v5741, %v5741
    %v5744 = vsel %vm342, %v5742, 0.0
    %5745 = vadd.xlane.f32.xlu0 %v5744
    %v5746 = vpop.xlane.xlu0 %5745
    %v5747 = vsel %vm342, %v5743, 0.0
    %5748 = vadd.xlane.f32.xlu0 %v5747
    %v5749 = vpop.xlane.xlu0 %5748
    %v5750 = vmul.f32 %v5746, %v850
    %v5751 = vmul.f32 %v5749, %v850
    %v5752 = vadd.f32 %v5750, 1e-12
    %v5753 = vadd.f32 %v5751, 1e-12
    %v5754 = vrsqrt.pop %v5752
    %v5755 = vrsqrt.pop %v5753
    %v5756 = vmul.f32 %v5740, %v5754
    %v5757 = vmul.f32 %v5741, %v5755
    %v5759 = vlaneseq
    %v5760 = vshrl.u32 %v5759, 7
    %v5761 = vsub.s32 0, %v5760
    %v5762 = vrot.slane %v5729, %v5761
    %v5764 = vmul.f32 %v5756, %v5762
    %v5765 = vmul.f32 %v5757, %v5762
    %v5767 = vlaneseq
    %v5768 = vshrl.u32 %v5767, 7
    %v5769 = vsub.s32 0, %v5768
    %v5770 = vrot.slane %v5731, %v5769
    %v5772 = vadd.f32 %v5764, %v5770
    %v5773 = vadd.f32 %v5765, %v5770
    %v5774 = vadd.f32 %v5002, %v5772
    %v5775 = vadd.f32 %v5003, %v5773
    %v5776 = vmul.f32 %v5774, 0.25
    %v5777 = vmul.f32 %v5775, 0.25
    %v5778 = vsel %vm342, %v5776, 0.0
    %v5779 = vsel %vm342, %v5777, 0.0
    %5780 = vrot.lane.b32.xlu0 %v5778, 32
    %v5781 = vpop.permute.xlu0 %5780
    %5782 = vrot.lane.b32.xlu0 %v5779, 32
    %v5783 = vpop.permute.xlu0 %5782
    %v5785 = vsel %vm342, %v270, 0
    %v5788 = vsel %vm342, %v271, 0
    %5790 = vmatprep.subr.mxu0 0.0
    %5791 = vmatpush1.msra.mxu0 %v295
    %5792 = vmatprep.subr.mxu0 0.0
    %5793 = vmatpush1.msra.mxu0 %v296
    %5794 = vmatprep.subr.mxu0 0.0
    %5795 = vmatpush1.msra.mxu0 %v297
    %5796 = vmatprep.subr.mxu0 0.0
    %5797 = vmatpush1.msra.mxu0 %v298
    %5798 = vmatprep.subr.mxu0 0.0
    %5799 = vmatpush1.msra.mxu0 %v299
    %5800 = vmatprep.subr.mxu0 0.0
    %5801 = vmatpush1.msra.mxu0 %v300
    %5802 = vmatprep.subr.mxu0 0.0
    %5803 = vmatpush1.msra.mxu0 %v301
    %5804 = vmatprep.subr.mxu0 0.0
    %5805 = vmatpush1.msra.mxu0 %v302
    %5806 = vmatprep.subr.mxu0 0.0
    %5807 = vmatpush1.msra.mxu0 0.0
    %5808 = vmatprep.subr.mxu0 0.0
    %5809 = vmatpush1.msra.mxu0 0.0
    %5810 = vmatprep.subr.mxu0 0.0
    %5811 = vmatpush1.msra.mxu0 0.0
    %5812 = vmatprep.subr.mxu0 0.0
    %5813 = vmatpush1.msra.mxu0 0.0
    %5814 = vmatprep.subr.mxu0 0.0
    %5815 = vmatpush1.msra.mxu0 0.0
    %5816 = vmatprep.subr.mxu0 0.0
    %5817 = vmatpush1.msra.mxu0 0.0
    %5818 = vmatprep.subr.mxu0 0.0
    %5819 = vmatpush1.msra.mxu0 0.0
    %5820 = vmatprep.subr.mxu0 0.0
    %5821 = vmatpush1.msra.mxu0 0.0
    %5822 = vmatprep.subr.mxu0 0.0
    %5823 = vmatpush1.msra.mxu0 0.0
    %5824 = vmatprep.subr.mxu0 0.0
    %5825 = vmatpush1.msra.mxu0 0.0
    %5826 = vmatprep.subr.mxu0 0.0
    %5827 = vmatpush1.msra.mxu0 0.0
    %5828 = vmatprep.subr.mxu0 0.0
    %5829 = vmatpush1.msra.mxu0 0.0
    %5830 = vmatprep.subr.mxu0 0.0
    %5831 = vmatpush1.msra.mxu0 0.0
    %5832 = vmatprep.subr.mxu0 0.0
    %5833 = vmatpush1.msra.mxu0 0.0
    %5834 = vmatprep.subr.mxu0 0.0
    %5835 = vmatpush1.msra.mxu0 0.0
    %5836 = vmatprep.subr.mxu0 0.0
    %5837 = vmatpush1.msra.mxu0 0.0
    %5838 = vmatprep.subr.mxu0 0.0
    %5839 = vmatpush1.msra.mxu0 0.0
    %5840 = vmatprep.subr.mxu0 0.0
    %5841 = vmatpush1.msra.mxu0 0.0
    %5842 = vmatprep.subr.mxu0 0.0
    %5843 = vmatpush1.msra.mxu0 0.0
    %5844 = vmatprep.subr.mxu0 0.0
    %5845 = vmatpush1.msra.mxu0 0.0
    %5846 = vmatprep.subr.mxu0 0.0
    %5847 = vmatpush1.msra.mxu0 0.0
    %5848 = vmatprep.subr.mxu0 0.0
    %5849 = vmatpush1.msra.mxu0 0.0
    %5850 = vmatprep.subr.mxu0 0.0
    %5851 = vmatpush1.msra.mxu0 0.0
    %5852 = vmatprep.subr.mxu0 0.0
    %5853 = vmatpush1.msra.mxu0 0.0
    %5854 = vmatprep.mubr.f32.mxu0 0.0
    %5855 = vmatmul.mubr.f32.gmra.mrb[0].mxu0 %v5785
    %v5856 = vpop.f32.mrb[0].mxu0
    %v5857 = vadd.f32 %v5781, %v5856
    %v5858 = vpop.f32.mrb[0].mxu0
    %5859 = vmatprep.mubr.f32.mxu0 0.0
    %5860 = vmatmul.mubr.f32.gmra.mrb[0].mxu0 %v5788
    %v5861 = vpop.f32.mrb[0].mxu0
    %v5862 = vadd.f32 %v5783, %v5861
    %v5863 = vpop.f32.mrb[0].mxu0
    %5864 = vdwg.mxu0
    %5865 = vst [vmem:[#allocation25] sm:$0xff] %v5857
    %5866 = vst [vmem:[#allocation25 + $0x8] sm:$0xff] %v5862
    // Predicated region
    $region130: #{bert_base_lexer_forward.1} parent=1 // pred_check
      _
    $region131: #{bert_base_lexer_forward.1} parent=1 // pred_check_branch
      %5868 = sbr.rel (0) target = $region133
    $region132: #{bert_base_lexer_forward.1} parent=1 // pred_region
      %s5870 = ssub.s32 256, 256
      %5871 = vsyncadd [#allocation4], %s5870
      %s5872 = sshll.u32 [#allocation25], 4
      %s5873 = int_to_ptr.vmem [resolvable:$true] %s5872
      %5878 = dma.vmem_to_hbm [thread:$0]  %s5873, 256, %s18, [#allocation4], 128, 128, 8
    $region133: #{bert_base_lexer_forward.1} parent=1 // pred_fallthru
      _
    // Predicated region
    $region134: #{bert_base_lexer_forward.1} parent=1 // pred_check
      _
    $region135: #{bert_base_lexer_forward.1} parent=1 // pred_check_branch
      %5880 = sbr.rel (0) target = $region137
    $region136: #{bert_base_lexer_forward.1} parent=1 // pred_region
      %5881 = dma.done [#allocation4], 256
    $region137: #{bert_base_lexer_forward.1} parent=1 // pred_fallthru
      _
    %5882 = vsyncpa [#allocation3], 1
    %5883 = vsyncpa [#allocation6], 1
    %5884 = vsyncpa [#allocation9], 1
    %5885 = vsyncpa [#allocation12], 1
    %5886 = vsyncpa [#allocation15], 1
    %5887 = vsyncpa [#allocation18], 1
    %5888 = vsyncpa [#allocation21], 1
    %5889 = vsyncpa [#allocation24], 1
    %5890 = vsyncpa [#allocation4], 1

</llo_original>
